<compile_context>
chip_gen: v5e
topology: v5e:2x2
jax: 0.10.0
libtpu: 0.0.40
codegen_flags: <defaults>
</compile_context>

<pallas_src>
import jax
import jax.numpy as jnp
from jax.experimental import pallas as pl
from jax.experimental.pallas import tpu as pltpu


def _make_dgb_kernel(BT, H, W, C, K, compute_dtype):
    P = K // 2
    WC = W * C
    M = BT * H

    def lrelu(v):
        return jnp.where(v > 0, v, 0.1 * v)

    def dgb_kernel(x0_ref, tw_ref, b_ref, out_ref):
        # x0_ref : (BT, H, W*C)       input feature block (lane-dense)
        # tw_ref : (4, K, W*C, W*C)   block-Toeplitz conv weights (bf16)
        # b_ref  : (4, 1, W*C)        bias rows (per-channel bias tiled over W), f32
        # out_ref: (BT, H, W*C)
        x0 = x0_ref[...].astype(jnp.float32)                       # (BT, H, WC) f32

        # Vertical-halo row index (hoisted once; conv-invariant).
        row = jax.lax.broadcasted_iota(jnp.int32, (BT, H, WC), 1)

        def conv(a, idx):
            # a: (BT, H, WC) f32 activation.  One conv = K row-band matmuls
            # against the dy-th Toeplitz slice; the dx taps live in the weight.
            acc = None
            for dy in range(K):
                s = P - dy                                         # band(h) = a(h - s)
                if s == 0:
                    band = a
                else:
                    band = pltpu.roll(a, s % H, axis=1)            # sublane roll (XLU)
                    if s > 0:                                      # zero top halo rows
                        band = jnp.where(row >= s, band, 0.0)
                    else:                                          # zero bottom halo rows
                        band = jnp.where(row < H + s, band, 0.0)
                lhs = band.astype(compute_dtype).reshape(M, WC)    # free leading collapse
                d = jnp.dot(lhs, tw_ref[idx, dy],
                            preferred_element_type=jnp.float32)    # (M, WC) f32
                acc = d if acc is None else acc + d
            return acc + b_ref[idx]                                # (M,WC) + (1,WC), f32

        def unflat(v):
            return v.reshape(BT, H, WC)

        # da_conv1 -> conv1 -> da_conv2 -> conv2 + residual, fully fused.
        f = unflat(lrelu(conv(x0, 0)))
        f = unflat(lrelu(conv(f, 1)))
        f = unflat(lrelu(conv(f, 2)))
        out = conv(f, 3) + x0.reshape(M, WC)
        out_ref[...] = out.reshape(BT, H, WC).astype(out_ref.dtype)  # full-lane store

    return dgb_kernel


def _toeplitz_weight(w_hwio, W):
    """(K, K, C_in, C_out) HWIO conv weight -> (K, W*C_in, W*C_out) block-Toeplitz
    folding the horizontal taps (dx) and SAME zero-padding into the weight."""
    K, _, Ci, Co = w_hwio.shape
    P = K // 2
    win = jnp.arange(W)[:, None]
    wout = jnp.arange(W)[None, :]
    dx = win - wout + P                                            # (W, W)
    valid = (dx >= 0) & (dx < K)
    blocks = w_hwio[:, jnp.clip(dx, 0, K - 1)]                     # (K, W, W, Ci, Co)
    blocks = blocks * valid[None, :, :, None, None].astype(w_hwio.dtype)
    # (dy, win, ci, wout, co) -> rows = (win, ci), cols = (wout, co)
    return blocks.transpose(0, 1, 3, 2, 4).reshape(K, W * Ci, W * Co)


def dgb_forward_nhwc(x0_nhwc, x1, x2, params, *, batch_tile=1,
                     compute_dtype=jnp.bfloat16):
    """Primary (lane-dense) entry point.  x0_nhwc: (B, H, W, C).
    x1: (B, C) and x2: (B, C, H, W) mirror the PyTorch forward signature but are
    unused in this (noe) variant.  Returns (B, H, W, C)."""
    del x1, x2
    B, H, W, C = x0_nhwc.shape
    K = params["w_da1"].shape[0]
    WC = W * C

    # Lane-dense feature layout: flatten (W, C) -> W*C (free reshape).
    x0 = x0_nhwc.reshape(B, H, WC)

    # Grid over batch; keep step count even so both TensorCores get work (v7x).
    BT = max(1, min(B, batch_tile))
    n_steps = -(-B // BT)
    Bp = n_steps * BT
    if Bp != B:
        x0 = jnp.pad(x0, ((0, Bp - B), (0, 0), (0, 0)))

    names = [("w_da1", "b_da1"), ("w_c1", "b_c1"),
             ("w_da2", "b_da2"), ("w_c2", "b_c2")]
    tw = jnp.stack([_toeplitz_weight(params[w], W) for w, _ in names]
                   ).astype(compute_dtype)                         # (4, K, WC, WC)
    bias = jnp.stack([jnp.tile(params[b].reshape(1, C), (1, W)) for _, b in names]
                     ).astype(jnp.float32)                         # (4, 1, WC)

    kernel = _make_dgb_kernel(BT, H, W, C, K, compute_dtype)

    feat_spec = pl.BlockSpec((BT, H, WC), lambda g: (g, 0, 0))
    out = pl.pallas_call(
        kernel,
        out_shape=jax.ShapeDtypeStruct((Bp, H, WC), x0.dtype),
        grid_spec=pltpu.PrefetchScalarGridSpec(
            num_scalar_prefetch=0,
            grid=(n_steps,),
            in_specs=[feat_spec,
                      pl.BlockSpec((4, K, WC, WC), lambda g: (0, 0, 0, 0)),
                      pl.BlockSpec((4, 1, WC), lambda g: (0, 0, 0))],
            out_specs=feat_spec,
        ),
        compiler_params=pltpu.CompilerParams(
            dimension_semantics=("parallel",),        # batch axis -> 2 TCs on v7x
            vmem_limit_bytes=48 * 1024 * 1024),
    )(x0, tw, bias)

    return out[:B].reshape(B, H, W, C)


def dgb_forward(x0_nchw, x1, x2, params, **kw):
    """PyTorch-parity NCHW wrapper.  Production callers should keep the model in
    NHWC and call dgb_forward_nhwc directly to avoid these two HBM transposes."""
    out = dgb_forward_nhwc(jnp.transpose(x0_nchw, (0, 2, 3, 1)), x1, x2, params, **kw)
    return jnp.transpose(out, (0, 3, 1, 2))


def ref_forward(x0_nchw, params):
    """Pure-JAX f32 reference (lax conv), for correctness checking."""
    x0 = jnp.transpose(x0_nchw, (0, 2, 3, 1))

    def conv(x, w, b):
        y = jax.lax.conv_general_dilated(
            x, w, window_strides=(1, 1), padding="SAME",
            dimension_numbers=("NHWC", "HWIO", "NHWC"))
        return y + b.reshape(1, 1, 1, -1)

    def lrelu(v):
        return jnp.where(v > 0, v, 0.1 * v)

    f = lrelu(conv(x0, params["w_da1"], params["b_da1"]))
    f = lrelu(conv(f, params["w_c1"], params["b_c1"]))
    f = lrelu(conv(f, params["w_da2"], params["b_da2"]))
    f = conv(f, params["w_c2"], params["b_c2"]) + x0
    return jnp.transpose(f, (0, 3, 1, 2))


def init_params(key, n_feat, kernel_size):
    ks = jax.random.split(key, 8)

    def w(k):
        return (0.05 * jax.random.normal(
            k, (kernel_size, kernel_size, n_feat, n_feat))).astype(jnp.float32)

    def b(k):
        return (0.05 * jax.random.normal(k, (1, n_feat))).astype(jnp.float32)

    return {
        "w_da1": w(ks[0]), "b_da1": b(ks[1]),
        "w_c1":  w(ks[2]), "b_c1":  b(ks[3]),
        "w_da2": w(ks[4]), "b_da2": b(ks[5]),
        "w_c2":  w(ks[6]), "b_c2":  b(ks[7]),
    }


if __name__ == "__main__":
    B, n_feat, H, W, K = 2, 32, 16, 16, 3
    key = jax.random.PRNGKey(0)
    k0, k1, k2, kp = jax.random.split(key, 4)

    x0 = jax.random.normal(k0, (B, n_feat, H, W), dtype=jnp.float32)  # feature map
    x1 = jax.random.normal(k1, (B, n_feat), dtype=jnp.float32)        # degradation repr (unused)
    x2 = jax.random.normal(k2, (B, n_feat, H, W), dtype=jnp.float32)  # degradation feat map (unused)
    params = init_params(kp, n_feat, K)

    # batch_tile=1 -> grid of 2 even steps (one per TensorCore on v7x).
    out = jax.block_until_ready(dgb_forward(x0, x1, x2, params, batch_tile=1))
    ref = jax.block_until_ready(ref_forward(x0, params))

    assert out.shape == (B, n_feat, H, W)
    # bf16 MXU path => loosened tolerance vs the f32 lax reference
    # (elementwise math, accumulation, bias, lrelu and residual stay f32).
    assert jnp.allclose(out, ref, atol=5e-2, rtol=5e-2), \
        float(jnp.max(jnp.abs(out - ref)))

    print("KERNEL_OK")
</pallas_src>

<mosaic_0001>
module attributes {stable_mosaic.version = 11 : i64} {
  func.func @dgb_kernel(%arg0: i32, %arg1: memref<1x16x512xf32, #tpu.memory_space<vmem>>, %arg2: memref<4x3x512x512xbf16, #tpu.memory_space<vmem>>, %arg3: memref<4x1x512xf32, #tpu.memory_space<vmem>>, %arg4: memref<1x16x512xf32, #tpu.memory_space<vmem>>) attributes {dimension_semantics = [#tpu.dimension_semantics<parallel>], iteration_bounds = array<i64: 2>, scalar_prefetch = 0 : i64, scratch_operands = 0 : i64, tpu.core_type = #tpu.core_type<tc>, window_params = [{transform_indices = @transform_0, window_bounds = array<i64: 1, 16, 512>}, {pipeline_mode = #tpu.pipeline_mode<synchronous>, transform_indices = @transform_1, window_bounds = array<i64: 4, 3, 512, 512>}, {pipeline_mode = #tpu.pipeline_mode<synchronous>, transform_indices = @transform_2, window_bounds = array<i64: 4, 1, 512>}, {transform_indices = @transform_3, window_bounds = array<i64: 1, 16, 512>}]} {
    %c0 = arith.constant 0 : index
    %c0_0 = arith.constant 0 : index
    %c0_1 = arith.constant 0 : index
    %0 = vector.load %arg1[%c0, %c0_0, %c0_1] : memref<1x16x512xf32, #tpu.memory_space<vmem>>, vector<1x16x512xf32>
    %1 = tpu.iota {dimensions = array<i32: 1>} : vector<1x16x512xi32>
    %c1_i32 = arith.constant 1 : i32
    %2 = tpu.dynamic_rotate %0 by %c1_i32 dim 1 : vector<1x16x512xf32>, i32 -> vector<1x16x512xf32>
    %c1_i32_2 = arith.constant 1 : i32
    %3 = vector.broadcast %c1_i32_2 : i32 to vector<1x16x512xi32>
    %4 = arith.cmpi sge, %1, %3 : vector<1x16x512xi32>
    %cst = arith.constant 0.000000e+00 : f32
    %5 = vector.broadcast %cst : f32 to vector<1x16x512xf32>
    %6 = arith.select %4, %2, %5 : vector<1x16x512xi1>, vector<1x16x512xf32>
    %7 = arith.truncf %6 : vector<1x16x512xf32> to vector<1x16x512xbf16>
    %8 = vector.shape_cast %7 : vector<1x16x512xbf16> to vector<16x512xbf16>
    %c0_3 = arith.constant 0 : index
    %c0_4 = arith.constant 0 : index
    %c0_5 = arith.constant 0 : index
    %c0_6 = arith.constant 0 : index
    %9 = vector.load %arg2[%c0_3, %c0_4, %c0_5, %c0_6] : memref<4x3x512x512xbf16, #tpu.memory_space<vmem>>, vector<1x1x512x512xbf16>
    %10 = vector.shape_cast %9 : vector<1x1x512x512xbf16> to vector<512x512xbf16>
    %cst_7 = arith.constant dense<0.000000e+00> : vector<16x512xf32>
    %11 = tpu.matmul %8, %10, %cst_7 {dimension_numbers = #tpu.dot_dimension_numbers<[1], [0], [0], [1], [0, 0, 1, 1], [], []>} : vector<16x512xbf16>, vector<512x512xbf16>, vector<16x512xf32> -> vector<16x512xf32>
    %12 = arith.truncf %0 : vector<1x16x512xf32> to vector<1x16x512xbf16>
    %13 = vector.shape_cast %12 : vector<1x16x512xbf16> to vector<16x512xbf16>
    %c0_8 = arith.constant 0 : index
    %c1 = arith.constant 1 : index
    %c0_9 = arith.constant 0 : index
    %c0_10 = arith.constant 0 : index
    %14 = vector.load %arg2[%c0_8, %c1, %c0_9, %c0_10] : memref<4x3x512x512xbf16, #tpu.memory_space<vmem>>, vector<1x1x512x512xbf16>
    %15 = vector.shape_cast %14 : vector<1x1x512x512xbf16> to vector<512x512xbf16>
    %cst_11 = arith.constant dense<0.000000e+00> : vector<16x512xf32>
    %16 = tpu.matmul %13, %15, %cst_11 {dimension_numbers = #tpu.dot_dimension_numbers<[1], [0], [0], [1], [0, 0, 1, 1], [], []>} : vector<16x512xbf16>, vector<512x512xbf16>, vector<16x512xf32> -> vector<16x512xf32>
    %17 = arith.addf %11, %16 : vector<16x512xf32>
    %c15_i32 = arith.constant 15 : i32
    %18 = tpu.dynamic_rotate %0 by %c15_i32 dim 1 : vector<1x16x512xf32>, i32 -> vector<1x16x512xf32>
    %c15_i32_12 = arith.constant 15 : i32
    %19 = vector.broadcast %c15_i32_12 : i32 to vector<1x16x512xi32>
    %20 = arith.cmpi slt, %1, %19 : vector<1x16x512xi32>
    %cst_13 = arith.constant 0.000000e+00 : f32
    %21 = vector.broadcast %cst_13 : f32 to vector<1x16x512xf32>
    %22 = arith.select %20, %18, %21 : vector<1x16x512xi1>, vector<1x16x512xf32>
    %23 = arith.truncf %22 : vector<1x16x512xf32> to vector<1x16x512xbf16>
    %24 = vector.shape_cast %23 : vector<1x16x512xbf16> to vector<16x512xbf16>
    %c0_14 = arith.constant 0 : index
    %c2 = arith.constant 2 : index
    %c0_15 = arith.constant 0 : index
    %c0_16 = arith.constant 0 : index
    %25 = vector.load %arg2[%c0_14, %c2, %c0_15, %c0_16] : memref<4x3x512x512xbf16, #tpu.memory_space<vmem>>, vector<1x1x512x512xbf16>
    %26 = vector.shape_cast %25 : vector<1x1x512x512xbf16> to vector<512x512xbf16>
    %cst_17 = arith.constant dense<0.000000e+00> : vector<16x512xf32>
    %27 = tpu.matmul %24, %26, %cst_17 {dimension_numbers = #tpu.dot_dimension_numbers<[1], [0], [0], [1], [0, 0, 1, 1], [], []>} : vector<16x512xbf16>, vector<512x512xbf16>, vector<16x512xf32> -> vector<16x512xf32>
    %28 = arith.addf %17, %27 : vector<16x512xf32>
    %c0_18 = arith.constant 0 : index
    %c0_19 = arith.constant 0 : index
    %c0_20 = arith.constant 0 : index
    %29 = vector.load %arg3[%c0_18, %c0_19, %c0_20] : memref<4x1x512xf32, #tpu.memory_space<vmem>>, vector<1x1x512xf32>
    %30 = vector.shape_cast %29 : vector<1x1x512xf32> to vector<1x512xf32>
    %31 = vector.broadcast %30 : vector<1x512xf32> to vector<16x512xf32>
    %32 = arith.addf %28, %31 : vector<16x512xf32>
    %cst_21 = arith.constant 0.000000e+00 : f32
    %33 = vector.broadcast %cst_21 : f32 to vector<16x512xf32>
    %34 = arith.cmpf ogt, %32, %33 : vector<16x512xf32>
    %cst_22 = arith.constant 1.000000e-01 : f32
    %35 = vector.broadcast %cst_22 : f32 to vector<16x512xf32>
    %36 = arith.mulf %35, %32 : vector<16x512xf32>
    %37 = arith.select %34, %32, %36 : vector<16x512xi1>, vector<16x512xf32>
    %38 = vector.shape_cast %37 : vector<16x512xf32> to vector<1x16x512xf32>
    %c1_i32_23 = arith.constant 1 : i32
    %39 = tpu.dynamic_rotate %38 by %c1_i32_23 dim 1 : vector<1x16x512xf32>, i32 -> vector<1x16x512xf32>
    %c1_i32_24 = arith.constant 1 : i32
    %40 = vector.broadcast %c1_i32_24 : i32 to vector<1x16x512xi32>
    %41 = arith.cmpi sge, %1, %40 : vector<1x16x512xi32>
    %cst_25 = arith.constant 0.000000e+00 : f32
    %42 = vector.broadcast %cst_25 : f32 to vector<1x16x512xf32>
    %43 = arith.select %41, %39, %42 : vector<1x16x512xi1>, vector<1x16x512xf32>
    %44 = arith.truncf %43 : vector<1x16x512xf32> to vector<1x16x512xbf16>
    %45 = vector.shape_cast %44 : vector<1x16x512xbf16> to vector<16x512xbf16>
    %c1_26 = arith.constant 1 : index
    %c0_27 = arith.constant 0 : index
    %c0_28 = arith.constant 0 : index
    %c0_29 = arith.constant 0 : index
    %46 = vector.load %arg2[%c1_26, %c0_27, %c0_28, %c0_29] : memref<4x3x512x512xbf16, #tpu.memory_space<vmem>>, vector<1x1x512x512xbf16>
    %47 = vector.shape_cast %46 : vector<1x1x512x512xbf16> to vector<512x512xbf16>
    %cst_30 = arith.constant dense<0.000000e+00> : vector<16x512xf32>
    %48 = tpu.matmul %45, %47, %cst_30 {dimension_numbers = #tpu.dot_dimension_numbers<[1], [0], [0], [1], [0, 0, 1, 1], [], []>} : vector<16x512xbf16>, vector<512x512xbf16>, vector<16x512xf32> -> vector<16x512xf32>
    %49 = arith.truncf %38 : vector<1x16x512xf32> to vector<1x16x512xbf16>
    %50 = vector.shape_cast %49 : vector<1x16x512xbf16> to vector<16x512xbf16>
    %c1_31 = arith.constant 1 : index
    %c1_32 = arith.constant 1 : index
    %c0_33 = arith.constant 0 : index
    %c0_34 = arith.constant 0 : index
    %51 = vector.load %arg2[%c1_31, %c1_32, %c0_33, %c0_34] : memref<4x3x512x512xbf16, #tpu.memory_space<vmem>>, vector<1x1x512x512xbf16>
    %52 = vector.shape_cast %51 : vector<1x1x512x512xbf16> to vector<512x512xbf16>
    %cst_35 = arith.constant dense<0.000000e+00> : vector<16x512xf32>
    %53 = tpu.matmul %50, %52, %cst_35 {dimension_numbers = #tpu.dot_dimension_numbers<[1], [0], [0], [1], [0, 0, 1, 1], [], []>} : vector<16x512xbf16>, vector<512x512xbf16>, vector<16x512xf32> -> vector<16x512xf32>
    %54 = arith.addf %48, %53 : vector<16x512xf32>
    %c15_i32_36 = arith.constant 15 : i32
    %55 = tpu.dynamic_rotate %38 by %c15_i32_36 dim 1 : vector<1x16x512xf32>, i32 -> vector<1x16x512xf32>
    %c15_i32_37 = arith.constant 15 : i32
    %56 = vector.broadcast %c15_i32_37 : i32 to vector<1x16x512xi32>
    %57 = arith.cmpi slt, %1, %56 : vector<1x16x512xi32>
    %cst_38 = arith.constant 0.000000e+00 : f32
    %58 = vector.broadcast %cst_38 : f32 to vector<1x16x512xf32>
    %59 = arith.select %57, %55, %58 : vector<1x16x512xi1>, vector<1x16x512xf32>
    %60 = arith.truncf %59 : vector<1x16x512xf32> to vector<1x16x512xbf16>
    %61 = vector.shape_cast %60 : vector<1x16x512xbf16> to vector<16x512xbf16>
    %c1_39 = arith.constant 1 : index
    %c2_40 = arith.constant 2 : index
    %c0_41 = arith.constant 0 : index
    %c0_42 = arith.constant 0 : index
    %62 = vector.load %arg2[%c1_39, %c2_40, %c0_41, %c0_42] : memref<4x3x512x512xbf16, #tpu.memory_space<vmem>>, vector<1x1x512x512xbf16>
    %63 = vector.shape_cast %62 : vector<1x1x512x512xbf16> to vector<512x512xbf16>
    %cst_43 = arith.constant dense<0.000000e+00> : vector<16x512xf32>
    %64 = tpu.matmul %61, %63, %cst_43 {dimension_numbers = #tpu.dot_dimension_numbers<[1], [0], [0], [1], [0, 0, 1, 1], [], []>} : vector<16x512xbf16>, vector<512x512xbf16>, vector<16x512xf32> -> vector<16x512xf32>
    %65 = arith.addf %54, %64 : vector<16x512xf32>
    %c1_44 = arith.constant 1 : index
    %c0_45 = arith.constant 0 : index
    %c0_46 = arith.constant 0 : index
    %66 = vector.load %arg3[%c1_44, %c0_45, %c0_46] : memref<4x1x512xf32, #tpu.memory_space<vmem>>, vector<1x1x512xf32>
    %67 = vector.shape_cast %66 : vector<1x1x512xf32> to vector<1x512xf32>
    %68 = vector.broadcast %67 : vector<1x512xf32> to vector<16x512xf32>
    %69 = arith.addf %65, %68 : vector<16x512xf32>
    %cst_47 = arith.constant 0.000000e+00 : f32
    %70 = vector.broadcast %cst_47 : f32 to vector<16x512xf32>
    %71 = arith.cmpf ogt, %69, %70 : vector<16x512xf32>
    %cst_48 = arith.constant 1.000000e-01 : f32
    %72 = vector.broadcast %cst_48 : f32 to vector<16x512xf32>
    %73 = arith.mulf %72, %69 : vector<16x512xf32>
    %74 = arith.select %71, %69, %73 : vector<16x512xi1>, vector<16x512xf32>
    %75 = vector.shape_cast %74 : vector<16x512xf32> to vector<1x16x512xf32>
    %c1_i32_49 = arith.constant 1 : i32
    %76 = tpu.dynamic_rotate %75 by %c1_i32_49 dim 1 : vector<1x16x512xf32>, i32 -> vector<1x16x512xf32>
    %c1_i32_50 = arith.constant 1 : i32
    %77 = vector.broadcast %c1_i32_50 : i32 to vector<1x16x512xi32>
    %78 = arith.cmpi sge, %1, %77 : vector<1x16x512xi32>
    %cst_51 = arith.constant 0.000000e+00 : f32
    %79 = vector.broadcast %cst_51 : f32 to vector<1x16x512xf32>
    %80 = arith.select %78, %76, %79 : vector<1x16x512xi1>, vector<1x16x512xf32>
    %81 = arith.truncf %80 : vector<1x16x512xf32> to vector<1x16x512xbf16>
    %82 = vector.shape_cast %81 : vector<1x16x512xbf16> to vector<16x512xbf16>
    %c2_52 = arith.constant 2 : index
    %c0_53 = arith.constant 0 : index
    %c0_54 = arith.constant 0 : index
    %c0_55 = arith.constant 0 : index
    %83 = vector.load %arg2[%c2_52, %c0_53, %c0_54, %c0_55] : memref<4x3x512x512xbf16, #tpu.memory_space<vmem>>, vector<1x1x512x512xbf16>
    %84 = vector.shape_cast %83 : vector<1x1x512x512xbf16> to vector<512x512xbf16>
    %cst_56 = arith.constant dense<0.000000e+00> : vector<16x512xf32>
    %85 = tpu.matmul %82, %84, %cst_56 {dimension_numbers = #tpu.dot_dimension_numbers<[1], [0], [0], [1], [0, 0, 1, 1], [], []>} : vector<16x512xbf16>, vector<512x512xbf16>, vector<16x512xf32> -> vector<16x512xf32>
    %86 = arith.truncf %75 : vector<1x16x512xf32> to vector<1x16x512xbf16>
    %87 = vector.shape_cast %86 : vector<1x16x512xbf16> to vector<16x512xbf16>
    %c2_57 = arith.constant 2 : index
    %c1_58 = arith.constant 1 : index
    %c0_59 = arith.constant 0 : index
    %c0_60 = arith.constant 0 : index
    %88 = vector.load %arg2[%c2_57, %c1_58, %c0_59, %c0_60] : memref<4x3x512x512xbf16, #tpu.memory_space<vmem>>, vector<1x1x512x512xbf16>
    %89 = vector.shape_cast %88 : vector<1x1x512x512xbf16> to vector<512x512xbf16>
    %cst_61 = arith.constant dense<0.000000e+00> : vector<16x512xf32>
    %90 = tpu.matmul %87, %89, %cst_61 {dimension_numbers = #tpu.dot_dimension_numbers<[1], [0], [0], [1], [0, 0, 1, 1], [], []>} : vector<16x512xbf16>, vector<512x512xbf16>, vector<16x512xf32> -> vector<16x512xf32>
    %91 = arith.addf %85, %90 : vector<16x512xf32>
    %c15_i32_62 = arith.constant 15 : i32
    %92 = tpu.dynamic_rotate %75 by %c15_i32_62 dim 1 : vector<1x16x512xf32>, i32 -> vector<1x16x512xf32>
    %c15_i32_63 = arith.constant 15 : i32
    %93 = vector.broadcast %c15_i32_63 : i32 to vector<1x16x512xi32>
    %94 = arith.cmpi slt, %1, %93 : vector<1x16x512xi32>
    %cst_64 = arith.constant 0.000000e+00 : f32
    %95 = vector.broadcast %cst_64 : f32 to vector<1x16x512xf32>
    %96 = arith.select %94, %92, %95 : vector<1x16x512xi1>, vector<1x16x512xf32>
    %97 = arith.truncf %96 : vector<1x16x512xf32> to vector<1x16x512xbf16>
    %98 = vector.shape_cast %97 : vector<1x16x512xbf16> to vector<16x512xbf16>
    %c2_65 = arith.constant 2 : index
    %c2_66 = arith.constant 2 : index
    %c0_67 = arith.constant 0 : index
    %c0_68 = arith.constant 0 : index
    %99 = vector.load %arg2[%c2_65, %c2_66, %c0_67, %c0_68] : memref<4x3x512x512xbf16, #tpu.memory_space<vmem>>, vector<1x1x512x512xbf16>
    %100 = vector.shape_cast %99 : vector<1x1x512x512xbf16> to vector<512x512xbf16>
    %cst_69 = arith.constant dense<0.000000e+00> : vector<16x512xf32>
    %101 = tpu.matmul %98, %100, %cst_69 {dimension_numbers = #tpu.dot_dimension_numbers<[1], [0], [0], [1], [0, 0, 1, 1], [], []>} : vector<16x512xbf16>, vector<512x512xbf16>, vector<16x512xf32> -> vector<16x512xf32>
    %102 = arith.addf %91, %101 : vector<16x512xf32>
    %c2_70 = arith.constant 2 : index
    %c0_71 = arith.constant 0 : index
    %c0_72 = arith.constant 0 : index
    %103 = vector.load %arg3[%c2_70, %c0_71, %c0_72] : memref<4x1x512xf32, #tpu.memory_space<vmem>>, vector<1x1x512xf32>
    %104 = vector.shape_cast %103 : vector<1x1x512xf32> to vector<1x512xf32>
    %105 = vector.broadcast %104 : vector<1x512xf32> to vector<16x512xf32>
    %106 = arith.addf %102, %105 : vector<16x512xf32>
    %cst_73 = arith.constant 0.000000e+00 : f32
    %107 = vector.broadcast %cst_73 : f32 to vector<16x512xf32>
    %108 = arith.cmpf ogt, %106, %107 : vector<16x512xf32>
    %cst_74 = arith.constant 1.000000e-01 : f32
    %109 = vector.broadcast %cst_74 : f32 to vector<16x512xf32>
    %110 = arith.mulf %109, %106 : vector<16x512xf32>
    %111 = arith.select %108, %106, %110 : vector<16x512xi1>, vector<16x512xf32>
    %112 = vector.shape_cast %111 : vector<16x512xf32> to vector<1x16x512xf32>
    %c1_i32_75 = arith.constant 1 : i32
    %113 = tpu.dynamic_rotate %112 by %c1_i32_75 dim 1 : vector<1x16x512xf32>, i32 -> vector<1x16x512xf32>
    %c1_i32_76 = arith.constant 1 : i32
    %114 = vector.broadcast %c1_i32_76 : i32 to vector<1x16x512xi32>
    %115 = arith.cmpi sge, %1, %114 : vector<1x16x512xi32>
    %cst_77 = arith.constant 0.000000e+00 : f32
    %116 = vector.broadcast %cst_77 : f32 to vector<1x16x512xf32>
    %117 = arith.select %115, %113, %116 : vector<1x16x512xi1>, vector<1x16x512xf32>
    %118 = arith.truncf %117 : vector<1x16x512xf32> to vector<1x16x512xbf16>
    %119 = vector.shape_cast %118 : vector<1x16x512xbf16> to vector<16x512xbf16>
    %c3 = arith.constant 3 : index
    %c0_78 = arith.constant 0 : index
    %c0_79 = arith.constant 0 : index
    %c0_80 = arith.constant 0 : index
    %120 = vector.load %arg2[%c3, %c0_78, %c0_79, %c0_80] : memref<4x3x512x512xbf16, #tpu.memory_space<vmem>>, vector<1x1x512x512xbf16>
    %121 = vector.shape_cast %120 : vector<1x1x512x512xbf16> to vector<512x512xbf16>
    %cst_81 = arith.constant dense<0.000000e+00> : vector<16x512xf32>
    %122 = tpu.matmul %119, %121, %cst_81 {dimension_numbers = #tpu.dot_dimension_numbers<[1], [0], [0], [1], [0, 0, 1, 1], [], []>} : vector<16x512xbf16>, vector<512x512xbf16>, vector<16x512xf32> -> vector<16x512xf32>
    %123 = arith.truncf %112 : vector<1x16x512xf32> to vector<1x16x512xbf16>
    %124 = vector.shape_cast %123 : vector<1x16x512xbf16> to vector<16x512xbf16>
    %c3_82 = arith.constant 3 : index
    %c1_83 = arith.constant 1 : index
    %c0_84 = arith.constant 0 : index
    %c0_85 = arith.constant 0 : index
    %125 = vector.load %arg2[%c3_82, %c1_83, %c0_84, %c0_85] : memref<4x3x512x512xbf16, #tpu.memory_space<vmem>>, vector<1x1x512x512xbf16>
    %126 = vector.shape_cast %125 : vector<1x1x512x512xbf16> to vector<512x512xbf16>
    %cst_86 = arith.constant dense<0.000000e+00> : vector<16x512xf32>
    %127 = tpu.matmul %124, %126, %cst_86 {dimension_numbers = #tpu.dot_dimension_numbers<[1], [0], [0], [1], [0, 0, 1, 1], [], []>} : vector<16x512xbf16>, vector<512x512xbf16>, vector<16x512xf32> -> vector<16x512xf32>
    %128 = arith.addf %122, %127 : vector<16x512xf32>
    %c15_i32_87 = arith.constant 15 : i32
    %129 = tpu.dynamic_rotate %112 by %c15_i32_87 dim 1 : vector<1x16x512xf32>, i32 -> vector<1x16x512xf32>
    %c15_i32_88 = arith.constant 15 : i32
    %130 = vector.broadcast %c15_i32_88 : i32 to vector<1x16x512xi32>
    %131 = arith.cmpi slt, %1, %130 : vector<1x16x512xi32>
    %cst_89 = arith.constant 0.000000e+00 : f32
    %132 = vector.broadcast %cst_89 : f32 to vector<1x16x512xf32>
    %133 = arith.select %131, %129, %132 : vector<1x16x512xi1>, vector<1x16x512xf32>
    %134 = arith.truncf %133 : vector<1x16x512xf32> to vector<1x16x512xbf16>
    %135 = vector.shape_cast %134 : vector<1x16x512xbf16> to vector<16x512xbf16>
    %c3_90 = arith.constant 3 : index
    %c2_91 = arith.constant 2 : index
    %c0_92 = arith.constant 0 : index
    %c0_93 = arith.constant 0 : index
    %136 = vector.load %arg2[%c3_90, %c2_91, %c0_92, %c0_93] : memref<4x3x512x512xbf16, #tpu.memory_space<vmem>>, vector<1x1x512x512xbf16>
    %137 = vector.shape_cast %136 : vector<1x1x512x512xbf16> to vector<512x512xbf16>
    %cst_94 = arith.constant dense<0.000000e+00> : vector<16x512xf32>
    %138 = tpu.matmul %135, %137, %cst_94 {dimension_numbers = #tpu.dot_dimension_numbers<[1], [0], [0], [1], [0, 0, 1, 1], [], []>} : vector<16x512xbf16>, vector<512x512xbf16>, vector<16x512xf32> -> vector<16x512xf32>
    %139 = arith.addf %128, %138 : vector<16x512xf32>
    %c3_95 = arith.constant 3 : index
    %c0_96 = arith.constant 0 : index
    %c0_97 = arith.constant 0 : index
    %140 = vector.load %arg3[%c3_95, %c0_96, %c0_97] : memref<4x1x512xf32, #tpu.memory_space<vmem>>, vector<1x1x512xf32>
    %141 = vector.shape_cast %140 : vector<1x1x512xf32> to vector<1x512xf32>
    %142 = vector.broadcast %141 : vector<1x512xf32> to vector<16x512xf32>
    %143 = arith.addf %139, %142 : vector<16x512xf32>
    %144 = vector.shape_cast %0 : vector<1x16x512xf32> to vector<16x512xf32>
    %145 = arith.addf %143, %144 : vector<16x512xf32>
    %146 = vector.shape_cast %145 : vector<16x512xf32> to vector<1x16x512xf32>
    %c0_98 = arith.constant 0 : index
    %c0_99 = arith.constant 0 : index
    %c0_100 = arith.constant 0 : index
    %147 = vector.load %arg4[%c0_98, %c0_99, %c0_100] : memref<1x16x512xf32, #tpu.memory_space<vmem>>, vector<1x16x512xf32>
    tpu.vector_store %arg4[%c0_98, %c0_99, %c0_100], %146 {strides = array<i32>} : memref<1x16x512xf32, #tpu.memory_space<vmem>>, vector<1x16x512xf32>,
    return
  }
  func.func @transform_0(%arg0: i32) -> (i32, i32, i32) {
    %c0_i32 = arith.constant 0 : i32
    %c0_i32_0 = arith.constant 0 : i32
    %c0_i32_1 = arith.constant 0 : i32
    return %arg0, %c0_i32, %c0_i32_0 : i32, i32, i32
  }
  func.func @transform_1(%arg0: i32) -> (i32, i32, i32, i32) {
    %c0_i32 = arith.constant 0 : i32
    %c0_i32_0 = arith.constant 0 : i32
    %c0_i32_1 = arith.constant 0 : i32
    %c0_i32_2 = arith.constant 0 : i32
    %c0_i32_3 = arith.constant 0 : i32
    return %c0_i32, %c0_i32_0, %c0_i32_1, %c0_i32_2 : i32, i32, i32, i32
  }
  func.func @transform_2(%arg0: i32) -> (i32, i32, i32) {
    %c0_i32 = arith.constant 0 : i32
    %c0_i32_0 = arith.constant 0 : i32
    %c0_i32_1 = arith.constant 0 : i32
    %c0_i32_2 = arith.constant 0 : i32
    return %c0_i32, %c0_i32_0, %c0_i32_1 : i32, i32, i32
  }
  func.func @transform_3(%arg0: i32) -> (i32, i32, i32) {
    %c0_i32 = arith.constant 0 : i32
    %c0_i32_0 = arith.constant 0 : i32
    %c0_i32_1 = arith.constant 0 : i32
    return %arg0, %c0_i32, %c0_i32_0 : i32, i32, i32
  }
}

</mosaic_0001>

<llo_original>
// kernel: tpu_custom_call.1
$region0: #{tpu_custom_call.1}
  #allocation0 [shape = 'u32[]', space=smem, size = 0x4, offset = 0x4, fixed_abs, tag = 'smem constant byte address 0x4 - core index']
  #allocation1 [shape = 'u32[72,128]{1,0:T(1,128)}', space=vmem, size = 0x9000, scoped, tag = 'internal scratch']
  %s0 = inlined_call_operand.hbm [shape: f32[2,16,512], index: 0, kind: input, shape index: {}]
  %s1 = inlined_call_operand.hbm [shape: bf16[4,3,512,512], index: 1, kind: input, shape index: {}]
  %s2 = inlined_call_operand.hbm [shape: f32[4,1,512], index: 2, kind: input, shape index: {}]
  %s3 = inlined_call_operand.hbm [shape: f32[2,16,512], index: 3, kind: output, shape index: {}]
  %s4 = sld [smem:[#allocation0]]
  $region57: #{tpu_custom_call.1} parent=0
    _
  %s6 = ssub.s32 1, %s4
  %s7 = scalar_select 0, %s6, %s4
  $region1: #{tpu_custom_call.1} parent=0
    #allocation2 [shape = 'u8[65536]{0}', space=vmem, size = 0x10000, scoped, tag = 'input window, operand 0']
    #allocation3 [shape = 's32[2]{0}', space=sflag, size = 0x8, scoped, tag = 'scoped memory for tpu_custom_call.1']
    #allocation4 [shape = 's32[2]{0}', space=sflag, size = 0x8, scoped, tag = 'scoped memory for tpu_custom_call.1']
    #allocation5 [shape = 'u8[6291456]{0}', space=vmem, size = 0x600000, scoped, tag = 'input window, operand 1, single buffered']
    #allocation6 [shape = 's32[1]{0}', space=sflag, size = 0x4, scoped, tag = 'scoped memory for tpu_custom_call.1']
    #allocation7 [shape = 'u8[8192]{0}', space=vmem, size = 0x2000, scoped, tag = 'input window, operand 2, single buffered']
    #allocation8 [shape = 'u8[65536]{0}', space=vmem, size = 0x10000, scoped, tag = 'output window, operand 0']
    %8 = vsyncpa [#allocation3], 0
    %s9 = scalar_lea.sflag [#allocation3], 1
    %10 = vsyncpa %s9, 0
    %11 = vsyncpa [#allocation6], 0
    %12 = vsyncpa [#allocation4], 0
    %s13 = scalar_lea.sflag [#allocation4], 1
    %14 = vsyncpa %s13, 0
    loop: start=0, step=1, limit=4
    $region2: #{tpu_custom_call.1} parent=1 // loop_pre_header
      _
    $region3: #{tpu_custom_call.1} parent=1 // loop_header
      %s16 = sphi 0, %s20
      %p17 = scmp.ge.s32.totalorder %s16, 4
      %s26 = sphi 0, %s28
      %s29 = sphi 0, %s26
      %s30 = sphi 0, %s29
      %s46 = sphi 0, %s30
      %s50 = sphi 0, %s50
      %s52 = sphi 0, %s50
      %s53 = sphi 0, %s52
      %s67 = sphi 0, %s53
      %s71 = sphi 0, %s71
      %s73 = sphi 0, %s71
      %s74 = sphi 0, %s73
      %s88 = sphi 0, %s74
      %s94 = sphi 0, %s96
      %s97 = sphi 0, %s94
      %s98 = sphi 0, %s97
      %s114 = sphi 0, %s98
    $region4: #{tpu_custom_call.1} parent=1 // loop_header_branch
      %19 = sbr.rel (%p17) target = $region8
    $region5: #{tpu_custom_call.1} parent=1 // loop_body
      %s21 = ssub.s32 %s16, 1
      %s22 = ssub.s32 %s16, 2
      %s23 = sadd.s32 %s16, 1
      %s24 = ssub.s32 %s16, %s23
      %p25 = scmp.eq.s32.totalorder %s24, 0
      %s27 = sadd.s32 %s26, 1
      %s28 = scalar_select %p25, %s26, %s27
      %p31 = pneg %p25
      %p32 = scmp.eq.s32.totalorder %s16, 1
      %p33 = por %p31, %p32
      %p34 = scmp.ne.s32.totalorder %s26, %s29
      %p35 = scmp.eq.s32.totalorder %s16, 0
      %p36 = por %p34, %p35
      %p37 = scmp.ne.s32.totalorder %s26, %s29
      %p38 = scmp.eq.s32.totalorder %s21, 1
      %p39 = por %p37, %p38
      %p40 = scmp.ne.s32.totalorder %s29, %s30
      %p41 = scmp.eq.s32.totalorder %s21, 0
      %p42 = por %p40, %p41
      %p43 = scmp.ne.s32.totalorder %s29, %s30
      %p44 = scmp.eq.s32.totalorder %s22, 1
      %p45 = por %p43, %p44
      %p47 = scmp.ne.s32.totalorder %s30, %s46
      %p48 = scmp.eq.s32.totalorder %s22, 0
      %p49 = por %p47, %p48
      %s51 = sadd.s32 %s50, 1
      %p54 = scmp.eq.s32.totalorder %s16, 1
      %p55 = scmp.ne.s32.totalorder %s50, %s52
      %p56 = scmp.eq.s32.totalorder %s16, 0
      %p57 = por %p55, %p56
      %p58 = scmp.ne.s32.totalorder %s50, %s52
      %p59 = scmp.eq.s32.totalorder %s21, 1
      %p60 = por %p58, %p59
      %p61 = scmp.ne.s32.totalorder %s52, %s53
      %p62 = scmp.eq.s32.totalorder %s21, 0
      %p63 = por %p61, %p62
      %p64 = scmp.ne.s32.totalorder %s52, %s53
      %p65 = scmp.eq.s32.totalorder %s22, 1
      %p66 = por %p64, %p65
      %p68 = scmp.ne.s32.totalorder %s53, %s67
      %p69 = scmp.eq.s32.totalorder %s22, 0
      %p70 = por %p68, %p69
      %s72 = sadd.s32 %s71, 1
      %p75 = scmp.eq.s32.totalorder %s16, 1
      %p76 = scmp.ne.s32.totalorder %s71, %s73
      %p77 = scmp.eq.s32.totalorder %s16, 0
      %p78 = por %p76, %p77
      %p79 = scmp.ne.s32.totalorder %s71, %s73
      %p80 = scmp.eq.s32.totalorder %s21, 1
      %p81 = por %p79, %p80
      %p82 = scmp.ne.s32.totalorder %s73, %s74
      %p83 = scmp.eq.s32.totalorder %s21, 0
      %p84 = por %p82, %p83
      %p85 = scmp.ne.s32.totalorder %s73, %s74
      %p86 = scmp.eq.s32.totalorder %s22, 1
      %p87 = por %p85, %p86
      %p89 = scmp.ne.s32.totalorder %s74, %s88
      %p90 = scmp.eq.s32.totalorder %s22, 0
      %p91 = por %p89, %p90
      %s92 = ssub.s32 %s16, %s23
      %p93 = scmp.eq.s32.totalorder %s92, 0
      %s95 = sadd.s32 %s94, 1
      %s96 = scalar_select %p93, %s94, %s95
      %p99 = pneg %p93
      %p100 = scmp.eq.s32.totalorder %s16, 1
      %p101 = por %p99, %p100
      %p102 = scmp.ne.s32.totalorder %s94, %s97
      %p103 = scmp.eq.s32.totalorder %s16, 0
      %p104 = por %p102, %p103
      %p105 = scmp.ne.s32.totalorder %s94, %s97
      %p106 = scmp.eq.s32.totalorder %s21, 1
      %p107 = por %p105, %p106
      %p108 = scmp.ne.s32.totalorder %s97, %s98
      %p109 = scmp.eq.s32.totalorder %s21, 0
      %p110 = por %p108, %p109
      %p111 = scmp.ne.s32.totalorder %s97, %s98
      %p112 = scmp.eq.s32.totalorder %s22, 1
      %p113 = por %p111, %p112
      %p115 = scmp.ne.s32.totalorder %s98, %s114
      %p116 = scmp.eq.s32.totalorder %s22, 0
      %p117 = por %p115, %p116
      %p118 = scmp.le.s32.totalorder 1, %s16
      %p119 = scmp.lt.s32.totalorder %s16, 3
      %p120 = pnand %p118, %p119
      %p121 = pneg %p120
      // Predicated region
      $region9: #{tpu_custom_call.1} parent=5 // pred_check
        _
      $region10: #{tpu_custom_call.1} parent=5 // pred_check_branch
        %123 = sbr.rel (%p120) target = $region12
      $region11: #{tpu_custom_call.1} parent=5 // pred_region
        %s124 = ssub.s32 %s16, 1
        // Predicated region
        $region13: #{tpu_custom_call.1} parent=11 // pred_check
          %p125 = pneg %p63
        $region14: #{tpu_custom_call.1} parent=11 // pred_check_branch
          %127 = sbr.rel (%p125) target = $region16
        $region15: #{tpu_custom_call.1} parent=11 // pred_region
          %129 = vsyncadd [#allocation6], 0
          %s130 = sshll.u32 %s1, 4
          %s131 = int_to_ptr.hbm [resolvable:$true] %s130
          %s132 = sshll.u32 [#allocation5], 4
          %s133 = int_to_ptr.vmem [resolvable:$true] %s132
          %138 = dma.hbm_to_vmem [thread:$0]  %s131, 196608, %s133, [#allocation6], 256, 256, 16
        $region16: #{tpu_custom_call.1} parent=11 // pred_fallthru
          _
        // Predicated region
        $region17: #{tpu_custom_call.1} parent=11 // pred_check
          %p139 = pneg %p84
        $region18: #{tpu_custom_call.1} parent=11 // pred_check_branch
          %141 = sbr.rel (%p139) target = $region20
        $region19: #{tpu_custom_call.1} parent=11 // pred_region
          %143 = vsyncadd [#allocation6], 0
          %s144 = sshll.u32 %s2, 4
          %s145 = int_to_ptr.hbm [resolvable:$true] %s144
          %s146 = sshll.u32 [#allocation7], 4
          %s147 = int_to_ptr.vmem [resolvable:$true] %s146
          %152 = dma.hbm_to_vmem [thread:$0]  %s145, 256, %s147, [#allocation6], 64, 64, 4
        $region20: #{tpu_custom_call.1} parent=11 // pred_fallthru
          _
      $region12: #{tpu_custom_call.1} parent=5 // pred_fallthru
        _
      %p153 = scmp.lt.s32.totalorder %s16, 2
      // Predicated region
      $region21: #{tpu_custom_call.1} parent=5 // pred_check
        %p154 = pneg %p153
      $region22: #{tpu_custom_call.1} parent=5 // pred_check_branch
        %156 = sbr.rel (%p154) target = $region24
      $region23: #{tpu_custom_call.1} parent=5 // pred_region
        // Predicated region
        $region25: #{tpu_custom_call.1} parent=23 // pred_check
          %p157 = pneg %p36
        $region26: #{tpu_custom_call.1} parent=23 // pred_check_branch
          %159 = sbr.rel (%p157) target = $region28
        $region27: #{tpu_custom_call.1} parent=23 // pred_region
          %s160 = sand.u32 %s26, 1
          %s161 = scalar_lea.sflag [#allocation3], %s160
          %s162 = sand.u32 %s26, 1
          %s163 = smul.addr %s162, 64
          %s164 = scalar_lea.vmem [#allocation2], %s163
          %166 = vsyncadd %s161, 0
          %s167 = smul.addr %s16, 8
          %s168 = smul.addr %s167, 8
          %s169 = scalar_lea.hbm %s0, %s168
          %s170 = sshll.u32 %s169, 4
          %s171 = int_to_ptr.hbm [resolvable:$true] %s170
          %s172 = sshll.u32 %s164, 4
          %s173 = int_to_ptr.vmem [resolvable:$true] %s172
          %178 = dma.hbm_to_vmem [thread:$0]  %s171, 1024, %s173, %s161, 512, 512, 32
        $region28: #{tpu_custom_call.1} parent=23 // pred_fallthru
          _
      $region24: #{tpu_custom_call.1} parent=5 // pred_fallthru
        _
      %p179 = scmp.le.s32.totalorder 1, %s16
      %p180 = scmp.lt.s32.totalorder %s16, 3
      %p181 = pnand %p179, %p180
      %p182 = pneg %p181
      // Predicated region
      $region29: #{tpu_custom_call.1} parent=5 // pred_check
        _
      $region30: #{tpu_custom_call.1} parent=5 // pred_check_branch
        %184 = sbr.rel (%p181) target = $region32
      $region31: #{tpu_custom_call.1} parent=5 // pred_region
        %s185 = ssub.s32 %s16, 1
        %s186 = sand.u32 %s29, 1
        %s187 = scalar_lea.sflag [#allocation3], %s186
        %s188 = sand.u32 %s29, 1
        %s189 = smul.addr %s188, 64
        %s190 = scalar_lea.vmem [#allocation2], %s189
        // Predicated region
        $region33: #{tpu_custom_call.1} parent=31 // pred_check
          %p191 = pneg %p42
        $region34: #{tpu_custom_call.1} parent=31 // pred_check_branch
          %193 = sbr.rel (%p191) target = $region36
        $region35: #{tpu_custom_call.1} parent=31 // pred_region
          %195 = dma.done %s187, 1024
        $region36: #{tpu_custom_call.1} parent=31 // pred_fallthru
          _
        // Predicated region
        $region37: #{tpu_custom_call.1} parent=31 // pred_check
          %p196 = pneg %p63
        $region38: #{tpu_custom_call.1} parent=31 // pred_check_branch
          %198 = sbr.rel (%p196) target = $region40
        $region39: #{tpu_custom_call.1} parent=31 // pred_region
          %200 = dma.done [#allocation6], 196608
        $region40: #{tpu_custom_call.1} parent=31 // pred_fallthru
          _
        // Predicated region
        $region41: #{tpu_custom_call.1} parent=31 // pred_check
          %p201 = pneg %p84
        $region42: #{tpu_custom_call.1} parent=31 // pred_check_branch
          %203 = sbr.rel (%p201) target = $region44
        $region43: #{tpu_custom_call.1} parent=31 // pred_region
          %205 = dma.done [#allocation6], 256
        $region44: #{tpu_custom_call.1} parent=31 // pred_fallthru
          _
        %s206 = sand.u32 %s29, 1
        %s207 = scalar_lea.sflag [#allocation3], %s206
        %s208 = sand.u32 %s29, 1
        %s209 = smul.addr %s208, 64
        %s210 = scalar_lea.vmem [#allocation2], %s209
        %p211 = pneg %p42
        %p212 = pneg %p39
        %p213 = pneg %p63
        %p214 = pneg %p60
        %p215 = pneg %p84
        %p216 = pneg %p81
        %p217 = pneg %p110
        %p218 = pneg %p107
        %s219 = sand.u32 %s97, 1
        %s220 = scalar_lea.sflag [#allocation4], %s219
        %s221 = sand.u32 %s97, 1
        %s222 = smul.addr %s221, 64
        %s223 = scalar_lea.vmem [#allocation8], %s222
        %v224 = vld [vmem:[%s190] sm:$0xff]
        %v225 = vld [vmem:[%s190 + $0x8] sm:$0xff]
        %v226 = vld [vmem:[%s190 + $0x10] sm:$0xff]
        %v227 = vld [vmem:[%s190 + $0x18] sm:$0xff]
        %v228 = vld [vmem:[%s190 + $0x20] sm:$0xff]
        %v229 = vld [vmem:[%s190 + $0x28] sm:$0xff]
        %v230 = vld [vmem:[%s190 + $0x30] sm:$0xff]
        %v231 = vld [vmem:[%s190 + $0x38] sm:$0xff]
        %v232 = vlaneseq
        %v233 = vshrl.u32 %v232, 7
        %v234 = vadd.s32 %v233, 8
        %v235 = vrot.slane %v224, 7
        %v236 = vrot.slane %v225, 7
        %v237 = vrot.slane %v226, 7
        %v238 = vrot.slane %v227, 7
        %v239 = vrot.slane %v228, 7
        %v240 = vrot.slane %v229, 7
        %v241 = vrot.slane %v230, 7
        %v242 = vrot.slane %v231, 7
        %vm243 = vcmp.lt.s32.totalorder %v233, 1
        %v244 = vsel %vm243, %v235, %v239
        %v245 = vsel %vm243, %v236, %v240
        %v246 = vsel %vm243, %v237, %v241
        %v247 = vsel %vm243, %v238, %v242
        %v248 = vsel %vm243, %v239, %v235
        %v249 = vsel %vm243, %v240, %v236
        %v250 = vsel %vm243, %v241, %v237
        %v251 = vsel %vm243, %v242, %v238
        %vm252 = vcmp.ge.s32.totalorder %v233, 1
        %vm253 = vcmp.ge.s32.totalorder %v234, 1
        %v254 = vsel %vm252, %v248, 0.0
        %v255 = vsel %vm252, %v249, 0.0
        %v256 = vsel %vm252, %v250, 0.0
        %v257 = vsel %vm252, %v251, 0.0
        %v258 = vsel %vm253, %v244, 0.0
        %v259 = vsel %vm253, %v245, 0.0
        %v260 = vsel %vm253, %v246, 0.0
        %v261 = vsel %vm253, %v247, 0.0
        %v262 = vpack.c.bf16 %v255, %v254
        %v263 = vpack.c.bf16 %v257, %v256
        %v264 = vpack.c.bf16 %v259, %v258
        %v265 = vpack.c.bf16 %v261, %v260
        %v266 = vld [vmem:[#allocation5] sm:$0xff]
        %v267 = vld [vmem:[#allocation5 + $0x8] sm:$0xff]
        %v268 = vld [vmem:[#allocation5 + $0x10] sm:$0xff]
        %v269 = vld [vmem:[#allocation5 + $0x18] sm:$0xff]
        %v270 = vld [vmem:[#allocation5 + $0x20] sm:$0xff]
        %v271 = vld [vmem:[#allocation5 + $0x28] sm:$0xff]
        %v272 = vld [vmem:[#allocation5 + $0x30] sm:$0xff]
        %v273 = vld [vmem:[#allocation5 + $0x38] sm:$0xff]
        %v274 = vld [vmem:[#allocation5 + $0x40] sm:$0xff]
        %v275 = vld [vmem:[#allocation5 + $0x48] sm:$0xff]
        %v276 = vld [vmem:[#allocation5 + $0x50] sm:$0xff]
        %v277 = vld [vmem:[#allocation5 + $0x58] sm:$0xff]
        %v278 = vld [vmem:[#allocation5 + $0x60] sm:$0xff]
        %v279 = vld [vmem:[#allocation5 + $0x68] sm:$0xff]
        %v280 = vld [vmem:[#allocation5 + $0x70] sm:$0xff]
        %v281 = vld [vmem:[#allocation5 + $0x78] sm:$0xff]
        %v282 = vld [vmem:[#allocation5 + $0x80] sm:$0xff]
        %v283 = vld [vmem:[#allocation5 + $0x88] sm:$0xff]
        %v284 = vld [vmem:[#allocation5 + $0x90] sm:$0xff]
        %v285 = vld [vmem:[#allocation5 + $0x98] sm:$0xff]
        %v286 = vld [vmem:[#allocation5 + $0xa0] sm:$0xff]
        %v287 = vld [vmem:[#allocation5 + $0xa8] sm:$0xff]
        %v288 = vld [vmem:[#allocation5 + $0xb0] sm:$0xff]
        %v289 = vld [vmem:[#allocation5 + $0xb8] sm:$0xff]
        %v290 = vld [vmem:[#allocation5 + $0xc0] sm:$0xff]
        %v291 = vld [vmem:[#allocation5 + $0xc8] sm:$0xff]
        %v292 = vld [vmem:[#allocation5 + $0xd0] sm:$0xff]
        %v293 = vld [vmem:[#allocation5 + $0xd8] sm:$0xff]
        %v294 = vld [vmem:[#allocation5 + $0xe0] sm:$0xff]
        %v295 = vld [vmem:[#allocation5 + $0xe8] sm:$0xff]
        %v296 = vld [vmem:[#allocation5 + $0xf0] sm:$0xff]
        %v297 = vld [vmem:[#allocation5 + $0xf8] sm:$0xff]
        %v298 = vld [vmem:[#allocation5 + $0x100] sm:$0xff]
        %v299 = vld [vmem:[#allocation5 + $0x108] sm:$0xff]
        %v300 = vld [vmem:[#allocation5 + $0x110] sm:$0xff]
        %v301 = vld [vmem:[#allocation5 + $0x118] sm:$0xff]
        %v302 = vld [vmem:[#allocation5 + $0x120] sm:$0xff]
        %v303 = vld [vmem:[#allocation5 + $0x128] sm:$0xff]
        %v304 = vld [vmem:[#allocation5 + $0x130] sm:$0xff]
        %v305 = vld [vmem:[#allocation5 + $0x138] sm:$0xff]
        %v306 = vld [vmem:[#allocation5 + $0x140] sm:$0xff]
        %v307 = vld [vmem:[#allocation5 + $0x148] sm:$0xff]
        %v308 = vld [vmem:[#allocation5 + $0x150] sm:$0xff]
        %v309 = vld [vmem:[#allocation5 + $0x158] sm:$0xff]
        %v310 = vld [vmem:[#allocation5 + $0x160] sm:$0xff]
        %v311 = vld [vmem:[#allocation5 + $0x168] sm:$0xff]
        %v312 = vld [vmem:[#allocation5 + $0x170] sm:$0xff]
        %v313 = vld [vmem:[#allocation5 + $0x178] sm:$0xff]
        %v314 = vld [vmem:[#allocation5 + $0x180] sm:$0xff]
        %v315 = vld [vmem:[#allocation5 + $0x188] sm:$0xff]
        %v316 = vld [vmem:[#allocation5 + $0x190] sm:$0xff]
        %v317 = vld [vmem:[#allocation5 + $0x198] sm:$0xff]
        %v318 = vld [vmem:[#allocation5 + $0x1a0] sm:$0xff]
        %v319 = vld [vmem:[#allocation5 + $0x1a8] sm:$0xff]
        %v320 = vld [vmem:[#allocation5 + $0x1b0] sm:$0xff]
        %v321 = vld [vmem:[#allocation5 + $0x1b8] sm:$0xff]
        %v322 = vld [vmem:[#allocation5 + $0x1c0] sm:$0xff]
        %v323 = vld [vmem:[#allocation5 + $0x1c8] sm:$0xff]
        %v324 = vld [vmem:[#allocation5 + $0x1d0] sm:$0xff]
        %v325 = vld [vmem:[#allocation5 + $0x1d8] sm:$0xff]
        %v326 = vld [vmem:[#allocation5 + $0x1e0] sm:$0xff]
        %v327 = vld [vmem:[#allocation5 + $0x1e8] sm:$0xff]
        %v328 = vld [vmem:[#allocation5 + $0x1f0] sm:$0xff]
        %v329 = vld [vmem:[#allocation5 + $0x1f8] sm:$0xff]
        %v330 = vld [vmem:[#allocation5 + $0x200] sm:$0xff]
        %v331 = vld [vmem:[#allocation5 + $0x208] sm:$0xff]
        %v332 = vld [vmem:[#allocation5 + $0x210] sm:$0xff]
        %v333 = vld [vmem:[#allocation5 + $0x218] sm:$0xff]
        %v334 = vld [vmem:[#allocation5 + $0x220] sm:$0xff]
        %v335 = vld [vmem:[#allocation5 + $0x228] sm:$0xff]
        %v336 = vld [vmem:[#allocation5 + $0x230] sm:$0xff]
        %v337 = vld [vmem:[#allocation5 + $0x238] sm:$0xff]
        %v338 = vld [vmem:[#allocation5 + $0x240] sm:$0xff]
        %v339 = vld [vmem:[#allocation5 + $0x248] sm:$0xff]
        %v340 = vld [vmem:[#allocation5 + $0x250] sm:$0xff]
        %v341 = vld [vmem:[#allocation5 + $0x258] sm:$0xff]
        %v342 = vld [vmem:[#allocation5 + $0x260] sm:$0xff]
        %v343 = vld [vmem:[#allocation5 + $0x268] sm:$0xff]
        %v344 = vld [vmem:[#allocation5 + $0x270] sm:$0xff]
        %v345 = vld [vmem:[#allocation5 + $0x278] sm:$0xff]
        %v346 = vld [vmem:[#allocation5 + $0x280] sm:$0xff]
        %v347 = vld [vmem:[#allocation5 + $0x288] sm:$0xff]
        %v348 = vld [vmem:[#allocation5 + $0x290] sm:$0xff]
        %v349 = vld [vmem:[#allocation5 + $0x298] sm:$0xff]
        %v350 = vld [vmem:[#allocation5 + $0x2a0] sm:$0xff]
        %v351 = vld [vmem:[#allocation5 + $0x2a8] sm:$0xff]
        %v352 = vld [vmem:[#allocation5 + $0x2b0] sm:$0xff]
        %v353 = vld [vmem:[#allocation5 + $0x2b8] sm:$0xff]
        %v354 = vld [vmem:[#allocation5 + $0x2c0] sm:$0xff]
        %v355 = vld [vmem:[#allocation5 + $0x2c8] sm:$0xff]
        %v356 = vld [vmem:[#allocation5 + $0x2d0] sm:$0xff]
        %v357 = vld [vmem:[#allocation5 + $0x2d8] sm:$0xff]
        %v358 = vld [vmem:[#allocation5 + $0x2e0] sm:$0xff]
        %v359 = vld [vmem:[#allocation5 + $0x2e8] sm:$0xff]
        %v360 = vld [vmem:[#allocation5 + $0x2f0] sm:$0xff]
        %v361 = vld [vmem:[#allocation5 + $0x2f8] sm:$0xff]
        %v362 = vld [vmem:[#allocation5 + $0x300] sm:$0xff]
        %v363 = vld [vmem:[#allocation5 + $0x308] sm:$0xff]
        %v364 = vld [vmem:[#allocation5 + $0x310] sm:$0xff]
        %v365 = vld [vmem:[#allocation5 + $0x318] sm:$0xff]
        %v366 = vld [vmem:[#allocation5 + $0x320] sm:$0xff]
        %v367 = vld [vmem:[#allocation5 + $0x328] sm:$0xff]
        %v368 = vld [vmem:[#allocation5 + $0x330] sm:$0xff]
        %v369 = vld [vmem:[#allocation5 + $0x338] sm:$0xff]
        %v370 = vld [vmem:[#allocation5 + $0x340] sm:$0xff]
        %v371 = vld [vmem:[#allocation5 + $0x348] sm:$0xff]
        %v372 = vld [vmem:[#allocation5 + $0x350] sm:$0xff]
        %v373 = vld [vmem:[#allocation5 + $0x358] sm:$0xff]
        %v374 = vld [vmem:[#allocation5 + $0x360] sm:$0xff]
        %v375 = vld [vmem:[#allocation5 + $0x368] sm:$0xff]
        %v376 = vld [vmem:[#allocation5 + $0x370] sm:$0xff]
        %v377 = vld [vmem:[#allocation5 + $0x378] sm:$0xff]
        %v378 = vld [vmem:[#allocation5 + $0x380] sm:$0xff]
        %v379 = vld [vmem:[#allocation5 + $0x388] sm:$0xff]
        %v380 = vld [vmem:[#allocation5 + $0x390] sm:$0xff]
        %v381 = vld [vmem:[#allocation5 + $0x398] sm:$0xff]
        %v382 = vld [vmem:[#allocation5 + $0x3a0] sm:$0xff]
        %v383 = vld [vmem:[#allocation5 + $0x3a8] sm:$0xff]
        %v384 = vld [vmem:[#allocation5 + $0x3b0] sm:$0xff]
        %v385 = vld [vmem:[#allocation5 + $0x3b8] sm:$0xff]
        %v386 = vld [vmem:[#allocation5 + $0x3c0] sm:$0xff]
        %v387 = vld [vmem:[#allocation5 + $0x3c8] sm:$0xff]
        %v388 = vld [vmem:[#allocation5 + $0x3d0] sm:$0xff]
        %v389 = vld [vmem:[#allocation5 + $0x3d8] sm:$0xff]
        %v390 = vld [vmem:[#allocation5 + $0x3e0] sm:$0xff]
        %v391 = vld [vmem:[#allocation5 + $0x3e8] sm:$0xff]
        %v392 = vld [vmem:[#allocation5 + $0x3f0] sm:$0xff]
        %v393 = vld [vmem:[#allocation5 + $0x3f8] sm:$0xff]
        %v394 = vpack.c.bf16 %v225, %v224
        %v395 = vpack.c.bf16 %v227, %v226
        %v396 = vpack.c.bf16 %v229, %v228
        %v397 = vpack.c.bf16 %v231, %v230
        %s398 = scalar_lea.vmem [#allocation5], 1024
        %v399 = vld [vmem:[%s398] sm:$0xff]
        %v400 = vld [vmem:[%s398 + $0x8] sm:$0xff]
        %v401 = vld [vmem:[%s398 + $0x10] sm:$0xff]
        %v402 = vld [vmem:[%s398 + $0x18] sm:$0xff]
        %v403 = vld [vmem:[%s398 + $0x20] sm:$0xff]
        %v404 = vld [vmem:[%s398 + $0x28] sm:$0xff]
        %v405 = vld [vmem:[%s398 + $0x30] sm:$0xff]
        %v406 = vld [vmem:[%s398 + $0x38] sm:$0xff]
        %v407 = vld [vmem:[%s398 + $0x40] sm:$0xff]
        %v408 = vld [vmem:[%s398 + $0x48] sm:$0xff]
        %v409 = vld [vmem:[%s398 + $0x50] sm:$0xff]
        %v410 = vld [vmem:[%s398 + $0x58] sm:$0xff]
        %v411 = vld [vmem:[%s398 + $0x60] sm:$0xff]
        %v412 = vld [vmem:[%s398 + $0x68] sm:$0xff]
        %v413 = vld [vmem:[%s398 + $0x70] sm:$0xff]
        %v414 = vld [vmem:[%s398 + $0x78] sm:$0xff]
        %v415 = vld [vmem:[%s398 + $0x80] sm:$0xff]
        %v416 = vld [vmem:[%s398 + $0x88] sm:$0xff]
        %v417 = vld [vmem:[%s398 + $0x90] sm:$0xff]
        %v418 = vld [vmem:[%s398 + $0x98] sm:$0xff]
        %v419 = vld [vmem:[%s398 + $0xa0] sm:$0xff]
        %v420 = vld [vmem:[%s398 + $0xa8] sm:$0xff]
        %v421 = vld [vmem:[%s398 + $0xb0] sm:$0xff]
        %v422 = vld [vmem:[%s398 + $0xb8] sm:$0xff]
        %v423 = vld [vmem:[%s398 + $0xc0] sm:$0xff]
        %v424 = vld [vmem:[%s398 + $0xc8] sm:$0xff]
        %v425 = vld [vmem:[%s398 + $0xd0] sm:$0xff]
        %v426 = vld [vmem:[%s398 + $0xd8] sm:$0xff]
        %v427 = vld [vmem:[%s398 + $0xe0] sm:$0xff]
        %v428 = vld [vmem:[%s398 + $0xe8] sm:$0xff]
        %v429 = vld [vmem:[%s398 + $0xf0] sm:$0xff]
        %v430 = vld [vmem:[%s398 + $0xf8] sm:$0xff]
        %v431 = vld [vmem:[%s398 + $0x100] sm:$0xff]
        %v432 = vld [vmem:[%s398 + $0x108] sm:$0xff]
        %v433 = vld [vmem:[%s398 + $0x110] sm:$0xff]
        %v434 = vld [vmem:[%s398 + $0x118] sm:$0xff]
        %v435 = vld [vmem:[%s398 + $0x120] sm:$0xff]
        %v436 = vld [vmem:[%s398 + $0x128] sm:$0xff]
        %v437 = vld [vmem:[%s398 + $0x130] sm:$0xff]
        %v438 = vld [vmem:[%s398 + $0x138] sm:$0xff]
        %v439 = vld [vmem:[%s398 + $0x140] sm:$0xff]
        %v440 = vld [vmem:[%s398 + $0x148] sm:$0xff]
        %v441 = vld [vmem:[%s398 + $0x150] sm:$0xff]
        %v442 = vld [vmem:[%s398 + $0x158] sm:$0xff]
        %v443 = vld [vmem:[%s398 + $0x160] sm:$0xff]
        %v444 = vld [vmem:[%s398 + $0x168] sm:$0xff]
        %v445 = vld [vmem:[%s398 + $0x170] sm:$0xff]
        %v446 = vld [vmem:[%s398 + $0x178] sm:$0xff]
        %v447 = vld [vmem:[%s398 + $0x180] sm:$0xff]
        %v448 = vld [vmem:[%s398 + $0x188] sm:$0xff]
        %v449 = vld [vmem:[%s398 + $0x190] sm:$0xff]
        %v450 = vld [vmem:[%s398 + $0x198] sm:$0xff]
        %v451 = vld [vmem:[%s398 + $0x1a0] sm:$0xff]
        %v452 = vld [vmem:[%s398 + $0x1a8] sm:$0xff]
        %v453 = vld [vmem:[%s398 + $0x1b0] sm:$0xff]
        %v454 = vld [vmem:[%s398 + $0x1b8] sm:$0xff]
        %v455 = vld [vmem:[%s398 + $0x1c0] sm:$0xff]
        %v456 = vld [vmem:[%s398 + $0x1c8] sm:$0xff]
        %v457 = vld [vmem:[%s398 + $0x1d0] sm:$0xff]
        %v458 = vld [vmem:[%s398 + $0x1d8] sm:$0xff]
        %v459 = vld [vmem:[%s398 + $0x1e0] sm:$0xff]
        %v460 = vld [vmem:[%s398 + $0x1e8] sm:$0xff]
        %v461 = vld [vmem:[%s398 + $0x1f0] sm:$0xff]
        %v462 = vld [vmem:[%s398 + $0x1f8] sm:$0xff]
        %v463 = vld [vmem:[%s398 + $0x200] sm:$0xff]
        %v464 = vld [vmem:[%s398 + $0x208] sm:$0xff]
        %v465 = vld [vmem:[%s398 + $0x210] sm:$0xff]
        %v466 = vld [vmem:[%s398 + $0x218] sm:$0xff]
        %v467 = vld [vmem:[%s398 + $0x220] sm:$0xff]
        %v468 = vld [vmem:[%s398 + $0x228] sm:$0xff]
        %v469 = vld [vmem:[%s398 + $0x230] sm:$0xff]
        %v470 = vld [vmem:[%s398 + $0x238] sm:$0xff]
        %v471 = vld [vmem:[%s398 + $0x240] sm:$0xff]
        %v472 = vld [vmem:[%s398 + $0x248] sm:$0xff]
        %v473 = vld [vmem:[%s398 + $0x250] sm:$0xff]
        %v474 = vld [vmem:[%s398 + $0x258] sm:$0xff]
        %v475 = vld [vmem:[%s398 + $0x260] sm:$0xff]
        %v476 = vld [vmem:[%s398 + $0x268] sm:$0xff]
        %v477 = vld [vmem:[%s398 + $0x270] sm:$0xff]
        %v478 = vld [vmem:[%s398 + $0x278] sm:$0xff]
        %v479 = vld [vmem:[%s398 + $0x280] sm:$0xff]
        %v480 = vld [vmem:[%s398 + $0x288] sm:$0xff]
        %v481 = vld [vmem:[%s398 + $0x290] sm:$0xff]
        %v482 = vld [vmem:[%s398 + $0x298] sm:$0xff]
        %v483 = vld [vmem:[%s398 + $0x2a0] sm:$0xff]
        %v484 = vld [vmem:[%s398 + $0x2a8] sm:$0xff]
        %v485 = vld [vmem:[%s398 + $0x2b0] sm:$0xff]
        %v486 = vld [vmem:[%s398 + $0x2b8] sm:$0xff]
        %v487 = vld [vmem:[%s398 + $0x2c0] sm:$0xff]
        %v488 = vld [vmem:[%s398 + $0x2c8] sm:$0xff]
        %v489 = vld [vmem:[%s398 + $0x2d0] sm:$0xff]
        %v490 = vld [vmem:[%s398 + $0x2d8] sm:$0xff]
        %v491 = vld [vmem:[%s398 + $0x2e0] sm:$0xff]
        %v492 = vld [vmem:[%s398 + $0x2e8] sm:$0xff]
        %v493 = vld [vmem:[%s398 + $0x2f0] sm:$0xff]
        %v494 = vld [vmem:[%s398 + $0x2f8] sm:$0xff]
        %v495 = vld [vmem:[%s398 + $0x300] sm:$0xff]
        %v496 = vld [vmem:[%s398 + $0x308] sm:$0xff]
        %v497 = vld [vmem:[%s398 + $0x310] sm:$0xff]
        %v498 = vld [vmem:[%s398 + $0x318] sm:$0xff]
        %v499 = vld [vmem:[%s398 + $0x320] sm:$0xff]
        %v500 = vld [vmem:[%s398 + $0x328] sm:$0xff]
        %v501 = vld [vmem:[%s398 + $0x330] sm:$0xff]
        %v502 = vld [vmem:[%s398 + $0x338] sm:$0xff]
        %v503 = vld [vmem:[%s398 + $0x340] sm:$0xff]
        %v504 = vld [vmem:[%s398 + $0x348] sm:$0xff]
        %v505 = vld [vmem:[%s398 + $0x350] sm:$0xff]
        %v506 = vld [vmem:[%s398 + $0x358] sm:$0xff]
        %v507 = vld [vmem:[%s398 + $0x360] sm:$0xff]
        %v508 = vld [vmem:[%s398 + $0x368] sm:$0xff]
        %v509 = vld [vmem:[%s398 + $0x370] sm:$0xff]
        %v510 = vld [vmem:[%s398 + $0x378] sm:$0xff]
        %v511 = vld [vmem:[%s398 + $0x380] sm:$0xff]
        %v512 = vld [vmem:[%s398 + $0x388] sm:$0xff]
        %v513 = vld [vmem:[%s398 + $0x390] sm:$0xff]
        %v514 = vld [vmem:[%s398 + $0x398] sm:$0xff]
        %v515 = vld [vmem:[%s398 + $0x3a0] sm:$0xff]
        %v516 = vld [vmem:[%s398 + $0x3a8] sm:$0xff]
        %v517 = vld [vmem:[%s398 + $0x3b0] sm:$0xff]
        %v518 = vld [vmem:[%s398 + $0x3b8] sm:$0xff]
        %v519 = vld [vmem:[%s398 + $0x3c0] sm:$0xff]
        %v520 = vld [vmem:[%s398 + $0x3c8] sm:$0xff]
        %v521 = vld [vmem:[%s398 + $0x3d0] sm:$0xff]
        %v522 = vld [vmem:[%s398 + $0x3d8] sm:$0xff]
        %v523 = vld [vmem:[%s398 + $0x3e0] sm:$0xff]
        %v524 = vld [vmem:[%s398 + $0x3e8] sm:$0xff]
        %v525 = vld [vmem:[%s398 + $0x3f0] sm:$0xff]
        %v526 = vld [vmem:[%s398 + $0x3f8] sm:$0xff]
        %v531 = vunpack.c.l.b16 %v394
        %v532 = vunpack.c.h.b16 %v394
        %v533 = vunpack.c.l.b16 %v395
        %v534 = vunpack.c.h.b16 %v395
        %v535 = vunpack.c.l.b16 %v396
        %v536 = vunpack.c.h.b16 %v396
        %v537 = vunpack.c.l.b16 %v397
        %v538 = vunpack.c.h.b16 %v397
        %v539 = vpack.c.b16 %v535, %v531
        %v540 = vpack.c.b16 %v536, %v532
        %v541 = vpack.c.b16 %v537, %v533
        %v542 = vpack.c.b16 %v538, %v534
        %v675 = vunpack.c.l.b16 %v399
        %v676 = vunpack.c.h.b16 %v399
        %v677 = vunpack.c.l.b16 %v400
        %v678 = vunpack.c.h.b16 %v400
        %v679 = vunpack.c.l.b16 %v401
        %v680 = vunpack.c.h.b16 %v401
        %v681 = vunpack.c.l.b16 %v402
        %v682 = vunpack.c.h.b16 %v402
        %v683 = vunpack.c.l.b16 %v403
        %v684 = vunpack.c.h.b16 %v403
        %v685 = vunpack.c.l.b16 %v404
        %v686 = vunpack.c.h.b16 %v404
        %v687 = vunpack.c.l.b16 %v405
        %v688 = vunpack.c.h.b16 %v405
        %v689 = vunpack.c.l.b16 %v406
        %v690 = vunpack.c.h.b16 %v406
        %v691 = vunpack.c.l.b16 %v407
        %v692 = vunpack.c.h.b16 %v407
        %v693 = vunpack.c.l.b16 %v408
        %v694 = vunpack.c.h.b16 %v408
        %v695 = vunpack.c.l.b16 %v409
        %v696 = vunpack.c.h.b16 %v409
        %v697 = vunpack.c.l.b16 %v410
        %v698 = vunpack.c.h.b16 %v410
        %v699 = vunpack.c.l.b16 %v411
        %v700 = vunpack.c.h.b16 %v411
        %v701 = vunpack.c.l.b16 %v412
        %v702 = vunpack.c.h.b16 %v412
        %v703 = vunpack.c.l.b16 %v413
        %v704 = vunpack.c.h.b16 %v413
        %v705 = vunpack.c.l.b16 %v414
        %v706 = vunpack.c.h.b16 %v414
        %v707 = vunpack.c.l.b16 %v415
        %v708 = vunpack.c.h.b16 %v415
        %v709 = vunpack.c.l.b16 %v416
        %v710 = vunpack.c.h.b16 %v416
        %v711 = vunpack.c.l.b16 %v417
        %v712 = vunpack.c.h.b16 %v417
        %v713 = vunpack.c.l.b16 %v418
        %v714 = vunpack.c.h.b16 %v418
        %v715 = vunpack.c.l.b16 %v419
        %v716 = vunpack.c.h.b16 %v419
        %v717 = vunpack.c.l.b16 %v420
        %v718 = vunpack.c.h.b16 %v420
        %v719 = vunpack.c.l.b16 %v421
        %v720 = vunpack.c.h.b16 %v421
        %v721 = vunpack.c.l.b16 %v422
        %v722 = vunpack.c.h.b16 %v422
        %v723 = vunpack.c.l.b16 %v423
        %v724 = vunpack.c.h.b16 %v423
        %v725 = vunpack.c.l.b16 %v424
        %v726 = vunpack.c.h.b16 %v424
        %v727 = vunpack.c.l.b16 %v425
        %v728 = vunpack.c.h.b16 %v425
        %v729 = vunpack.c.l.b16 %v426
        %v730 = vunpack.c.h.b16 %v426
        %v731 = vunpack.c.l.b16 %v427
        %v732 = vunpack.c.h.b16 %v427
        %v733 = vunpack.c.l.b16 %v428
        %v734 = vunpack.c.h.b16 %v428
        %v735 = vunpack.c.l.b16 %v429
        %v736 = vunpack.c.h.b16 %v429
        %v737 = vunpack.c.l.b16 %v430
        %v738 = vunpack.c.h.b16 %v430
        %v739 = vunpack.c.l.b16 %v431
        %v740 = vunpack.c.h.b16 %v431
        %v741 = vunpack.c.l.b16 %v432
        %v742 = vunpack.c.h.b16 %v432
        %v743 = vunpack.c.l.b16 %v433
        %v744 = vunpack.c.h.b16 %v433
        %v745 = vunpack.c.l.b16 %v434
        %v746 = vunpack.c.h.b16 %v434
        %v747 = vunpack.c.l.b16 %v435
        %v748 = vunpack.c.h.b16 %v435
        %v749 = vunpack.c.l.b16 %v436
        %v750 = vunpack.c.h.b16 %v436
        %v751 = vunpack.c.l.b16 %v437
        %v752 = vunpack.c.h.b16 %v437
        %v753 = vunpack.c.l.b16 %v438
        %v754 = vunpack.c.h.b16 %v438
        %v755 = vunpack.c.l.b16 %v439
        %v756 = vunpack.c.h.b16 %v439
        %v757 = vunpack.c.l.b16 %v440
        %v758 = vunpack.c.h.b16 %v440
        %v759 = vunpack.c.l.b16 %v441
        %v760 = vunpack.c.h.b16 %v441
        %v761 = vunpack.c.l.b16 %v442
        %v762 = vunpack.c.h.b16 %v442
        %v763 = vunpack.c.l.b16 %v443
        %v764 = vunpack.c.h.b16 %v443
        %v765 = vunpack.c.l.b16 %v444
        %v766 = vunpack.c.h.b16 %v444
        %v767 = vunpack.c.l.b16 %v445
        %v768 = vunpack.c.h.b16 %v445
        %v769 = vunpack.c.l.b16 %v446
        %v770 = vunpack.c.h.b16 %v446
        %v771 = vunpack.c.l.b16 %v447
        %v772 = vunpack.c.h.b16 %v447
        %v773 = vunpack.c.l.b16 %v448
        %v774 = vunpack.c.h.b16 %v448
        %v775 = vunpack.c.l.b16 %v449
        %v776 = vunpack.c.h.b16 %v449
        %v777 = vunpack.c.l.b16 %v450
        %v778 = vunpack.c.h.b16 %v450
        %v779 = vunpack.c.l.b16 %v451
        %v780 = vunpack.c.h.b16 %v451
        %v781 = vunpack.c.l.b16 %v452
        %v782 = vunpack.c.h.b16 %v452
        %v783 = vunpack.c.l.b16 %v453
        %v784 = vunpack.c.h.b16 %v453
        %v785 = vunpack.c.l.b16 %v454
        %v786 = vunpack.c.h.b16 %v454
        %v787 = vunpack.c.l.b16 %v455
        %v788 = vunpack.c.h.b16 %v455
        %v789 = vunpack.c.l.b16 %v456
        %v790 = vunpack.c.h.b16 %v456
        %v791 = vunpack.c.l.b16 %v457
        %v792 = vunpack.c.h.b16 %v457
        %v793 = vunpack.c.l.b16 %v458
        %v794 = vunpack.c.h.b16 %v458
        %v795 = vunpack.c.l.b16 %v459
        %v796 = vunpack.c.h.b16 %v459
        %v797 = vunpack.c.l.b16 %v460
        %v798 = vunpack.c.h.b16 %v460
        %v799 = vunpack.c.l.b16 %v461
        %v800 = vunpack.c.h.b16 %v461
        %v801 = vunpack.c.l.b16 %v462
        %v802 = vunpack.c.h.b16 %v462
        %v803 = vunpack.c.l.b16 %v463
        %v804 = vunpack.c.h.b16 %v463
        %v805 = vunpack.c.l.b16 %v464
        %v806 = vunpack.c.h.b16 %v464
        %v807 = vunpack.c.l.b16 %v465
        %v808 = vunpack.c.h.b16 %v465
        %v809 = vunpack.c.l.b16 %v466
        %v810 = vunpack.c.h.b16 %v466
        %v811 = vunpack.c.l.b16 %v467
        %v812 = vunpack.c.h.b16 %v467
        %v813 = vunpack.c.l.b16 %v468
        %v814 = vunpack.c.h.b16 %v468
        %v815 = vunpack.c.l.b16 %v469
        %v816 = vunpack.c.h.b16 %v469
        %v817 = vunpack.c.l.b16 %v470
        %v818 = vunpack.c.h.b16 %v470
        %v819 = vunpack.c.l.b16 %v471
        %v820 = vunpack.c.h.b16 %v471
        %v821 = vunpack.c.l.b16 %v472
        %v822 = vunpack.c.h.b16 %v472
        %v823 = vunpack.c.l.b16 %v473
        %v824 = vunpack.c.h.b16 %v473
        %v825 = vunpack.c.l.b16 %v474
        %v826 = vunpack.c.h.b16 %v474
        %v827 = vunpack.c.l.b16 %v475
        %v828 = vunpack.c.h.b16 %v475
        %v829 = vunpack.c.l.b16 %v476
        %v830 = vunpack.c.h.b16 %v476
        %v831 = vunpack.c.l.b16 %v477
        %v832 = vunpack.c.h.b16 %v477
        %v833 = vunpack.c.l.b16 %v478
        %v834 = vunpack.c.h.b16 %v478
        %v835 = vunpack.c.l.b16 %v479
        %v836 = vunpack.c.h.b16 %v479
        %v837 = vunpack.c.l.b16 %v480
        %v838 = vunpack.c.h.b16 %v480
        %v839 = vunpack.c.l.b16 %v481
        %v840 = vunpack.c.h.b16 %v481
        %v841 = vunpack.c.l.b16 %v482
        %v842 = vunpack.c.h.b16 %v482
        %v843 = vunpack.c.l.b16 %v483
        %v844 = vunpack.c.h.b16 %v483
        %v845 = vunpack.c.l.b16 %v484
        %v846 = vunpack.c.h.b16 %v484
        %v847 = vunpack.c.l.b16 %v485
        %v848 = vunpack.c.h.b16 %v485
        %v849 = vunpack.c.l.b16 %v486
        %v850 = vunpack.c.h.b16 %v486
        %v851 = vunpack.c.l.b16 %v487
        %v852 = vunpack.c.h.b16 %v487
        %v853 = vunpack.c.l.b16 %v488
        %v854 = vunpack.c.h.b16 %v488
        %v855 = vunpack.c.l.b16 %v489
        %v856 = vunpack.c.h.b16 %v489
        %v857 = vunpack.c.l.b16 %v490
        %v858 = vunpack.c.h.b16 %v490
        %v859 = vunpack.c.l.b16 %v491
        %v860 = vunpack.c.h.b16 %v491
        %v861 = vunpack.c.l.b16 %v492
        %v862 = vunpack.c.h.b16 %v492
        %v863 = vunpack.c.l.b16 %v493
        %v864 = vunpack.c.h.b16 %v493
        %v865 = vunpack.c.l.b16 %v494
        %v866 = vunpack.c.h.b16 %v494
        %v867 = vunpack.c.l.b16 %v495
        %v868 = vunpack.c.h.b16 %v495
        %v869 = vunpack.c.l.b16 %v496
        %v870 = vunpack.c.h.b16 %v496
        %v871 = vunpack.c.l.b16 %v497
        %v872 = vunpack.c.h.b16 %v497
        %v873 = vunpack.c.l.b16 %v498
        %v874 = vunpack.c.h.b16 %v498
        %v875 = vunpack.c.l.b16 %v499
        %v876 = vunpack.c.h.b16 %v499
        %v877 = vunpack.c.l.b16 %v500
        %v878 = vunpack.c.h.b16 %v500
        %v879 = vunpack.c.l.b16 %v501
        %v880 = vunpack.c.h.b16 %v501
        %v881 = vunpack.c.l.b16 %v502
        %v882 = vunpack.c.h.b16 %v502
        %v883 = vunpack.c.l.b16 %v503
        %v884 = vunpack.c.h.b16 %v503
        %v885 = vunpack.c.l.b16 %v504
        %v886 = vunpack.c.h.b16 %v504
        %v887 = vunpack.c.l.b16 %v505
        %v888 = vunpack.c.h.b16 %v505
        %v889 = vunpack.c.l.b16 %v506
        %v890 = vunpack.c.h.b16 %v506
        %v891 = vunpack.c.l.b16 %v507
        %v892 = vunpack.c.h.b16 %v507
        %v893 = vunpack.c.l.b16 %v508
        %v894 = vunpack.c.h.b16 %v508
        %v895 = vunpack.c.l.b16 %v509
        %v896 = vunpack.c.h.b16 %v509
        %v897 = vunpack.c.l.b16 %v510
        %v898 = vunpack.c.h.b16 %v510
        %v899 = vunpack.c.l.b16 %v511
        %v900 = vunpack.c.h.b16 %v511
        %v901 = vunpack.c.l.b16 %v512
        %v902 = vunpack.c.h.b16 %v512
        %v903 = vunpack.c.l.b16 %v513
        %v904 = vunpack.c.h.b16 %v513
        %v905 = vunpack.c.l.b16 %v514
        %v906 = vunpack.c.h.b16 %v514
        %v907 = vunpack.c.l.b16 %v515
        %v908 = vunpack.c.h.b16 %v515
        %v909 = vunpack.c.l.b16 %v516
        %v910 = vunpack.c.h.b16 %v516
        %v911 = vunpack.c.l.b16 %v517
        %v912 = vunpack.c.h.b16 %v517
        %v913 = vunpack.c.l.b16 %v518
        %v914 = vunpack.c.h.b16 %v518
        %v915 = vunpack.c.l.b16 %v519
        %v916 = vunpack.c.h.b16 %v519
        %v917 = vunpack.c.l.b16 %v520
        %v918 = vunpack.c.h.b16 %v520
        %v919 = vunpack.c.l.b16 %v521
        %v920 = vunpack.c.h.b16 %v521
        %v921 = vunpack.c.l.b16 %v522
        %v922 = vunpack.c.h.b16 %v522
        %v923 = vunpack.c.l.b16 %v523
        %v924 = vunpack.c.h.b16 %v523
        %v925 = vunpack.c.l.b16 %v524
        %v926 = vunpack.c.h.b16 %v524
        %v927 = vunpack.c.l.b16 %v525
        %v928 = vunpack.c.h.b16 %v525
        %v929 = vunpack.c.l.b16 %v526
        %v930 = vunpack.c.h.b16 %v526
        %v931 = vpack.c.b16 %v679, %v675
        %v932 = vpack.c.b16 %v680, %v676
        %v933 = vpack.c.b16 %v681, %v677
        %v934 = vpack.c.b16 %v682, %v678
        %v935 = vpack.c.b16 %v687, %v683
        %v936 = vpack.c.b16 %v688, %v684
        %v937 = vpack.c.b16 %v689, %v685
        %v938 = vpack.c.b16 %v690, %v686
        %v939 = vpack.c.b16 %v695, %v691
        %v940 = vpack.c.b16 %v696, %v692
        %v941 = vpack.c.b16 %v697, %v693
        %v942 = vpack.c.b16 %v698, %v694
        %v943 = vpack.c.b16 %v703, %v699
        %v944 = vpack.c.b16 %v704, %v700
        %v945 = vpack.c.b16 %v705, %v701
        %v946 = vpack.c.b16 %v706, %v702
        %v947 = vpack.c.b16 %v711, %v707
        %v948 = vpack.c.b16 %v712, %v708
        %v949 = vpack.c.b16 %v713, %v709
        %v950 = vpack.c.b16 %v714, %v710
        %v951 = vpack.c.b16 %v719, %v715
        %v952 = vpack.c.b16 %v720, %v716
        %v953 = vpack.c.b16 %v721, %v717
        %v954 = vpack.c.b16 %v722, %v718
        %v955 = vpack.c.b16 %v727, %v723
        %v956 = vpack.c.b16 %v728, %v724
        %v957 = vpack.c.b16 %v729, %v725
        %v958 = vpack.c.b16 %v730, %v726
        %v959 = vpack.c.b16 %v735, %v731
        %v960 = vpack.c.b16 %v736, %v732
        %v961 = vpack.c.b16 %v737, %v733
        %v962 = vpack.c.b16 %v738, %v734
        %v963 = vpack.c.b16 %v743, %v739
        %v964 = vpack.c.b16 %v744, %v740
        %v965 = vpack.c.b16 %v745, %v741
        %v966 = vpack.c.b16 %v746, %v742
        %v967 = vpack.c.b16 %v751, %v747
        %v968 = vpack.c.b16 %v752, %v748
        %v969 = vpack.c.b16 %v753, %v749
        %v970 = vpack.c.b16 %v754, %v750
        %v971 = vpack.c.b16 %v759, %v755
        %v972 = vpack.c.b16 %v760, %v756
        %v973 = vpack.c.b16 %v761, %v757
        %v974 = vpack.c.b16 %v762, %v758
        %v975 = vpack.c.b16 %v767, %v763
        %v976 = vpack.c.b16 %v768, %v764
        %v977 = vpack.c.b16 %v769, %v765
        %v978 = vpack.c.b16 %v770, %v766
        %v979 = vpack.c.b16 %v775, %v771
        %v980 = vpack.c.b16 %v776, %v772
        %v981 = vpack.c.b16 %v777, %v773
        %v982 = vpack.c.b16 %v778, %v774
        %v983 = vpack.c.b16 %v783, %v779
        %v984 = vpack.c.b16 %v784, %v780
        %v985 = vpack.c.b16 %v785, %v781
        %v986 = vpack.c.b16 %v786, %v782
        %v987 = vpack.c.b16 %v791, %v787
        %v988 = vpack.c.b16 %v792, %v788
        %v989 = vpack.c.b16 %v793, %v789
        %v990 = vpack.c.b16 %v794, %v790
        %v991 = vpack.c.b16 %v799, %v795
        %v992 = vpack.c.b16 %v800, %v796
        %v993 = vpack.c.b16 %v801, %v797
        %v994 = vpack.c.b16 %v802, %v798
        %v995 = vpack.c.b16 %v807, %v803
        %v996 = vpack.c.b16 %v808, %v804
        %v997 = vpack.c.b16 %v809, %v805
        %v998 = vpack.c.b16 %v810, %v806
        %v999 = vpack.c.b16 %v815, %v811
        %v1000 = vpack.c.b16 %v816, %v812
        %v1001 = vpack.c.b16 %v817, %v813
        %v1002 = vpack.c.b16 %v818, %v814
        %v1003 = vpack.c.b16 %v823, %v819
        %v1004 = vpack.c.b16 %v824, %v820
        %v1005 = vpack.c.b16 %v825, %v821
        %v1006 = vpack.c.b16 %v826, %v822
        %v1007 = vpack.c.b16 %v831, %v827
        %v1008 = vpack.c.b16 %v832, %v828
        %v1009 = vpack.c.b16 %v833, %v829
        %v1010 = vpack.c.b16 %v834, %v830
        %v1011 = vpack.c.b16 %v839, %v835
        %v1012 = vpack.c.b16 %v840, %v836
        %v1013 = vpack.c.b16 %v841, %v837
        %v1014 = vpack.c.b16 %v842, %v838
        %v1015 = vpack.c.b16 %v847, %v843
        %v1016 = vpack.c.b16 %v848, %v844
        %v1017 = vpack.c.b16 %v849, %v845
        %v1018 = vpack.c.b16 %v850, %v846
        %v1019 = vpack.c.b16 %v855, %v851
        %v1020 = vpack.c.b16 %v856, %v852
        %v1021 = vpack.c.b16 %v857, %v853
        %v1022 = vpack.c.b16 %v858, %v854
        %v1023 = vpack.c.b16 %v863, %v859
        %v1024 = vpack.c.b16 %v864, %v860
        %v1025 = vpack.c.b16 %v865, %v861
        %v1026 = vpack.c.b16 %v866, %v862
        %v1027 = vpack.c.b16 %v871, %v867
        %v1028 = vpack.c.b16 %v872, %v868
        %v1029 = vpack.c.b16 %v873, %v869
        %v1030 = vpack.c.b16 %v874, %v870
        %v1031 = vpack.c.b16 %v879, %v875
        %v1032 = vpack.c.b16 %v880, %v876
        %v1033 = vpack.c.b16 %v881, %v877
        %v1034 = vpack.c.b16 %v882, %v878
        %v1035 = vpack.c.b16 %v887, %v883
        %v1036 = vpack.c.b16 %v888, %v884
        %v1037 = vpack.c.b16 %v889, %v885
        %v1038 = vpack.c.b16 %v890, %v886
        %v1039 = vpack.c.b16 %v895, %v891
        %v1040 = vpack.c.b16 %v896, %v892
        %v1041 = vpack.c.b16 %v897, %v893
        %v1042 = vpack.c.b16 %v898, %v894
        %v1043 = vpack.c.b16 %v903, %v899
        %v1044 = vpack.c.b16 %v904, %v900
        %v1045 = vpack.c.b16 %v905, %v901
        %v1046 = vpack.c.b16 %v906, %v902
        %v1047 = vpack.c.b16 %v911, %v907
        %v1048 = vpack.c.b16 %v912, %v908
        %v1049 = vpack.c.b16 %v913, %v909
        %v1050 = vpack.c.b16 %v914, %v910
        %v1051 = vpack.c.b16 %v919, %v915
        %v1052 = vpack.c.b16 %v920, %v916
        %v1053 = vpack.c.b16 %v921, %v917
        %v1054 = vpack.c.b16 %v922, %v918
        %v1055 = vpack.c.b16 %v927, %v923
        %v1056 = vpack.c.b16 %v928, %v924
        %v1057 = vpack.c.b16 %v929, %v925
        %v1058 = vpack.c.b16 %v930, %v926
        %1187 = vmatpush.bf16.msra.mxu0 %v959
        %1188 = vmatpush.bf16.msra.mxu0 %v955
        %1189 = vmatpush.bf16.msra.mxu0 %v951
        %1190 = vmatpush.bf16.msra.mxu0 %v947
        %1191 = vmatpush.bf16.msra.mxu0 %v943
        %1192 = vmatpush.bf16.msra.mxu0 %v939
        %1193 = vmatpush.bf16.msra.mxu0 %v935
        %1194 = vmatpush.bf16.msra.mxu0 %v931
        %1195 = vmatmul.bf16.gmra.mxu0 %v539
        %v1196 = vpop.f32.mrf.mxu0
        %v1197 = vadd.f32 0.0, %v1196
        %v1198 = vpop.f32.mrf.mxu0
        %v1199 = vadd.f32 0.0, %v1198
        %1200 = vdwg.mxu0
        %1201 = vmatpush.bf16.msra.mxu0 %v991
        %1202 = vmatpush.bf16.msra.mxu0 %v987
        %1203 = vmatpush.bf16.msra.mxu0 %v983
        %1204 = vmatpush.bf16.msra.mxu0 %v979
        %1205 = vmatpush.bf16.msra.mxu0 %v975
        %1206 = vmatpush.bf16.msra.mxu0 %v971
        %1207 = vmatpush.bf16.msra.mxu0 %v967
        %1208 = vmatpush.bf16.msra.mxu0 %v963
        %1209 = vmatmul.bf16.gmra.mxu0 %v540
        %v1210 = vpop.f32.mrf.mxu0
        %v1211 = vadd.f32 %v1197, %v1210
        %v1212 = vpop.f32.mrf.mxu0
        %v1213 = vadd.f32 %v1199, %v1212
        %1214 = vdwg.mxu0
        %1215 = vmatpush.bf16.msra.mxu0 %v1023
        %1216 = vmatpush.bf16.msra.mxu0 %v1019
        %1217 = vmatpush.bf16.msra.mxu0 %v1015
        %1218 = vmatpush.bf16.msra.mxu0 %v1011
        %1219 = vmatpush.bf16.msra.mxu0 %v1007
        %1220 = vmatpush.bf16.msra.mxu0 %v1003
        %1221 = vmatpush.bf16.msra.mxu0 %v999
        %1222 = vmatpush.bf16.msra.mxu0 %v995
        %1223 = vmatmul.bf16.gmra.mxu0 %v541
        %v1224 = vpop.f32.mrf.mxu0
        %v1225 = vadd.f32 %v1211, %v1224
        %v1226 = vpop.f32.mrf.mxu0
        %v1227 = vadd.f32 %v1213, %v1226
        %1228 = vdwg.mxu0
        %1229 = vmatpush.bf16.msra.mxu0 %v1055
        %1230 = vmatpush.bf16.msra.mxu0 %v1051
        %1231 = vmatpush.bf16.msra.mxu0 %v1047
        %1232 = vmatpush.bf16.msra.mxu0 %v1043
        %1233 = vmatpush.bf16.msra.mxu0 %v1039
        %1234 = vmatpush.bf16.msra.mxu0 %v1035
        %1235 = vmatpush.bf16.msra.mxu0 %v1031
        %1236 = vmatpush.bf16.msra.mxu0 %v1027
        %1237 = vmatmul.bf16.gmra.mxu0 %v542
        %v1238 = vpop.f32.mrf.mxu0
        %v1239 = vadd.f32 %v1225, %v1238
        %v1240 = vpop.f32.mrf.mxu0
        %v1241 = vadd.f32 %v1227, %v1240
        %1242 = vdwg.mxu0
        %1243 = vmatpush.bf16.msra.mxu0 %v960
        %1244 = vmatpush.bf16.msra.mxu0 %v956
        %1245 = vmatpush.bf16.msra.mxu0 %v952
        %1246 = vmatpush.bf16.msra.mxu0 %v948
        %1247 = vmatpush.bf16.msra.mxu0 %v944
        %1248 = vmatpush.bf16.msra.mxu0 %v940
        %1249 = vmatpush.bf16.msra.mxu0 %v936
        %1250 = vmatpush.bf16.msra.mxu0 %v932
        %1251 = vmatmul.bf16.gmra.mxu0 %v539
        %v1252 = vpop.f32.mrf.mxu0
        %v1253 = vadd.f32 0.0, %v1252
        %v1254 = vpop.f32.mrf.mxu0
        %v1255 = vadd.f32 0.0, %v1254
        %1256 = vdwg.mxu0
        %1257 = vmatpush.bf16.msra.mxu0 %v992
        %1258 = vmatpush.bf16.msra.mxu0 %v988
        %1259 = vmatpush.bf16.msra.mxu0 %v984
        %1260 = vmatpush.bf16.msra.mxu0 %v980
        %1261 = vmatpush.bf16.msra.mxu0 %v976
        %1262 = vmatpush.bf16.msra.mxu0 %v972
        %1263 = vmatpush.bf16.msra.mxu0 %v968
        %1264 = vmatpush.bf16.msra.mxu0 %v964
        %1265 = vmatmul.bf16.gmra.mxu0 %v540
        %v1266 = vpop.f32.mrf.mxu0
        %v1267 = vadd.f32 %v1253, %v1266
        %v1268 = vpop.f32.mrf.mxu0
        %v1269 = vadd.f32 %v1255, %v1268
        %1270 = vdwg.mxu0
        %1271 = vmatpush.bf16.msra.mxu0 %v1024
        %1272 = vmatpush.bf16.msra.mxu0 %v1020
        %1273 = vmatpush.bf16.msra.mxu0 %v1016
        %1274 = vmatpush.bf16.msra.mxu0 %v1012
        %1275 = vmatpush.bf16.msra.mxu0 %v1008
        %1276 = vmatpush.bf16.msra.mxu0 %v1004
        %1277 = vmatpush.bf16.msra.mxu0 %v1000
        %1278 = vmatpush.bf16.msra.mxu0 %v996
        %1279 = vmatmul.bf16.gmra.mxu0 %v541
        %v1280 = vpop.f32.mrf.mxu0
        %v1281 = vadd.f32 %v1267, %v1280
        %v1282 = vpop.f32.mrf.mxu0
        %v1283 = vadd.f32 %v1269, %v1282
        %1284 = vdwg.mxu0
        %1285 = vmatpush.bf16.msra.mxu0 %v1056
        %1286 = vmatpush.bf16.msra.mxu0 %v1052
        %1287 = vmatpush.bf16.msra.mxu0 %v1048
        %1288 = vmatpush.bf16.msra.mxu0 %v1044
        %1289 = vmatpush.bf16.msra.mxu0 %v1040
        %1290 = vmatpush.bf16.msra.mxu0 %v1036
        %1291 = vmatpush.bf16.msra.mxu0 %v1032
        %1292 = vmatpush.bf16.msra.mxu0 %v1028
        %1293 = vmatmul.bf16.gmra.mxu0 %v542
        %v1294 = vpop.f32.mrf.mxu0
        %v1295 = vadd.f32 %v1281, %v1294
        %v1296 = vpop.f32.mrf.mxu0
        %v1297 = vadd.f32 %v1283, %v1296
        %1298 = vdwg.mxu0
        %1299 = vmatpush.bf16.msra.mxu0 %v961
        %1300 = vmatpush.bf16.msra.mxu0 %v957
        %1301 = vmatpush.bf16.msra.mxu0 %v953
        %1302 = vmatpush.bf16.msra.mxu0 %v949
        %1303 = vmatpush.bf16.msra.mxu0 %v945
        %1304 = vmatpush.bf16.msra.mxu0 %v941
        %1305 = vmatpush.bf16.msra.mxu0 %v937
        %1306 = vmatpush.bf16.msra.mxu0 %v933
        %1307 = vmatmul.bf16.gmra.mxu0 %v539
        %v1308 = vpop.f32.mrf.mxu0
        %v1309 = vadd.f32 0.0, %v1308
        %v1310 = vpop.f32.mrf.mxu0
        %v1311 = vadd.f32 0.0, %v1310
        %1312 = vdwg.mxu0
        %1313 = vmatpush.bf16.msra.mxu0 %v993
        %1314 = vmatpush.bf16.msra.mxu0 %v989
        %1315 = vmatpush.bf16.msra.mxu0 %v985
        %1316 = vmatpush.bf16.msra.mxu0 %v981
        %1317 = vmatpush.bf16.msra.mxu0 %v977
        %1318 = vmatpush.bf16.msra.mxu0 %v973
        %1319 = vmatpush.bf16.msra.mxu0 %v969
        %1320 = vmatpush.bf16.msra.mxu0 %v965
        %1321 = vmatmul.bf16.gmra.mxu0 %v540
        %v1322 = vpop.f32.mrf.mxu0
        %v1323 = vadd.f32 %v1309, %v1322
        %v1324 = vpop.f32.mrf.mxu0
        %v1325 = vadd.f32 %v1311, %v1324
        %1326 = vdwg.mxu0
        %1327 = vmatpush.bf16.msra.mxu0 %v1025
        %1328 = vmatpush.bf16.msra.mxu0 %v1021
        %1329 = vmatpush.bf16.msra.mxu0 %v1017
        %1330 = vmatpush.bf16.msra.mxu0 %v1013
        %1331 = vmatpush.bf16.msra.mxu0 %v1009
        %1332 = vmatpush.bf16.msra.mxu0 %v1005
        %1333 = vmatpush.bf16.msra.mxu0 %v1001
        %1334 = vmatpush.bf16.msra.mxu0 %v997
        %1335 = vmatmul.bf16.gmra.mxu0 %v541
        %v1336 = vpop.f32.mrf.mxu0
        %v1337 = vadd.f32 %v1323, %v1336
        %v1338 = vpop.f32.mrf.mxu0
        %v1339 = vadd.f32 %v1325, %v1338
        %1340 = vdwg.mxu0
        %1341 = vmatpush.bf16.msra.mxu0 %v1057
        %1342 = vmatpush.bf16.msra.mxu0 %v1053
        %1343 = vmatpush.bf16.msra.mxu0 %v1049
        %1344 = vmatpush.bf16.msra.mxu0 %v1045
        %1345 = vmatpush.bf16.msra.mxu0 %v1041
        %1346 = vmatpush.bf16.msra.mxu0 %v1037
        %1347 = vmatpush.bf16.msra.mxu0 %v1033
        %1348 = vmatpush.bf16.msra.mxu0 %v1029
        %1349 = vmatmul.bf16.gmra.mxu0 %v542
        %v1350 = vpop.f32.mrf.mxu0
        %v1351 = vadd.f32 %v1337, %v1350
        %v1352 = vpop.f32.mrf.mxu0
        %v1353 = vadd.f32 %v1339, %v1352
        %1354 = vdwg.mxu0
        %1355 = vmatpush.bf16.msra.mxu0 %v962
        %1356 = vmatpush.bf16.msra.mxu0 %v958
        %1357 = vmatpush.bf16.msra.mxu0 %v954
        %1358 = vmatpush.bf16.msra.mxu0 %v950
        %1359 = vmatpush.bf16.msra.mxu0 %v946
        %1360 = vmatpush.bf16.msra.mxu0 %v942
        %1361 = vmatpush.bf16.msra.mxu0 %v938
        %1362 = vmatpush.bf16.msra.mxu0 %v934
        %1363 = vmatmul.bf16.gmra.mxu0 %v539
        %v1364 = vpop.f32.mrf.mxu0
        %v1365 = vadd.f32 0.0, %v1364
        %v1366 = vpop.f32.mrf.mxu0
        %v1367 = vadd.f32 0.0, %v1366
        %1368 = vdwg.mxu0
        %1369 = vmatpush.bf16.msra.mxu0 %v994
        %1370 = vmatpush.bf16.msra.mxu0 %v990
        %1371 = vmatpush.bf16.msra.mxu0 %v986
        %1372 = vmatpush.bf16.msra.mxu0 %v982
        %1373 = vmatpush.bf16.msra.mxu0 %v978
        %1374 = vmatpush.bf16.msra.mxu0 %v974
        %1375 = vmatpush.bf16.msra.mxu0 %v970
        %1376 = vmatpush.bf16.msra.mxu0 %v966
        %1377 = vmatmul.bf16.gmra.mxu0 %v540
        %v1378 = vpop.f32.mrf.mxu0
        %v1379 = vadd.f32 %v1365, %v1378
        %v1380 = vpop.f32.mrf.mxu0
        %v1381 = vadd.f32 %v1367, %v1380
        %1382 = vdwg.mxu0
        %1383 = vmatpush.bf16.msra.mxu0 %v1026
        %1384 = vmatpush.bf16.msra.mxu0 %v1022
        %1385 = vmatpush.bf16.msra.mxu0 %v1018
        %1386 = vmatpush.bf16.msra.mxu0 %v1014
        %1387 = vmatpush.bf16.msra.mxu0 %v1010
        %1388 = vmatpush.bf16.msra.mxu0 %v1006
        %1389 = vmatpush.bf16.msra.mxu0 %v1002
        %1390 = vmatpush.bf16.msra.mxu0 %v998
        %1391 = vmatmul.bf16.gmra.mxu0 %v541
        %v1392 = vpop.f32.mrf.mxu0
        %v1393 = vadd.f32 %v1379, %v1392
        %v1394 = vpop.f32.mrf.mxu0
        %v1395 = vadd.f32 %v1381, %v1394
        %1396 = vdwg.mxu0
        %1397 = vmatpush.bf16.msra.mxu0 %v1058
        %1398 = vmatpush.bf16.msra.mxu0 %v1054
        %1399 = vmatpush.bf16.msra.mxu0 %v1050
        %1400 = vmatpush.bf16.msra.mxu0 %v1046
        %1401 = vmatpush.bf16.msra.mxu0 %v1042
        %1402 = vmatpush.bf16.msra.mxu0 %v1038
        %1403 = vmatpush.bf16.msra.mxu0 %v1034
        %1404 = vmatpush.bf16.msra.mxu0 %v1030
        %1405 = vmatmul.bf16.gmra.mxu0 %v542
        %v1406 = vpop.f32.mrf.mxu0
        %v1407 = vadd.f32 %v1393, %v1406
        %v1408 = vpop.f32.mrf.mxu0
        %v1409 = vadd.f32 %v1395, %v1408
        %1410 = vdwg.mxu0
        %v1415 = vunpack.c.l.b16 %v262
        %v1416 = vunpack.c.h.b16 %v262
        %v1417 = vunpack.c.l.b16 %v263
        %v1418 = vunpack.c.h.b16 %v263
        %v1419 = vunpack.c.l.b16 %v264
        %v1420 = vunpack.c.h.b16 %v264
        %v1421 = vunpack.c.l.b16 %v265
        %v1422 = vunpack.c.h.b16 %v265
        %v1423 = vpack.c.b16 %v1419, %v1415
        %v1424 = vpack.c.b16 %v1420, %v1416
        %v1425 = vpack.c.b16 %v1421, %v1417
        %v1426 = vpack.c.b16 %v1422, %v1418
        %v1559 = vunpack.c.l.b16 %v266
        %v1560 = vunpack.c.h.b16 %v266
        %v1561 = vunpack.c.l.b16 %v267
        %v1562 = vunpack.c.h.b16 %v267
        %v1563 = vunpack.c.l.b16 %v268
        %v1564 = vunpack.c.h.b16 %v268
        %v1565 = vunpack.c.l.b16 %v269
        %v1566 = vunpack.c.h.b16 %v269
        %v1567 = vunpack.c.l.b16 %v270
        %v1568 = vunpack.c.h.b16 %v270
        %v1569 = vunpack.c.l.b16 %v271
        %v1570 = vunpack.c.h.b16 %v271
        %v1571 = vunpack.c.l.b16 %v272
        %v1572 = vunpack.c.h.b16 %v272
        %v1573 = vunpack.c.l.b16 %v273
        %v1574 = vunpack.c.h.b16 %v273
        %v1575 = vunpack.c.l.b16 %v274
        %v1576 = vunpack.c.h.b16 %v274
        %v1577 = vunpack.c.l.b16 %v275
        %v1578 = vunpack.c.h.b16 %v275
        %v1579 = vunpack.c.l.b16 %v276
        %v1580 = vunpack.c.h.b16 %v276
        %v1581 = vunpack.c.l.b16 %v277
        %v1582 = vunpack.c.h.b16 %v277
        %v1583 = vunpack.c.l.b16 %v278
        %v1584 = vunpack.c.h.b16 %v278
        %v1585 = vunpack.c.l.b16 %v279
        %v1586 = vunpack.c.h.b16 %v279
        %v1587 = vunpack.c.l.b16 %v280
        %v1588 = vunpack.c.h.b16 %v280
        %v1589 = vunpack.c.l.b16 %v281
        %v1590 = vunpack.c.h.b16 %v281
        %v1591 = vunpack.c.l.b16 %v282
        %v1592 = vunpack.c.h.b16 %v282
        %v1593 = vunpack.c.l.b16 %v283
        %v1594 = vunpack.c.h.b16 %v283
        %v1595 = vunpack.c.l.b16 %v284
        %v1596 = vunpack.c.h.b16 %v284
        %v1597 = vunpack.c.l.b16 %v285
        %v1598 = vunpack.c.h.b16 %v285
        %v1599 = vunpack.c.l.b16 %v286
        %v1600 = vunpack.c.h.b16 %v286
        %v1601 = vunpack.c.l.b16 %v287
        %v1602 = vunpack.c.h.b16 %v287
        %v1603 = vunpack.c.l.b16 %v288
        %v1604 = vunpack.c.h.b16 %v288
        %v1605 = vunpack.c.l.b16 %v289
        %v1606 = vunpack.c.h.b16 %v289
        %v1607 = vunpack.c.l.b16 %v290
        %v1608 = vunpack.c.h.b16 %v290
        %v1609 = vunpack.c.l.b16 %v291
        %v1610 = vunpack.c.h.b16 %v291
        %v1611 = vunpack.c.l.b16 %v292
        %v1612 = vunpack.c.h.b16 %v292
        %v1613 = vunpack.c.l.b16 %v293
        %v1614 = vunpack.c.h.b16 %v293
        %v1615 = vunpack.c.l.b16 %v294
        %v1616 = vunpack.c.h.b16 %v294
        %v1617 = vunpack.c.l.b16 %v295
        %v1618 = vunpack.c.h.b16 %v295
        %v1619 = vunpack.c.l.b16 %v296
        %v1620 = vunpack.c.h.b16 %v296
        %v1621 = vunpack.c.l.b16 %v297
        %v1622 = vunpack.c.h.b16 %v297
        %v1623 = vunpack.c.l.b16 %v298
        %v1624 = vunpack.c.h.b16 %v298
        %v1625 = vunpack.c.l.b16 %v299
        %v1626 = vunpack.c.h.b16 %v299
        %v1627 = vunpack.c.l.b16 %v300
        %v1628 = vunpack.c.h.b16 %v300
        %v1629 = vunpack.c.l.b16 %v301
        %v1630 = vunpack.c.h.b16 %v301
        %v1631 = vunpack.c.l.b16 %v302
        %v1632 = vunpack.c.h.b16 %v302
        %v1633 = vunpack.c.l.b16 %v303
        %v1634 = vunpack.c.h.b16 %v303
        %v1635 = vunpack.c.l.b16 %v304
        %v1636 = vunpack.c.h.b16 %v304
        %v1637 = vunpack.c.l.b16 %v305
        %v1638 = vunpack.c.h.b16 %v305
        %v1639 = vunpack.c.l.b16 %v306
        %v1640 = vunpack.c.h.b16 %v306
        %v1641 = vunpack.c.l.b16 %v307
        %v1642 = vunpack.c.h.b16 %v307
        %v1643 = vunpack.c.l.b16 %v308
        %v1644 = vunpack.c.h.b16 %v308
        %v1645 = vunpack.c.l.b16 %v309
        %v1646 = vunpack.c.h.b16 %v309
        %v1647 = vunpack.c.l.b16 %v310
        %v1648 = vunpack.c.h.b16 %v310
        %v1649 = vunpack.c.l.b16 %v311
        %v1650 = vunpack.c.h.b16 %v311
        %v1651 = vunpack.c.l.b16 %v312
        %v1652 = vunpack.c.h.b16 %v312
        %v1653 = vunpack.c.l.b16 %v313
        %v1654 = vunpack.c.h.b16 %v313
        %v1655 = vunpack.c.l.b16 %v314
        %v1656 = vunpack.c.h.b16 %v314
        %v1657 = vunpack.c.l.b16 %v315
        %v1658 = vunpack.c.h.b16 %v315
        %v1659 = vunpack.c.l.b16 %v316
        %v1660 = vunpack.c.h.b16 %v316
        %v1661 = vunpack.c.l.b16 %v317
        %v1662 = vunpack.c.h.b16 %v317
        %v1663 = vunpack.c.l.b16 %v318
        %v1664 = vunpack.c.h.b16 %v318
        %v1665 = vunpack.c.l.b16 %v319
        %v1666 = vunpack.c.h.b16 %v319
        %v1667 = vunpack.c.l.b16 %v320
        %v1668 = vunpack.c.h.b16 %v320
        %v1669 = vunpack.c.l.b16 %v321
        %v1670 = vunpack.c.h.b16 %v321
        %v1671 = vunpack.c.l.b16 %v322
        %v1672 = vunpack.c.h.b16 %v322
        %v1673 = vunpack.c.l.b16 %v323
        %v1674 = vunpack.c.h.b16 %v323
        %v1675 = vunpack.c.l.b16 %v324
        %v1676 = vunpack.c.h.b16 %v324
        %v1677 = vunpack.c.l.b16 %v325
        %v1678 = vunpack.c.h.b16 %v325
        %v1679 = vunpack.c.l.b16 %v326
        %v1680 = vunpack.c.h.b16 %v326
        %v1681 = vunpack.c.l.b16 %v327
        %v1682 = vunpack.c.h.b16 %v327
        %v1683 = vunpack.c.l.b16 %v328
        %v1684 = vunpack.c.h.b16 %v328
        %v1685 = vunpack.c.l.b16 %v329
        %v1686 = vunpack.c.h.b16 %v329
        %v1687 = vunpack.c.l.b16 %v330
        %v1688 = vunpack.c.h.b16 %v330
        %v1689 = vunpack.c.l.b16 %v331
        %v1690 = vunpack.c.h.b16 %v331
        %v1691 = vunpack.c.l.b16 %v332
        %v1692 = vunpack.c.h.b16 %v332
        %v1693 = vunpack.c.l.b16 %v333
        %v1694 = vunpack.c.h.b16 %v333
        %v1695 = vunpack.c.l.b16 %v334
        %v1696 = vunpack.c.h.b16 %v334
        %v1697 = vunpack.c.l.b16 %v335
        %v1698 = vunpack.c.h.b16 %v335
        %v1699 = vunpack.c.l.b16 %v336
        %v1700 = vunpack.c.h.b16 %v336
        %v1701 = vunpack.c.l.b16 %v337
        %v1702 = vunpack.c.h.b16 %v337
        %v1703 = vunpack.c.l.b16 %v338
        %v1704 = vunpack.c.h.b16 %v338
        %v1705 = vunpack.c.l.b16 %v339
        %v1706 = vunpack.c.h.b16 %v339
        %v1707 = vunpack.c.l.b16 %v340
        %v1708 = vunpack.c.h.b16 %v340
        %v1709 = vunpack.c.l.b16 %v341
        %v1710 = vunpack.c.h.b16 %v341
        %v1711 = vunpack.c.l.b16 %v342
        %v1712 = vunpack.c.h.b16 %v342
        %v1713 = vunpack.c.l.b16 %v343
        %v1714 = vunpack.c.h.b16 %v343
        %v1715 = vunpack.c.l.b16 %v344
        %v1716 = vunpack.c.h.b16 %v344
        %v1717 = vunpack.c.l.b16 %v345
        %v1718 = vunpack.c.h.b16 %v345
        %v1719 = vunpack.c.l.b16 %v346
        %v1720 = vunpack.c.h.b16 %v346
        %v1721 = vunpack.c.l.b16 %v347
        %v1722 = vunpack.c.h.b16 %v347
        %v1723 = vunpack.c.l.b16 %v348
        %v1724 = vunpack.c.h.b16 %v348
        %v1725 = vunpack.c.l.b16 %v349
        %v1726 = vunpack.c.h.b16 %v349
        %v1727 = vunpack.c.l.b16 %v350
        %v1728 = vunpack.c.h.b16 %v350
        %v1729 = vunpack.c.l.b16 %v351
        %v1730 = vunpack.c.h.b16 %v351
        %v1731 = vunpack.c.l.b16 %v352
        %v1732 = vunpack.c.h.b16 %v352
        %v1733 = vunpack.c.l.b16 %v353
        %v1734 = vunpack.c.h.b16 %v353
        %v1735 = vunpack.c.l.b16 %v354
        %v1736 = vunpack.c.h.b16 %v354
        %v1737 = vunpack.c.l.b16 %v355
        %v1738 = vunpack.c.h.b16 %v355
        %v1739 = vunpack.c.l.b16 %v356
        %v1740 = vunpack.c.h.b16 %v356
        %v1741 = vunpack.c.l.b16 %v357
        %v1742 = vunpack.c.h.b16 %v357
        %v1743 = vunpack.c.l.b16 %v358
        %v1744 = vunpack.c.h.b16 %v358
        %v1745 = vunpack.c.l.b16 %v359
        %v1746 = vunpack.c.h.b16 %v359
        %v1747 = vunpack.c.l.b16 %v360
        %v1748 = vunpack.c.h.b16 %v360
        %v1749 = vunpack.c.l.b16 %v361
        %v1750 = vunpack.c.h.b16 %v361
        %v1751 = vunpack.c.l.b16 %v362
        %v1752 = vunpack.c.h.b16 %v362
        %v1753 = vunpack.c.l.b16 %v363
        %v1754 = vunpack.c.h.b16 %v363
        %v1755 = vunpack.c.l.b16 %v364
        %v1756 = vunpack.c.h.b16 %v364
        %v1757 = vunpack.c.l.b16 %v365
        %v1758 = vunpack.c.h.b16 %v365
        %v1759 = vunpack.c.l.b16 %v366
        %v1760 = vunpack.c.h.b16 %v366
        %v1761 = vunpack.c.l.b16 %v367
        %v1762 = vunpack.c.h.b16 %v367
        %v1763 = vunpack.c.l.b16 %v368
        %v1764 = vunpack.c.h.b16 %v368
        %v1765 = vunpack.c.l.b16 %v369
        %v1766 = vunpack.c.h.b16 %v369
        %v1767 = vunpack.c.l.b16 %v370
        %v1768 = vunpack.c.h.b16 %v370
        %v1769 = vunpack.c.l.b16 %v371
        %v1770 = vunpack.c.h.b16 %v371
        %v1771 = vunpack.c.l.b16 %v372
        %v1772 = vunpack.c.h.b16 %v372
        %v1773 = vunpack.c.l.b16 %v373
        %v1774 = vunpack.c.h.b16 %v373
        %v1775 = vunpack.c.l.b16 %v374
        %v1776 = vunpack.c.h.b16 %v374
        %v1777 = vunpack.c.l.b16 %v375
        %v1778 = vunpack.c.h.b16 %v375
        %v1779 = vunpack.c.l.b16 %v376
        %v1780 = vunpack.c.h.b16 %v376
        %v1781 = vunpack.c.l.b16 %v377
        %v1782 = vunpack.c.h.b16 %v377
        %v1783 = vunpack.c.l.b16 %v378
        %v1784 = vunpack.c.h.b16 %v378
        %v1785 = vunpack.c.l.b16 %v379
        %v1786 = vunpack.c.h.b16 %v379
        %v1787 = vunpack.c.l.b16 %v380
        %v1788 = vunpack.c.h.b16 %v380
        %v1789 = vunpack.c.l.b16 %v381
        %v1790 = vunpack.c.h.b16 %v381
        %v1791 = vunpack.c.l.b16 %v382
        %v1792 = vunpack.c.h.b16 %v382
        %v1793 = vunpack.c.l.b16 %v383
        %v1794 = vunpack.c.h.b16 %v383
        %v1795 = vunpack.c.l.b16 %v384
        %v1796 = vunpack.c.h.b16 %v384
        %v1797 = vunpack.c.l.b16 %v385
        %v1798 = vunpack.c.h.b16 %v385
        %v1799 = vunpack.c.l.b16 %v386
        %v1800 = vunpack.c.h.b16 %v386
        %v1801 = vunpack.c.l.b16 %v387
        %v1802 = vunpack.c.h.b16 %v387
        %v1803 = vunpack.c.l.b16 %v388
        %v1804 = vunpack.c.h.b16 %v388
        %v1805 = vunpack.c.l.b16 %v389
        %v1806 = vunpack.c.h.b16 %v389
        %v1807 = vunpack.c.l.b16 %v390
        %v1808 = vunpack.c.h.b16 %v390
        %v1809 = vunpack.c.l.b16 %v391
        %v1810 = vunpack.c.h.b16 %v391
        %v1811 = vunpack.c.l.b16 %v392
        %v1812 = vunpack.c.h.b16 %v392
        %v1813 = vunpack.c.l.b16 %v393
        %v1814 = vunpack.c.h.b16 %v393
        %v1815 = vpack.c.b16 %v1563, %v1559
        %v1816 = vpack.c.b16 %v1564, %v1560
        %v1817 = vpack.c.b16 %v1565, %v1561
        %v1818 = vpack.c.b16 %v1566, %v1562
        %v1819 = vpack.c.b16 %v1571, %v1567
        %v1820 = vpack.c.b16 %v1572, %v1568
        %v1821 = vpack.c.b16 %v1573, %v1569
        %v1822 = vpack.c.b16 %v1574, %v1570
        %v1823 = vpack.c.b16 %v1579, %v1575
        %v1824 = vpack.c.b16 %v1580, %v1576
        %v1825 = vpack.c.b16 %v1581, %v1577
        %v1826 = vpack.c.b16 %v1582, %v1578
        %v1827 = vpack.c.b16 %v1587, %v1583
        %v1828 = vpack.c.b16 %v1588, %v1584
        %v1829 = vpack.c.b16 %v1589, %v1585
        %v1830 = vpack.c.b16 %v1590, %v1586
        %v1831 = vpack.c.b16 %v1595, %v1591
        %v1832 = vpack.c.b16 %v1596, %v1592
        %v1833 = vpack.c.b16 %v1597, %v1593
        %v1834 = vpack.c.b16 %v1598, %v1594
        %v1835 = vpack.c.b16 %v1603, %v1599
        %v1836 = vpack.c.b16 %v1604, %v1600
        %v1837 = vpack.c.b16 %v1605, %v1601
        %v1838 = vpack.c.b16 %v1606, %v1602
        %v1839 = vpack.c.b16 %v1611, %v1607
        %v1840 = vpack.c.b16 %v1612, %v1608
        %v1841 = vpack.c.b16 %v1613, %v1609
        %v1842 = vpack.c.b16 %v1614, %v1610
        %v1843 = vpack.c.b16 %v1619, %v1615
        %v1844 = vpack.c.b16 %v1620, %v1616
        %v1845 = vpack.c.b16 %v1621, %v1617
        %v1846 = vpack.c.b16 %v1622, %v1618
        %v1847 = vpack.c.b16 %v1627, %v1623
        %v1848 = vpack.c.b16 %v1628, %v1624
        %v1849 = vpack.c.b16 %v1629, %v1625
        %v1850 = vpack.c.b16 %v1630, %v1626
        %v1851 = vpack.c.b16 %v1635, %v1631
        %v1852 = vpack.c.b16 %v1636, %v1632
        %v1853 = vpack.c.b16 %v1637, %v1633
        %v1854 = vpack.c.b16 %v1638, %v1634
        %v1855 = vpack.c.b16 %v1643, %v1639
        %v1856 = vpack.c.b16 %v1644, %v1640
        %v1857 = vpack.c.b16 %v1645, %v1641
        %v1858 = vpack.c.b16 %v1646, %v1642
        %v1859 = vpack.c.b16 %v1651, %v1647
        %v1860 = vpack.c.b16 %v1652, %v1648
        %v1861 = vpack.c.b16 %v1653, %v1649
        %v1862 = vpack.c.b16 %v1654, %v1650
        %v1863 = vpack.c.b16 %v1659, %v1655
        %v1864 = vpack.c.b16 %v1660, %v1656
        %v1865 = vpack.c.b16 %v1661, %v1657
        %v1866 = vpack.c.b16 %v1662, %v1658
        %v1867 = vpack.c.b16 %v1667, %v1663
        %v1868 = vpack.c.b16 %v1668, %v1664
        %v1869 = vpack.c.b16 %v1669, %v1665
        %v1870 = vpack.c.b16 %v1670, %v1666
        %v1871 = vpack.c.b16 %v1675, %v1671
        %v1872 = vpack.c.b16 %v1676, %v1672
        %v1873 = vpack.c.b16 %v1677, %v1673
        %v1874 = vpack.c.b16 %v1678, %v1674
        %v1875 = vpack.c.b16 %v1683, %v1679
        %v1876 = vpack.c.b16 %v1684, %v1680
        %v1877 = vpack.c.b16 %v1685, %v1681
        %v1878 = vpack.c.b16 %v1686, %v1682
        %v1879 = vpack.c.b16 %v1691, %v1687
        %v1880 = vpack.c.b16 %v1692, %v1688
        %v1881 = vpack.c.b16 %v1693, %v1689
        %v1882 = vpack.c.b16 %v1694, %v1690
        %v1883 = vpack.c.b16 %v1699, %v1695
        %v1884 = vpack.c.b16 %v1700, %v1696
        %v1885 = vpack.c.b16 %v1701, %v1697
        %v1886 = vpack.c.b16 %v1702, %v1698
        %v1887 = vpack.c.b16 %v1707, %v1703
        %v1888 = vpack.c.b16 %v1708, %v1704
        %v1889 = vpack.c.b16 %v1709, %v1705
        %v1890 = vpack.c.b16 %v1710, %v1706
        %v1891 = vpack.c.b16 %v1715, %v1711
        %v1892 = vpack.c.b16 %v1716, %v1712
        %v1893 = vpack.c.b16 %v1717, %v1713
        %v1894 = vpack.c.b16 %v1718, %v1714
        %v1895 = vpack.c.b16 %v1723, %v1719
        %v1896 = vpack.c.b16 %v1724, %v1720
        %v1897 = vpack.c.b16 %v1725, %v1721
        %v1898 = vpack.c.b16 %v1726, %v1722
        %v1899 = vpack.c.b16 %v1731, %v1727
        %v1900 = vpack.c.b16 %v1732, %v1728
        %v1901 = vpack.c.b16 %v1733, %v1729
        %v1902 = vpack.c.b16 %v1734, %v1730
        %v1903 = vpack.c.b16 %v1739, %v1735
        %v1904 = vpack.c.b16 %v1740, %v1736
        %v1905 = vpack.c.b16 %v1741, %v1737
        %v1906 = vpack.c.b16 %v1742, %v1738
        %v1907 = vpack.c.b16 %v1747, %v1743
        %v1908 = vpack.c.b16 %v1748, %v1744
        %v1909 = vpack.c.b16 %v1749, %v1745
        %v1910 = vpack.c.b16 %v1750, %v1746
        %v1911 = vpack.c.b16 %v1755, %v1751
        %v1912 = vpack.c.b16 %v1756, %v1752
        %v1913 = vpack.c.b16 %v1757, %v1753
        %v1914 = vpack.c.b16 %v1758, %v1754
        %v1915 = vpack.c.b16 %v1763, %v1759
        %v1916 = vpack.c.b16 %v1764, %v1760
        %v1917 = vpack.c.b16 %v1765, %v1761
        %v1918 = vpack.c.b16 %v1766, %v1762
        %v1919 = vpack.c.b16 %v1771, %v1767
        %v1920 = vpack.c.b16 %v1772, %v1768
        %v1921 = vpack.c.b16 %v1773, %v1769
        %v1922 = vpack.c.b16 %v1774, %v1770
        %v1923 = vpack.c.b16 %v1779, %v1775
        %v1924 = vpack.c.b16 %v1780, %v1776
        %v1925 = vpack.c.b16 %v1781, %v1777
        %v1926 = vpack.c.b16 %v1782, %v1778
        %v1927 = vpack.c.b16 %v1787, %v1783
        %v1928 = vpack.c.b16 %v1788, %v1784
        %v1929 = vpack.c.b16 %v1789, %v1785
        %v1930 = vpack.c.b16 %v1790, %v1786
        %v1931 = vpack.c.b16 %v1795, %v1791
        %v1932 = vpack.c.b16 %v1796, %v1792
        %v1933 = vpack.c.b16 %v1797, %v1793
        %v1934 = vpack.c.b16 %v1798, %v1794
        %v1935 = vpack.c.b16 %v1803, %v1799
        %v1936 = vpack.c.b16 %v1804, %v1800
        %v1937 = vpack.c.b16 %v1805, %v1801
        %v1938 = vpack.c.b16 %v1806, %v1802
        %v1939 = vpack.c.b16 %v1811, %v1807
        %v1940 = vpack.c.b16 %v1812, %v1808
        %v1941 = vpack.c.b16 %v1813, %v1809
        %v1942 = vpack.c.b16 %v1814, %v1810
        %2071 = vmatpush.bf16.msra.mxu0 %v1843
        %2072 = vmatpush.bf16.msra.mxu0 %v1839
        %2073 = vmatpush.bf16.msra.mxu0 %v1835
        %2074 = vmatpush.bf16.msra.mxu0 %v1831
        %2075 = vmatpush.bf16.msra.mxu0 %v1827
        %2076 = vmatpush.bf16.msra.mxu0 %v1823
        %2077 = vmatpush.bf16.msra.mxu0 %v1819
        %2078 = vmatpush.bf16.msra.mxu0 %v1815
        %2079 = vmatmul.bf16.gmra.mxu0 %v1423
        %v2080 = vpop.f32.mrf.mxu0
        %v2081 = vadd.f32 %v1239, %v2080
        %v2082 = vpop.f32.mrf.mxu0
        %v2083 = vadd.f32 %v1241, %v2082
        %2084 = vdwg.mxu0
        %2085 = vmatpush.bf16.msra.mxu0 %v1875
        %2086 = vmatpush.bf16.msra.mxu0 %v1871
        %2087 = vmatpush.bf16.msra.mxu0 %v1867
        %2088 = vmatpush.bf16.msra.mxu0 %v1863
        %2089 = vmatpush.bf16.msra.mxu0 %v1859
        %2090 = vmatpush.bf16.msra.mxu0 %v1855
        %2091 = vmatpush.bf16.msra.mxu0 %v1851
        %2092 = vmatpush.bf16.msra.mxu0 %v1847
        %2093 = vmatmul.bf16.gmra.mxu0 %v1424
        %v2094 = vpop.f32.mrf.mxu0
        %v2095 = vadd.f32 %v2081, %v2094
        %v2096 = vpop.f32.mrf.mxu0
        %v2097 = vadd.f32 %v2083, %v2096
        %2098 = vdwg.mxu0
        %2099 = vmatpush.bf16.msra.mxu0 %v1907
        %2100 = vmatpush.bf16.msra.mxu0 %v1903
        %2101 = vmatpush.bf16.msra.mxu0 %v1899
        %2102 = vmatpush.bf16.msra.mxu0 %v1895
        %2103 = vmatpush.bf16.msra.mxu0 %v1891
        %2104 = vmatpush.bf16.msra.mxu0 %v1887
        %2105 = vmatpush.bf16.msra.mxu0 %v1883
        %2106 = vmatpush.bf16.msra.mxu0 %v1879
        %2107 = vmatmul.bf16.gmra.mxu0 %v1425
        %v2108 = vpop.f32.mrf.mxu0
        %v2109 = vadd.f32 %v2095, %v2108
        %v2110 = vpop.f32.mrf.mxu0
        %v2111 = vadd.f32 %v2097, %v2110
        %2112 = vdwg.mxu0
        %2113 = vmatpush.bf16.msra.mxu0 %v1939
        %2114 = vmatpush.bf16.msra.mxu0 %v1935
        %2115 = vmatpush.bf16.msra.mxu0 %v1931
        %2116 = vmatpush.bf16.msra.mxu0 %v1927
        %2117 = vmatpush.bf16.msra.mxu0 %v1923
        %2118 = vmatpush.bf16.msra.mxu0 %v1919
        %2119 = vmatpush.bf16.msra.mxu0 %v1915
        %2120 = vmatpush.bf16.msra.mxu0 %v1911
        %2121 = vmatmul.bf16.gmra.mxu0 %v1426
        %v2122 = vpop.f32.mrf.mxu0
        %v2123 = vadd.f32 %v2109, %v2122
        %v2124 = vpop.f32.mrf.mxu0
        %v2125 = vadd.f32 %v2111, %v2124
        %2126 = vdwg.mxu0
        %2127 = vmatpush.bf16.msra.mxu0 %v1844
        %2128 = vmatpush.bf16.msra.mxu0 %v1840
        %2129 = vmatpush.bf16.msra.mxu0 %v1836
        %2130 = vmatpush.bf16.msra.mxu0 %v1832
        %2131 = vmatpush.bf16.msra.mxu0 %v1828
        %2132 = vmatpush.bf16.msra.mxu0 %v1824
        %2133 = vmatpush.bf16.msra.mxu0 %v1820
        %2134 = vmatpush.bf16.msra.mxu0 %v1816
        %2135 = vmatmul.bf16.gmra.mxu0 %v1423
        %v2136 = vpop.f32.mrf.mxu0
        %v2137 = vadd.f32 %v1295, %v2136
        %v2138 = vpop.f32.mrf.mxu0
        %v2139 = vadd.f32 %v1297, %v2138
        %2140 = vdwg.mxu0
        %2141 = vmatpush.bf16.msra.mxu0 %v1876
        %2142 = vmatpush.bf16.msra.mxu0 %v1872
        %2143 = vmatpush.bf16.msra.mxu0 %v1868
        %2144 = vmatpush.bf16.msra.mxu0 %v1864
        %2145 = vmatpush.bf16.msra.mxu0 %v1860
        %2146 = vmatpush.bf16.msra.mxu0 %v1856
        %2147 = vmatpush.bf16.msra.mxu0 %v1852
        %2148 = vmatpush.bf16.msra.mxu0 %v1848
        %2149 = vmatmul.bf16.gmra.mxu0 %v1424
        %v2150 = vpop.f32.mrf.mxu0
        %v2151 = vadd.f32 %v2137, %v2150
        %v2152 = vpop.f32.mrf.mxu0
        %v2153 = vadd.f32 %v2139, %v2152
        %2154 = vdwg.mxu0
        %2155 = vmatpush.bf16.msra.mxu0 %v1908
        %2156 = vmatpush.bf16.msra.mxu0 %v1904
        %2157 = vmatpush.bf16.msra.mxu0 %v1900
        %2158 = vmatpush.bf16.msra.mxu0 %v1896
        %2159 = vmatpush.bf16.msra.mxu0 %v1892
        %2160 = vmatpush.bf16.msra.mxu0 %v1888
        %2161 = vmatpush.bf16.msra.mxu0 %v1884
        %2162 = vmatpush.bf16.msra.mxu0 %v1880
        %2163 = vmatmul.bf16.gmra.mxu0 %v1425
        %v2164 = vpop.f32.mrf.mxu0
        %v2165 = vadd.f32 %v2151, %v2164
        %v2166 = vpop.f32.mrf.mxu0
        %v2167 = vadd.f32 %v2153, %v2166
        %2168 = vdwg.mxu0
        %2169 = vmatpush.bf16.msra.mxu0 %v1940
        %2170 = vmatpush.bf16.msra.mxu0 %v1936
        %2171 = vmatpush.bf16.msra.mxu0 %v1932
        %2172 = vmatpush.bf16.msra.mxu0 %v1928
        %2173 = vmatpush.bf16.msra.mxu0 %v1924
        %2174 = vmatpush.bf16.msra.mxu0 %v1920
        %2175 = vmatpush.bf16.msra.mxu0 %v1916
        %2176 = vmatpush.bf16.msra.mxu0 %v1912
        %2177 = vmatmul.bf16.gmra.mxu0 %v1426
        %v2178 = vpop.f32.mrf.mxu0
        %v2179 = vadd.f32 %v2165, %v2178
        %v2180 = vpop.f32.mrf.mxu0
        %v2181 = vadd.f32 %v2167, %v2180
        %2182 = vdwg.mxu0
        %2183 = vmatpush.bf16.msra.mxu0 %v1845
        %2184 = vmatpush.bf16.msra.mxu0 %v1841
        %2185 = vmatpush.bf16.msra.mxu0 %v1837
        %2186 = vmatpush.bf16.msra.mxu0 %v1833
        %2187 = vmatpush.bf16.msra.mxu0 %v1829
        %2188 = vmatpush.bf16.msra.mxu0 %v1825
        %2189 = vmatpush.bf16.msra.mxu0 %v1821
        %2190 = vmatpush.bf16.msra.mxu0 %v1817
        %2191 = vmatmul.bf16.gmra.mxu0 %v1423
        %v2192 = vpop.f32.mrf.mxu0
        %v2193 = vadd.f32 %v1351, %v2192
        %v2194 = vpop.f32.mrf.mxu0
        %v2195 = vadd.f32 %v1353, %v2194
        %2196 = vdwg.mxu0
        %2197 = vmatpush.bf16.msra.mxu0 %v1877
        %2198 = vmatpush.bf16.msra.mxu0 %v1873
        %2199 = vmatpush.bf16.msra.mxu0 %v1869
        %2200 = vmatpush.bf16.msra.mxu0 %v1865
        %2201 = vmatpush.bf16.msra.mxu0 %v1861
        %2202 = vmatpush.bf16.msra.mxu0 %v1857
        %2203 = vmatpush.bf16.msra.mxu0 %v1853
        %2204 = vmatpush.bf16.msra.mxu0 %v1849
        %2205 = vmatmul.bf16.gmra.mxu0 %v1424
        %v2206 = vpop.f32.mrf.mxu0
        %v2207 = vadd.f32 %v2193, %v2206
        %v2208 = vpop.f32.mrf.mxu0
        %v2209 = vadd.f32 %v2195, %v2208
        %2210 = vdwg.mxu0
        %2211 = vmatpush.bf16.msra.mxu0 %v1909
        %2212 = vmatpush.bf16.msra.mxu0 %v1905
        %2213 = vmatpush.bf16.msra.mxu0 %v1901
        %2214 = vmatpush.bf16.msra.mxu0 %v1897
        %2215 = vmatpush.bf16.msra.mxu0 %v1893
        %2216 = vmatpush.bf16.msra.mxu0 %v1889
        %2217 = vmatpush.bf16.msra.mxu0 %v1885
        %2218 = vmatpush.bf16.msra.mxu0 %v1881
        %2219 = vmatmul.bf16.gmra.mxu0 %v1425
        %v2220 = vpop.f32.mrf.mxu0
        %v2221 = vadd.f32 %v2207, %v2220
        %v2222 = vpop.f32.mrf.mxu0
        %v2223 = vadd.f32 %v2209, %v2222
        %2224 = vdwg.mxu0
        %2225 = vmatpush.bf16.msra.mxu0 %v1941
        %2226 = vmatpush.bf16.msra.mxu0 %v1937
        %2227 = vmatpush.bf16.msra.mxu0 %v1933
        %2228 = vmatpush.bf16.msra.mxu0 %v1929
        %2229 = vmatpush.bf16.msra.mxu0 %v1925
        %2230 = vmatpush.bf16.msra.mxu0 %v1921
        %2231 = vmatpush.bf16.msra.mxu0 %v1917
        %2232 = vmatpush.bf16.msra.mxu0 %v1913
        %2233 = vmatmul.bf16.gmra.mxu0 %v1426
        %v2234 = vpop.f32.mrf.mxu0
        %v2235 = vadd.f32 %v2221, %v2234
        %v2236 = vpop.f32.mrf.mxu0
        %v2237 = vadd.f32 %v2223, %v2236
        %2238 = vdwg.mxu0
        %2239 = vmatpush.bf16.msra.mxu0 %v1846
        %2240 = vmatpush.bf16.msra.mxu0 %v1842
        %2241 = vmatpush.bf16.msra.mxu0 %v1838
        %2242 = vmatpush.bf16.msra.mxu0 %v1834
        %2243 = vmatpush.bf16.msra.mxu0 %v1830
        %2244 = vmatpush.bf16.msra.mxu0 %v1826
        %2245 = vmatpush.bf16.msra.mxu0 %v1822
        %2246 = vmatpush.bf16.msra.mxu0 %v1818
        %2247 = vmatmul.bf16.gmra.mxu0 %v1423
        %v2248 = vpop.f32.mrf.mxu0
        %v2249 = vadd.f32 %v1407, %v2248
        %v2250 = vpop.f32.mrf.mxu0
        %v2251 = vadd.f32 %v1409, %v2250
        %2252 = vdwg.mxu0
        %2253 = vmatpush.bf16.msra.mxu0 %v1878
        %2254 = vmatpush.bf16.msra.mxu0 %v1874
        %2255 = vmatpush.bf16.msra.mxu0 %v1870
        %2256 = vmatpush.bf16.msra.mxu0 %v1866
        %2257 = vmatpush.bf16.msra.mxu0 %v1862
        %2258 = vmatpush.bf16.msra.mxu0 %v1858
        %2259 = vmatpush.bf16.msra.mxu0 %v1854
        %2260 = vmatpush.bf16.msra.mxu0 %v1850
        %2261 = vmatmul.bf16.gmra.mxu0 %v1424
        %v2262 = vpop.f32.mrf.mxu0
        %v2263 = vadd.f32 %v2249, %v2262
        %v2264 = vpop.f32.mrf.mxu0
        %v2265 = vadd.f32 %v2251, %v2264
        %2266 = vdwg.mxu0
        %2267 = vmatpush.bf16.msra.mxu0 %v1910
        %2268 = vmatpush.bf16.msra.mxu0 %v1906
        %2269 = vmatpush.bf16.msra.mxu0 %v1902
        %2270 = vmatpush.bf16.msra.mxu0 %v1898
        %2271 = vmatpush.bf16.msra.mxu0 %v1894
        %2272 = vmatpush.bf16.msra.mxu0 %v1890
        %2273 = vmatpush.bf16.msra.mxu0 %v1886
        %2274 = vmatpush.bf16.msra.mxu0 %v1882
        %2275 = vmatmul.bf16.gmra.mxu0 %v1425
        %v2276 = vpop.f32.mrf.mxu0
        %v2277 = vadd.f32 %v2263, %v2276
        %v2278 = vpop.f32.mrf.mxu0
        %v2279 = vadd.f32 %v2265, %v2278
        %2280 = vdwg.mxu0
        %2281 = vmatpush.bf16.msra.mxu0 %v1942
        %2282 = vmatpush.bf16.msra.mxu0 %v1938
        %2283 = vmatpush.bf16.msra.mxu0 %v1934
        %2284 = vmatpush.bf16.msra.mxu0 %v1930
        %2285 = vmatpush.bf16.msra.mxu0 %v1926
        %2286 = vmatpush.bf16.msra.mxu0 %v1922
        %2287 = vmatpush.bf16.msra.mxu0 %v1918
        %2288 = vmatpush.bf16.msra.mxu0 %v1914
        %2289 = vmatmul.bf16.gmra.mxu0 %v1426
        %v2290 = vpop.f32.mrf.mxu0
        %v2291 = vadd.f32 %v2277, %v2290
        %v2292 = vpop.f32.mrf.mxu0
        %v2293 = vadd.f32 %v2279, %v2292
        %2294 = vdwg.mxu0
        %v2295 = vrot.slane %v224, 1
        %v2296 = vrot.slane %v225, 1
        %v2297 = vrot.slane %v226, 1
        %v2298 = vrot.slane %v227, 1
        %v2299 = vrot.slane %v228, 1
        %v2300 = vrot.slane %v229, 1
        %v2301 = vrot.slane %v230, 1
        %v2302 = vrot.slane %v231, 1
        %vm2303 = vcmp.lt.s32.totalorder %v233, 7
        %v2304 = vsel %vm2303, %v2295, %v2299
        %v2305 = vsel %vm2303, %v2296, %v2300
        %v2306 = vsel %vm2303, %v2297, %v2301
        %v2307 = vsel %vm2303, %v2298, %v2302
        %v2308 = vsel %vm2303, %v2299, %v2295
        %v2309 = vsel %vm2303, %v2300, %v2296
        %v2310 = vsel %vm2303, %v2301, %v2297
        %v2311 = vsel %vm2303, %v2302, %v2298
        %vm2312 = vcmp.lt.s32.totalorder %v233, 15
        %vm2313 = vcmp.lt.s32.totalorder %v234, 15
        %v2314 = vsel %vm2312, %v2304, 0.0
        %v2315 = vsel %vm2312, %v2305, 0.0
        %v2316 = vsel %vm2312, %v2306, 0.0
        %v2317 = vsel %vm2312, %v2307, 0.0
        %v2318 = vsel %vm2313, %v2308, 0.0
        %v2319 = vsel %vm2313, %v2309, 0.0
        %v2320 = vsel %vm2313, %v2310, 0.0
        %v2321 = vsel %vm2313, %v2311, 0.0
        %v2322 = vpack.c.bf16 %v2315, %v2314
        %v2323 = vpack.c.bf16 %v2317, %v2316
        %v2324 = vpack.c.bf16 %v2319, %v2318
        %v2325 = vpack.c.bf16 %v2321, %v2320
        %s2326 = scalar_lea.vmem [#allocation5], 2048
        %v2327 = vld [vmem:[%s2326] sm:$0xff]
        %v2328 = vld [vmem:[%s2326 + $0x8] sm:$0xff]
        %v2329 = vld [vmem:[%s2326 + $0x10] sm:$0xff]
        %v2330 = vld [vmem:[%s2326 + $0x18] sm:$0xff]
        %v2331 = vld [vmem:[%s2326 + $0x20] sm:$0xff]
        %v2332 = vld [vmem:[%s2326 + $0x28] sm:$0xff]
        %v2333 = vld [vmem:[%s2326 + $0x30] sm:$0xff]
        %v2334 = vld [vmem:[%s2326 + $0x38] sm:$0xff]
        %v2335 = vld [vmem:[%s2326 + $0x40] sm:$0xff]
        %v2336 = vld [vmem:[%s2326 + $0x48] sm:$0xff]
        %v2337 = vld [vmem:[%s2326 + $0x50] sm:$0xff]
        %v2338 = vld [vmem:[%s2326 + $0x58] sm:$0xff]
        %v2339 = vld [vmem:[%s2326 + $0x60] sm:$0xff]
        %v2340 = vld [vmem:[%s2326 + $0x68] sm:$0xff]
        %v2341 = vld [vmem:[%s2326 + $0x70] sm:$0xff]
        %v2342 = vld [vmem:[%s2326 + $0x78] sm:$0xff]
        %v2343 = vld [vmem:[%s2326 + $0x80] sm:$0xff]
        %v2344 = vld [vmem:[%s2326 + $0x88] sm:$0xff]
        %v2345 = vld [vmem:[%s2326 + $0x90] sm:$0xff]
        %v2346 = vld [vmem:[%s2326 + $0x98] sm:$0xff]
        %v2347 = vld [vmem:[%s2326 + $0xa0] sm:$0xff]
        %v2348 = vld [vmem:[%s2326 + $0xa8] sm:$0xff]
        %v2349 = vld [vmem:[%s2326 + $0xb0] sm:$0xff]
        %v2350 = vld [vmem:[%s2326 + $0xb8] sm:$0xff]
        %v2351 = vld [vmem:[%s2326 + $0xc0] sm:$0xff]
        %v2352 = vld [vmem:[%s2326 + $0xc8] sm:$0xff]
        %v2353 = vld [vmem:[%s2326 + $0xd0] sm:$0xff]
        %v2354 = vld [vmem:[%s2326 + $0xd8] sm:$0xff]
        %v2355 = vld [vmem:[%s2326 + $0xe0] sm:$0xff]
        %v2356 = vld [vmem:[%s2326 + $0xe8] sm:$0xff]
        %v2357 = vld [vmem:[%s2326 + $0xf0] sm:$0xff]
        %v2358 = vld [vmem:[%s2326 + $0xf8] sm:$0xff]
        %v2359 = vld [vmem:[%s2326 + $0x100] sm:$0xff]
        %v2360 = vld [vmem:[%s2326 + $0x108] sm:$0xff]
        %v2361 = vld [vmem:[%s2326 + $0x110] sm:$0xff]
        %v2362 = vld [vmem:[%s2326 + $0x118] sm:$0xff]
        %v2363 = vld [vmem:[%s2326 + $0x120] sm:$0xff]
        %v2364 = vld [vmem:[%s2326 + $0x128] sm:$0xff]
        %v2365 = vld [vmem:[%s2326 + $0x130] sm:$0xff]
        %v2366 = vld [vmem:[%s2326 + $0x138] sm:$0xff]
        %v2367 = vld [vmem:[%s2326 + $0x140] sm:$0xff]
        %v2368 = vld [vmem:[%s2326 + $0x148] sm:$0xff]
        %v2369 = vld [vmem:[%s2326 + $0x150] sm:$0xff]
        %v2370 = vld [vmem:[%s2326 + $0x158] sm:$0xff]
        %v2371 = vld [vmem:[%s2326 + $0x160] sm:$0xff]
        %v2372 = vld [vmem:[%s2326 + $0x168] sm:$0xff]
        %v2373 = vld [vmem:[%s2326 + $0x170] sm:$0xff]
        %v2374 = vld [vmem:[%s2326 + $0x178] sm:$0xff]
        %v2375 = vld [vmem:[%s2326 + $0x180] sm:$0xff]
        %v2376 = vld [vmem:[%s2326 + $0x188] sm:$0xff]
        %v2377 = vld [vmem:[%s2326 + $0x190] sm:$0xff]
        %v2378 = vld [vmem:[%s2326 + $0x198] sm:$0xff]
        %v2379 = vld [vmem:[%s2326 + $0x1a0] sm:$0xff]
        %v2380 = vld [vmem:[%s2326 + $0x1a8] sm:$0xff]
        %v2381 = vld [vmem:[%s2326 + $0x1b0] sm:$0xff]
        %v2382 = vld [vmem:[%s2326 + $0x1b8] sm:$0xff]
        %v2383 = vld [vmem:[%s2326 + $0x1c0] sm:$0xff]
        %v2384 = vld [vmem:[%s2326 + $0x1c8] sm:$0xff]
        %v2385 = vld [vmem:[%s2326 + $0x1d0] sm:$0xff]
        %v2386 = vld [vmem:[%s2326 + $0x1d8] sm:$0xff]
        %v2387 = vld [vmem:[%s2326 + $0x1e0] sm:$0xff]
        %v2388 = vld [vmem:[%s2326 + $0x1e8] sm:$0xff]
        %v2389 = vld [vmem:[%s2326 + $0x1f0] sm:$0xff]
        %v2390 = vld [vmem:[%s2326 + $0x1f8] sm:$0xff]
        %v2391 = vld [vmem:[%s2326 + $0x200] sm:$0xff]
        %v2392 = vld [vmem:[%s2326 + $0x208] sm:$0xff]
        %v2393 = vld [vmem:[%s2326 + $0x210] sm:$0xff]
        %v2394 = vld [vmem:[%s2326 + $0x218] sm:$0xff]
        %v2395 = vld [vmem:[%s2326 + $0x220] sm:$0xff]
        %v2396 = vld [vmem:[%s2326 + $0x228] sm:$0xff]
        %v2397 = vld [vmem:[%s2326 + $0x230] sm:$0xff]
        %v2398 = vld [vmem:[%s2326 + $0x238] sm:$0xff]
        %v2399 = vld [vmem:[%s2326 + $0x240] sm:$0xff]
        %v2400 = vld [vmem:[%s2326 + $0x248] sm:$0xff]
        %v2401 = vld [vmem:[%s2326 + $0x250] sm:$0xff]
        %v2402 = vld [vmem:[%s2326 + $0x258] sm:$0xff]
        %v2403 = vld [vmem:[%s2326 + $0x260] sm:$0xff]
        %v2404 = vld [vmem:[%s2326 + $0x268] sm:$0xff]
        %v2405 = vld [vmem:[%s2326 + $0x270] sm:$0xff]
        %v2406 = vld [vmem:[%s2326 + $0x278] sm:$0xff]
        %v2407 = vld [vmem:[%s2326 + $0x280] sm:$0xff]
        %v2408 = vld [vmem:[%s2326 + $0x288] sm:$0xff]
        %v2409 = vld [vmem:[%s2326 + $0x290] sm:$0xff]
        %v2410 = vld [vmem:[%s2326 + $0x298] sm:$0xff]
        %v2411 = vld [vmem:[%s2326 + $0x2a0] sm:$0xff]
        %v2412 = vld [vmem:[%s2326 + $0x2a8] sm:$0xff]
        %v2413 = vld [vmem:[%s2326 + $0x2b0] sm:$0xff]
        %v2414 = vld [vmem:[%s2326 + $0x2b8] sm:$0xff]
        %v2415 = vld [vmem:[%s2326 + $0x2c0] sm:$0xff]
        %v2416 = vld [vmem:[%s2326 + $0x2c8] sm:$0xff]
        %v2417 = vld [vmem:[%s2326 + $0x2d0] sm:$0xff]
        %v2418 = vld [vmem:[%s2326 + $0x2d8] sm:$0xff]
        %v2419 = vld [vmem:[%s2326 + $0x2e0] sm:$0xff]
        %v2420 = vld [vmem:[%s2326 + $0x2e8] sm:$0xff]
        %v2421 = vld [vmem:[%s2326 + $0x2f0] sm:$0xff]
        %v2422 = vld [vmem:[%s2326 + $0x2f8] sm:$0xff]
        %v2423 = vld [vmem:[%s2326 + $0x300] sm:$0xff]
        %v2424 = vld [vmem:[%s2326 + $0x308] sm:$0xff]
        %v2425 = vld [vmem:[%s2326 + $0x310] sm:$0xff]
        %v2426 = vld [vmem:[%s2326 + $0x318] sm:$0xff]
        %v2427 = vld [vmem:[%s2326 + $0x320] sm:$0xff]
        %v2428 = vld [vmem:[%s2326 + $0x328] sm:$0xff]
        %v2429 = vld [vmem:[%s2326 + $0x330] sm:$0xff]
        %v2430 = vld [vmem:[%s2326 + $0x338] sm:$0xff]
        %v2431 = vld [vmem:[%s2326 + $0x340] sm:$0xff]
        %v2432 = vld [vmem:[%s2326 + $0x348] sm:$0xff]
        %v2433 = vld [vmem:[%s2326 + $0x350] sm:$0xff]
        %v2434 = vld [vmem:[%s2326 + $0x358] sm:$0xff]
        %v2435 = vld [vmem:[%s2326 + $0x360] sm:$0xff]
        %v2436 = vld [vmem:[%s2326 + $0x368] sm:$0xff]
        %v2437 = vld [vmem:[%s2326 + $0x370] sm:$0xff]
        %v2438 = vld [vmem:[%s2326 + $0x378] sm:$0xff]
        %v2439 = vld [vmem:[%s2326 + $0x380] sm:$0xff]
        %v2440 = vld [vmem:[%s2326 + $0x388] sm:$0xff]
        %v2441 = vld [vmem:[%s2326 + $0x390] sm:$0xff]
        %v2442 = vld [vmem:[%s2326 + $0x398] sm:$0xff]
        %v2443 = vld [vmem:[%s2326 + $0x3a0] sm:$0xff]
        %v2444 = vld [vmem:[%s2326 + $0x3a8] sm:$0xff]
        %v2445 = vld [vmem:[%s2326 + $0x3b0] sm:$0xff]
        %v2446 = vld [vmem:[%s2326 + $0x3b8] sm:$0xff]
        %v2447 = vld [vmem:[%s2326 + $0x3c0] sm:$0xff]
        %v2448 = vld [vmem:[%s2326 + $0x3c8] sm:$0xff]
        %v2449 = vld [vmem:[%s2326 + $0x3d0] sm:$0xff]
        %v2450 = vld [vmem:[%s2326 + $0x3d8] sm:$0xff]
        %v2451 = vld [vmem:[%s2326 + $0x3e0] sm:$0xff]
        %v2452 = vld [vmem:[%s2326 + $0x3e8] sm:$0xff]
        %v2453 = vld [vmem:[%s2326 + $0x3f0] sm:$0xff]
        %v2454 = vld [vmem:[%s2326 + $0x3f8] sm:$0xff]
        %v2459 = vunpack.c.l.b16 %v2322
        %v2460 = vunpack.c.h.b16 %v2322
        %v2461 = vunpack.c.l.b16 %v2323
        %v2462 = vunpack.c.h.b16 %v2323
        %v2463 = vunpack.c.l.b16 %v2324
        %v2464 = vunpack.c.h.b16 %v2324
        %v2465 = vunpack.c.l.b16 %v2325
        %v2466 = vunpack.c.h.b16 %v2325
        %v2467 = vpack.c.b16 %v2463, %v2459
        %v2468 = vpack.c.b16 %v2464, %v2460
        %v2469 = vpack.c.b16 %v2465, %v2461
        %v2470 = vpack.c.b16 %v2466, %v2462
        %v2603 = vunpack.c.l.b16 %v2327
        %v2604 = vunpack.c.h.b16 %v2327
        %v2605 = vunpack.c.l.b16 %v2328
        %v2606 = vunpack.c.h.b16 %v2328
        %v2607 = vunpack.c.l.b16 %v2329
        %v2608 = vunpack.c.h.b16 %v2329
        %v2609 = vunpack.c.l.b16 %v2330
        %v2610 = vunpack.c.h.b16 %v2330
        %v2611 = vunpack.c.l.b16 %v2331
        %v2612 = vunpack.c.h.b16 %v2331
        %v2613 = vunpack.c.l.b16 %v2332
        %v2614 = vunpack.c.h.b16 %v2332
        %v2615 = vunpack.c.l.b16 %v2333
        %v2616 = vunpack.c.h.b16 %v2333
        %v2617 = vunpack.c.l.b16 %v2334
        %v2618 = vunpack.c.h.b16 %v2334
        %v2619 = vunpack.c.l.b16 %v2335
        %v2620 = vunpack.c.h.b16 %v2335
        %v2621 = vunpack.c.l.b16 %v2336
        %v2622 = vunpack.c.h.b16 %v2336
        %v2623 = vunpack.c.l.b16 %v2337
        %v2624 = vunpack.c.h.b16 %v2337
        %v2625 = vunpack.c.l.b16 %v2338
        %v2626 = vunpack.c.h.b16 %v2338
        %v2627 = vunpack.c.l.b16 %v2339
        %v2628 = vunpack.c.h.b16 %v2339
        %v2629 = vunpack.c.l.b16 %v2340
        %v2630 = vunpack.c.h.b16 %v2340
        %v2631 = vunpack.c.l.b16 %v2341
        %v2632 = vunpack.c.h.b16 %v2341
        %v2633 = vunpack.c.l.b16 %v2342
        %v2634 = vunpack.c.h.b16 %v2342
        %v2635 = vunpack.c.l.b16 %v2343
        %v2636 = vunpack.c.h.b16 %v2343
        %v2637 = vunpack.c.l.b16 %v2344
        %v2638 = vunpack.c.h.b16 %v2344
        %v2639 = vunpack.c.l.b16 %v2345
        %v2640 = vunpack.c.h.b16 %v2345
        %v2641 = vunpack.c.l.b16 %v2346
        %v2642 = vunpack.c.h.b16 %v2346
        %v2643 = vunpack.c.l.b16 %v2347
        %v2644 = vunpack.c.h.b16 %v2347
        %v2645 = vunpack.c.l.b16 %v2348
        %v2646 = vunpack.c.h.b16 %v2348
        %v2647 = vunpack.c.l.b16 %v2349
        %v2648 = vunpack.c.h.b16 %v2349
        %v2649 = vunpack.c.l.b16 %v2350
        %v2650 = vunpack.c.h.b16 %v2350
        %v2651 = vunpack.c.l.b16 %v2351
        %v2652 = vunpack.c.h.b16 %v2351
        %v2653 = vunpack.c.l.b16 %v2352
        %v2654 = vunpack.c.h.b16 %v2352
        %v2655 = vunpack.c.l.b16 %v2353
        %v2656 = vunpack.c.h.b16 %v2353
        %v2657 = vunpack.c.l.b16 %v2354
        %v2658 = vunpack.c.h.b16 %v2354
        %v2659 = vunpack.c.l.b16 %v2355
        %v2660 = vunpack.c.h.b16 %v2355
        %v2661 = vunpack.c.l.b16 %v2356
        %v2662 = vunpack.c.h.b16 %v2356
        %v2663 = vunpack.c.l.b16 %v2357
        %v2664 = vunpack.c.h.b16 %v2357
        %v2665 = vunpack.c.l.b16 %v2358
        %v2666 = vunpack.c.h.b16 %v2358
        %v2667 = vunpack.c.l.b16 %v2359
        %v2668 = vunpack.c.h.b16 %v2359
        %v2669 = vunpack.c.l.b16 %v2360
        %v2670 = vunpack.c.h.b16 %v2360
        %v2671 = vunpack.c.l.b16 %v2361
        %v2672 = vunpack.c.h.b16 %v2361
        %v2673 = vunpack.c.l.b16 %v2362
        %v2674 = vunpack.c.h.b16 %v2362
        %v2675 = vunpack.c.l.b16 %v2363
        %v2676 = vunpack.c.h.b16 %v2363
        %v2677 = vunpack.c.l.b16 %v2364
        %v2678 = vunpack.c.h.b16 %v2364
        %v2679 = vunpack.c.l.b16 %v2365
        %v2680 = vunpack.c.h.b16 %v2365
        %v2681 = vunpack.c.l.b16 %v2366
        %v2682 = vunpack.c.h.b16 %v2366
        %v2683 = vunpack.c.l.b16 %v2367
        %v2684 = vunpack.c.h.b16 %v2367
        %v2685 = vunpack.c.l.b16 %v2368
        %v2686 = vunpack.c.h.b16 %v2368
        %v2687 = vunpack.c.l.b16 %v2369
        %v2688 = vunpack.c.h.b16 %v2369
        %v2689 = vunpack.c.l.b16 %v2370
        %v2690 = vunpack.c.h.b16 %v2370
        %v2691 = vunpack.c.l.b16 %v2371
        %v2692 = vunpack.c.h.b16 %v2371
        %v2693 = vunpack.c.l.b16 %v2372
        %v2694 = vunpack.c.h.b16 %v2372
        %v2695 = vunpack.c.l.b16 %v2373
        %v2696 = vunpack.c.h.b16 %v2373
        %v2697 = vunpack.c.l.b16 %v2374
        %v2698 = vunpack.c.h.b16 %v2374
        %v2699 = vunpack.c.l.b16 %v2375
        %v2700 = vunpack.c.h.b16 %v2375
        %v2701 = vunpack.c.l.b16 %v2376
        %v2702 = vunpack.c.h.b16 %v2376
        %v2703 = vunpack.c.l.b16 %v2377
        %v2704 = vunpack.c.h.b16 %v2377
        %v2705 = vunpack.c.l.b16 %v2378
        %v2706 = vunpack.c.h.b16 %v2378
        %v2707 = vunpack.c.l.b16 %v2379
        %v2708 = vunpack.c.h.b16 %v2379
        %v2709 = vunpack.c.l.b16 %v2380
        %v2710 = vunpack.c.h.b16 %v2380
        %v2711 = vunpack.c.l.b16 %v2381
        %v2712 = vunpack.c.h.b16 %v2381
        %v2713 = vunpack.c.l.b16 %v2382
        %v2714 = vunpack.c.h.b16 %v2382
        %v2715 = vunpack.c.l.b16 %v2383
        %v2716 = vunpack.c.h.b16 %v2383
        %v2717 = vunpack.c.l.b16 %v2384
        %v2718 = vunpack.c.h.b16 %v2384
        %v2719 = vunpack.c.l.b16 %v2385
        %v2720 = vunpack.c.h.b16 %v2385
        %v2721 = vunpack.c.l.b16 %v2386
        %v2722 = vunpack.c.h.b16 %v2386
        %v2723 = vunpack.c.l.b16 %v2387
        %v2724 = vunpack.c.h.b16 %v2387
        %v2725 = vunpack.c.l.b16 %v2388
        %v2726 = vunpack.c.h.b16 %v2388
        %v2727 = vunpack.c.l.b16 %v2389
        %v2728 = vunpack.c.h.b16 %v2389
        %v2729 = vunpack.c.l.b16 %v2390
        %v2730 = vunpack.c.h.b16 %v2390
        %v2731 = vunpack.c.l.b16 %v2391
        %v2732 = vunpack.c.h.b16 %v2391
        %v2733 = vunpack.c.l.b16 %v2392
        %v2734 = vunpack.c.h.b16 %v2392
        %v2735 = vunpack.c.l.b16 %v2393
        %v2736 = vunpack.c.h.b16 %v2393
        %v2737 = vunpack.c.l.b16 %v2394
        %v2738 = vunpack.c.h.b16 %v2394
        %v2739 = vunpack.c.l.b16 %v2395
        %v2740 = vunpack.c.h.b16 %v2395
        %v2741 = vunpack.c.l.b16 %v2396
        %v2742 = vunpack.c.h.b16 %v2396
        %v2743 = vunpack.c.l.b16 %v2397
        %v2744 = vunpack.c.h.b16 %v2397
        %v2745 = vunpack.c.l.b16 %v2398
        %v2746 = vunpack.c.h.b16 %v2398
        %v2747 = vunpack.c.l.b16 %v2399
        %v2748 = vunpack.c.h.b16 %v2399
        %v2749 = vunpack.c.l.b16 %v2400
        %v2750 = vunpack.c.h.b16 %v2400
        %v2751 = vunpack.c.l.b16 %v2401
        %v2752 = vunpack.c.h.b16 %v2401
        %v2753 = vunpack.c.l.b16 %v2402
        %v2754 = vunpack.c.h.b16 %v2402
        %v2755 = vunpack.c.l.b16 %v2403
        %v2756 = vunpack.c.h.b16 %v2403
        %v2757 = vunpack.c.l.b16 %v2404
        %v2758 = vunpack.c.h.b16 %v2404
        %v2759 = vunpack.c.l.b16 %v2405
        %v2760 = vunpack.c.h.b16 %v2405
        %v2761 = vunpack.c.l.b16 %v2406
        %v2762 = vunpack.c.h.b16 %v2406
        %v2763 = vunpack.c.l.b16 %v2407
        %v2764 = vunpack.c.h.b16 %v2407
        %v2765 = vunpack.c.l.b16 %v2408
        %v2766 = vunpack.c.h.b16 %v2408
        %v2767 = vunpack.c.l.b16 %v2409
        %v2768 = vunpack.c.h.b16 %v2409
        %v2769 = vunpack.c.l.b16 %v2410
        %v2770 = vunpack.c.h.b16 %v2410
        %v2771 = vunpack.c.l.b16 %v2411
        %v2772 = vunpack.c.h.b16 %v2411
        %v2773 = vunpack.c.l.b16 %v2412
        %v2774 = vunpack.c.h.b16 %v2412
        %v2775 = vunpack.c.l.b16 %v2413
        %v2776 = vunpack.c.h.b16 %v2413
        %v2777 = vunpack.c.l.b16 %v2414
        %v2778 = vunpack.c.h.b16 %v2414
        %v2779 = vunpack.c.l.b16 %v2415
        %v2780 = vunpack.c.h.b16 %v2415
        %v2781 = vunpack.c.l.b16 %v2416
        %v2782 = vunpack.c.h.b16 %v2416
        %v2783 = vunpack.c.l.b16 %v2417
        %v2784 = vunpack.c.h.b16 %v2417
        %v2785 = vunpack.c.l.b16 %v2418
        %v2786 = vunpack.c.h.b16 %v2418
        %v2787 = vunpack.c.l.b16 %v2419
        %v2788 = vunpack.c.h.b16 %v2419
        %v2789 = vunpack.c.l.b16 %v2420
        %v2790 = vunpack.c.h.b16 %v2420
        %v2791 = vunpack.c.l.b16 %v2421
        %v2792 = vunpack.c.h.b16 %v2421
        %v2793 = vunpack.c.l.b16 %v2422
        %v2794 = vunpack.c.h.b16 %v2422
        %v2795 = vunpack.c.l.b16 %v2423
        %v2796 = vunpack.c.h.b16 %v2423
        %v2797 = vunpack.c.l.b16 %v2424
        %v2798 = vunpack.c.h.b16 %v2424
        %v2799 = vunpack.c.l.b16 %v2425
        %v2800 = vunpack.c.h.b16 %v2425
        %v2801 = vunpack.c.l.b16 %v2426
        %v2802 = vunpack.c.h.b16 %v2426
        %v2803 = vunpack.c.l.b16 %v2427
        %v2804 = vunpack.c.h.b16 %v2427
        %v2805 = vunpack.c.l.b16 %v2428
        %v2806 = vunpack.c.h.b16 %v2428
        %v2807 = vunpack.c.l.b16 %v2429
        %v2808 = vunpack.c.h.b16 %v2429
        %v2809 = vunpack.c.l.b16 %v2430
        %v2810 = vunpack.c.h.b16 %v2430
        %v2811 = vunpack.c.l.b16 %v2431
        %v2812 = vunpack.c.h.b16 %v2431
        %v2813 = vunpack.c.l.b16 %v2432
        %v2814 = vunpack.c.h.b16 %v2432
        %v2815 = vunpack.c.l.b16 %v2433
        %v2816 = vunpack.c.h.b16 %v2433
        %v2817 = vunpack.c.l.b16 %v2434
        %v2818 = vunpack.c.h.b16 %v2434
        %v2819 = vunpack.c.l.b16 %v2435
        %v2820 = vunpack.c.h.b16 %v2435
        %v2821 = vunpack.c.l.b16 %v2436
        %v2822 = vunpack.c.h.b16 %v2436
        %v2823 = vunpack.c.l.b16 %v2437
        %v2824 = vunpack.c.h.b16 %v2437
        %v2825 = vunpack.c.l.b16 %v2438
        %v2826 = vunpack.c.h.b16 %v2438
        %v2827 = vunpack.c.l.b16 %v2439
        %v2828 = vunpack.c.h.b16 %v2439
        %v2829 = vunpack.c.l.b16 %v2440
        %v2830 = vunpack.c.h.b16 %v2440
        %v2831 = vunpack.c.l.b16 %v2441
        %v2832 = vunpack.c.h.b16 %v2441
        %v2833 = vunpack.c.l.b16 %v2442
        %v2834 = vunpack.c.h.b16 %v2442
        %v2835 = vunpack.c.l.b16 %v2443
        %v2836 = vunpack.c.h.b16 %v2443
        %v2837 = vunpack.c.l.b16 %v2444
        %v2838 = vunpack.c.h.b16 %v2444
        %v2839 = vunpack.c.l.b16 %v2445
        %v2840 = vunpack.c.h.b16 %v2445
        %v2841 = vunpack.c.l.b16 %v2446
        %v2842 = vunpack.c.h.b16 %v2446
        %v2843 = vunpack.c.l.b16 %v2447
        %v2844 = vunpack.c.h.b16 %v2447
        %v2845 = vunpack.c.l.b16 %v2448
        %v2846 = vunpack.c.h.b16 %v2448
        %v2847 = vunpack.c.l.b16 %v2449
        %v2848 = vunpack.c.h.b16 %v2449
        %v2849 = vunpack.c.l.b16 %v2450
        %v2850 = vunpack.c.h.b16 %v2450
        %v2851 = vunpack.c.l.b16 %v2451
        %v2852 = vunpack.c.h.b16 %v2451
        %v2853 = vunpack.c.l.b16 %v2452
        %v2854 = vunpack.c.h.b16 %v2452
        %v2855 = vunpack.c.l.b16 %v2453
        %v2856 = vunpack.c.h.b16 %v2453
        %v2857 = vunpack.c.l.b16 %v2454
        %v2858 = vunpack.c.h.b16 %v2454
        %v2859 = vpack.c.b16 %v2607, %v2603
        %v2860 = vpack.c.b16 %v2608, %v2604
        %v2861 = vpack.c.b16 %v2609, %v2605
        %v2862 = vpack.c.b16 %v2610, %v2606
        %v2863 = vpack.c.b16 %v2615, %v2611
        %v2864 = vpack.c.b16 %v2616, %v2612
        %v2865 = vpack.c.b16 %v2617, %v2613
        %v2866 = vpack.c.b16 %v2618, %v2614
        %v2867 = vpack.c.b16 %v2623, %v2619
        %v2868 = vpack.c.b16 %v2624, %v2620
        %v2869 = vpack.c.b16 %v2625, %v2621
        %v2870 = vpack.c.b16 %v2626, %v2622
        %v2871 = vpack.c.b16 %v2631, %v2627
        %v2872 = vpack.c.b16 %v2632, %v2628
        %v2873 = vpack.c.b16 %v2633, %v2629
        %v2874 = vpack.c.b16 %v2634, %v2630
        %v2875 = vpack.c.b16 %v2639, %v2635
        %v2876 = vpack.c.b16 %v2640, %v2636
        %v2877 = vpack.c.b16 %v2641, %v2637
        %v2878 = vpack.c.b16 %v2642, %v2638
        %v2879 = vpack.c.b16 %v2647, %v2643
        %v2880 = vpack.c.b16 %v2648, %v2644
        %v2881 = vpack.c.b16 %v2649, %v2645
        %v2882 = vpack.c.b16 %v2650, %v2646
        %v2883 = vpack.c.b16 %v2655, %v2651
        %v2884 = vpack.c.b16 %v2656, %v2652
        %v2885 = vpack.c.b16 %v2657, %v2653
        %v2886 = vpack.c.b16 %v2658, %v2654
        %v2887 = vpack.c.b16 %v2663, %v2659
        %v2888 = vpack.c.b16 %v2664, %v2660
        %v2889 = vpack.c.b16 %v2665, %v2661
        %v2890 = vpack.c.b16 %v2666, %v2662
        %v2891 = vpack.c.b16 %v2671, %v2667
        %v2892 = vpack.c.b16 %v2672, %v2668
        %v2893 = vpack.c.b16 %v2673, %v2669
        %v2894 = vpack.c.b16 %v2674, %v2670
        %v2895 = vpack.c.b16 %v2679, %v2675
        %v2896 = vpack.c.b16 %v2680, %v2676
        %v2897 = vpack.c.b16 %v2681, %v2677
        %v2898 = vpack.c.b16 %v2682, %v2678
        %v2899 = vpack.c.b16 %v2687, %v2683
        %v2900 = vpack.c.b16 %v2688, %v2684
        %v2901 = vpack.c.b16 %v2689, %v2685
        %v2902 = vpack.c.b16 %v2690, %v2686
        %v2903 = vpack.c.b16 %v2695, %v2691
        %v2904 = vpack.c.b16 %v2696, %v2692
        %v2905 = vpack.c.b16 %v2697, %v2693
        %v2906 = vpack.c.b16 %v2698, %v2694
        %v2907 = vpack.c.b16 %v2703, %v2699
        %v2908 = vpack.c.b16 %v2704, %v2700
        %v2909 = vpack.c.b16 %v2705, %v2701
        %v2910 = vpack.c.b16 %v2706, %v2702
        %v2911 = vpack.c.b16 %v2711, %v2707
        %v2912 = vpack.c.b16 %v2712, %v2708
        %v2913 = vpack.c.b16 %v2713, %v2709
        %v2914 = vpack.c.b16 %v2714, %v2710
        %v2915 = vpack.c.b16 %v2719, %v2715
        %v2916 = vpack.c.b16 %v2720, %v2716
        %v2917 = vpack.c.b16 %v2721, %v2717
        %v2918 = vpack.c.b16 %v2722, %v2718
        %v2919 = vpack.c.b16 %v2727, %v2723
        %v2920 = vpack.c.b16 %v2728, %v2724
        %v2921 = vpack.c.b16 %v2729, %v2725
        %v2922 = vpack.c.b16 %v2730, %v2726
        %v2923 = vpack.c.b16 %v2735, %v2731
        %v2924 = vpack.c.b16 %v2736, %v2732
        %v2925 = vpack.c.b16 %v2737, %v2733
        %v2926 = vpack.c.b16 %v2738, %v2734
        %v2927 = vpack.c.b16 %v2743, %v2739
        %v2928 = vpack.c.b16 %v2744, %v2740
        %v2929 = vpack.c.b16 %v2745, %v2741
        %v2930 = vpack.c.b16 %v2746, %v2742
        %v2931 = vpack.c.b16 %v2751, %v2747
        %v2932 = vpack.c.b16 %v2752, %v2748
        %v2933 = vpack.c.b16 %v2753, %v2749
        %v2934 = vpack.c.b16 %v2754, %v2750
        %v2935 = vpack.c.b16 %v2759, %v2755
        %v2936 = vpack.c.b16 %v2760, %v2756
        %v2937 = vpack.c.b16 %v2761, %v2757
        %v2938 = vpack.c.b16 %v2762, %v2758
        %v2939 = vpack.c.b16 %v2767, %v2763
        %v2940 = vpack.c.b16 %v2768, %v2764
        %v2941 = vpack.c.b16 %v2769, %v2765
        %v2942 = vpack.c.b16 %v2770, %v2766
        %v2943 = vpack.c.b16 %v2775, %v2771
        %v2944 = vpack.c.b16 %v2776, %v2772
        %v2945 = vpack.c.b16 %v2777, %v2773
        %v2946 = vpack.c.b16 %v2778, %v2774
        %v2947 = vpack.c.b16 %v2783, %v2779
        %v2948 = vpack.c.b16 %v2784, %v2780
        %v2949 = vpack.c.b16 %v2785, %v2781
        %v2950 = vpack.c.b16 %v2786, %v2782
        %v2951 = vpack.c.b16 %v2791, %v2787
        %v2952 = vpack.c.b16 %v2792, %v2788
        %v2953 = vpack.c.b16 %v2793, %v2789
        %v2954 = vpack.c.b16 %v2794, %v2790
        %v2955 = vpack.c.b16 %v2799, %v2795
        %v2956 = vpack.c.b16 %v2800, %v2796
        %v2957 = vpack.c.b16 %v2801, %v2797
        %v2958 = vpack.c.b16 %v2802, %v2798
        %v2959 = vpack.c.b16 %v2807, %v2803
        %v2960 = vpack.c.b16 %v2808, %v2804
        %v2961 = vpack.c.b16 %v2809, %v2805
        %v2962 = vpack.c.b16 %v2810, %v2806
        %v2963 = vpack.c.b16 %v2815, %v2811
        %v2964 = vpack.c.b16 %v2816, %v2812
        %v2965 = vpack.c.b16 %v2817, %v2813
        %v2966 = vpack.c.b16 %v2818, %v2814
        %v2967 = vpack.c.b16 %v2823, %v2819
        %v2968 = vpack.c.b16 %v2824, %v2820
        %v2969 = vpack.c.b16 %v2825, %v2821
        %v2970 = vpack.c.b16 %v2826, %v2822
        %v2971 = vpack.c.b16 %v2831, %v2827
        %v2972 = vpack.c.b16 %v2832, %v2828
        %v2973 = vpack.c.b16 %v2833, %v2829
        %v2974 = vpack.c.b16 %v2834, %v2830
        %v2975 = vpack.c.b16 %v2839, %v2835
        %v2976 = vpack.c.b16 %v2840, %v2836
        %v2977 = vpack.c.b16 %v2841, %v2837
        %v2978 = vpack.c.b16 %v2842, %v2838
        %v2979 = vpack.c.b16 %v2847, %v2843
        %v2980 = vpack.c.b16 %v2848, %v2844
        %v2981 = vpack.c.b16 %v2849, %v2845
        %v2982 = vpack.c.b16 %v2850, %v2846
        %v2983 = vpack.c.b16 %v2855, %v2851
        %v2984 = vpack.c.b16 %v2856, %v2852
        %v2985 = vpack.c.b16 %v2857, %v2853
        %v2986 = vpack.c.b16 %v2858, %v2854
        %3115 = vmatpush.bf16.msra.mxu0 %v2887
        %3116 = vmatpush.bf16.msra.mxu0 %v2883
        %3117 = vmatpush.bf16.msra.mxu0 %v2879
        %3118 = vmatpush.bf16.msra.mxu0 %v2875
        %3119 = vmatpush.bf16.msra.mxu0 %v2871
        %3120 = vmatpush.bf16.msra.mxu0 %v2867
        %3121 = vmatpush.bf16.msra.mxu0 %v2863
        %3122 = vmatpush.bf16.msra.mxu0 %v2859
        %3123 = vmatmul.bf16.gmra.mxu0 %v2467
        %v3124 = vpop.f32.mrf.mxu0
        %v3125 = vadd.f32 0.0, %v3124
        %v3126 = vpop.f32.mrf.mxu0
        %v3127 = vadd.f32 0.0, %v3126
        %3128 = vdwg.mxu0
        %3129 = vmatpush.bf16.msra.mxu0 %v2919
        %3130 = vmatpush.bf16.msra.mxu0 %v2915
        %3131 = vmatpush.bf16.msra.mxu0 %v2911
        %3132 = vmatpush.bf16.msra.mxu0 %v2907
        %3133 = vmatpush.bf16.msra.mxu0 %v2903
        %3134 = vmatpush.bf16.msra.mxu0 %v2899
        %3135 = vmatpush.bf16.msra.mxu0 %v2895
        %3136 = vmatpush.bf16.msra.mxu0 %v2891
        %3137 = vmatmul.bf16.gmra.mxu0 %v2468
        %v3138 = vpop.f32.mrf.mxu0
        %v3139 = vadd.f32 %v3125, %v3138
        %v3140 = vpop.f32.mrf.mxu0
        %v3141 = vadd.f32 %v3127, %v3140
        %3142 = vdwg.mxu0
        %3143 = vmatpush.bf16.msra.mxu0 %v2951
        %3144 = vmatpush.bf16.msra.mxu0 %v2947
        %3145 = vmatpush.bf16.msra.mxu0 %v2943
        %3146 = vmatpush.bf16.msra.mxu0 %v2939
        %3147 = vmatpush.bf16.msra.mxu0 %v2935
        %3148 = vmatpush.bf16.msra.mxu0 %v2931
        %3149 = vmatpush.bf16.msra.mxu0 %v2927
        %3150 = vmatpush.bf16.msra.mxu0 %v2923
        %3151 = vmatmul.bf16.gmra.mxu0 %v2469
        %v3152 = vpop.f32.mrf.mxu0
        %v3153 = vadd.f32 %v3139, %v3152
        %v3154 = vpop.f32.mrf.mxu0
        %v3155 = vadd.f32 %v3141, %v3154
        %3156 = vdwg.mxu0
        %3157 = vmatpush.bf16.msra.mxu0 %v2983
        %3158 = vmatpush.bf16.msra.mxu0 %v2979
        %3159 = vmatpush.bf16.msra.mxu0 %v2975
        %3160 = vmatpush.bf16.msra.mxu0 %v2971
        %3161 = vmatpush.bf16.msra.mxu0 %v2967
        %3162 = vmatpush.bf16.msra.mxu0 %v2963
        %3163 = vmatpush.bf16.msra.mxu0 %v2959
        %3164 = vmatpush.bf16.msra.mxu0 %v2955
        %3165 = vmatmul.bf16.gmra.mxu0 %v2470
        %v3166 = vpop.f32.mrf.mxu0
        %v3167 = vadd.f32 %v3153, %v3166
        %v3168 = vpop.f32.mrf.mxu0
        %v3169 = vadd.f32 %v3155, %v3168
        %3170 = vdwg.mxu0
        %3171 = vmatpush.bf16.msra.mxu0 %v2888
        %3172 = vmatpush.bf16.msra.mxu0 %v2884
        %3173 = vmatpush.bf16.msra.mxu0 %v2880
        %3174 = vmatpush.bf16.msra.mxu0 %v2876
        %3175 = vmatpush.bf16.msra.mxu0 %v2872
        %3176 = vmatpush.bf16.msra.mxu0 %v2868
        %3177 = vmatpush.bf16.msra.mxu0 %v2864
        %3178 = vmatpush.bf16.msra.mxu0 %v2860
        %3179 = vmatmul.bf16.gmra.mxu0 %v2467
        %v3180 = vpop.f32.mrf.mxu0
        %v3181 = vadd.f32 0.0, %v3180
        %v3182 = vpop.f32.mrf.mxu0
        %v3183 = vadd.f32 0.0, %v3182
        %3184 = vdwg.mxu0
        %3185 = vmatpush.bf16.msra.mxu0 %v2920
        %3186 = vmatpush.bf16.msra.mxu0 %v2916
        %3187 = vmatpush.bf16.msra.mxu0 %v2912
        %3188 = vmatpush.bf16.msra.mxu0 %v2908
        %3189 = vmatpush.bf16.msra.mxu0 %v2904
        %3190 = vmatpush.bf16.msra.mxu0 %v2900
        %3191 = vmatpush.bf16.msra.mxu0 %v2896
        %3192 = vmatpush.bf16.msra.mxu0 %v2892
        %3193 = vmatmul.bf16.gmra.mxu0 %v2468
        %v3194 = vpop.f32.mrf.mxu0
        %v3195 = vadd.f32 %v3181, %v3194
        %v3196 = vpop.f32.mrf.mxu0
        %v3197 = vadd.f32 %v3183, %v3196
        %3198 = vdwg.mxu0
        %3199 = vmatpush.bf16.msra.mxu0 %v2952
        %3200 = vmatpush.bf16.msra.mxu0 %v2948
        %3201 = vmatpush.bf16.msra.mxu0 %v2944
        %3202 = vmatpush.bf16.msra.mxu0 %v2940
        %3203 = vmatpush.bf16.msra.mxu0 %v2936
        %3204 = vmatpush.bf16.msra.mxu0 %v2932
        %3205 = vmatpush.bf16.msra.mxu0 %v2928
        %3206 = vmatpush.bf16.msra.mxu0 %v2924
        %3207 = vmatmul.bf16.gmra.mxu0 %v2469
        %v3208 = vpop.f32.mrf.mxu0
        %v3209 = vadd.f32 %v3195, %v3208
        %v3210 = vpop.f32.mrf.mxu0
        %v3211 = vadd.f32 %v3197, %v3210
        %3212 = vdwg.mxu0
        %3213 = vmatpush.bf16.msra.mxu0 %v2984
        %3214 = vmatpush.bf16.msra.mxu0 %v2980
        %3215 = vmatpush.bf16.msra.mxu0 %v2976
        %3216 = vmatpush.bf16.msra.mxu0 %v2972
        %3217 = vmatpush.bf16.msra.mxu0 %v2968
        %3218 = vmatpush.bf16.msra.mxu0 %v2964
        %3219 = vmatpush.bf16.msra.mxu0 %v2960
        %3220 = vmatpush.bf16.msra.mxu0 %v2956
        %3221 = vmatmul.bf16.gmra.mxu0 %v2470
        %v3222 = vpop.f32.mrf.mxu0
        %v3223 = vadd.f32 %v3209, %v3222
        %v3224 = vpop.f32.mrf.mxu0
        %v3225 = vadd.f32 %v3211, %v3224
        %3226 = vdwg.mxu0
        %3227 = vmatpush.bf16.msra.mxu0 %v2889
        %3228 = vmatpush.bf16.msra.mxu0 %v2885
        %3229 = vmatpush.bf16.msra.mxu0 %v2881
        %3230 = vmatpush.bf16.msra.mxu0 %v2877
        %3231 = vmatpush.bf16.msra.mxu0 %v2873
        %3232 = vmatpush.bf16.msra.mxu0 %v2869
        %3233 = vmatpush.bf16.msra.mxu0 %v2865
        %3234 = vmatpush.bf16.msra.mxu0 %v2861
        %3235 = vmatmul.bf16.gmra.mxu0 %v2467
        %v3236 = vpop.f32.mrf.mxu0
        %v3237 = vadd.f32 0.0, %v3236
        %v3238 = vpop.f32.mrf.mxu0
        %v3239 = vadd.f32 0.0, %v3238
        %3240 = vdwg.mxu0
        %3241 = vmatpush.bf16.msra.mxu0 %v2921
        %3242 = vmatpush.bf16.msra.mxu0 %v2917
        %3243 = vmatpush.bf16.msra.mxu0 %v2913
        %3244 = vmatpush.bf16.msra.mxu0 %v2909
        %3245 = vmatpush.bf16.msra.mxu0 %v2905
        %3246 = vmatpush.bf16.msra.mxu0 %v2901
        %3247 = vmatpush.bf16.msra.mxu0 %v2897
        %3248 = vmatpush.bf16.msra.mxu0 %v2893
        %3249 = vmatmul.bf16.gmra.mxu0 %v2468
        %v3250 = vpop.f32.mrf.mxu0
        %v3251 = vadd.f32 %v3237, %v3250
        %v3252 = vpop.f32.mrf.mxu0
        %v3253 = vadd.f32 %v3239, %v3252
        %3254 = vdwg.mxu0
        %3255 = vmatpush.bf16.msra.mxu0 %v2953
        %3256 = vmatpush.bf16.msra.mxu0 %v2949
        %3257 = vmatpush.bf16.msra.mxu0 %v2945
        %3258 = vmatpush.bf16.msra.mxu0 %v2941
        %3259 = vmatpush.bf16.msra.mxu0 %v2937
        %3260 = vmatpush.bf16.msra.mxu0 %v2933
        %3261 = vmatpush.bf16.msra.mxu0 %v2929
        %3262 = vmatpush.bf16.msra.mxu0 %v2925
        %3263 = vmatmul.bf16.gmra.mxu0 %v2469
        %v3264 = vpop.f32.mrf.mxu0
        %v3265 = vadd.f32 %v3251, %v3264
        %v3266 = vpop.f32.mrf.mxu0
        %v3267 = vadd.f32 %v3253, %v3266
        %3268 = vdwg.mxu0
        %3269 = vmatpush.bf16.msra.mxu0 %v2985
        %3270 = vmatpush.bf16.msra.mxu0 %v2981
        %3271 = vmatpush.bf16.msra.mxu0 %v2977
        %3272 = vmatpush.bf16.msra.mxu0 %v2973
        %3273 = vmatpush.bf16.msra.mxu0 %v2969
        %3274 = vmatpush.bf16.msra.mxu0 %v2965
        %3275 = vmatpush.bf16.msra.mxu0 %v2961
        %3276 = vmatpush.bf16.msra.mxu0 %v2957
        %3277 = vmatmul.bf16.gmra.mxu0 %v2470
        %v3278 = vpop.f32.mrf.mxu0
        %v3279 = vadd.f32 %v3265, %v3278
        %v3280 = vpop.f32.mrf.mxu0
        %v3281 = vadd.f32 %v3267, %v3280
        %3282 = vdwg.mxu0
        %3283 = vmatpush.bf16.msra.mxu0 %v2890
        %3284 = vmatpush.bf16.msra.mxu0 %v2886
        %3285 = vmatpush.bf16.msra.mxu0 %v2882
        %3286 = vmatpush.bf16.msra.mxu0 %v2878
        %3287 = vmatpush.bf16.msra.mxu0 %v2874
        %3288 = vmatpush.bf16.msra.mxu0 %v2870
        %3289 = vmatpush.bf16.msra.mxu0 %v2866
        %3290 = vmatpush.bf16.msra.mxu0 %v2862
        %3291 = vmatmul.bf16.gmra.mxu0 %v2467
        %v3292 = vpop.f32.mrf.mxu0
        %v3293 = vadd.f32 0.0, %v3292
        %v3294 = vpop.f32.mrf.mxu0
        %v3295 = vadd.f32 0.0, %v3294
        %3296 = vdwg.mxu0
        %3297 = vmatpush.bf16.msra.mxu0 %v2922
        %3298 = vmatpush.bf16.msra.mxu0 %v2918
        %3299 = vmatpush.bf16.msra.mxu0 %v2914
        %3300 = vmatpush.bf16.msra.mxu0 %v2910
        %3301 = vmatpush.bf16.msra.mxu0 %v2906
        %3302 = vmatpush.bf16.msra.mxu0 %v2902
        %3303 = vmatpush.bf16.msra.mxu0 %v2898
        %3304 = vmatpush.bf16.msra.mxu0 %v2894
        %3305 = vmatmul.bf16.gmra.mxu0 %v2468
        %v3306 = vpop.f32.mrf.mxu0
        %v3307 = vadd.f32 %v3293, %v3306
        %v3308 = vpop.f32.mrf.mxu0
        %v3309 = vadd.f32 %v3295, %v3308
        %3310 = vdwg.mxu0
        %3311 = vmatpush.bf16.msra.mxu0 %v2954
        %3312 = vmatpush.bf16.msra.mxu0 %v2950
        %3313 = vmatpush.bf16.msra.mxu0 %v2946
        %3314 = vmatpush.bf16.msra.mxu0 %v2942
        %3315 = vmatpush.bf16.msra.mxu0 %v2938
        %3316 = vmatpush.bf16.msra.mxu0 %v2934
        %3317 = vmatpush.bf16.msra.mxu0 %v2930
        %3318 = vmatpush.bf16.msra.mxu0 %v2926
        %3319 = vmatmul.bf16.gmra.mxu0 %v2469
        %v3320 = vpop.f32.mrf.mxu0
        %v3321 = vadd.f32 %v3307, %v3320
        %v3322 = vpop.f32.mrf.mxu0
        %v3323 = vadd.f32 %v3309, %v3322
        %3324 = vdwg.mxu0
        %3325 = vmatpush.bf16.msra.mxu0 %v2986
        %3326 = vmatpush.bf16.msra.mxu0 %v2982
        %3327 = vmatpush.bf16.msra.mxu0 %v2978
        %3328 = vmatpush.bf16.msra.mxu0 %v2974
        %3329 = vmatpush.bf16.msra.mxu0 %v2970
        %3330 = vmatpush.bf16.msra.mxu0 %v2966
        %3331 = vmatpush.bf16.msra.mxu0 %v2962
        %3332 = vmatpush.bf16.msra.mxu0 %v2958
        %3333 = vmatmul.bf16.gmra.mxu0 %v2470
        %v3334 = vpop.f32.mrf.mxu0
        %v3335 = vadd.f32 %v3321, %v3334
        %v3336 = vpop.f32.mrf.mxu0
        %v3337 = vadd.f32 %v3323, %v3336
        %3338 = vdwg.mxu0
        %v3339 = vadd.f32 %v2123, %v3167
        %v3340 = vadd.f32 %v2179, %v3223
        %v3341 = vadd.f32 %v2235, %v3279
        %v3342 = vadd.f32 %v2291, %v3335
        %v3343 = vadd.f32 %v2125, %v3169
        %v3344 = vadd.f32 %v2181, %v3225
        %v3345 = vadd.f32 %v2237, %v3281
        %v3346 = vadd.f32 %v2293, %v3337
        %v3347 = vld [vmem:[#allocation7] sm:$0xf]
        %v3349 = vperm.slane %v3347, 0
        %v3350 = vperm.slane %v3347, 1
        %v3351 = vperm.slane %v3347, 2
        %v3352 = vperm.slane %v3347, 3
        %v3357 = vadd.f32 %v3339, %v3349
        %v3358 = vadd.f32 %v3340, %v3350
        %v3359 = vadd.f32 %v3341, %v3351
        %v3360 = vadd.f32 %v3342, %v3352
        %v3361 = vadd.f32 %v3343, %v3349
        %v3362 = vadd.f32 %v3344, %v3350
        %v3363 = vadd.f32 %v3345, %v3351
        %v3364 = vadd.f32 %v3346, %v3352
        %vm3365 = vcmp.gt.f32.partialorder %v3357, 0.0
        %vm3366 = vcmp.gt.f32.partialorder %v3358, 0.0
        %vm3367 = vcmp.gt.f32.partialorder %v3359, 0.0
        %vm3368 = vcmp.gt.f32.partialorder %v3360, 0.0
        %vm3369 = vcmp.gt.f32.partialorder %v3361, 0.0
        %vm3370 = vcmp.gt.f32.partialorder %v3362, 0.0
        %vm3371 = vcmp.gt.f32.partialorder %v3363, 0.0
        %vm3372 = vcmp.gt.f32.partialorder %v3364, 0.0
        %v3373 = vmul.f32 %v3357, 0.1
        %v3374 = vmul.f32 %v3358, 0.1
        %v3375 = vmul.f32 %v3359, 0.1
        %v3376 = vmul.f32 %v3360, 0.1
        %v3377 = vmul.f32 %v3361, 0.1
        %v3378 = vmul.f32 %v3362, 0.1
        %v3379 = vmul.f32 %v3363, 0.1
        %v3380 = vmul.f32 %v3364, 0.1
        %v3381 = vsel %vm3365, %v3357, %v3373
        %v3382 = vsel %vm3366, %v3358, %v3374
        %v3383 = vsel %vm3367, %v3359, %v3375
        %v3384 = vsel %vm3368, %v3360, %v3376
        %v3385 = vsel %vm3369, %v3361, %v3377
        %v3386 = vsel %vm3370, %v3362, %v3378
        %v3387 = vsel %vm3371, %v3363, %v3379
        %v3388 = vsel %vm3372, %v3364, %v3380
        %v3389 = vrot.slane %v3381, 7
        %v3390 = vrot.slane %v3382, 7
        %v3391 = vrot.slane %v3383, 7
        %v3392 = vrot.slane %v3384, 7
        %v3393 = vrot.slane %v3385, 7
        %v3394 = vrot.slane %v3386, 7
        %v3395 = vrot.slane %v3387, 7
        %v3396 = vrot.slane %v3388, 7
        %v3397 = vsel %vm243, %v3389, %v3393
        %v3398 = vsel %vm243, %v3390, %v3394
        %v3399 = vsel %vm243, %v3391, %v3395
        %v3400 = vsel %vm243, %v3392, %v3396
        %v3401 = vsel %vm243, %v3393, %v3389
        %v3402 = vsel %vm243, %v3394, %v3390
        %v3403 = vsel %vm243, %v3395, %v3391
        %v3404 = vsel %vm243, %v3396, %v3392
        %v3405 = vsel %vm252, %v3401, 0.0
        %v3406 = vsel %vm252, %v3402, 0.0
        %v3407 = vsel %vm252, %v3403, 0.0
        %v3408 = vsel %vm252, %v3404, 0.0
        %v3409 = vsel %vm253, %v3397, 0.0
        %v3410 = vsel %vm253, %v3398, 0.0
        %v3411 = vsel %vm253, %v3399, 0.0
        %v3412 = vsel %vm253, %v3400, 0.0
        %v3413 = vpack.c.bf16 %v3406, %v3405
        %v3414 = vpack.c.bf16 %v3408, %v3407
        %v3415 = vpack.c.bf16 %v3410, %v3409
        %v3416 = vpack.c.bf16 %v3412, %v3411
        %s3417 = scalar_lea.vmem [#allocation5], 3072
        %v3418 = vld [vmem:[%s3417] sm:$0xff]
        %v3419 = vld [vmem:[%s3417 + $0x8] sm:$0xff]
        %v3420 = vld [vmem:[%s3417 + $0x10] sm:$0xff]
        %v3421 = vld [vmem:[%s3417 + $0x18] sm:$0xff]
        %v3422 = vld [vmem:[%s3417 + $0x20] sm:$0xff]
        %v3423 = vld [vmem:[%s3417 + $0x28] sm:$0xff]
        %v3424 = vld [vmem:[%s3417 + $0x30] sm:$0xff]
        %v3425 = vld [vmem:[%s3417 + $0x38] sm:$0xff]
        %v3426 = vld [vmem:[%s3417 + $0x40] sm:$0xff]
        %v3427 = vld [vmem:[%s3417 + $0x48] sm:$0xff]
        %v3428 = vld [vmem:[%s3417 + $0x50] sm:$0xff]
        %v3429 = vld [vmem:[%s3417 + $0x58] sm:$0xff]
        %v3430 = vld [vmem:[%s3417 + $0x60] sm:$0xff]
        %v3431 = vld [vmem:[%s3417 + $0x68] sm:$0xff]
        %v3432 = vld [vmem:[%s3417 + $0x70] sm:$0xff]
        %v3433 = vld [vmem:[%s3417 + $0x78] sm:$0xff]
        %v3434 = vld [vmem:[%s3417 + $0x80] sm:$0xff]
        %v3435 = vld [vmem:[%s3417 + $0x88] sm:$0xff]
        %v3436 = vld [vmem:[%s3417 + $0x90] sm:$0xff]
        %v3437 = vld [vmem:[%s3417 + $0x98] sm:$0xff]
        %v3438 = vld [vmem:[%s3417 + $0xa0] sm:$0xff]
        %v3439 = vld [vmem:[%s3417 + $0xa8] sm:$0xff]
        %v3440 = vld [vmem:[%s3417 + $0xb0] sm:$0xff]
        %v3441 = vld [vmem:[%s3417 + $0xb8] sm:$0xff]
        %v3442 = vld [vmem:[%s3417 + $0xc0] sm:$0xff]
        %v3443 = vld [vmem:[%s3417 + $0xc8] sm:$0xff]
        %v3444 = vld [vmem:[%s3417 + $0xd0] sm:$0xff]
        %v3445 = vld [vmem:[%s3417 + $0xd8] sm:$0xff]
        %v3446 = vld [vmem:[%s3417 + $0xe0] sm:$0xff]
        %v3447 = vld [vmem:[%s3417 + $0xe8] sm:$0xff]
        %v3448 = vld [vmem:[%s3417 + $0xf0] sm:$0xff]
        %v3449 = vld [vmem:[%s3417 + $0xf8] sm:$0xff]
        %v3450 = vld [vmem:[%s3417 + $0x100] sm:$0xff]
        %v3451 = vld [vmem:[%s3417 + $0x108] sm:$0xff]
        %v3452 = vld [vmem:[%s3417 + $0x110] sm:$0xff]
        %v3453 = vld [vmem:[%s3417 + $0x118] sm:$0xff]
        %v3454 = vld [vmem:[%s3417 + $0x120] sm:$0xff]
        %v3455 = vld [vmem:[%s3417 + $0x128] sm:$0xff]
        %v3456 = vld [vmem:[%s3417 + $0x130] sm:$0xff]
        %v3457 = vld [vmem:[%s3417 + $0x138] sm:$0xff]
        %v3458 = vld [vmem:[%s3417 + $0x140] sm:$0xff]
        %v3459 = vld [vmem:[%s3417 + $0x148] sm:$0xff]
        %v3460 = vld [vmem:[%s3417 + $0x150] sm:$0xff]
        %v3461 = vld [vmem:[%s3417 + $0x158] sm:$0xff]
        %v3462 = vld [vmem:[%s3417 + $0x160] sm:$0xff]
        %v3463 = vld [vmem:[%s3417 + $0x168] sm:$0xff]
        %v3464 = vld [vmem:[%s3417 + $0x170] sm:$0xff]
        %v3465 = vld [vmem:[%s3417 + $0x178] sm:$0xff]
        %v3466 = vld [vmem:[%s3417 + $0x180] sm:$0xff]
        %v3467 = vld [vmem:[%s3417 + $0x188] sm:$0xff]
        %v3468 = vld [vmem:[%s3417 + $0x190] sm:$0xff]
        %v3469 = vld [vmem:[%s3417 + $0x198] sm:$0xff]
        %v3470 = vld [vmem:[%s3417 + $0x1a0] sm:$0xff]
        %v3471 = vld [vmem:[%s3417 + $0x1a8] sm:$0xff]
        %v3472 = vld [vmem:[%s3417 + $0x1b0] sm:$0xff]
        %v3473 = vld [vmem:[%s3417 + $0x1b8] sm:$0xff]
        %v3474 = vld [vmem:[%s3417 + $0x1c0] sm:$0xff]
        %v3475 = vld [vmem:[%s3417 + $0x1c8] sm:$0xff]
        %v3476 = vld [vmem:[%s3417 + $0x1d0] sm:$0xff]
        %v3477 = vld [vmem:[%s3417 + $0x1d8] sm:$0xff]
        %v3478 = vld [vmem:[%s3417 + $0x1e0] sm:$0xff]
        %v3479 = vld [vmem:[%s3417 + $0x1e8] sm:$0xff]
        %v3480 = vld [vmem:[%s3417 + $0x1f0] sm:$0xff]
        %v3481 = vld [vmem:[%s3417 + $0x1f8] sm:$0xff]
        %v3482 = vld [vmem:[%s3417 + $0x200] sm:$0xff]
        %v3483 = vld [vmem:[%s3417 + $0x208] sm:$0xff]
        %v3484 = vld [vmem:[%s3417 + $0x210] sm:$0xff]
        %v3485 = vld [vmem:[%s3417 + $0x218] sm:$0xff]
        %v3486 = vld [vmem:[%s3417 + $0x220] sm:$0xff]
        %v3487 = vld [vmem:[%s3417 + $0x228] sm:$0xff]
        %v3488 = vld [vmem:[%s3417 + $0x230] sm:$0xff]
        %v3489 = vld [vmem:[%s3417 + $0x238] sm:$0xff]
        %v3490 = vld [vmem:[%s3417 + $0x240] sm:$0xff]
        %v3491 = vld [vmem:[%s3417 + $0x248] sm:$0xff]
        %v3492 = vld [vmem:[%s3417 + $0x250] sm:$0xff]
        %v3493 = vld [vmem:[%s3417 + $0x258] sm:$0xff]
        %v3494 = vld [vmem:[%s3417 + $0x260] sm:$0xff]
        %v3495 = vld [vmem:[%s3417 + $0x268] sm:$0xff]
        %v3496 = vld [vmem:[%s3417 + $0x270] sm:$0xff]
        %v3497 = vld [vmem:[%s3417 + $0x278] sm:$0xff]
        %v3498 = vld [vmem:[%s3417 + $0x280] sm:$0xff]
        %v3499 = vld [vmem:[%s3417 + $0x288] sm:$0xff]
        %v3500 = vld [vmem:[%s3417 + $0x290] sm:$0xff]
        %v3501 = vld [vmem:[%s3417 + $0x298] sm:$0xff]
        %v3502 = vld [vmem:[%s3417 + $0x2a0] sm:$0xff]
        %v3503 = vld [vmem:[%s3417 + $0x2a8] sm:$0xff]
        %v3504 = vld [vmem:[%s3417 + $0x2b0] sm:$0xff]
        %v3505 = vld [vmem:[%s3417 + $0x2b8] sm:$0xff]
        %v3506 = vld [vmem:[%s3417 + $0x2c0] sm:$0xff]
        %v3507 = vld [vmem:[%s3417 + $0x2c8] sm:$0xff]
        %v3508 = vld [vmem:[%s3417 + $0x2d0] sm:$0xff]
        %v3509 = vld [vmem:[%s3417 + $0x2d8] sm:$0xff]
        %v3510 = vld [vmem:[%s3417 + $0x2e0] sm:$0xff]
        %v3511 = vld [vmem:[%s3417 + $0x2e8] sm:$0xff]
        %v3512 = vld [vmem:[%s3417 + $0x2f0] sm:$0xff]
        %v3513 = vld [vmem:[%s3417 + $0x2f8] sm:$0xff]
        %v3514 = vld [vmem:[%s3417 + $0x300] sm:$0xff]
        %v3515 = vld [vmem:[%s3417 + $0x308] sm:$0xff]
        %v3516 = vld [vmem:[%s3417 + $0x310] sm:$0xff]
        %v3517 = vld [vmem:[%s3417 + $0x318] sm:$0xff]
        %v3518 = vld [vmem:[%s3417 + $0x320] sm:$0xff]
        %v3519 = vld [vmem:[%s3417 + $0x328] sm:$0xff]
        %v3520 = vld [vmem:[%s3417 + $0x330] sm:$0xff]
        %v3521 = vld [vmem:[%s3417 + $0x338] sm:$0xff]
        %v3522 = vld [vmem:[%s3417 + $0x340] sm:$0xff]
        %v3523 = vld [vmem:[%s3417 + $0x348] sm:$0xff]
        %v3524 = vld [vmem:[%s3417 + $0x350] sm:$0xff]
        %v3525 = vld [vmem:[%s3417 + $0x358] sm:$0xff]
        %v3526 = vld [vmem:[%s3417 + $0x360] sm:$0xff]
        %v3527 = vld [vmem:[%s3417 + $0x368] sm:$0xff]
        %v3528 = vld [vmem:[%s3417 + $0x370] sm:$0xff]
        %v3529 = vld [vmem:[%s3417 + $0x378] sm:$0xff]
        %v3530 = vld [vmem:[%s3417 + $0x380] sm:$0xff]
        %v3531 = vld [vmem:[%s3417 + $0x388] sm:$0xff]
        %v3532 = vld [vmem:[%s3417 + $0x390] sm:$0xff]
        %v3533 = vld [vmem:[%s3417 + $0x398] sm:$0xff]
        %v3534 = vld [vmem:[%s3417 + $0x3a0] sm:$0xff]
        %v3535 = vld [vmem:[%s3417 + $0x3a8] sm:$0xff]
        %v3536 = vld [vmem:[%s3417 + $0x3b0] sm:$0xff]
        %v3537 = vld [vmem:[%s3417 + $0x3b8] sm:$0xff]
        %v3538 = vld [vmem:[%s3417 + $0x3c0] sm:$0xff]
        %v3539 = vld [vmem:[%s3417 + $0x3c8] sm:$0xff]
        %v3540 = vld [vmem:[%s3417 + $0x3d0] sm:$0xff]
        %v3541 = vld [vmem:[%s3417 + $0x3d8] sm:$0xff]
        %v3542 = vld [vmem:[%s3417 + $0x3e0] sm:$0xff]
        %v3543 = vld [vmem:[%s3417 + $0x3e8] sm:$0xff]
        %v3544 = vld [vmem:[%s3417 + $0x3f0] sm:$0xff]
        %v3545 = vld [vmem:[%s3417 + $0x3f8] sm:$0xff]
        %v3546 = vpack.c.bf16 %v3382, %v3381
        %v3547 = vpack.c.bf16 %v3384, %v3383
        %v3548 = vpack.c.bf16 %v3386, %v3385
        %v3549 = vpack.c.bf16 %v3388, %v3387
        %s3550 = scalar_lea.vmem [#allocation5], 4096
        %v3551 = vld [vmem:[%s3550] sm:$0xff]
        %v3552 = vld [vmem:[%s3550 + $0x8] sm:$0xff]
        %v3553 = vld [vmem:[%s3550 + $0x10] sm:$0xff]
        %v3554 = vld [vmem:[%s3550 + $0x18] sm:$0xff]
        %v3555 = vld [vmem:[%s3550 + $0x20] sm:$0xff]
        %v3556 = vld [vmem:[%s3550 + $0x28] sm:$0xff]
        %v3557 = vld [vmem:[%s3550 + $0x30] sm:$0xff]
        %v3558 = vld [vmem:[%s3550 + $0x38] sm:$0xff]
        %v3559 = vld [vmem:[%s3550 + $0x40] sm:$0xff]
        %v3560 = vld [vmem:[%s3550 + $0x48] sm:$0xff]
        %v3561 = vld [vmem:[%s3550 + $0x50] sm:$0xff]
        %v3562 = vld [vmem:[%s3550 + $0x58] sm:$0xff]
        %v3563 = vld [vmem:[%s3550 + $0x60] sm:$0xff]
        %v3564 = vld [vmem:[%s3550 + $0x68] sm:$0xff]
        %v3565 = vld [vmem:[%s3550 + $0x70] sm:$0xff]
        %v3566 = vld [vmem:[%s3550 + $0x78] sm:$0xff]
        %v3567 = vld [vmem:[%s3550 + $0x80] sm:$0xff]
        %v3568 = vld [vmem:[%s3550 + $0x88] sm:$0xff]
        %v3569 = vld [vmem:[%s3550 + $0x90] sm:$0xff]
        %v3570 = vld [vmem:[%s3550 + $0x98] sm:$0xff]
        %v3571 = vld [vmem:[%s3550 + $0xa0] sm:$0xff]
        %v3572 = vld [vmem:[%s3550 + $0xa8] sm:$0xff]
        %v3573 = vld [vmem:[%s3550 + $0xb0] sm:$0xff]
        %v3574 = vld [vmem:[%s3550 + $0xb8] sm:$0xff]
        %v3575 = vld [vmem:[%s3550 + $0xc0] sm:$0xff]
        %v3576 = vld [vmem:[%s3550 + $0xc8] sm:$0xff]
        %v3577 = vld [vmem:[%s3550 + $0xd0] sm:$0xff]
        %v3578 = vld [vmem:[%s3550 + $0xd8] sm:$0xff]
        %v3579 = vld [vmem:[%s3550 + $0xe0] sm:$0xff]
        %v3580 = vld [vmem:[%s3550 + $0xe8] sm:$0xff]
        %v3581 = vld [vmem:[%s3550 + $0xf0] sm:$0xff]
        %v3582 = vld [vmem:[%s3550 + $0xf8] sm:$0xff]
        %v3583 = vld [vmem:[%s3550 + $0x100] sm:$0xff]
        %v3584 = vld [vmem:[%s3550 + $0x108] sm:$0xff]
        %v3585 = vld [vmem:[%s3550 + $0x110] sm:$0xff]
        %v3586 = vld [vmem:[%s3550 + $0x118] sm:$0xff]
        %v3587 = vld [vmem:[%s3550 + $0x120] sm:$0xff]
        %v3588 = vld [vmem:[%s3550 + $0x128] sm:$0xff]
        %v3589 = vld [vmem:[%s3550 + $0x130] sm:$0xff]
        %v3590 = vld [vmem:[%s3550 + $0x138] sm:$0xff]
        %v3591 = vld [vmem:[%s3550 + $0x140] sm:$0xff]
        %v3592 = vld [vmem:[%s3550 + $0x148] sm:$0xff]
        %v3593 = vld [vmem:[%s3550 + $0x150] sm:$0xff]
        %v3594 = vld [vmem:[%s3550 + $0x158] sm:$0xff]
        %v3595 = vld [vmem:[%s3550 + $0x160] sm:$0xff]
        %v3596 = vld [vmem:[%s3550 + $0x168] sm:$0xff]
        %v3597 = vld [vmem:[%s3550 + $0x170] sm:$0xff]
        %v3598 = vld [vmem:[%s3550 + $0x178] sm:$0xff]
        %v3599 = vld [vmem:[%s3550 + $0x180] sm:$0xff]
        %v3600 = vld [vmem:[%s3550 + $0x188] sm:$0xff]
        %v3601 = vld [vmem:[%s3550 + $0x190] sm:$0xff]
        %v3602 = vld [vmem:[%s3550 + $0x198] sm:$0xff]
        %v3603 = vld [vmem:[%s3550 + $0x1a0] sm:$0xff]
        %v3604 = vld [vmem:[%s3550 + $0x1a8] sm:$0xff]
        %v3605 = vld [vmem:[%s3550 + $0x1b0] sm:$0xff]
        %v3606 = vld [vmem:[%s3550 + $0x1b8] sm:$0xff]
        %v3607 = vld [vmem:[%s3550 + $0x1c0] sm:$0xff]
        %v3608 = vld [vmem:[%s3550 + $0x1c8] sm:$0xff]
        %v3609 = vld [vmem:[%s3550 + $0x1d0] sm:$0xff]
        %v3610 = vld [vmem:[%s3550 + $0x1d8] sm:$0xff]
        %v3611 = vld [vmem:[%s3550 + $0x1e0] sm:$0xff]
        %v3612 = vld [vmem:[%s3550 + $0x1e8] sm:$0xff]
        %v3613 = vld [vmem:[%s3550 + $0x1f0] sm:$0xff]
        %v3614 = vld [vmem:[%s3550 + $0x1f8] sm:$0xff]
        %v3615 = vld [vmem:[%s3550 + $0x200] sm:$0xff]
        %v3616 = vld [vmem:[%s3550 + $0x208] sm:$0xff]
        %v3617 = vld [vmem:[%s3550 + $0x210] sm:$0xff]
        %v3618 = vld [vmem:[%s3550 + $0x218] sm:$0xff]
        %v3619 = vld [vmem:[%s3550 + $0x220] sm:$0xff]
        %v3620 = vld [vmem:[%s3550 + $0x228] sm:$0xff]
        %v3621 = vld [vmem:[%s3550 + $0x230] sm:$0xff]
        %v3622 = vld [vmem:[%s3550 + $0x238] sm:$0xff]
        %v3623 = vld [vmem:[%s3550 + $0x240] sm:$0xff]
        %v3624 = vld [vmem:[%s3550 + $0x248] sm:$0xff]
        %v3625 = vld [vmem:[%s3550 + $0x250] sm:$0xff]
        %v3626 = vld [vmem:[%s3550 + $0x258] sm:$0xff]
        %v3627 = vld [vmem:[%s3550 + $0x260] sm:$0xff]
        %v3628 = vld [vmem:[%s3550 + $0x268] sm:$0xff]
        %v3629 = vld [vmem:[%s3550 + $0x270] sm:$0xff]
        %v3630 = vld [vmem:[%s3550 + $0x278] sm:$0xff]
        %v3631 = vld [vmem:[%s3550 + $0x280] sm:$0xff]
        %v3632 = vld [vmem:[%s3550 + $0x288] sm:$0xff]
        %v3633 = vld [vmem:[%s3550 + $0x290] sm:$0xff]
        %v3634 = vld [vmem:[%s3550 + $0x298] sm:$0xff]
        %v3635 = vld [vmem:[%s3550 + $0x2a0] sm:$0xff]
        %v3636 = vld [vmem:[%s3550 + $0x2a8] sm:$0xff]
        %v3637 = vld [vmem:[%s3550 + $0x2b0] sm:$0xff]
        %v3638 = vld [vmem:[%s3550 + $0x2b8] sm:$0xff]
        %v3639 = vld [vmem:[%s3550 + $0x2c0] sm:$0xff]
        %v3640 = vld [vmem:[%s3550 + $0x2c8] sm:$0xff]
        %v3641 = vld [vmem:[%s3550 + $0x2d0] sm:$0xff]
        %v3642 = vld [vmem:[%s3550 + $0x2d8] sm:$0xff]
        %v3643 = vld [vmem:[%s3550 + $0x2e0] sm:$0xff]
        %v3644 = vld [vmem:[%s3550 + $0x2e8] sm:$0xff]
        %v3645 = vld [vmem:[%s3550 + $0x2f0] sm:$0xff]
        %v3646 = vld [vmem:[%s3550 + $0x2f8] sm:$0xff]
        %v3647 = vld [vmem:[%s3550 + $0x300] sm:$0xff]
        %v3648 = vld [vmem:[%s3550 + $0x308] sm:$0xff]
        %v3649 = vld [vmem:[%s3550 + $0x310] sm:$0xff]
        %v3650 = vld [vmem:[%s3550 + $0x318] sm:$0xff]
        %v3651 = vld [vmem:[%s3550 + $0x320] sm:$0xff]
        %v3652 = vld [vmem:[%s3550 + $0x328] sm:$0xff]
        %v3653 = vld [vmem:[%s3550 + $0x330] sm:$0xff]
        %v3654 = vld [vmem:[%s3550 + $0x338] sm:$0xff]
        %v3655 = vld [vmem:[%s3550 + $0x340] sm:$0xff]
        %v3656 = vld [vmem:[%s3550 + $0x348] sm:$0xff]
        %v3657 = vld [vmem:[%s3550 + $0x350] sm:$0xff]
        %v3658 = vld [vmem:[%s3550 + $0x358] sm:$0xff]
        %v3659 = vld [vmem:[%s3550 + $0x360] sm:$0xff]
        %v3660 = vld [vmem:[%s3550 + $0x368] sm:$0xff]
        %v3661 = vld [vmem:[%s3550 + $0x370] sm:$0xff]
        %v3662 = vld [vmem:[%s3550 + $0x378] sm:$0xff]
        %v3663 = vld [vmem:[%s3550 + $0x380] sm:$0xff]
        %v3664 = vld [vmem:[%s3550 + $0x388] sm:$0xff]
        %v3665 = vld [vmem:[%s3550 + $0x390] sm:$0xff]
        %v3666 = vld [vmem:[%s3550 + $0x398] sm:$0xff]
        %v3667 = vld [vmem:[%s3550 + $0x3a0] sm:$0xff]
        %v3668 = vld [vmem:[%s3550 + $0x3a8] sm:$0xff]
        %v3669 = vld [vmem:[%s3550 + $0x3b0] sm:$0xff]
        %v3670 = vld [vmem:[%s3550 + $0x3b8] sm:$0xff]
        %v3671 = vld [vmem:[%s3550 + $0x3c0] sm:$0xff]
        %v3672 = vld [vmem:[%s3550 + $0x3c8] sm:$0xff]
        %v3673 = vld [vmem:[%s3550 + $0x3d0] sm:$0xff]
        %v3674 = vld [vmem:[%s3550 + $0x3d8] sm:$0xff]
        %v3675 = vld [vmem:[%s3550 + $0x3e0] sm:$0xff]
        %v3676 = vld [vmem:[%s3550 + $0x3e8] sm:$0xff]
        %v3677 = vld [vmem:[%s3550 + $0x3f0] sm:$0xff]
        %v3678 = vld [vmem:[%s3550 + $0x3f8] sm:$0xff]
        %v3683 = vunpack.c.l.b16 %v3546
        %v3684 = vunpack.c.h.b16 %v3546
        %v3685 = vunpack.c.l.b16 %v3547
        %v3686 = vunpack.c.h.b16 %v3547
        %v3687 = vunpack.c.l.b16 %v3548
        %v3688 = vunpack.c.h.b16 %v3548
        %v3689 = vunpack.c.l.b16 %v3549
        %v3690 = vunpack.c.h.b16 %v3549
        %v3691 = vpack.c.b16 %v3687, %v3683
        %v3692 = vpack.c.b16 %v3688, %v3684
        %v3693 = vpack.c.b16 %v3689, %v3685
        %v3694 = vpack.c.b16 %v3690, %v3686
        %v3827 = vunpack.c.l.b16 %v3551
        %v3828 = vunpack.c.h.b16 %v3551
        %v3829 = vunpack.c.l.b16 %v3552
        %v3830 = vunpack.c.h.b16 %v3552
        %v3831 = vunpack.c.l.b16 %v3553
        %v3832 = vunpack.c.h.b16 %v3553
        %v3833 = vunpack.c.l.b16 %v3554
        %v3834 = vunpack.c.h.b16 %v3554
        %v3835 = vunpack.c.l.b16 %v3555
        %v3836 = vunpack.c.h.b16 %v3555
        %v3837 = vunpack.c.l.b16 %v3556
        %v3838 = vunpack.c.h.b16 %v3556
        %v3839 = vunpack.c.l.b16 %v3557
        %v3840 = vunpack.c.h.b16 %v3557
        %v3841 = vunpack.c.l.b16 %v3558
        %v3842 = vunpack.c.h.b16 %v3558
        %v3843 = vunpack.c.l.b16 %v3559
        %v3844 = vunpack.c.h.b16 %v3559
        %v3845 = vunpack.c.l.b16 %v3560
        %v3846 = vunpack.c.h.b16 %v3560
        %v3847 = vunpack.c.l.b16 %v3561
        %v3848 = vunpack.c.h.b16 %v3561
        %v3849 = vunpack.c.l.b16 %v3562
        %v3850 = vunpack.c.h.b16 %v3562
        %v3851 = vunpack.c.l.b16 %v3563
        %v3852 = vunpack.c.h.b16 %v3563
        %v3853 = vunpack.c.l.b16 %v3564
        %v3854 = vunpack.c.h.b16 %v3564
        %v3855 = vunpack.c.l.b16 %v3565
        %v3856 = vunpack.c.h.b16 %v3565
        %v3857 = vunpack.c.l.b16 %v3566
        %v3858 = vunpack.c.h.b16 %v3566
        %v3859 = vunpack.c.l.b16 %v3567
        %v3860 = vunpack.c.h.b16 %v3567
        %v3861 = vunpack.c.l.b16 %v3568
        %v3862 = vunpack.c.h.b16 %v3568
        %v3863 = vunpack.c.l.b16 %v3569
        %v3864 = vunpack.c.h.b16 %v3569
        %v3865 = vunpack.c.l.b16 %v3570
        %v3866 = vunpack.c.h.b16 %v3570
        %v3867 = vunpack.c.l.b16 %v3571
        %v3868 = vunpack.c.h.b16 %v3571
        %v3869 = vunpack.c.l.b16 %v3572
        %v3870 = vunpack.c.h.b16 %v3572
        %v3871 = vunpack.c.l.b16 %v3573
        %v3872 = vunpack.c.h.b16 %v3573
        %v3873 = vunpack.c.l.b16 %v3574
        %v3874 = vunpack.c.h.b16 %v3574
        %v3875 = vunpack.c.l.b16 %v3575
        %v3876 = vunpack.c.h.b16 %v3575
        %v3877 = vunpack.c.l.b16 %v3576
        %v3878 = vunpack.c.h.b16 %v3576
        %v3879 = vunpack.c.l.b16 %v3577
        %v3880 = vunpack.c.h.b16 %v3577
        %v3881 = vunpack.c.l.b16 %v3578
        %v3882 = vunpack.c.h.b16 %v3578
        %v3883 = vunpack.c.l.b16 %v3579
        %v3884 = vunpack.c.h.b16 %v3579
        %v3885 = vunpack.c.l.b16 %v3580
        %v3886 = vunpack.c.h.b16 %v3580
        %v3887 = vunpack.c.l.b16 %v3581
        %v3888 = vunpack.c.h.b16 %v3581
        %v3889 = vunpack.c.l.b16 %v3582
        %v3890 = vunpack.c.h.b16 %v3582
        %v3891 = vunpack.c.l.b16 %v3583
        %v3892 = vunpack.c.h.b16 %v3583
        %v3893 = vunpack.c.l.b16 %v3584
        %v3894 = vunpack.c.h.b16 %v3584
        %v3895 = vunpack.c.l.b16 %v3585
        %v3896 = vunpack.c.h.b16 %v3585
        %v3897 = vunpack.c.l.b16 %v3586
        %v3898 = vunpack.c.h.b16 %v3586
        %v3899 = vunpack.c.l.b16 %v3587
        %v3900 = vunpack.c.h.b16 %v3587
        %v3901 = vunpack.c.l.b16 %v3588
        %v3902 = vunpack.c.h.b16 %v3588
        %v3903 = vunpack.c.l.b16 %v3589
        %v3904 = vunpack.c.h.b16 %v3589
        %v3905 = vunpack.c.l.b16 %v3590
        %v3906 = vunpack.c.h.b16 %v3590
        %v3907 = vunpack.c.l.b16 %v3591
        %v3908 = vunpack.c.h.b16 %v3591
        %v3909 = vunpack.c.l.b16 %v3592
        %v3910 = vunpack.c.h.b16 %v3592
        %v3911 = vunpack.c.l.b16 %v3593
        %v3912 = vunpack.c.h.b16 %v3593
        %v3913 = vunpack.c.l.b16 %v3594
        %v3914 = vunpack.c.h.b16 %v3594
        %v3915 = vunpack.c.l.b16 %v3595
        %v3916 = vunpack.c.h.b16 %v3595
        %v3917 = vunpack.c.l.b16 %v3596
        %v3918 = vunpack.c.h.b16 %v3596
        %v3919 = vunpack.c.l.b16 %v3597
        %v3920 = vunpack.c.h.b16 %v3597
        %v3921 = vunpack.c.l.b16 %v3598
        %v3922 = vunpack.c.h.b16 %v3598
        %v3923 = vunpack.c.l.b16 %v3599
        %v3924 = vunpack.c.h.b16 %v3599
        %v3925 = vunpack.c.l.b16 %v3600
        %v3926 = vunpack.c.h.b16 %v3600
        %v3927 = vunpack.c.l.b16 %v3601
        %v3928 = vunpack.c.h.b16 %v3601
        %v3929 = vunpack.c.l.b16 %v3602
        %v3930 = vunpack.c.h.b16 %v3602
        %v3931 = vunpack.c.l.b16 %v3603
        %v3932 = vunpack.c.h.b16 %v3603
        %v3933 = vunpack.c.l.b16 %v3604
        %v3934 = vunpack.c.h.b16 %v3604
        %v3935 = vunpack.c.l.b16 %v3605
        %v3936 = vunpack.c.h.b16 %v3605
        %v3937 = vunpack.c.l.b16 %v3606
        %v3938 = vunpack.c.h.b16 %v3606
        %v3939 = vunpack.c.l.b16 %v3607
        %v3940 = vunpack.c.h.b16 %v3607
        %v3941 = vunpack.c.l.b16 %v3608
        %v3942 = vunpack.c.h.b16 %v3608
        %v3943 = vunpack.c.l.b16 %v3609
        %v3944 = vunpack.c.h.b16 %v3609
        %v3945 = vunpack.c.l.b16 %v3610
        %v3946 = vunpack.c.h.b16 %v3610
        %v3947 = vunpack.c.l.b16 %v3611
        %v3948 = vunpack.c.h.b16 %v3611
        %v3949 = vunpack.c.l.b16 %v3612
        %v3950 = vunpack.c.h.b16 %v3612
        %v3951 = vunpack.c.l.b16 %v3613
        %v3952 = vunpack.c.h.b16 %v3613
        %v3953 = vunpack.c.l.b16 %v3614
        %v3954 = vunpack.c.h.b16 %v3614
        %v3955 = vunpack.c.l.b16 %v3615
        %v3956 = vunpack.c.h.b16 %v3615
        %v3957 = vunpack.c.l.b16 %v3616
        %v3958 = vunpack.c.h.b16 %v3616
        %v3959 = vunpack.c.l.b16 %v3617
        %v3960 = vunpack.c.h.b16 %v3617
        %v3961 = vunpack.c.l.b16 %v3618
        %v3962 = vunpack.c.h.b16 %v3618
        %v3963 = vunpack.c.l.b16 %v3619
        %v3964 = vunpack.c.h.b16 %v3619
        %v3965 = vunpack.c.l.b16 %v3620
        %v3966 = vunpack.c.h.b16 %v3620
        %v3967 = vunpack.c.l.b16 %v3621
        %v3968 = vunpack.c.h.b16 %v3621
        %v3969 = vunpack.c.l.b16 %v3622
        %v3970 = vunpack.c.h.b16 %v3622
        %v3971 = vunpack.c.l.b16 %v3623
        %v3972 = vunpack.c.h.b16 %v3623
        %v3973 = vunpack.c.l.b16 %v3624
        %v3974 = vunpack.c.h.b16 %v3624
        %v3975 = vunpack.c.l.b16 %v3625
        %v3976 = vunpack.c.h.b16 %v3625
        %v3977 = vunpack.c.l.b16 %v3626
        %v3978 = vunpack.c.h.b16 %v3626
        %v3979 = vunpack.c.l.b16 %v3627
        %v3980 = vunpack.c.h.b16 %v3627
        %v3981 = vunpack.c.l.b16 %v3628
        %v3982 = vunpack.c.h.b16 %v3628
        %v3983 = vunpack.c.l.b16 %v3629
        %v3984 = vunpack.c.h.b16 %v3629
        %v3985 = vunpack.c.l.b16 %v3630
        %v3986 = vunpack.c.h.b16 %v3630
        %v3987 = vunpack.c.l.b16 %v3631
        %v3988 = vunpack.c.h.b16 %v3631
        %v3989 = vunpack.c.l.b16 %v3632
        %v3990 = vunpack.c.h.b16 %v3632
        %v3991 = vunpack.c.l.b16 %v3633
        %v3992 = vunpack.c.h.b16 %v3633
        %v3993 = vunpack.c.l.b16 %v3634
        %v3994 = vunpack.c.h.b16 %v3634
        %v3995 = vunpack.c.l.b16 %v3635
        %v3996 = vunpack.c.h.b16 %v3635
        %v3997 = vunpack.c.l.b16 %v3636
        %v3998 = vunpack.c.h.b16 %v3636
        %v3999 = vunpack.c.l.b16 %v3637
        %v4000 = vunpack.c.h.b16 %v3637
        %v4001 = vunpack.c.l.b16 %v3638
        %v4002 = vunpack.c.h.b16 %v3638
        %v4003 = vunpack.c.l.b16 %v3639
        %v4004 = vunpack.c.h.b16 %v3639
        %v4005 = vunpack.c.l.b16 %v3640
        %v4006 = vunpack.c.h.b16 %v3640
        %v4007 = vunpack.c.l.b16 %v3641
        %v4008 = vunpack.c.h.b16 %v3641
        %v4009 = vunpack.c.l.b16 %v3642
        %v4010 = vunpack.c.h.b16 %v3642
        %v4011 = vunpack.c.l.b16 %v3643
        %v4012 = vunpack.c.h.b16 %v3643
        %v4013 = vunpack.c.l.b16 %v3644
        %v4014 = vunpack.c.h.b16 %v3644
        %v4015 = vunpack.c.l.b16 %v3645
        %v4016 = vunpack.c.h.b16 %v3645
        %v4017 = vunpack.c.l.b16 %v3646
        %v4018 = vunpack.c.h.b16 %v3646
        %v4019 = vunpack.c.l.b16 %v3647
        %v4020 = vunpack.c.h.b16 %v3647
        %v4021 = vunpack.c.l.b16 %v3648
        %v4022 = vunpack.c.h.b16 %v3648
        %v4023 = vunpack.c.l.b16 %v3649
        %v4024 = vunpack.c.h.b16 %v3649
        %v4025 = vunpack.c.l.b16 %v3650
        %v4026 = vunpack.c.h.b16 %v3650
        %v4027 = vunpack.c.l.b16 %v3651
        %v4028 = vunpack.c.h.b16 %v3651
        %v4029 = vunpack.c.l.b16 %v3652
        %v4030 = vunpack.c.h.b16 %v3652
        %v4031 = vunpack.c.l.b16 %v3653
        %v4032 = vunpack.c.h.b16 %v3653
        %v4033 = vunpack.c.l.b16 %v3654
        %v4034 = vunpack.c.h.b16 %v3654
        %v4035 = vunpack.c.l.b16 %v3655
        %v4036 = vunpack.c.h.b16 %v3655
        %v4037 = vunpack.c.l.b16 %v3656
        %v4038 = vunpack.c.h.b16 %v3656
        %v4039 = vunpack.c.l.b16 %v3657
        %v4040 = vunpack.c.h.b16 %v3657
        %v4041 = vunpack.c.l.b16 %v3658
        %v4042 = vunpack.c.h.b16 %v3658
        %v4043 = vunpack.c.l.b16 %v3659
        %v4044 = vunpack.c.h.b16 %v3659
        %v4045 = vunpack.c.l.b16 %v3660
        %v4046 = vunpack.c.h.b16 %v3660
        %v4047 = vunpack.c.l.b16 %v3661
        %v4048 = vunpack.c.h.b16 %v3661
        %v4049 = vunpack.c.l.b16 %v3662
        %v4050 = vunpack.c.h.b16 %v3662
        %v4051 = vunpack.c.l.b16 %v3663
        %v4052 = vunpack.c.h.b16 %v3663
        %v4053 = vunpack.c.l.b16 %v3664
        %v4054 = vunpack.c.h.b16 %v3664
        %v4055 = vunpack.c.l.b16 %v3665
        %v4056 = vunpack.c.h.b16 %v3665
        %v4057 = vunpack.c.l.b16 %v3666
        %v4058 = vunpack.c.h.b16 %v3666
        %v4059 = vunpack.c.l.b16 %v3667
        %v4060 = vunpack.c.h.b16 %v3667
        %v4061 = vunpack.c.l.b16 %v3668
        %v4062 = vunpack.c.h.b16 %v3668
        %v4063 = vunpack.c.l.b16 %v3669
        %v4064 = vunpack.c.h.b16 %v3669
        %v4065 = vunpack.c.l.b16 %v3670
        %v4066 = vunpack.c.h.b16 %v3670
        %v4067 = vunpack.c.l.b16 %v3671
        %v4068 = vunpack.c.h.b16 %v3671
        %v4069 = vunpack.c.l.b16 %v3672
        %v4070 = vunpack.c.h.b16 %v3672
        %v4071 = vunpack.c.l.b16 %v3673
        %v4072 = vunpack.c.h.b16 %v3673
        %v4073 = vunpack.c.l.b16 %v3674
        %v4074 = vunpack.c.h.b16 %v3674
        %v4075 = vunpack.c.l.b16 %v3675
        %v4076 = vunpack.c.h.b16 %v3675
        %v4077 = vunpack.c.l.b16 %v3676
        %v4078 = vunpack.c.h.b16 %v3676
        %v4079 = vunpack.c.l.b16 %v3677
        %v4080 = vunpack.c.h.b16 %v3677
        %v4081 = vunpack.c.l.b16 %v3678
        %v4082 = vunpack.c.h.b16 %v3678
        %v4083 = vpack.c.b16 %v3831, %v3827
        %v4084 = vpack.c.b16 %v3832, %v3828
        %v4085 = vpack.c.b16 %v3833, %v3829
        %v4086 = vpack.c.b16 %v3834, %v3830
        %v4087 = vpack.c.b16 %v3839, %v3835
        %v4088 = vpack.c.b16 %v3840, %v3836
        %v4089 = vpack.c.b16 %v3841, %v3837
        %v4090 = vpack.c.b16 %v3842, %v3838
        %v4091 = vpack.c.b16 %v3847, %v3843
        %v4092 = vpack.c.b16 %v3848, %v3844
        %v4093 = vpack.c.b16 %v3849, %v3845
        %v4094 = vpack.c.b16 %v3850, %v3846
        %v4095 = vpack.c.b16 %v3855, %v3851
        %v4096 = vpack.c.b16 %v3856, %v3852
        %v4097 = vpack.c.b16 %v3857, %v3853
        %v4098 = vpack.c.b16 %v3858, %v3854
        %v4099 = vpack.c.b16 %v3863, %v3859
        %v4100 = vpack.c.b16 %v3864, %v3860
        %v4101 = vpack.c.b16 %v3865, %v3861
        %v4102 = vpack.c.b16 %v3866, %v3862
        %v4103 = vpack.c.b16 %v3871, %v3867
        %v4104 = vpack.c.b16 %v3872, %v3868
        %v4105 = vpack.c.b16 %v3873, %v3869
        %v4106 = vpack.c.b16 %v3874, %v3870
        %v4107 = vpack.c.b16 %v3879, %v3875
        %v4108 = vpack.c.b16 %v3880, %v3876
        %v4109 = vpack.c.b16 %v3881, %v3877
        %v4110 = vpack.c.b16 %v3882, %v3878
        %v4111 = vpack.c.b16 %v3887, %v3883
        %v4112 = vpack.c.b16 %v3888, %v3884
        %v4113 = vpack.c.b16 %v3889, %v3885
        %v4114 = vpack.c.b16 %v3890, %v3886
        %v4115 = vpack.c.b16 %v3895, %v3891
        %v4116 = vpack.c.b16 %v3896, %v3892
        %v4117 = vpack.c.b16 %v3897, %v3893
        %v4118 = vpack.c.b16 %v3898, %v3894
        %v4119 = vpack.c.b16 %v3903, %v3899
        %v4120 = vpack.c.b16 %v3904, %v3900
        %v4121 = vpack.c.b16 %v3905, %v3901
        %v4122 = vpack.c.b16 %v3906, %v3902
        %v4123 = vpack.c.b16 %v3911, %v3907
        %v4124 = vpack.c.b16 %v3912, %v3908
        %v4125 = vpack.c.b16 %v3913, %v3909
        %v4126 = vpack.c.b16 %v3914, %v3910
        %v4127 = vpack.c.b16 %v3919, %v3915
        %v4128 = vpack.c.b16 %v3920, %v3916
        %v4129 = vpack.c.b16 %v3921, %v3917
        %v4130 = vpack.c.b16 %v3922, %v3918
        %v4131 = vpack.c.b16 %v3927, %v3923
        %v4132 = vpack.c.b16 %v3928, %v3924
        %v4133 = vpack.c.b16 %v3929, %v3925
        %v4134 = vpack.c.b16 %v3930, %v3926
        %v4135 = vpack.c.b16 %v3935, %v3931
        %v4136 = vpack.c.b16 %v3936, %v3932
        %v4137 = vpack.c.b16 %v3937, %v3933
        %v4138 = vpack.c.b16 %v3938, %v3934
        %v4139 = vpack.c.b16 %v3943, %v3939
        %v4140 = vpack.c.b16 %v3944, %v3940
        %v4141 = vpack.c.b16 %v3945, %v3941
        %v4142 = vpack.c.b16 %v3946, %v3942
        %v4143 = vpack.c.b16 %v3951, %v3947
        %v4144 = vpack.c.b16 %v3952, %v3948
        %v4145 = vpack.c.b16 %v3953, %v3949
        %v4146 = vpack.c.b16 %v3954, %v3950
        %v4147 = vpack.c.b16 %v3959, %v3955
        %v4148 = vpack.c.b16 %v3960, %v3956
        %v4149 = vpack.c.b16 %v3961, %v3957
        %v4150 = vpack.c.b16 %v3962, %v3958
        %v4151 = vpack.c.b16 %v3967, %v3963
        %v4152 = vpack.c.b16 %v3968, %v3964
        %v4153 = vpack.c.b16 %v3969, %v3965
        %v4154 = vpack.c.b16 %v3970, %v3966
        %v4155 = vpack.c.b16 %v3975, %v3971
        %v4156 = vpack.c.b16 %v3976, %v3972
        %v4157 = vpack.c.b16 %v3977, %v3973
        %v4158 = vpack.c.b16 %v3978, %v3974
        %v4159 = vpack.c.b16 %v3983, %v3979
        %v4160 = vpack.c.b16 %v3984, %v3980
        %v4161 = vpack.c.b16 %v3985, %v3981
        %v4162 = vpack.c.b16 %v3986, %v3982
        %v4163 = vpack.c.b16 %v3991, %v3987
        %v4164 = vpack.c.b16 %v3992, %v3988
        %v4165 = vpack.c.b16 %v3993, %v3989
        %v4166 = vpack.c.b16 %v3994, %v3990
        %v4167 = vpack.c.b16 %v3999, %v3995
        %v4168 = vpack.c.b16 %v4000, %v3996
        %v4169 = vpack.c.b16 %v4001, %v3997
        %v4170 = vpack.c.b16 %v4002, %v3998
        %v4171 = vpack.c.b16 %v4007, %v4003
        %v4172 = vpack.c.b16 %v4008, %v4004
        %v4173 = vpack.c.b16 %v4009, %v4005
        %v4174 = vpack.c.b16 %v4010, %v4006
        %v4175 = vpack.c.b16 %v4015, %v4011
        %v4176 = vpack.c.b16 %v4016, %v4012
        %v4177 = vpack.c.b16 %v4017, %v4013
        %v4178 = vpack.c.b16 %v4018, %v4014
        %v4179 = vpack.c.b16 %v4023, %v4019
        %v4180 = vpack.c.b16 %v4024, %v4020
        %v4181 = vpack.c.b16 %v4025, %v4021
        %v4182 = vpack.c.b16 %v4026, %v4022
        %v4183 = vpack.c.b16 %v4031, %v4027
        %v4184 = vpack.c.b16 %v4032, %v4028
        %v4185 = vpack.c.b16 %v4033, %v4029
        %v4186 = vpack.c.b16 %v4034, %v4030
        %v4187 = vpack.c.b16 %v4039, %v4035
        %v4188 = vpack.c.b16 %v4040, %v4036
        %v4189 = vpack.c.b16 %v4041, %v4037
        %v4190 = vpack.c.b16 %v4042, %v4038
        %v4191 = vpack.c.b16 %v4047, %v4043
        %v4192 = vpack.c.b16 %v4048, %v4044
        %v4193 = vpack.c.b16 %v4049, %v4045
        %v4194 = vpack.c.b16 %v4050, %v4046
        %v4195 = vpack.c.b16 %v4055, %v4051
        %v4196 = vpack.c.b16 %v4056, %v4052
        %v4197 = vpack.c.b16 %v4057, %v4053
        %v4198 = vpack.c.b16 %v4058, %v4054
        %v4199 = vpack.c.b16 %v4063, %v4059
        %v4200 = vpack.c.b16 %v4064, %v4060
        %v4201 = vpack.c.b16 %v4065, %v4061
        %v4202 = vpack.c.b16 %v4066, %v4062
        %v4203 = vpack.c.b16 %v4071, %v4067
        %v4204 = vpack.c.b16 %v4072, %v4068
        %v4205 = vpack.c.b16 %v4073, %v4069
        %v4206 = vpack.c.b16 %v4074, %v4070
        %v4207 = vpack.c.b16 %v4079, %v4075
        %v4208 = vpack.c.b16 %v4080, %v4076
        %v4209 = vpack.c.b16 %v4081, %v4077
        %v4210 = vpack.c.b16 %v4082, %v4078
        %4339 = vmatpush.bf16.msra.mxu0 %v4111
        %4340 = vmatpush.bf16.msra.mxu0 %v4107
        %4341 = vmatpush.bf16.msra.mxu0 %v4103
        %4342 = vmatpush.bf16.msra.mxu0 %v4099
        %4343 = vmatpush.bf16.msra.mxu0 %v4095
        %4344 = vmatpush.bf16.msra.mxu0 %v4091
        %4345 = vmatpush.bf16.msra.mxu0 %v4087
        %4346 = vmatpush.bf16.msra.mxu0 %v4083
        %4347 = vmatmul.bf16.gmra.mxu0 %v3691
        %v4348 = vpop.f32.mrf.mxu0
        %v4349 = vadd.f32 0.0, %v4348
        %v4350 = vpop.f32.mrf.mxu0
        %v4351 = vadd.f32 0.0, %v4350
        %4352 = vdwg.mxu0
        %4353 = vmatpush.bf16.msra.mxu0 %v4143
        %4354 = vmatpush.bf16.msra.mxu0 %v4139
        %4355 = vmatpush.bf16.msra.mxu0 %v4135
        %4356 = vmatpush.bf16.msra.mxu0 %v4131
        %4357 = vmatpush.bf16.msra.mxu0 %v4127
        %4358 = vmatpush.bf16.msra.mxu0 %v4123
        %4359 = vmatpush.bf16.msra.mxu0 %v4119
        %4360 = vmatpush.bf16.msra.mxu0 %v4115
        %4361 = vmatmul.bf16.gmra.mxu0 %v3692
        %v4362 = vpop.f32.mrf.mxu0
        %v4363 = vadd.f32 %v4349, %v4362
        %v4364 = vpop.f32.mrf.mxu0
        %v4365 = vadd.f32 %v4351, %v4364
        %4366 = vdwg.mxu0
        %4367 = vmatpush.bf16.msra.mxu0 %v4175
        %4368 = vmatpush.bf16.msra.mxu0 %v4171
        %4369 = vmatpush.bf16.msra.mxu0 %v4167
        %4370 = vmatpush.bf16.msra.mxu0 %v4163
        %4371 = vmatpush.bf16.msra.mxu0 %v4159
        %4372 = vmatpush.bf16.msra.mxu0 %v4155
        %4373 = vmatpush.bf16.msra.mxu0 %v4151
        %4374 = vmatpush.bf16.msra.mxu0 %v4147
        %4375 = vmatmul.bf16.gmra.mxu0 %v3693
        %v4376 = vpop.f32.mrf.mxu0
        %v4377 = vadd.f32 %v4363, %v4376
        %v4378 = vpop.f32.mrf.mxu0
        %v4379 = vadd.f32 %v4365, %v4378
        %4380 = vdwg.mxu0
        %4381 = vmatpush.bf16.msra.mxu0 %v4207
        %4382 = vmatpush.bf16.msra.mxu0 %v4203
        %4383 = vmatpush.bf16.msra.mxu0 %v4199
        %4384 = vmatpush.bf16.msra.mxu0 %v4195
        %4385 = vmatpush.bf16.msra.mxu0 %v4191
        %4386 = vmatpush.bf16.msra.mxu0 %v4187
        %4387 = vmatpush.bf16.msra.mxu0 %v4183
        %4388 = vmatpush.bf16.msra.mxu0 %v4179
        %4389 = vmatmul.bf16.gmra.mxu0 %v3694
        %v4390 = vpop.f32.mrf.mxu0
        %v4391 = vadd.f32 %v4377, %v4390
        %v4392 = vpop.f32.mrf.mxu0
        %v4393 = vadd.f32 %v4379, %v4392
        %4394 = vdwg.mxu0
        %4395 = vmatpush.bf16.msra.mxu0 %v4112
        %4396 = vmatpush.bf16.msra.mxu0 %v4108
        %4397 = vmatpush.bf16.msra.mxu0 %v4104
        %4398 = vmatpush.bf16.msra.mxu0 %v4100
        %4399 = vmatpush.bf16.msra.mxu0 %v4096
        %4400 = vmatpush.bf16.msra.mxu0 %v4092
        %4401 = vmatpush.bf16.msra.mxu0 %v4088
        %4402 = vmatpush.bf16.msra.mxu0 %v4084
        %4403 = vmatmul.bf16.gmra.mxu0 %v3691
        %v4404 = vpop.f32.mrf.mxu0
        %v4405 = vadd.f32 0.0, %v4404
        %v4406 = vpop.f32.mrf.mxu0
        %v4407 = vadd.f32 0.0, %v4406
        %4408 = vdwg.mxu0
        %4409 = vmatpush.bf16.msra.mxu0 %v4144
        %4410 = vmatpush.bf16.msra.mxu0 %v4140
        %4411 = vmatpush.bf16.msra.mxu0 %v4136
        %4412 = vmatpush.bf16.msra.mxu0 %v4132
        %4413 = vmatpush.bf16.msra.mxu0 %v4128
        %4414 = vmatpush.bf16.msra.mxu0 %v4124
        %4415 = vmatpush.bf16.msra.mxu0 %v4120
        %4416 = vmatpush.bf16.msra.mxu0 %v4116
        %4417 = vmatmul.bf16.gmra.mxu0 %v3692
        %v4418 = vpop.f32.mrf.mxu0
        %v4419 = vadd.f32 %v4405, %v4418
        %v4420 = vpop.f32.mrf.mxu0
        %v4421 = vadd.f32 %v4407, %v4420
        %4422 = vdwg.mxu0
        %4423 = vmatpush.bf16.msra.mxu0 %v4176
        %4424 = vmatpush.bf16.msra.mxu0 %v4172
        %4425 = vmatpush.bf16.msra.mxu0 %v4168
        %4426 = vmatpush.bf16.msra.mxu0 %v4164
        %4427 = vmatpush.bf16.msra.mxu0 %v4160
        %4428 = vmatpush.bf16.msra.mxu0 %v4156
        %4429 = vmatpush.bf16.msra.mxu0 %v4152
        %4430 = vmatpush.bf16.msra.mxu0 %v4148
        %4431 = vmatmul.bf16.gmra.mxu0 %v3693
        %v4432 = vpop.f32.mrf.mxu0
        %v4433 = vadd.f32 %v4419, %v4432
        %v4434 = vpop.f32.mrf.mxu0
        %v4435 = vadd.f32 %v4421, %v4434
        %4436 = vdwg.mxu0
        %4437 = vmatpush.bf16.msra.mxu0 %v4208
        %4438 = vmatpush.bf16.msra.mxu0 %v4204
        %4439 = vmatpush.bf16.msra.mxu0 %v4200
        %4440 = vmatpush.bf16.msra.mxu0 %v4196
        %4441 = vmatpush.bf16.msra.mxu0 %v4192
        %4442 = vmatpush.bf16.msra.mxu0 %v4188
        %4443 = vmatpush.bf16.msra.mxu0 %v4184
        %4444 = vmatpush.bf16.msra.mxu0 %v4180
        %4445 = vmatmul.bf16.gmra.mxu0 %v3694
        %v4446 = vpop.f32.mrf.mxu0
        %v4447 = vadd.f32 %v4433, %v4446
        %v4448 = vpop.f32.mrf.mxu0
        %v4449 = vadd.f32 %v4435, %v4448
        %4450 = vdwg.mxu0
        %4451 = vmatpush.bf16.msra.mxu0 %v4113
        %4452 = vmatpush.bf16.msra.mxu0 %v4109
        %4453 = vmatpush.bf16.msra.mxu0 %v4105
        %4454 = vmatpush.bf16.msra.mxu0 %v4101
        %4455 = vmatpush.bf16.msra.mxu0 %v4097
        %4456 = vmatpush.bf16.msra.mxu0 %v4093
        %4457 = vmatpush.bf16.msra.mxu0 %v4089
        %4458 = vmatpush.bf16.msra.mxu0 %v4085
        %4459 = vmatmul.bf16.gmra.mxu0 %v3691
        %v4460 = vpop.f32.mrf.mxu0
        %v4461 = vadd.f32 0.0, %v4460
        %v4462 = vpop.f32.mrf.mxu0
        %v4463 = vadd.f32 0.0, %v4462
        %4464 = vdwg.mxu0
        %4465 = vmatpush.bf16.msra.mxu0 %v4145
        %4466 = vmatpush.bf16.msra.mxu0 %v4141
        %4467 = vmatpush.bf16.msra.mxu0 %v4137
        %4468 = vmatpush.bf16.msra.mxu0 %v4133
        %4469 = vmatpush.bf16.msra.mxu0 %v4129
        %4470 = vmatpush.bf16.msra.mxu0 %v4125
        %4471 = vmatpush.bf16.msra.mxu0 %v4121
        %4472 = vmatpush.bf16.msra.mxu0 %v4117
        %4473 = vmatmul.bf16.gmra.mxu0 %v3692
        %v4474 = vpop.f32.mrf.mxu0
        %v4475 = vadd.f32 %v4461, %v4474
        %v4476 = vpop.f32.mrf.mxu0
        %v4477 = vadd.f32 %v4463, %v4476
        %4478 = vdwg.mxu0
        %4479 = vmatpush.bf16.msra.mxu0 %v4177
        %4480 = vmatpush.bf16.msra.mxu0 %v4173
        %4481 = vmatpush.bf16.msra.mxu0 %v4169
        %4482 = vmatpush.bf16.msra.mxu0 %v4165
        %4483 = vmatpush.bf16.msra.mxu0 %v4161
        %4484 = vmatpush.bf16.msra.mxu0 %v4157
        %4485 = vmatpush.bf16.msra.mxu0 %v4153
        %4486 = vmatpush.bf16.msra.mxu0 %v4149
        %4487 = vmatmul.bf16.gmra.mxu0 %v3693
        %v4488 = vpop.f32.mrf.mxu0
        %v4489 = vadd.f32 %v4475, %v4488
        %v4490 = vpop.f32.mrf.mxu0
        %v4491 = vadd.f32 %v4477, %v4490
        %4492 = vdwg.mxu0
        %4493 = vmatpush.bf16.msra.mxu0 %v4209
        %4494 = vmatpush.bf16.msra.mxu0 %v4205
        %4495 = vmatpush.bf16.msra.mxu0 %v4201
        %4496 = vmatpush.bf16.msra.mxu0 %v4197
        %4497 = vmatpush.bf16.msra.mxu0 %v4193
        %4498 = vmatpush.bf16.msra.mxu0 %v4189
        %4499 = vmatpush.bf16.msra.mxu0 %v4185
        %4500 = vmatpush.bf16.msra.mxu0 %v4181
        %4501 = vmatmul.bf16.gmra.mxu0 %v3694
        %v4502 = vpop.f32.mrf.mxu0
        %v4503 = vadd.f32 %v4489, %v4502
        %v4504 = vpop.f32.mrf.mxu0
        %v4505 = vadd.f32 %v4491, %v4504
        %4506 = vdwg.mxu0
        %4507 = vmatpush.bf16.msra.mxu0 %v4114
        %4508 = vmatpush.bf16.msra.mxu0 %v4110
        %4509 = vmatpush.bf16.msra.mxu0 %v4106
        %4510 = vmatpush.bf16.msra.mxu0 %v4102
        %4511 = vmatpush.bf16.msra.mxu0 %v4098
        %4512 = vmatpush.bf16.msra.mxu0 %v4094
        %4513 = vmatpush.bf16.msra.mxu0 %v4090
        %4514 = vmatpush.bf16.msra.mxu0 %v4086
        %4515 = vmatmul.bf16.gmra.mxu0 %v3691
        %v4516 = vpop.f32.mrf.mxu0
        %v4517 = vadd.f32 0.0, %v4516
        %v4518 = vpop.f32.mrf.mxu0
        %v4519 = vadd.f32 0.0, %v4518
        %4520 = vdwg.mxu0
        %4521 = vmatpush.bf16.msra.mxu0 %v4146
        %4522 = vmatpush.bf16.msra.mxu0 %v4142
        %4523 = vmatpush.bf16.msra.mxu0 %v4138
        %4524 = vmatpush.bf16.msra.mxu0 %v4134
        %4525 = vmatpush.bf16.msra.mxu0 %v4130
        %4526 = vmatpush.bf16.msra.mxu0 %v4126
        %4527 = vmatpush.bf16.msra.mxu0 %v4122
        %4528 = vmatpush.bf16.msra.mxu0 %v4118
        %4529 = vmatmul.bf16.gmra.mxu0 %v3692
        %v4530 = vpop.f32.mrf.mxu0
        %v4531 = vadd.f32 %v4517, %v4530
        %v4532 = vpop.f32.mrf.mxu0
        %v4533 = vadd.f32 %v4519, %v4532
        %4534 = vdwg.mxu0
        %4535 = vmatpush.bf16.msra.mxu0 %v4178
        %4536 = vmatpush.bf16.msra.mxu0 %v4174
        %4537 = vmatpush.bf16.msra.mxu0 %v4170
        %4538 = vmatpush.bf16.msra.mxu0 %v4166
        %4539 = vmatpush.bf16.msra.mxu0 %v4162
        %4540 = vmatpush.bf16.msra.mxu0 %v4158
        %4541 = vmatpush.bf16.msra.mxu0 %v4154
        %4542 = vmatpush.bf16.msra.mxu0 %v4150
        %4543 = vmatmul.bf16.gmra.mxu0 %v3693
        %v4544 = vpop.f32.mrf.mxu0
        %v4545 = vadd.f32 %v4531, %v4544
        %v4546 = vpop.f32.mrf.mxu0
        %v4547 = vadd.f32 %v4533, %v4546
        %4548 = vdwg.mxu0
        %4549 = vmatpush.bf16.msra.mxu0 %v4210
        %4550 = vmatpush.bf16.msra.mxu0 %v4206
        %4551 = vmatpush.bf16.msra.mxu0 %v4202
        %4552 = vmatpush.bf16.msra.mxu0 %v4198
        %4553 = vmatpush.bf16.msra.mxu0 %v4194
        %4554 = vmatpush.bf16.msra.mxu0 %v4190
        %4555 = vmatpush.bf16.msra.mxu0 %v4186
        %4556 = vmatpush.bf16.msra.mxu0 %v4182
        %4557 = vmatmul.bf16.gmra.mxu0 %v3694
        %v4558 = vpop.f32.mrf.mxu0
        %v4559 = vadd.f32 %v4545, %v4558
        %v4560 = vpop.f32.mrf.mxu0
        %v4561 = vadd.f32 %v4547, %v4560
        %4562 = vdwg.mxu0
        %v4567 = vunpack.c.l.b16 %v3413
        %v4568 = vunpack.c.h.b16 %v3413
        %v4569 = vunpack.c.l.b16 %v3414
        %v4570 = vunpack.c.h.b16 %v3414
        %v4571 = vunpack.c.l.b16 %v3415
        %v4572 = vunpack.c.h.b16 %v3415
        %v4573 = vunpack.c.l.b16 %v3416
        %v4574 = vunpack.c.h.b16 %v3416
        %v4575 = vpack.c.b16 %v4571, %v4567
        %v4576 = vpack.c.b16 %v4572, %v4568
        %v4577 = vpack.c.b16 %v4573, %v4569
        %v4578 = vpack.c.b16 %v4574, %v4570
        %v4711 = vunpack.c.l.b16 %v3418
        %v4712 = vunpack.c.h.b16 %v3418
        %v4713 = vunpack.c.l.b16 %v3419
        %v4714 = vunpack.c.h.b16 %v3419
        %v4715 = vunpack.c.l.b16 %v3420
        %v4716 = vunpack.c.h.b16 %v3420
        %v4717 = vunpack.c.l.b16 %v3421
        %v4718 = vunpack.c.h.b16 %v3421
        %v4719 = vunpack.c.l.b16 %v3422
        %v4720 = vunpack.c.h.b16 %v3422
        %v4721 = vunpack.c.l.b16 %v3423
        %v4722 = vunpack.c.h.b16 %v3423
        %v4723 = vunpack.c.l.b16 %v3424
        %v4724 = vunpack.c.h.b16 %v3424
        %v4725 = vunpack.c.l.b16 %v3425
        %v4726 = vunpack.c.h.b16 %v3425
        %v4727 = vunpack.c.l.b16 %v3426
        %v4728 = vunpack.c.h.b16 %v3426
        %v4729 = vunpack.c.l.b16 %v3427
        %v4730 = vunpack.c.h.b16 %v3427
        %v4731 = vunpack.c.l.b16 %v3428
        %v4732 = vunpack.c.h.b16 %v3428
        %v4733 = vunpack.c.l.b16 %v3429
        %v4734 = vunpack.c.h.b16 %v3429
        %v4735 = vunpack.c.l.b16 %v3430
        %v4736 = vunpack.c.h.b16 %v3430
        %v4737 = vunpack.c.l.b16 %v3431
        %v4738 = vunpack.c.h.b16 %v3431
        %v4739 = vunpack.c.l.b16 %v3432
        %v4740 = vunpack.c.h.b16 %v3432
        %v4741 = vunpack.c.l.b16 %v3433
        %v4742 = vunpack.c.h.b16 %v3433
        %v4743 = vunpack.c.l.b16 %v3434
        %v4744 = vunpack.c.h.b16 %v3434
        %v4745 = vunpack.c.l.b16 %v3435
        %v4746 = vunpack.c.h.b16 %v3435
        %v4747 = vunpack.c.l.b16 %v3436
        %v4748 = vunpack.c.h.b16 %v3436
        %v4749 = vunpack.c.l.b16 %v3437
        %v4750 = vunpack.c.h.b16 %v3437
        %v4751 = vunpack.c.l.b16 %v3438
        %v4752 = vunpack.c.h.b16 %v3438
        %v4753 = vunpack.c.l.b16 %v3439
        %v4754 = vunpack.c.h.b16 %v3439
        %v4755 = vunpack.c.l.b16 %v3440
        %v4756 = vunpack.c.h.b16 %v3440
        %v4757 = vunpack.c.l.b16 %v3441
        %v4758 = vunpack.c.h.b16 %v3441
        %v4759 = vunpack.c.l.b16 %v3442
        %v4760 = vunpack.c.h.b16 %v3442
        %v4761 = vunpack.c.l.b16 %v3443
        %v4762 = vunpack.c.h.b16 %v3443
        %v4763 = vunpack.c.l.b16 %v3444
        %v4764 = vunpack.c.h.b16 %v3444
        %v4765 = vunpack.c.l.b16 %v3445
        %v4766 = vunpack.c.h.b16 %v3445
        %v4767 = vunpack.c.l.b16 %v3446
        %v4768 = vunpack.c.h.b16 %v3446
        %v4769 = vunpack.c.l.b16 %v3447
        %v4770 = vunpack.c.h.b16 %v3447
        %v4771 = vunpack.c.l.b16 %v3448
        %v4772 = vunpack.c.h.b16 %v3448
        %v4773 = vunpack.c.l.b16 %v3449
        %v4774 = vunpack.c.h.b16 %v3449
        %v4775 = vunpack.c.l.b16 %v3450
        %v4776 = vunpack.c.h.b16 %v3450
        %v4777 = vunpack.c.l.b16 %v3451
        %v4778 = vunpack.c.h.b16 %v3451
        %v4779 = vunpack.c.l.b16 %v3452
        %v4780 = vunpack.c.h.b16 %v3452
        %v4781 = vunpack.c.l.b16 %v3453
        %v4782 = vunpack.c.h.b16 %v3453
        %v4783 = vunpack.c.l.b16 %v3454
        %v4784 = vunpack.c.h.b16 %v3454
        %v4785 = vunpack.c.l.b16 %v3455
        %v4786 = vunpack.c.h.b16 %v3455
        %v4787 = vunpack.c.l.b16 %v3456
        %v4788 = vunpack.c.h.b16 %v3456
        %v4789 = vunpack.c.l.b16 %v3457
        %v4790 = vunpack.c.h.b16 %v3457
        %v4791 = vunpack.c.l.b16 %v3458
        %v4792 = vunpack.c.h.b16 %v3458
        %v4793 = vunpack.c.l.b16 %v3459
        %v4794 = vunpack.c.h.b16 %v3459
        %v4795 = vunpack.c.l.b16 %v3460
        %v4796 = vunpack.c.h.b16 %v3460
        %v4797 = vunpack.c.l.b16 %v3461
        %v4798 = vunpack.c.h.b16 %v3461
        %v4799 = vunpack.c.l.b16 %v3462
        %v4800 = vunpack.c.h.b16 %v3462
        %v4801 = vunpack.c.l.b16 %v3463
        %v4802 = vunpack.c.h.b16 %v3463
        %v4803 = vunpack.c.l.b16 %v3464
        %v4804 = vunpack.c.h.b16 %v3464
        %v4805 = vunpack.c.l.b16 %v3465
        %v4806 = vunpack.c.h.b16 %v3465
        %v4807 = vunpack.c.l.b16 %v3466
        %v4808 = vunpack.c.h.b16 %v3466
        %v4809 = vunpack.c.l.b16 %v3467
        %v4810 = vunpack.c.h.b16 %v3467
        %v4811 = vunpack.c.l.b16 %v3468
        %v4812 = vunpack.c.h.b16 %v3468
        %v4813 = vunpack.c.l.b16 %v3469
        %v4814 = vunpack.c.h.b16 %v3469
        %v4815 = vunpack.c.l.b16 %v3470
        %v4816 = vunpack.c.h.b16 %v3470
        %v4817 = vunpack.c.l.b16 %v3471
        %v4818 = vunpack.c.h.b16 %v3471
        %v4819 = vunpack.c.l.b16 %v3472
        %v4820 = vunpack.c.h.b16 %v3472
        %v4821 = vunpack.c.l.b16 %v3473
        %v4822 = vunpack.c.h.b16 %v3473
        %v4823 = vunpack.c.l.b16 %v3474
        %v4824 = vunpack.c.h.b16 %v3474
        %v4825 = vunpack.c.l.b16 %v3475
        %v4826 = vunpack.c.h.b16 %v3475
        %v4827 = vunpack.c.l.b16 %v3476
        %v4828 = vunpack.c.h.b16 %v3476
        %v4829 = vunpack.c.l.b16 %v3477
        %v4830 = vunpack.c.h.b16 %v3477
        %v4831 = vunpack.c.l.b16 %v3478
        %v4832 = vunpack.c.h.b16 %v3478
        %v4833 = vunpack.c.l.b16 %v3479
        %v4834 = vunpack.c.h.b16 %v3479
        %v4835 = vunpack.c.l.b16 %v3480
        %v4836 = vunpack.c.h.b16 %v3480
        %v4837 = vunpack.c.l.b16 %v3481
        %v4838 = vunpack.c.h.b16 %v3481
        %v4839 = vunpack.c.l.b16 %v3482
        %v4840 = vunpack.c.h.b16 %v3482
        %v4841 = vunpack.c.l.b16 %v3483
        %v4842 = vunpack.c.h.b16 %v3483
        %v4843 = vunpack.c.l.b16 %v3484
        %v4844 = vunpack.c.h.b16 %v3484
        %v4845 = vunpack.c.l.b16 %v3485
        %v4846 = vunpack.c.h.b16 %v3485
        %v4847 = vunpack.c.l.b16 %v3486
        %v4848 = vunpack.c.h.b16 %v3486
        %v4849 = vunpack.c.l.b16 %v3487
        %v4850 = vunpack.c.h.b16 %v3487
        %v4851 = vunpack.c.l.b16 %v3488
        %v4852 = vunpack.c.h.b16 %v3488
        %v4853 = vunpack.c.l.b16 %v3489
        %v4854 = vunpack.c.h.b16 %v3489
        %v4855 = vunpack.c.l.b16 %v3490
        %v4856 = vunpack.c.h.b16 %v3490
        %v4857 = vunpack.c.l.b16 %v3491
        %v4858 = vunpack.c.h.b16 %v3491
        %v4859 = vunpack.c.l.b16 %v3492
        %v4860 = vunpack.c.h.b16 %v3492
        %v4861 = vunpack.c.l.b16 %v3493
        %v4862 = vunpack.c.h.b16 %v3493
        %v4863 = vunpack.c.l.b16 %v3494
        %v4864 = vunpack.c.h.b16 %v3494
        %v4865 = vunpack.c.l.b16 %v3495
        %v4866 = vunpack.c.h.b16 %v3495
        %v4867 = vunpack.c.l.b16 %v3496
        %v4868 = vunpack.c.h.b16 %v3496
        %v4869 = vunpack.c.l.b16 %v3497
        %v4870 = vunpack.c.h.b16 %v3497
        %v4871 = vunpack.c.l.b16 %v3498
        %v4872 = vunpack.c.h.b16 %v3498
        %v4873 = vunpack.c.l.b16 %v3499
        %v4874 = vunpack.c.h.b16 %v3499
        %v4875 = vunpack.c.l.b16 %v3500
        %v4876 = vunpack.c.h.b16 %v3500
        %v4877 = vunpack.c.l.b16 %v3501
        %v4878 = vunpack.c.h.b16 %v3501
        %v4879 = vunpack.c.l.b16 %v3502
        %v4880 = vunpack.c.h.b16 %v3502
        %v4881 = vunpack.c.l.b16 %v3503
        %v4882 = vunpack.c.h.b16 %v3503
        %v4883 = vunpack.c.l.b16 %v3504
        %v4884 = vunpack.c.h.b16 %v3504
        %v4885 = vunpack.c.l.b16 %v3505
        %v4886 = vunpack.c.h.b16 %v3505
        %v4887 = vunpack.c.l.b16 %v3506
        %v4888 = vunpack.c.h.b16 %v3506
        %v4889 = vunpack.c.l.b16 %v3507
        %v4890 = vunpack.c.h.b16 %v3507
        %v4891 = vunpack.c.l.b16 %v3508
        %v4892 = vunpack.c.h.b16 %v3508
        %v4893 = vunpack.c.l.b16 %v3509
        %v4894 = vunpack.c.h.b16 %v3509
        %v4895 = vunpack.c.l.b16 %v3510
        %v4896 = vunpack.c.h.b16 %v3510
        %v4897 = vunpack.c.l.b16 %v3511
        %v4898 = vunpack.c.h.b16 %v3511
        %v4899 = vunpack.c.l.b16 %v3512
        %v4900 = vunpack.c.h.b16 %v3512
        %v4901 = vunpack.c.l.b16 %v3513
        %v4902 = vunpack.c.h.b16 %v3513
        %v4903 = vunpack.c.l.b16 %v3514
        %v4904 = vunpack.c.h.b16 %v3514
        %v4905 = vunpack.c.l.b16 %v3515
        %v4906 = vunpack.c.h.b16 %v3515
        %v4907 = vunpack.c.l.b16 %v3516
        %v4908 = vunpack.c.h.b16 %v3516
        %v4909 = vunpack.c.l.b16 %v3517
        %v4910 = vunpack.c.h.b16 %v3517
        %v4911 = vunpack.c.l.b16 %v3518
        %v4912 = vunpack.c.h.b16 %v3518
        %v4913 = vunpack.c.l.b16 %v3519
        %v4914 = vunpack.c.h.b16 %v3519
        %v4915 = vunpack.c.l.b16 %v3520
        %v4916 = vunpack.c.h.b16 %v3520
        %v4917 = vunpack.c.l.b16 %v3521
        %v4918 = vunpack.c.h.b16 %v3521
        %v4919 = vunpack.c.l.b16 %v3522
        %v4920 = vunpack.c.h.b16 %v3522
        %v4921 = vunpack.c.l.b16 %v3523
        %v4922 = vunpack.c.h.b16 %v3523
        %v4923 = vunpack.c.l.b16 %v3524
        %v4924 = vunpack.c.h.b16 %v3524
        %v4925 = vunpack.c.l.b16 %v3525
        %v4926 = vunpack.c.h.b16 %v3525
        %v4927 = vunpack.c.l.b16 %v3526
        %v4928 = vunpack.c.h.b16 %v3526
        %v4929 = vunpack.c.l.b16 %v3527
        %v4930 = vunpack.c.h.b16 %v3527
        %v4931 = vunpack.c.l.b16 %v3528
        %v4932 = vunpack.c.h.b16 %v3528
        %v4933 = vunpack.c.l.b16 %v3529
        %v4934 = vunpack.c.h.b16 %v3529
        %v4935 = vunpack.c.l.b16 %v3530
        %v4936 = vunpack.c.h.b16 %v3530
        %v4937 = vunpack.c.l.b16 %v3531
        %v4938 = vunpack.c.h.b16 %v3531
        %v4939 = vunpack.c.l.b16 %v3532
        %v4940 = vunpack.c.h.b16 %v3532
        %v4941 = vunpack.c.l.b16 %v3533
        %v4942 = vunpack.c.h.b16 %v3533
        %v4943 = vunpack.c.l.b16 %v3534
        %v4944 = vunpack.c.h.b16 %v3534
        %v4945 = vunpack.c.l.b16 %v3535
        %v4946 = vunpack.c.h.b16 %v3535
        %v4947 = vunpack.c.l.b16 %v3536
        %v4948 = vunpack.c.h.b16 %v3536
        %v4949 = vunpack.c.l.b16 %v3537
        %v4950 = vunpack.c.h.b16 %v3537
        %v4951 = vunpack.c.l.b16 %v3538
        %v4952 = vunpack.c.h.b16 %v3538
        %v4953 = vunpack.c.l.b16 %v3539
        %v4954 = vunpack.c.h.b16 %v3539
        %v4955 = vunpack.c.l.b16 %v3540
        %v4956 = vunpack.c.h.b16 %v3540
        %v4957 = vunpack.c.l.b16 %v3541
        %v4958 = vunpack.c.h.b16 %v3541
        %v4959 = vunpack.c.l.b16 %v3542
        %v4960 = vunpack.c.h.b16 %v3542
        %v4961 = vunpack.c.l.b16 %v3543
        %v4962 = vunpack.c.h.b16 %v3543
        %v4963 = vunpack.c.l.b16 %v3544
        %v4964 = vunpack.c.h.b16 %v3544
        %v4965 = vunpack.c.l.b16 %v3545
        %v4966 = vunpack.c.h.b16 %v3545
        %v4967 = vpack.c.b16 %v4715, %v4711
        %v4968 = vpack.c.b16 %v4716, %v4712
        %v4969 = vpack.c.b16 %v4717, %v4713
        %v4970 = vpack.c.b16 %v4718, %v4714
        %v4971 = vpack.c.b16 %v4723, %v4719
        %v4972 = vpack.c.b16 %v4724, %v4720
        %v4973 = vpack.c.b16 %v4725, %v4721
        %v4974 = vpack.c.b16 %v4726, %v4722
        %v4975 = vpack.c.b16 %v4731, %v4727
        %v4976 = vpack.c.b16 %v4732, %v4728
        %v4977 = vpack.c.b16 %v4733, %v4729
        %v4978 = vpack.c.b16 %v4734, %v4730
        %v4979 = vpack.c.b16 %v4739, %v4735
        %v4980 = vpack.c.b16 %v4740, %v4736
        %v4981 = vpack.c.b16 %v4741, %v4737
        %v4982 = vpack.c.b16 %v4742, %v4738
        %v4983 = vpack.c.b16 %v4747, %v4743
        %v4984 = vpack.c.b16 %v4748, %v4744
        %v4985 = vpack.c.b16 %v4749, %v4745
        %v4986 = vpack.c.b16 %v4750, %v4746
        %v4987 = vpack.c.b16 %v4755, %v4751
        %v4988 = vpack.c.b16 %v4756, %v4752
        %v4989 = vpack.c.b16 %v4757, %v4753
        %v4990 = vpack.c.b16 %v4758, %v4754
        %v4991 = vpack.c.b16 %v4763, %v4759
        %v4992 = vpack.c.b16 %v4764, %v4760
        %v4993 = vpack.c.b16 %v4765, %v4761
        %v4994 = vpack.c.b16 %v4766, %v4762
        %v4995 = vpack.c.b16 %v4771, %v4767
        %v4996 = vpack.c.b16 %v4772, %v4768
        %v4997 = vpack.c.b16 %v4773, %v4769
        %v4998 = vpack.c.b16 %v4774, %v4770
        %v4999 = vpack.c.b16 %v4779, %v4775
        %v5000 = vpack.c.b16 %v4780, %v4776
        %v5001 = vpack.c.b16 %v4781, %v4777
        %v5002 = vpack.c.b16 %v4782, %v4778
        %v5003 = vpack.c.b16 %v4787, %v4783
        %v5004 = vpack.c.b16 %v4788, %v4784
        %v5005 = vpack.c.b16 %v4789, %v4785
        %v5006 = vpack.c.b16 %v4790, %v4786
        %v5007 = vpack.c.b16 %v4795, %v4791
        %v5008 = vpack.c.b16 %v4796, %v4792
        %v5009 = vpack.c.b16 %v4797, %v4793
        %v5010 = vpack.c.b16 %v4798, %v4794
        %v5011 = vpack.c.b16 %v4803, %v4799
        %v5012 = vpack.c.b16 %v4804, %v4800
        %v5013 = vpack.c.b16 %v4805, %v4801
        %v5014 = vpack.c.b16 %v4806, %v4802
        %v5015 = vpack.c.b16 %v4811, %v4807
        %v5016 = vpack.c.b16 %v4812, %v4808
        %v5017 = vpack.c.b16 %v4813, %v4809
        %v5018 = vpack.c.b16 %v4814, %v4810
        %v5019 = vpack.c.b16 %v4819, %v4815
        %v5020 = vpack.c.b16 %v4820, %v4816
        %v5021 = vpack.c.b16 %v4821, %v4817
        %v5022 = vpack.c.b16 %v4822, %v4818
        %v5023 = vpack.c.b16 %v4827, %v4823
        %v5024 = vpack.c.b16 %v4828, %v4824
        %v5025 = vpack.c.b16 %v4829, %v4825
        %v5026 = vpack.c.b16 %v4830, %v4826
        %v5027 = vpack.c.b16 %v4835, %v4831
        %v5028 = vpack.c.b16 %v4836, %v4832
        %v5029 = vpack.c.b16 %v4837, %v4833
        %v5030 = vpack.c.b16 %v4838, %v4834
        %v5031 = vpack.c.b16 %v4843, %v4839
        %v5032 = vpack.c.b16 %v4844, %v4840
        %v5033 = vpack.c.b16 %v4845, %v4841
        %v5034 = vpack.c.b16 %v4846, %v4842
        %v5035 = vpack.c.b16 %v4851, %v4847
        %v5036 = vpack.c.b16 %v4852, %v4848
        %v5037 = vpack.c.b16 %v4853, %v4849
        %v5038 = vpack.c.b16 %v4854, %v4850
        %v5039 = vpack.c.b16 %v4859, %v4855
        %v5040 = vpack.c.b16 %v4860, %v4856
        %v5041 = vpack.c.b16 %v4861, %v4857
        %v5042 = vpack.c.b16 %v4862, %v4858
        %v5043 = vpack.c.b16 %v4867, %v4863
        %v5044 = vpack.c.b16 %v4868, %v4864
        %v5045 = vpack.c.b16 %v4869, %v4865
        %v5046 = vpack.c.b16 %v4870, %v4866
        %v5047 = vpack.c.b16 %v4875, %v4871
        %v5048 = vpack.c.b16 %v4876, %v4872
        %v5049 = vpack.c.b16 %v4877, %v4873
        %v5050 = vpack.c.b16 %v4878, %v4874
        %v5051 = vpack.c.b16 %v4883, %v4879
        %v5052 = vpack.c.b16 %v4884, %v4880
        %v5053 = vpack.c.b16 %v4885, %v4881
        %v5054 = vpack.c.b16 %v4886, %v4882
        %v5055 = vpack.c.b16 %v4891, %v4887
        %v5056 = vpack.c.b16 %v4892, %v4888
        %v5057 = vpack.c.b16 %v4893, %v4889
        %v5058 = vpack.c.b16 %v4894, %v4890
        %v5059 = vpack.c.b16 %v4899, %v4895
        %v5060 = vpack.c.b16 %v4900, %v4896
        %v5061 = vpack.c.b16 %v4901, %v4897
        %v5062 = vpack.c.b16 %v4902, %v4898
        %v5063 = vpack.c.b16 %v4907, %v4903
        %v5064 = vpack.c.b16 %v4908, %v4904
        %v5065 = vpack.c.b16 %v4909, %v4905
        %v5066 = vpack.c.b16 %v4910, %v4906
        %v5067 = vpack.c.b16 %v4915, %v4911
        %v5068 = vpack.c.b16 %v4916, %v4912
        %v5069 = vpack.c.b16 %v4917, %v4913
        %v5070 = vpack.c.b16 %v4918, %v4914
        %v5071 = vpack.c.b16 %v4923, %v4919
        %v5072 = vpack.c.b16 %v4924, %v4920
        %v5073 = vpack.c.b16 %v4925, %v4921
        %v5074 = vpack.c.b16 %v4926, %v4922
        %v5075 = vpack.c.b16 %v4931, %v4927
        %v5076 = vpack.c.b16 %v4932, %v4928
        %v5077 = vpack.c.b16 %v4933, %v4929
        %v5078 = vpack.c.b16 %v4934, %v4930
        %v5079 = vpack.c.b16 %v4939, %v4935
        %v5080 = vpack.c.b16 %v4940, %v4936
        %v5081 = vpack.c.b16 %v4941, %v4937
        %v5082 = vpack.c.b16 %v4942, %v4938
        %v5083 = vpack.c.b16 %v4947, %v4943
        %v5084 = vpack.c.b16 %v4948, %v4944
        %v5085 = vpack.c.b16 %v4949, %v4945
        %v5086 = vpack.c.b16 %v4950, %v4946
        %v5087 = vpack.c.b16 %v4955, %v4951
        %v5088 = vpack.c.b16 %v4956, %v4952
        %v5089 = vpack.c.b16 %v4957, %v4953
        %v5090 = vpack.c.b16 %v4958, %v4954
        %v5091 = vpack.c.b16 %v4963, %v4959
        %v5092 = vpack.c.b16 %v4964, %v4960
        %v5093 = vpack.c.b16 %v4965, %v4961
        %v5094 = vpack.c.b16 %v4966, %v4962
        %5223 = vmatpush.bf16.msra.mxu0 %v4995
        %5224 = vmatpush.bf16.msra.mxu0 %v4991
        %5225 = vmatpush.bf16.msra.mxu0 %v4987
        %5226 = vmatpush.bf16.msra.mxu0 %v4983
        %5227 = vmatpush.bf16.msra.mxu0 %v4979
        %5228 = vmatpush.bf16.msra.mxu0 %v4975
        %5229 = vmatpush.bf16.msra.mxu0 %v4971
        %5230 = vmatpush.bf16.msra.mxu0 %v4967
        %5231 = vmatmul.bf16.gmra.mxu0 %v4575
        %v5232 = vpop.f32.mrf.mxu0
        %v5233 = vadd.f32 %v4391, %v5232
        %v5234 = vpop.f32.mrf.mxu0
        %v5235 = vadd.f32 %v4393, %v5234
        %5236 = vdwg.mxu0
        %5237 = vmatpush.bf16.msra.mxu0 %v5027
        %5238 = vmatpush.bf16.msra.mxu0 %v5023
        %5239 = vmatpush.bf16.msra.mxu0 %v5019
        %5240 = vmatpush.bf16.msra.mxu0 %v5015
        %5241 = vmatpush.bf16.msra.mxu0 %v5011
        %5242 = vmatpush.bf16.msra.mxu0 %v5007
        %5243 = vmatpush.bf16.msra.mxu0 %v5003
        %5244 = vmatpush.bf16.msra.mxu0 %v4999
        %5245 = vmatmul.bf16.gmra.mxu0 %v4576
        %v5246 = vpop.f32.mrf.mxu0
        %v5247 = vadd.f32 %v5233, %v5246
        %v5248 = vpop.f32.mrf.mxu0
        %v5249 = vadd.f32 %v5235, %v5248
        %5250 = vdwg.mxu0
        %5251 = vmatpush.bf16.msra.mxu0 %v5059
        %5252 = vmatpush.bf16.msra.mxu0 %v5055
        %5253 = vmatpush.bf16.msra.mxu0 %v5051
        %5254 = vmatpush.bf16.msra.mxu0 %v5047
        %5255 = vmatpush.bf16.msra.mxu0 %v5043
        %5256 = vmatpush.bf16.msra.mxu0 %v5039
        %5257 = vmatpush.bf16.msra.mxu0 %v5035
        %5258 = vmatpush.bf16.msra.mxu0 %v5031
        %5259 = vmatmul.bf16.gmra.mxu0 %v4577
        %v5260 = vpop.f32.mrf.mxu0
        %v5261 = vadd.f32 %v5247, %v5260
        %v5262 = vpop.f32.mrf.mxu0
        %v5263 = vadd.f32 %v5249, %v5262
        %5264 = vdwg.mxu0
        %5265 = vmatpush.bf16.msra.mxu0 %v5091
        %5266 = vmatpush.bf16.msra.mxu0 %v5087
        %5267 = vmatpush.bf16.msra.mxu0 %v5083
        %5268 = vmatpush.bf16.msra.mxu0 %v5079
        %5269 = vmatpush.bf16.msra.mxu0 %v5075
        %5270 = vmatpush.bf16.msra.mxu0 %v5071
        %5271 = vmatpush.bf16.msra.mxu0 %v5067
        %5272 = vmatpush.bf16.msra.mxu0 %v5063
        %5273 = vmatmul.bf16.gmra.mxu0 %v4578
        %v5274 = vpop.f32.mrf.mxu0
        %v5275 = vadd.f32 %v5261, %v5274
        %v5276 = vpop.f32.mrf.mxu0
        %v5277 = vadd.f32 %v5263, %v5276
        %5278 = vdwg.mxu0
        %5279 = vmatpush.bf16.msra.mxu0 %v4996
        %5280 = vmatpush.bf16.msra.mxu0 %v4992
        %5281 = vmatpush.bf16.msra.mxu0 %v4988
        %5282 = vmatpush.bf16.msra.mxu0 %v4984
        %5283 = vmatpush.bf16.msra.mxu0 %v4980
        %5284 = vmatpush.bf16.msra.mxu0 %v4976
        %5285 = vmatpush.bf16.msra.mxu0 %v4972
        %5286 = vmatpush.bf16.msra.mxu0 %v4968
        %5287 = vmatmul.bf16.gmra.mxu0 %v4575
        %v5288 = vpop.f32.mrf.mxu0
        %v5289 = vadd.f32 %v4447, %v5288
        %v5290 = vpop.f32.mrf.mxu0
        %v5291 = vadd.f32 %v4449, %v5290
        %5292 = vdwg.mxu0
        %5293 = vmatpush.bf16.msra.mxu0 %v5028
        %5294 = vmatpush.bf16.msra.mxu0 %v5024
        %5295 = vmatpush.bf16.msra.mxu0 %v5020
        %5296 = vmatpush.bf16.msra.mxu0 %v5016
        %5297 = vmatpush.bf16.msra.mxu0 %v5012
        %5298 = vmatpush.bf16.msra.mxu0 %v5008
        %5299 = vmatpush.bf16.msra.mxu0 %v5004
        %5300 = vmatpush.bf16.msra.mxu0 %v5000
        %5301 = vmatmul.bf16.gmra.mxu0 %v4576
        %v5302 = vpop.f32.mrf.mxu0
        %v5303 = vadd.f32 %v5289, %v5302
        %v5304 = vpop.f32.mrf.mxu0
        %v5305 = vadd.f32 %v5291, %v5304
        %5306 = vdwg.mxu0
        %5307 = vmatpush.bf16.msra.mxu0 %v5060
        %5308 = vmatpush.bf16.msra.mxu0 %v5056
        %5309 = vmatpush.bf16.msra.mxu0 %v5052
        %5310 = vmatpush.bf16.msra.mxu0 %v5048
        %5311 = vmatpush.bf16.msra.mxu0 %v5044
        %5312 = vmatpush.bf16.msra.mxu0 %v5040
        %5313 = vmatpush.bf16.msra.mxu0 %v5036
        %5314 = vmatpush.bf16.msra.mxu0 %v5032
        %5315 = vmatmul.bf16.gmra.mxu0 %v4577
        %v5316 = vpop.f32.mrf.mxu0
        %v5317 = vadd.f32 %v5303, %v5316
        %v5318 = vpop.f32.mrf.mxu0
        %v5319 = vadd.f32 %v5305, %v5318
        %5320 = vdwg.mxu0
        %5321 = vmatpush.bf16.msra.mxu0 %v5092
        %5322 = vmatpush.bf16.msra.mxu0 %v5088
        %5323 = vmatpush.bf16.msra.mxu0 %v5084
        %5324 = vmatpush.bf16.msra.mxu0 %v5080
        %5325 = vmatpush.bf16.msra.mxu0 %v5076
        %5326 = vmatpush.bf16.msra.mxu0 %v5072
        %5327 = vmatpush.bf16.msra.mxu0 %v5068
        %5328 = vmatpush.bf16.msra.mxu0 %v5064
        %5329 = vmatmul.bf16.gmra.mxu0 %v4578
        %v5330 = vpop.f32.mrf.mxu0
        %v5331 = vadd.f32 %v5317, %v5330
        %v5332 = vpop.f32.mrf.mxu0
        %v5333 = vadd.f32 %v5319, %v5332
        %5334 = vdwg.mxu0
        %5335 = vmatpush.bf16.msra.mxu0 %v4997
        %5336 = vmatpush.bf16.msra.mxu0 %v4993
        %5337 = vmatpush.bf16.msra.mxu0 %v4989
        %5338 = vmatpush.bf16.msra.mxu0 %v4985
        %5339 = vmatpush.bf16.msra.mxu0 %v4981
        %5340 = vmatpush.bf16.msra.mxu0 %v4977
        %5341 = vmatpush.bf16.msra.mxu0 %v4973
        %5342 = vmatpush.bf16.msra.mxu0 %v4969
        %5343 = vmatmul.bf16.gmra.mxu0 %v4575
        %v5344 = vpop.f32.mrf.mxu0
        %v5345 = vadd.f32 %v4503, %v5344
        %v5346 = vpop.f32.mrf.mxu0
        %v5347 = vadd.f32 %v4505, %v5346
        %5348 = vdwg.mxu0
        %5349 = vmatpush.bf16.msra.mxu0 %v5029
        %5350 = vmatpush.bf16.msra.mxu0 %v5025
        %5351 = vmatpush.bf16.msra.mxu0 %v5021
        %5352 = vmatpush.bf16.msra.mxu0 %v5017
        %5353 = vmatpush.bf16.msra.mxu0 %v5013
        %5354 = vmatpush.bf16.msra.mxu0 %v5009
        %5355 = vmatpush.bf16.msra.mxu0 %v5005
        %5356 = vmatpush.bf16.msra.mxu0 %v5001
        %5357 = vmatmul.bf16.gmra.mxu0 %v4576
        %v5358 = vpop.f32.mrf.mxu0
        %v5359 = vadd.f32 %v5345, %v5358
        %v5360 = vpop.f32.mrf.mxu0
        %v5361 = vadd.f32 %v5347, %v5360
        %5362 = vdwg.mxu0
        %5363 = vmatpush.bf16.msra.mxu0 %v5061
        %5364 = vmatpush.bf16.msra.mxu0 %v5057
        %5365 = vmatpush.bf16.msra.mxu0 %v5053
        %5366 = vmatpush.bf16.msra.mxu0 %v5049
        %5367 = vmatpush.bf16.msra.mxu0 %v5045
        %5368 = vmatpush.bf16.msra.mxu0 %v5041
        %5369 = vmatpush.bf16.msra.mxu0 %v5037
        %5370 = vmatpush.bf16.msra.mxu0 %v5033
        %5371 = vmatmul.bf16.gmra.mxu0 %v4577
        %v5372 = vpop.f32.mrf.mxu0
        %v5373 = vadd.f32 %v5359, %v5372
        %v5374 = vpop.f32.mrf.mxu0
        %v5375 = vadd.f32 %v5361, %v5374
        %5376 = vdwg.mxu0
        %5377 = vmatpush.bf16.msra.mxu0 %v5093
        %5378 = vmatpush.bf16.msra.mxu0 %v5089
        %5379 = vmatpush.bf16.msra.mxu0 %v5085
        %5380 = vmatpush.bf16.msra.mxu0 %v5081
        %5381 = vmatpush.bf16.msra.mxu0 %v5077
        %5382 = vmatpush.bf16.msra.mxu0 %v5073
        %5383 = vmatpush.bf16.msra.mxu0 %v5069
        %5384 = vmatpush.bf16.msra.mxu0 %v5065
        %5385 = vmatmul.bf16.gmra.mxu0 %v4578
        %v5386 = vpop.f32.mrf.mxu0
        %v5387 = vadd.f32 %v5373, %v5386
        %v5388 = vpop.f32.mrf.mxu0
        %v5389 = vadd.f32 %v5375, %v5388
        %5390 = vdwg.mxu0
        %5391 = vmatpush.bf16.msra.mxu0 %v4998
        %5392 = vmatpush.bf16.msra.mxu0 %v4994
        %5393 = vmatpush.bf16.msra.mxu0 %v4990
        %5394 = vmatpush.bf16.msra.mxu0 %v4986
        %5395 = vmatpush.bf16.msra.mxu0 %v4982
        %5396 = vmatpush.bf16.msra.mxu0 %v4978
        %5397 = vmatpush.bf16.msra.mxu0 %v4974
        %5398 = vmatpush.bf16.msra.mxu0 %v4970
        %5399 = vmatmul.bf16.gmra.mxu0 %v4575
        %v5400 = vpop.f32.mrf.mxu0
        %v5401 = vadd.f32 %v4559, %v5400
        %v5402 = vpop.f32.mrf.mxu0
        %v5403 = vadd.f32 %v4561, %v5402
        %5404 = vdwg.mxu0
        %5405 = vmatpush.bf16.msra.mxu0 %v5030
        %5406 = vmatpush.bf16.msra.mxu0 %v5026
        %5407 = vmatpush.bf16.msra.mxu0 %v5022
        %5408 = vmatpush.bf16.msra.mxu0 %v5018
        %5409 = vmatpush.bf16.msra.mxu0 %v5014
        %5410 = vmatpush.bf16.msra.mxu0 %v5010
        %5411 = vmatpush.bf16.msra.mxu0 %v5006
        %5412 = vmatpush.bf16.msra.mxu0 %v5002
        %5413 = vmatmul.bf16.gmra.mxu0 %v4576
        %v5414 = vpop.f32.mrf.mxu0
        %v5415 = vadd.f32 %v5401, %v5414
        %v5416 = vpop.f32.mrf.mxu0
        %v5417 = vadd.f32 %v5403, %v5416
        %5418 = vdwg.mxu0
        %5419 = vmatpush.bf16.msra.mxu0 %v5062
        %5420 = vmatpush.bf16.msra.mxu0 %v5058
        %5421 = vmatpush.bf16.msra.mxu0 %v5054
        %5422 = vmatpush.bf16.msra.mxu0 %v5050
        %5423 = vmatpush.bf16.msra.mxu0 %v5046
        %5424 = vmatpush.bf16.msra.mxu0 %v5042
        %5425 = vmatpush.bf16.msra.mxu0 %v5038
        %5426 = vmatpush.bf16.msra.mxu0 %v5034
        %5427 = vmatmul.bf16.gmra.mxu0 %v4577
        %v5428 = vpop.f32.mrf.mxu0
        %v5429 = vadd.f32 %v5415, %v5428
        %v5430 = vpop.f32.mrf.mxu0
        %v5431 = vadd.f32 %v5417, %v5430
        %5432 = vdwg.mxu0
        %5433 = vmatpush.bf16.msra.mxu0 %v5094
        %5434 = vmatpush.bf16.msra.mxu0 %v5090
        %5435 = vmatpush.bf16.msra.mxu0 %v5086
        %5436 = vmatpush.bf16.msra.mxu0 %v5082
        %5437 = vmatpush.bf16.msra.mxu0 %v5078
        %5438 = vmatpush.bf16.msra.mxu0 %v5074
        %5439 = vmatpush.bf16.msra.mxu0 %v5070
        %5440 = vmatpush.bf16.msra.mxu0 %v5066
        %5441 = vmatmul.bf16.gmra.mxu0 %v4578
        %v5442 = vpop.f32.mrf.mxu0
        %v5443 = vadd.f32 %v5429, %v5442
        %v5444 = vpop.f32.mrf.mxu0
        %v5445 = vadd.f32 %v5431, %v5444
        %5446 = vdwg.mxu0
        %v5447 = vrot.slane %v3381, 1
        %v5448 = vrot.slane %v3382, 1
        %v5449 = vrot.slane %v3383, 1
        %v5450 = vrot.slane %v3384, 1
        %v5451 = vrot.slane %v3385, 1
        %v5452 = vrot.slane %v3386, 1
        %v5453 = vrot.slane %v3387, 1
        %v5454 = vrot.slane %v3388, 1
        %v5455 = vsel %vm2303, %v5447, %v5451
        %v5456 = vsel %vm2303, %v5448, %v5452
        %v5457 = vsel %vm2303, %v5449, %v5453
        %v5458 = vsel %vm2303, %v5450, %v5454
        %v5459 = vsel %vm2303, %v5451, %v5447
        %v5460 = vsel %vm2303, %v5452, %v5448
        %v5461 = vsel %vm2303, %v5453, %v5449
        %v5462 = vsel %vm2303, %v5454, %v5450
        %v5463 = vsel %vm2312, %v5455, 0.0
        %v5464 = vsel %vm2312, %v5456, 0.0
        %v5465 = vsel %vm2312, %v5457, 0.0
        %v5466 = vsel %vm2312, %v5458, 0.0
        %v5467 = vsel %vm2313, %v5459, 0.0
        %v5468 = vsel %vm2313, %v5460, 0.0
        %v5469 = vsel %vm2313, %v5461, 0.0
        %v5470 = vsel %vm2313, %v5462, 0.0
        %v5471 = vpack.c.bf16 %v5464, %v5463
        %v5472 = vpack.c.bf16 %v5466, %v5465
        %v5473 = vpack.c.bf16 %v5468, %v5467
        %v5474 = vpack.c.bf16 %v5470, %v5469
        %s5475 = scalar_lea.vmem [#allocation5], 5120
        %v5476 = vld [vmem:[%s5475] sm:$0xff]
        %v5477 = vld [vmem:[%s5475 + $0x8] sm:$0xff]
        %v5478 = vld [vmem:[%s5475 + $0x10] sm:$0xff]
        %v5479 = vld [vmem:[%s5475 + $0x18] sm:$0xff]
        %v5480 = vld [vmem:[%s5475 + $0x20] sm:$0xff]
        %v5481 = vld [vmem:[%s5475 + $0x28] sm:$0xff]
        %v5482 = vld [vmem:[%s5475 + $0x30] sm:$0xff]
        %v5483 = vld [vmem:[%s5475 + $0x38] sm:$0xff]
        %v5484 = vld [vmem:[%s5475 + $0x40] sm:$0xff]
        %v5485 = vld [vmem:[%s5475 + $0x48] sm:$0xff]
        %v5486 = vld [vmem:[%s5475 + $0x50] sm:$0xff]
        %v5487 = vld [vmem:[%s5475 + $0x58] sm:$0xff]
        %v5488 = vld [vmem:[%s5475 + $0x60] sm:$0xff]
        %v5489 = vld [vmem:[%s5475 + $0x68] sm:$0xff]
        %v5490 = vld [vmem:[%s5475 + $0x70] sm:$0xff]
        %v5491 = vld [vmem:[%s5475 + $0x78] sm:$0xff]
        %v5492 = vld [vmem:[%s5475 + $0x80] sm:$0xff]
        %v5493 = vld [vmem:[%s5475 + $0x88] sm:$0xff]
        %v5494 = vld [vmem:[%s5475 + $0x90] sm:$0xff]
        %v5495 = vld [vmem:[%s5475 + $0x98] sm:$0xff]
        %v5496 = vld [vmem:[%s5475 + $0xa0] sm:$0xff]
        %v5497 = vld [vmem:[%s5475 + $0xa8] sm:$0xff]
        %v5498 = vld [vmem:[%s5475 + $0xb0] sm:$0xff]
        %v5499 = vld [vmem:[%s5475 + $0xb8] sm:$0xff]
        %v5500 = vld [vmem:[%s5475 + $0xc0] sm:$0xff]
        %v5501 = vld [vmem:[%s5475 + $0xc8] sm:$0xff]
        %v5502 = vld [vmem:[%s5475 + $0xd0] sm:$0xff]
        %v5503 = vld [vmem:[%s5475 + $0xd8] sm:$0xff]
        %v5504 = vld [vmem:[%s5475 + $0xe0] sm:$0xff]
        %v5505 = vld [vmem:[%s5475 + $0xe8] sm:$0xff]
        %v5506 = vld [vmem:[%s5475 + $0xf0] sm:$0xff]
        %v5507 = vld [vmem:[%s5475 + $0xf8] sm:$0xff]
        %v5508 = vld [vmem:[%s5475 + $0x100] sm:$0xff]
        %v5509 = vld [vmem:[%s5475 + $0x108] sm:$0xff]
        %v5510 = vld [vmem:[%s5475 + $0x110] sm:$0xff]
        %v5511 = vld [vmem:[%s5475 + $0x118] sm:$0xff]
        %v5512 = vld [vmem:[%s5475 + $0x120] sm:$0xff]
        %v5513 = vld [vmem:[%s5475 + $0x128] sm:$0xff]
        %v5514 = vld [vmem:[%s5475 + $0x130] sm:$0xff]
        %v5515 = vld [vmem:[%s5475 + $0x138] sm:$0xff]
        %v5516 = vld [vmem:[%s5475 + $0x140] sm:$0xff]
        %v5517 = vld [vmem:[%s5475 + $0x148] sm:$0xff]
        %v5518 = vld [vmem:[%s5475 + $0x150] sm:$0xff]
        %v5519 = vld [vmem:[%s5475 + $0x158] sm:$0xff]
        %v5520 = vld [vmem:[%s5475 + $0x160] sm:$0xff]
        %v5521 = vld [vmem:[%s5475 + $0x168] sm:$0xff]
        %v5522 = vld [vmem:[%s5475 + $0x170] sm:$0xff]
        %v5523 = vld [vmem:[%s5475 + $0x178] sm:$0xff]
        %v5524 = vld [vmem:[%s5475 + $0x180] sm:$0xff]
        %v5525 = vld [vmem:[%s5475 + $0x188] sm:$0xff]
        %v5526 = vld [vmem:[%s5475 + $0x190] sm:$0xff]
        %v5527 = vld [vmem:[%s5475 + $0x198] sm:$0xff]
        %v5528 = vld [vmem:[%s5475 + $0x1a0] sm:$0xff]
        %v5529 = vld [vmem:[%s5475 + $0x1a8] sm:$0xff]
        %v5530 = vld [vmem:[%s5475 + $0x1b0] sm:$0xff]
        %v5531 = vld [vmem:[%s5475 + $0x1b8] sm:$0xff]
        %v5532 = vld [vmem:[%s5475 + $0x1c0] sm:$0xff]
        %v5533 = vld [vmem:[%s5475 + $0x1c8] sm:$0xff]
        %v5534 = vld [vmem:[%s5475 + $0x1d0] sm:$0xff]
        %v5535 = vld [vmem:[%s5475 + $0x1d8] sm:$0xff]
        %v5536 = vld [vmem:[%s5475 + $0x1e0] sm:$0xff]
        %v5537 = vld [vmem:[%s5475 + $0x1e8] sm:$0xff]
        %v5538 = vld [vmem:[%s5475 + $0x1f0] sm:$0xff]
        %v5539 = vld [vmem:[%s5475 + $0x1f8] sm:$0xff]
        %v5540 = vld [vmem:[%s5475 + $0x200] sm:$0xff]
        %v5541 = vld [vmem:[%s5475 + $0x208] sm:$0xff]
        %v5542 = vld [vmem:[%s5475 + $0x210] sm:$0xff]
        %v5543 = vld [vmem:[%s5475 + $0x218] sm:$0xff]
        %v5544 = vld [vmem:[%s5475 + $0x220] sm:$0xff]
        %v5545 = vld [vmem:[%s5475 + $0x228] sm:$0xff]
        %v5546 = vld [vmem:[%s5475 + $0x230] sm:$0xff]
        %v5547 = vld [vmem:[%s5475 + $0x238] sm:$0xff]
        %v5548 = vld [vmem:[%s5475 + $0x240] sm:$0xff]
        %v5549 = vld [vmem:[%s5475 + $0x248] sm:$0xff]
        %v5550 = vld [vmem:[%s5475 + $0x250] sm:$0xff]
        %v5551 = vld [vmem:[%s5475 + $0x258] sm:$0xff]
        %v5552 = vld [vmem:[%s5475 + $0x260] sm:$0xff]
        %v5553 = vld [vmem:[%s5475 + $0x268] sm:$0xff]
        %v5554 = vld [vmem:[%s5475 + $0x270] sm:$0xff]
        %v5555 = vld [vmem:[%s5475 + $0x278] sm:$0xff]
        %v5556 = vld [vmem:[%s5475 + $0x280] sm:$0xff]
        %v5557 = vld [vmem:[%s5475 + $0x288] sm:$0xff]
        %v5558 = vld [vmem:[%s5475 + $0x290] sm:$0xff]
        %v5559 = vld [vmem:[%s5475 + $0x298] sm:$0xff]
        %v5560 = vld [vmem:[%s5475 + $0x2a0] sm:$0xff]
        %v5561 = vld [vmem:[%s5475 + $0x2a8] sm:$0xff]
        %v5562 = vld [vmem:[%s5475 + $0x2b0] sm:$0xff]
        %v5563 = vld [vmem:[%s5475 + $0x2b8] sm:$0xff]
        %v5564 = vld [vmem:[%s5475 + $0x2c0] sm:$0xff]
        %v5565 = vld [vmem:[%s5475 + $0x2c8] sm:$0xff]
        %v5566 = vld [vmem:[%s5475 + $0x2d0] sm:$0xff]
        %v5567 = vld [vmem:[%s5475 + $0x2d8] sm:$0xff]
        %v5568 = vld [vmem:[%s5475 + $0x2e0] sm:$0xff]
        %v5569 = vld [vmem:[%s5475 + $0x2e8] sm:$0xff]
        %v5570 = vld [vmem:[%s5475 + $0x2f0] sm:$0xff]
        %v5571 = vld [vmem:[%s5475 + $0x2f8] sm:$0xff]
        %v5572 = vld [vmem:[%s5475 + $0x300] sm:$0xff]
        %v5573 = vld [vmem:[%s5475 + $0x308] sm:$0xff]
        %v5574 = vld [vmem:[%s5475 + $0x310] sm:$0xff]
        %v5575 = vld [vmem:[%s5475 + $0x318] sm:$0xff]
        %v5576 = vld [vmem:[%s5475 + $0x320] sm:$0xff]
        %v5577 = vld [vmem:[%s5475 + $0x328] sm:$0xff]
        %v5578 = vld [vmem:[%s5475 + $0x330] sm:$0xff]
        %v5579 = vld [vmem:[%s5475 + $0x338] sm:$0xff]
        %v5580 = vld [vmem:[%s5475 + $0x340] sm:$0xff]
        %v5581 = vld [vmem:[%s5475 + $0x348] sm:$0xff]
        %v5582 = vld [vmem:[%s5475 + $0x350] sm:$0xff]
        %v5583 = vld [vmem:[%s5475 + $0x358] sm:$0xff]
        %v5584 = vld [vmem:[%s5475 + $0x360] sm:$0xff]
        %v5585 = vld [vmem:[%s5475 + $0x368] sm:$0xff]
        %v5586 = vld [vmem:[%s5475 + $0x370] sm:$0xff]
        %v5587 = vld [vmem:[%s5475 + $0x378] sm:$0xff]
        %v5588 = vld [vmem:[%s5475 + $0x380] sm:$0xff]
        %v5589 = vld [vmem:[%s5475 + $0x388] sm:$0xff]
        %v5590 = vld [vmem:[%s5475 + $0x390] sm:$0xff]
        %v5591 = vld [vmem:[%s5475 + $0x398] sm:$0xff]
        %v5592 = vld [vmem:[%s5475 + $0x3a0] sm:$0xff]
        %v5593 = vld [vmem:[%s5475 + $0x3a8] sm:$0xff]
        %v5594 = vld [vmem:[%s5475 + $0x3b0] sm:$0xff]
        %v5595 = vld [vmem:[%s5475 + $0x3b8] sm:$0xff]
        %v5596 = vld [vmem:[%s5475 + $0x3c0] sm:$0xff]
        %v5597 = vld [vmem:[%s5475 + $0x3c8] sm:$0xff]
        %v5598 = vld [vmem:[%s5475 + $0x3d0] sm:$0xff]
        %v5599 = vld [vmem:[%s5475 + $0x3d8] sm:$0xff]
        %v5600 = vld [vmem:[%s5475 + $0x3e0] sm:$0xff]
        %v5601 = vld [vmem:[%s5475 + $0x3e8] sm:$0xff]
        %v5602 = vld [vmem:[%s5475 + $0x3f0] sm:$0xff]
        %v5603 = vld [vmem:[%s5475 + $0x3f8] sm:$0xff]
        %v5608 = vunpack.c.l.b16 %v5471
        %v5609 = vunpack.c.h.b16 %v5471
        %v5610 = vunpack.c.l.b16 %v5472
        %v5611 = vunpack.c.h.b16 %v5472
        %v5612 = vunpack.c.l.b16 %v5473
        %v5613 = vunpack.c.h.b16 %v5473
        %v5614 = vunpack.c.l.b16 %v5474
        %v5615 = vunpack.c.h.b16 %v5474
        %v5616 = vpack.c.b16 %v5612, %v5608
        %v5617 = vpack.c.b16 %v5613, %v5609
        %v5618 = vpack.c.b16 %v5614, %v5610
        %v5619 = vpack.c.b16 %v5615, %v5611
        %v5752 = vunpack.c.l.b16 %v5476
        %v5753 = vunpack.c.h.b16 %v5476
        %v5754 = vunpack.c.l.b16 %v5477
        %v5755 = vunpack.c.h.b16 %v5477
        %v5756 = vunpack.c.l.b16 %v5478
        %v5757 = vunpack.c.h.b16 %v5478
        %v5758 = vunpack.c.l.b16 %v5479
        %v5759 = vunpack.c.h.b16 %v5479
        %v5760 = vunpack.c.l.b16 %v5480
        %v5761 = vunpack.c.h.b16 %v5480
        %v5762 = vunpack.c.l.b16 %v5481
        %v5763 = vunpack.c.h.b16 %v5481
        %v5764 = vunpack.c.l.b16 %v5482
        %v5765 = vunpack.c.h.b16 %v5482
        %v5766 = vunpack.c.l.b16 %v5483
        %v5767 = vunpack.c.h.b16 %v5483
        %v5768 = vunpack.c.l.b16 %v5484
        %v5769 = vunpack.c.h.b16 %v5484
        %v5770 = vunpack.c.l.b16 %v5485
        %v5771 = vunpack.c.h.b16 %v5485
        %v5772 = vunpack.c.l.b16 %v5486
        %v5773 = vunpack.c.h.b16 %v5486
        %v5774 = vunpack.c.l.b16 %v5487
        %v5775 = vunpack.c.h.b16 %v5487
        %v5776 = vunpack.c.l.b16 %v5488
        %v5777 = vunpack.c.h.b16 %v5488
        %v5778 = vunpack.c.l.b16 %v5489
        %v5779 = vunpack.c.h.b16 %v5489
        %v5780 = vunpack.c.l.b16 %v5490
        %v5781 = vunpack.c.h.b16 %v5490
        %v5782 = vunpack.c.l.b16 %v5491
        %v5783 = vunpack.c.h.b16 %v5491
        %v5784 = vunpack.c.l.b16 %v5492
        %v5785 = vunpack.c.h.b16 %v5492
        %v5786 = vunpack.c.l.b16 %v5493
        %v5787 = vunpack.c.h.b16 %v5493
        %v5788 = vunpack.c.l.b16 %v5494
        %v5789 = vunpack.c.h.b16 %v5494
        %v5790 = vunpack.c.l.b16 %v5495
        %v5791 = vunpack.c.h.b16 %v5495
        %v5792 = vunpack.c.l.b16 %v5496
        %v5793 = vunpack.c.h.b16 %v5496
        %v5794 = vunpack.c.l.b16 %v5497
        %v5795 = vunpack.c.h.b16 %v5497
        %v5796 = vunpack.c.l.b16 %v5498
        %v5797 = vunpack.c.h.b16 %v5498
        %v5798 = vunpack.c.l.b16 %v5499
        %v5799 = vunpack.c.h.b16 %v5499
        %v5800 = vunpack.c.l.b16 %v5500
        %v5801 = vunpack.c.h.b16 %v5500
        %v5802 = vunpack.c.l.b16 %v5501
        %v5803 = vunpack.c.h.b16 %v5501
        %v5804 = vunpack.c.l.b16 %v5502
        %v5805 = vunpack.c.h.b16 %v5502
        %v5806 = vunpack.c.l.b16 %v5503
        %v5807 = vunpack.c.h.b16 %v5503
        %v5808 = vunpack.c.l.b16 %v5504
        %v5809 = vunpack.c.h.b16 %v5504
        %v5810 = vunpack.c.l.b16 %v5505
        %v5811 = vunpack.c.h.b16 %v5505
        %v5812 = vunpack.c.l.b16 %v5506
        %v5813 = vunpack.c.h.b16 %v5506
        %v5814 = vunpack.c.l.b16 %v5507
        %v5815 = vunpack.c.h.b16 %v5507
        %v5816 = vunpack.c.l.b16 %v5508
        %v5817 = vunpack.c.h.b16 %v5508
        %v5818 = vunpack.c.l.b16 %v5509
        %v5819 = vunpack.c.h.b16 %v5509
        %v5820 = vunpack.c.l.b16 %v5510
        %v5821 = vunpack.c.h.b16 %v5510
        %v5822 = vunpack.c.l.b16 %v5511
        %v5823 = vunpack.c.h.b16 %v5511
        %v5824 = vunpack.c.l.b16 %v5512
        %v5825 = vunpack.c.h.b16 %v5512
        %v5826 = vunpack.c.l.b16 %v5513
        %v5827 = vunpack.c.h.b16 %v5513
        %v5828 = vunpack.c.l.b16 %v5514
        %v5829 = vunpack.c.h.b16 %v5514
        %v5830 = vunpack.c.l.b16 %v5515
        %v5831 = vunpack.c.h.b16 %v5515
        %v5832 = vunpack.c.l.b16 %v5516
        %v5833 = vunpack.c.h.b16 %v5516
        %v5834 = vunpack.c.l.b16 %v5517
        %v5835 = vunpack.c.h.b16 %v5517
        %v5836 = vunpack.c.l.b16 %v5518
        %v5837 = vunpack.c.h.b16 %v5518
        %v5838 = vunpack.c.l.b16 %v5519
        %v5839 = vunpack.c.h.b16 %v5519
        %v5840 = vunpack.c.l.b16 %v5520
        %v5841 = vunpack.c.h.b16 %v5520
        %v5842 = vunpack.c.l.b16 %v5521
        %v5843 = vunpack.c.h.b16 %v5521
        %v5844 = vunpack.c.l.b16 %v5522
        %v5845 = vunpack.c.h.b16 %v5522
        %v5846 = vunpack.c.l.b16 %v5523
        %v5847 = vunpack.c.h.b16 %v5523
        %v5848 = vunpack.c.l.b16 %v5524
        %v5849 = vunpack.c.h.b16 %v5524
        %v5850 = vunpack.c.l.b16 %v5525
        %v5851 = vunpack.c.h.b16 %v5525
        %v5852 = vunpack.c.l.b16 %v5526
        %v5853 = vunpack.c.h.b16 %v5526
        %v5854 = vunpack.c.l.b16 %v5527
        %v5855 = vunpack.c.h.b16 %v5527
        %v5856 = vunpack.c.l.b16 %v5528
        %v5857 = vunpack.c.h.b16 %v5528
        %v5858 = vunpack.c.l.b16 %v5529
        %v5859 = vunpack.c.h.b16 %v5529
        %v5860 = vunpack.c.l.b16 %v5530
        %v5861 = vunpack.c.h.b16 %v5530
        %v5862 = vunpack.c.l.b16 %v5531
        %v5863 = vunpack.c.h.b16 %v5531
        %v5864 = vunpack.c.l.b16 %v5532
        %v5865 = vunpack.c.h.b16 %v5532
        %v5866 = vunpack.c.l.b16 %v5533
        %v5867 = vunpack.c.h.b16 %v5533
        %v5868 = vunpack.c.l.b16 %v5534
        %v5869 = vunpack.c.h.b16 %v5534
        %v5870 = vunpack.c.l.b16 %v5535
        %v5871 = vunpack.c.h.b16 %v5535
        %v5872 = vunpack.c.l.b16 %v5536
        %v5873 = vunpack.c.h.b16 %v5536
        %v5874 = vunpack.c.l.b16 %v5537
        %v5875 = vunpack.c.h.b16 %v5537
        %v5876 = vunpack.c.l.b16 %v5538
        %v5877 = vunpack.c.h.b16 %v5538
        %v5878 = vunpack.c.l.b16 %v5539
        %v5879 = vunpack.c.h.b16 %v5539
        %v5880 = vunpack.c.l.b16 %v5540
        %v5881 = vunpack.c.h.b16 %v5540
        %v5882 = vunpack.c.l.b16 %v5541
        %v5883 = vunpack.c.h.b16 %v5541
        %v5884 = vunpack.c.l.b16 %v5542
        %v5885 = vunpack.c.h.b16 %v5542
        %v5886 = vunpack.c.l.b16 %v5543
        %v5887 = vunpack.c.h.b16 %v5543
        %v5888 = vunpack.c.l.b16 %v5544
        %v5889 = vunpack.c.h.b16 %v5544
        %v5890 = vunpack.c.l.b16 %v5545
        %v5891 = vunpack.c.h.b16 %v5545
        %v5892 = vunpack.c.l.b16 %v5546
        %v5893 = vunpack.c.h.b16 %v5546
        %v5894 = vunpack.c.l.b16 %v5547
        %v5895 = vunpack.c.h.b16 %v5547
        %v5896 = vunpack.c.l.b16 %v5548
        %v5897 = vunpack.c.h.b16 %v5548
        %v5898 = vunpack.c.l.b16 %v5549
        %v5899 = vunpack.c.h.b16 %v5549
        %v5900 = vunpack.c.l.b16 %v5550
        %v5901 = vunpack.c.h.b16 %v5550
        %v5902 = vunpack.c.l.b16 %v5551
        %v5903 = vunpack.c.h.b16 %v5551
        %v5904 = vunpack.c.l.b16 %v5552
        %v5905 = vunpack.c.h.b16 %v5552
        %v5906 = vunpack.c.l.b16 %v5553
        %v5907 = vunpack.c.h.b16 %v5553
        %v5908 = vunpack.c.l.b16 %v5554
        %v5909 = vunpack.c.h.b16 %v5554
        %v5910 = vunpack.c.l.b16 %v5555
        %v5911 = vunpack.c.h.b16 %v5555
        %v5912 = vunpack.c.l.b16 %v5556
        %v5913 = vunpack.c.h.b16 %v5556
        %v5914 = vunpack.c.l.b16 %v5557
        %v5915 = vunpack.c.h.b16 %v5557
        %v5916 = vunpack.c.l.b16 %v5558
        %v5917 = vunpack.c.h.b16 %v5558
        %v5918 = vunpack.c.l.b16 %v5559
        %v5919 = vunpack.c.h.b16 %v5559
        %v5920 = vunpack.c.l.b16 %v5560
        %v5921 = vunpack.c.h.b16 %v5560
        %v5922 = vunpack.c.l.b16 %v5561
        %v5923 = vunpack.c.h.b16 %v5561
        %v5924 = vunpack.c.l.b16 %v5562
        %v5925 = vunpack.c.h.b16 %v5562
        %v5926 = vunpack.c.l.b16 %v5563
        %v5927 = vunpack.c.h.b16 %v5563
        %v5928 = vunpack.c.l.b16 %v5564
        %v5929 = vunpack.c.h.b16 %v5564
        %v5930 = vunpack.c.l.b16 %v5565
        %v5931 = vunpack.c.h.b16 %v5565
        %v5932 = vunpack.c.l.b16 %v5566
        %v5933 = vunpack.c.h.b16 %v5566
        %v5934 = vunpack.c.l.b16 %v5567
        %v5935 = vunpack.c.h.b16 %v5567
        %v5936 = vunpack.c.l.b16 %v5568
        %v5937 = vunpack.c.h.b16 %v5568
        %v5938 = vunpack.c.l.b16 %v5569
        %v5939 = vunpack.c.h.b16 %v5569
        %v5940 = vunpack.c.l.b16 %v5570
        %v5941 = vunpack.c.h.b16 %v5570
        %v5942 = vunpack.c.l.b16 %v5571
        %v5943 = vunpack.c.h.b16 %v5571
        %v5944 = vunpack.c.l.b16 %v5572
        %v5945 = vunpack.c.h.b16 %v5572
        %v5946 = vunpack.c.l.b16 %v5573
        %v5947 = vunpack.c.h.b16 %v5573
        %v5948 = vunpack.c.l.b16 %v5574
        %v5949 = vunpack.c.h.b16 %v5574
        %v5950 = vunpack.c.l.b16 %v5575
        %v5951 = vunpack.c.h.b16 %v5575
        %v5952 = vunpack.c.l.b16 %v5576
        %v5953 = vunpack.c.h.b16 %v5576
        %v5954 = vunpack.c.l.b16 %v5577
        %v5955 = vunpack.c.h.b16 %v5577
        %v5956 = vunpack.c.l.b16 %v5578
        %v5957 = vunpack.c.h.b16 %v5578
        %v5958 = vunpack.c.l.b16 %v5579
        %v5959 = vunpack.c.h.b16 %v5579
        %v5960 = vunpack.c.l.b16 %v5580
        %v5961 = vunpack.c.h.b16 %v5580
        %v5962 = vunpack.c.l.b16 %v5581
        %v5963 = vunpack.c.h.b16 %v5581
        %v5964 = vunpack.c.l.b16 %v5582
        %v5965 = vunpack.c.h.b16 %v5582
        %v5966 = vunpack.c.l.b16 %v5583
        %v5967 = vunpack.c.h.b16 %v5583
        %v5968 = vunpack.c.l.b16 %v5584
        %v5969 = vunpack.c.h.b16 %v5584
        %v5970 = vunpack.c.l.b16 %v5585
        %v5971 = vunpack.c.h.b16 %v5585
        %v5972 = vunpack.c.l.b16 %v5586
        %v5973 = vunpack.c.h.b16 %v5586
        %v5974 = vunpack.c.l.b16 %v5587
        %v5975 = vunpack.c.h.b16 %v5587
        %v5976 = vunpack.c.l.b16 %v5588
        %v5977 = vunpack.c.h.b16 %v5588
        %v5978 = vunpack.c.l.b16 %v5589
        %v5979 = vunpack.c.h.b16 %v5589
        %v5980 = vunpack.c.l.b16 %v5590
        %v5981 = vunpack.c.h.b16 %v5590
        %v5982 = vunpack.c.l.b16 %v5591
        %v5983 = vunpack.c.h.b16 %v5591
        %v5984 = vunpack.c.l.b16 %v5592
        %v5985 = vunpack.c.h.b16 %v5592
        %v5986 = vunpack.c.l.b16 %v5593
        %v5987 = vunpack.c.h.b16 %v5593
        %v5988 = vunpack.c.l.b16 %v5594
        %v5989 = vunpack.c.h.b16 %v5594
        %v5990 = vunpack.c.l.b16 %v5595
        %v5991 = vunpack.c.h.b16 %v5595
        %v5992 = vunpack.c.l.b16 %v5596
        %v5993 = vunpack.c.h.b16 %v5596
        %v5994 = vunpack.c.l.b16 %v5597
        %v5995 = vunpack.c.h.b16 %v5597
        %v5996 = vunpack.c.l.b16 %v5598
        %v5997 = vunpack.c.h.b16 %v5598
        %v5998 = vunpack.c.l.b16 %v5599
        %v5999 = vunpack.c.h.b16 %v5599
        %v6000 = vunpack.c.l.b16 %v5600
        %v6001 = vunpack.c.h.b16 %v5600
        %v6002 = vunpack.c.l.b16 %v5601
        %v6003 = vunpack.c.h.b16 %v5601
        %v6004 = vunpack.c.l.b16 %v5602
        %v6005 = vunpack.c.h.b16 %v5602
        %v6006 = vunpack.c.l.b16 %v5603
        %v6007 = vunpack.c.h.b16 %v5603
        %v6008 = vpack.c.b16 %v5756, %v5752
        %v6009 = vpack.c.b16 %v5757, %v5753
        %v6010 = vpack.c.b16 %v5758, %v5754
        %v6011 = vpack.c.b16 %v5759, %v5755
        %v6012 = vpack.c.b16 %v5764, %v5760
        %v6013 = vpack.c.b16 %v5765, %v5761
        %v6014 = vpack.c.b16 %v5766, %v5762
        %v6015 = vpack.c.b16 %v5767, %v5763
        %v6016 = vpack.c.b16 %v5772, %v5768
        %v6017 = vpack.c.b16 %v5773, %v5769
        %v6018 = vpack.c.b16 %v5774, %v5770
        %v6019 = vpack.c.b16 %v5775, %v5771
        %v6020 = vpack.c.b16 %v5780, %v5776
        %v6021 = vpack.c.b16 %v5781, %v5777
        %v6022 = vpack.c.b16 %v5782, %v5778
        %v6023 = vpack.c.b16 %v5783, %v5779
        %v6024 = vpack.c.b16 %v5788, %v5784
        %v6025 = vpack.c.b16 %v5789, %v5785
        %v6026 = vpack.c.b16 %v5790, %v5786
        %v6027 = vpack.c.b16 %v5791, %v5787
        %v6028 = vpack.c.b16 %v5796, %v5792
        %v6029 = vpack.c.b16 %v5797, %v5793
        %v6030 = vpack.c.b16 %v5798, %v5794
        %v6031 = vpack.c.b16 %v5799, %v5795
        %v6032 = vpack.c.b16 %v5804, %v5800
        %v6033 = vpack.c.b16 %v5805, %v5801
        %v6034 = vpack.c.b16 %v5806, %v5802
        %v6035 = vpack.c.b16 %v5807, %v5803
        %v6036 = vpack.c.b16 %v5812, %v5808
        %v6037 = vpack.c.b16 %v5813, %v5809
        %v6038 = vpack.c.b16 %v5814, %v5810
        %v6039 = vpack.c.b16 %v5815, %v5811
        %v6040 = vpack.c.b16 %v5820, %v5816
        %v6041 = vpack.c.b16 %v5821, %v5817
        %v6042 = vpack.c.b16 %v5822, %v5818
        %v6043 = vpack.c.b16 %v5823, %v5819
        %v6044 = vpack.c.b16 %v5828, %v5824
        %v6045 = vpack.c.b16 %v5829, %v5825
        %v6046 = vpack.c.b16 %v5830, %v5826
        %v6047 = vpack.c.b16 %v5831, %v5827
        %v6048 = vpack.c.b16 %v5836, %v5832
        %v6049 = vpack.c.b16 %v5837, %v5833
        %v6050 = vpack.c.b16 %v5838, %v5834
        %v6051 = vpack.c.b16 %v5839, %v5835
        %v6052 = vpack.c.b16 %v5844, %v5840
        %v6053 = vpack.c.b16 %v5845, %v5841
        %v6054 = vpack.c.b16 %v5846, %v5842
        %v6055 = vpack.c.b16 %v5847, %v5843
        %v6056 = vpack.c.b16 %v5852, %v5848
        %v6057 = vpack.c.b16 %v5853, %v5849
        %v6058 = vpack.c.b16 %v5854, %v5850
        %v6059 = vpack.c.b16 %v5855, %v5851
        %v6060 = vpack.c.b16 %v5860, %v5856
        %v6061 = vpack.c.b16 %v5861, %v5857
        %v6062 = vpack.c.b16 %v5862, %v5858
        %v6063 = vpack.c.b16 %v5863, %v5859
        %v6064 = vpack.c.b16 %v5868, %v5864
        %v6065 = vpack.c.b16 %v5869, %v5865
        %v6066 = vpack.c.b16 %v5870, %v5866
        %v6067 = vpack.c.b16 %v5871, %v5867
        %v6068 = vpack.c.b16 %v5876, %v5872
        %v6069 = vpack.c.b16 %v5877, %v5873
        %v6070 = vpack.c.b16 %v5878, %v5874
        %v6071 = vpack.c.b16 %v5879, %v5875
        %v6072 = vpack.c.b16 %v5884, %v5880
        %v6073 = vpack.c.b16 %v5885, %v5881
        %v6074 = vpack.c.b16 %v5886, %v5882
        %v6075 = vpack.c.b16 %v5887, %v5883
        %v6076 = vpack.c.b16 %v5892, %v5888
        %v6077 = vpack.c.b16 %v5893, %v5889
        %v6078 = vpack.c.b16 %v5894, %v5890
        %v6079 = vpack.c.b16 %v5895, %v5891
        %v6080 = vpack.c.b16 %v5900, %v5896
        %v6081 = vpack.c.b16 %v5901, %v5897
        %v6082 = vpack.c.b16 %v5902, %v5898
        %v6083 = vpack.c.b16 %v5903, %v5899
        %v6084 = vpack.c.b16 %v5908, %v5904
        %v6085 = vpack.c.b16 %v5909, %v5905
        %v6086 = vpack.c.b16 %v5910, %v5906
        %v6087 = vpack.c.b16 %v5911, %v5907
        %v6088 = vpack.c.b16 %v5916, %v5912
        %v6089 = vpack.c.b16 %v5917, %v5913
        %v6090 = vpack.c.b16 %v5918, %v5914
        %v6091 = vpack.c.b16 %v5919, %v5915
        %v6092 = vpack.c.b16 %v5924, %v5920
        %v6093 = vpack.c.b16 %v5925, %v5921
        %v6094 = vpack.c.b16 %v5926, %v5922
        %v6095 = vpack.c.b16 %v5927, %v5923
        %v6096 = vpack.c.b16 %v5932, %v5928
        %v6097 = vpack.c.b16 %v5933, %v5929
        %v6098 = vpack.c.b16 %v5934, %v5930
        %v6099 = vpack.c.b16 %v5935, %v5931
        %v6100 = vpack.c.b16 %v5940, %v5936
        %v6101 = vpack.c.b16 %v5941, %v5937
        %v6102 = vpack.c.b16 %v5942, %v5938
        %v6103 = vpack.c.b16 %v5943, %v5939
        %v6104 = vpack.c.b16 %v5948, %v5944
        %v6105 = vpack.c.b16 %v5949, %v5945
        %v6106 = vpack.c.b16 %v5950, %v5946
        %v6107 = vpack.c.b16 %v5951, %v5947
        %v6108 = vpack.c.b16 %v5956, %v5952
        %v6109 = vpack.c.b16 %v5957, %v5953
        %v6110 = vpack.c.b16 %v5958, %v5954
        %v6111 = vpack.c.b16 %v5959, %v5955
        %v6112 = vpack.c.b16 %v5964, %v5960
        %v6113 = vpack.c.b16 %v5965, %v5961
        %v6114 = vpack.c.b16 %v5966, %v5962
        %v6115 = vpack.c.b16 %v5967, %v5963
        %v6116 = vpack.c.b16 %v5972, %v5968
        %v6117 = vpack.c.b16 %v5973, %v5969
        %v6118 = vpack.c.b16 %v5974, %v5970
        %v6119 = vpack.c.b16 %v5975, %v5971
        %v6120 = vpack.c.b16 %v5980, %v5976
        %v6121 = vpack.c.b16 %v5981, %v5977
        %v6122 = vpack.c.b16 %v5982, %v5978
        %v6123 = vpack.c.b16 %v5983, %v5979
        %v6124 = vpack.c.b16 %v5988, %v5984
        %v6125 = vpack.c.b16 %v5989, %v5985
        %v6126 = vpack.c.b16 %v5990, %v5986
        %v6127 = vpack.c.b16 %v5991, %v5987
        %v6128 = vpack.c.b16 %v5996, %v5992
        %v6129 = vpack.c.b16 %v5997, %v5993
        %v6130 = vpack.c.b16 %v5998, %v5994
        %v6131 = vpack.c.b16 %v5999, %v5995
        %v6132 = vpack.c.b16 %v6004, %v6000
        %v6133 = vpack.c.b16 %v6005, %v6001
        %v6134 = vpack.c.b16 %v6006, %v6002
        %v6135 = vpack.c.b16 %v6007, %v6003
        %6264 = vmatpush.bf16.msra.mxu0 %v6036
        %6265 = vmatpush.bf16.msra.mxu0 %v6032
        %6266 = vmatpush.bf16.msra.mxu0 %v6028
        %6267 = vmatpush.bf16.msra.mxu0 %v6024
        %6268 = vmatpush.bf16.msra.mxu0 %v6020
        %6269 = vmatpush.bf16.msra.mxu0 %v6016
        %6270 = vmatpush.bf16.msra.mxu0 %v6012
        %6271 = vmatpush.bf16.msra.mxu0 %v6008
        %6272 = vmatmul.bf16.gmra.mxu0 %v5616
        %v6273 = vpop.f32.mrf.mxu0
        %v6274 = vadd.f32 0.0, %v6273
        %v6275 = vpop.f32.mrf.mxu0
        %v6276 = vadd.f32 0.0, %v6275
        %6277 = vdwg.mxu0
        %6278 = vmatpush.bf16.msra.mxu0 %v6068
        %6279 = vmatpush.bf16.msra.mxu0 %v6064
        %6280 = vmatpush.bf16.msra.mxu0 %v6060
        %6281 = vmatpush.bf16.msra.mxu0 %v6056
        %6282 = vmatpush.bf16.msra.mxu0 %v6052
        %6283 = vmatpush.bf16.msra.mxu0 %v6048
        %6284 = vmatpush.bf16.msra.mxu0 %v6044
        %6285 = vmatpush.bf16.msra.mxu0 %v6040
        %6286 = vmatmul.bf16.gmra.mxu0 %v5617
        %v6287 = vpop.f32.mrf.mxu0
        %v6288 = vadd.f32 %v6274, %v6287
        %v6289 = vpop.f32.mrf.mxu0
        %v6290 = vadd.f32 %v6276, %v6289
        %6291 = vdwg.mxu0
        %6292 = vmatpush.bf16.msra.mxu0 %v6100
        %6293 = vmatpush.bf16.msra.mxu0 %v6096
        %6294 = vmatpush.bf16.msra.mxu0 %v6092
        %6295 = vmatpush.bf16.msra.mxu0 %v6088
        %6296 = vmatpush.bf16.msra.mxu0 %v6084
        %6297 = vmatpush.bf16.msra.mxu0 %v6080
        %6298 = vmatpush.bf16.msra.mxu0 %v6076
        %6299 = vmatpush.bf16.msra.mxu0 %v6072
        %6300 = vmatmul.bf16.gmra.mxu0 %v5618
        %v6301 = vpop.f32.mrf.mxu0
        %v6302 = vadd.f32 %v6288, %v6301
        %v6303 = vpop.f32.mrf.mxu0
        %v6304 = vadd.f32 %v6290, %v6303
        %6305 = vdwg.mxu0
        %6306 = vmatpush.bf16.msra.mxu0 %v6132
        %6307 = vmatpush.bf16.msra.mxu0 %v6128
        %6308 = vmatpush.bf16.msra.mxu0 %v6124
        %6309 = vmatpush.bf16.msra.mxu0 %v6120
        %6310 = vmatpush.bf16.msra.mxu0 %v6116
        %6311 = vmatpush.bf16.msra.mxu0 %v6112
        %6312 = vmatpush.bf16.msra.mxu0 %v6108
        %6313 = vmatpush.bf16.msra.mxu0 %v6104
        %6314 = vmatmul.bf16.gmra.mxu0 %v5619
        %v6315 = vpop.f32.mrf.mxu0
        %v6316 = vadd.f32 %v6302, %v6315
        %v6317 = vpop.f32.mrf.mxu0
        %v6318 = vadd.f32 %v6304, %v6317
        %6319 = vdwg.mxu0
        %6320 = vmatpush.bf16.msra.mxu0 %v6037
        %6321 = vmatpush.bf16.msra.mxu0 %v6033
        %6322 = vmatpush.bf16.msra.mxu0 %v6029
        %6323 = vmatpush.bf16.msra.mxu0 %v6025
        %6324 = vmatpush.bf16.msra.mxu0 %v6021
        %6325 = vmatpush.bf16.msra.mxu0 %v6017
        %6326 = vmatpush.bf16.msra.mxu0 %v6013
        %6327 = vmatpush.bf16.msra.mxu0 %v6009
        %6328 = vmatmul.bf16.gmra.mxu0 %v5616
        %v6329 = vpop.f32.mrf.mxu0
        %v6330 = vadd.f32 0.0, %v6329
        %v6331 = vpop.f32.mrf.mxu0
        %v6332 = vadd.f32 0.0, %v6331
        %6333 = vdwg.mxu0
        %6334 = vmatpush.bf16.msra.mxu0 %v6069
        %6335 = vmatpush.bf16.msra.mxu0 %v6065
        %6336 = vmatpush.bf16.msra.mxu0 %v6061
        %6337 = vmatpush.bf16.msra.mxu0 %v6057
        %6338 = vmatpush.bf16.msra.mxu0 %v6053
        %6339 = vmatpush.bf16.msra.mxu0 %v6049
        %6340 = vmatpush.bf16.msra.mxu0 %v6045
        %6341 = vmatpush.bf16.msra.mxu0 %v6041
        %6342 = vmatmul.bf16.gmra.mxu0 %v5617
        %v6343 = vpop.f32.mrf.mxu0
        %v6344 = vadd.f32 %v6330, %v6343
        %v6345 = vpop.f32.mrf.mxu0
        %v6346 = vadd.f32 %v6332, %v6345
        %6347 = vdwg.mxu0
        %6348 = vmatpush.bf16.msra.mxu0 %v6101
        %6349 = vmatpush.bf16.msra.mxu0 %v6097
        %6350 = vmatpush.bf16.msra.mxu0 %v6093
        %6351 = vmatpush.bf16.msra.mxu0 %v6089
        %6352 = vmatpush.bf16.msra.mxu0 %v6085
        %6353 = vmatpush.bf16.msra.mxu0 %v6081
        %6354 = vmatpush.bf16.msra.mxu0 %v6077
        %6355 = vmatpush.bf16.msra.mxu0 %v6073
        %6356 = vmatmul.bf16.gmra.mxu0 %v5618
        %v6357 = vpop.f32.mrf.mxu0
        %v6358 = vadd.f32 %v6344, %v6357
        %v6359 = vpop.f32.mrf.mxu0
        %v6360 = vadd.f32 %v6346, %v6359
        %6361 = vdwg.mxu0
        %6362 = vmatpush.bf16.msra.mxu0 %v6133
        %6363 = vmatpush.bf16.msra.mxu0 %v6129
        %6364 = vmatpush.bf16.msra.mxu0 %v6125
        %6365 = vmatpush.bf16.msra.mxu0 %v6121
        %6366 = vmatpush.bf16.msra.mxu0 %v6117
        %6367 = vmatpush.bf16.msra.mxu0 %v6113
        %6368 = vmatpush.bf16.msra.mxu0 %v6109
        %6369 = vmatpush.bf16.msra.mxu0 %v6105
        %6370 = vmatmul.bf16.gmra.mxu0 %v5619
        %v6371 = vpop.f32.mrf.mxu0
        %v6372 = vadd.f32 %v6358, %v6371
        %v6373 = vpop.f32.mrf.mxu0
        %v6374 = vadd.f32 %v6360, %v6373
        %6375 = vdwg.mxu0
        %6376 = vmatpush.bf16.msra.mxu0 %v6038
        %6377 = vmatpush.bf16.msra.mxu0 %v6034
        %6378 = vmatpush.bf16.msra.mxu0 %v6030
        %6379 = vmatpush.bf16.msra.mxu0 %v6026
        %6380 = vmatpush.bf16.msra.mxu0 %v6022
        %6381 = vmatpush.bf16.msra.mxu0 %v6018
        %6382 = vmatpush.bf16.msra.mxu0 %v6014
        %6383 = vmatpush.bf16.msra.mxu0 %v6010
        %6384 = vmatmul.bf16.gmra.mxu0 %v5616
        %v6385 = vpop.f32.mrf.mxu0
        %v6386 = vadd.f32 0.0, %v6385
        %v6387 = vpop.f32.mrf.mxu0
        %v6388 = vadd.f32 0.0, %v6387
        %6389 = vdwg.mxu0
        %6390 = vmatpush.bf16.msra.mxu0 %v6070
        %6391 = vmatpush.bf16.msra.mxu0 %v6066
        %6392 = vmatpush.bf16.msra.mxu0 %v6062
        %6393 = vmatpush.bf16.msra.mxu0 %v6058
        %6394 = vmatpush.bf16.msra.mxu0 %v6054
        %6395 = vmatpush.bf16.msra.mxu0 %v6050
        %6396 = vmatpush.bf16.msra.mxu0 %v6046
        %6397 = vmatpush.bf16.msra.mxu0 %v6042
        %6398 = vmatmul.bf16.gmra.mxu0 %v5617
        %v6399 = vpop.f32.mrf.mxu0
        %v6400 = vadd.f32 %v6386, %v6399
        %v6401 = vpop.f32.mrf.mxu0
        %v6402 = vadd.f32 %v6388, %v6401
        %6403 = vdwg.mxu0
        %6404 = vmatpush.bf16.msra.mxu0 %v6102
        %6405 = vmatpush.bf16.msra.mxu0 %v6098
        %6406 = vmatpush.bf16.msra.mxu0 %v6094
        %6407 = vmatpush.bf16.msra.mxu0 %v6090
        %6408 = vmatpush.bf16.msra.mxu0 %v6086
        %6409 = vmatpush.bf16.msra.mxu0 %v6082
        %6410 = vmatpush.bf16.msra.mxu0 %v6078
        %6411 = vmatpush.bf16.msra.mxu0 %v6074
        %6412 = vmatmul.bf16.gmra.mxu0 %v5618
        %v6413 = vpop.f32.mrf.mxu0
        %v6414 = vadd.f32 %v6400, %v6413
        %v6415 = vpop.f32.mrf.mxu0
        %v6416 = vadd.f32 %v6402, %v6415
        %6417 = vdwg.mxu0
        %6418 = vmatpush.bf16.msra.mxu0 %v6134
        %6419 = vmatpush.bf16.msra.mxu0 %v6130
        %6420 = vmatpush.bf16.msra.mxu0 %v6126
        %6421 = vmatpush.bf16.msra.mxu0 %v6122
        %6422 = vmatpush.bf16.msra.mxu0 %v6118
        %6423 = vmatpush.bf16.msra.mxu0 %v6114
        %6424 = vmatpush.bf16.msra.mxu0 %v6110
        %6425 = vmatpush.bf16.msra.mxu0 %v6106
        %6426 = vmatmul.bf16.gmra.mxu0 %v5619
        %v6427 = vpop.f32.mrf.mxu0
        %v6428 = vadd.f32 %v6414, %v6427
        %v6429 = vpop.f32.mrf.mxu0
        %v6430 = vadd.f32 %v6416, %v6429
        %6431 = vdwg.mxu0
        %6432 = vmatpush.bf16.msra.mxu0 %v6039
        %6433 = vmatpush.bf16.msra.mxu0 %v6035
        %6434 = vmatpush.bf16.msra.mxu0 %v6031
        %6435 = vmatpush.bf16.msra.mxu0 %v6027
        %6436 = vmatpush.bf16.msra.mxu0 %v6023
        %6437 = vmatpush.bf16.msra.mxu0 %v6019
        %6438 = vmatpush.bf16.msra.mxu0 %v6015
        %6439 = vmatpush.bf16.msra.mxu0 %v6011
        %6440 = vmatmul.bf16.gmra.mxu0 %v5616
        %v6441 = vpop.f32.mrf.mxu0
        %v6442 = vadd.f32 0.0, %v6441
        %v6443 = vpop.f32.mrf.mxu0
        %v6444 = vadd.f32 0.0, %v6443
        %6445 = vdwg.mxu0
        %6446 = vmatpush.bf16.msra.mxu0 %v6071
        %6447 = vmatpush.bf16.msra.mxu0 %v6067
        %6448 = vmatpush.bf16.msra.mxu0 %v6063
        %6449 = vmatpush.bf16.msra.mxu0 %v6059
        %6450 = vmatpush.bf16.msra.mxu0 %v6055
        %6451 = vmatpush.bf16.msra.mxu0 %v6051
        %6452 = vmatpush.bf16.msra.mxu0 %v6047
        %6453 = vmatpush.bf16.msra.mxu0 %v6043
        %6454 = vmatmul.bf16.gmra.mxu0 %v5617
        %v6455 = vpop.f32.mrf.mxu0
        %v6456 = vadd.f32 %v6442, %v6455
        %v6457 = vpop.f32.mrf.mxu0
        %v6458 = vadd.f32 %v6444, %v6457
        %6459 = vdwg.mxu0
        %6460 = vmatpush.bf16.msra.mxu0 %v6103
        %6461 = vmatpush.bf16.msra.mxu0 %v6099
        %6462 = vmatpush.bf16.msra.mxu0 %v6095
        %6463 = vmatpush.bf16.msra.mxu0 %v6091
        %6464 = vmatpush.bf16.msra.mxu0 %v6087
        %6465 = vmatpush.bf16.msra.mxu0 %v6083
        %6466 = vmatpush.bf16.msra.mxu0 %v6079
        %6467 = vmatpush.bf16.msra.mxu0 %v6075
        %6468 = vmatmul.bf16.gmra.mxu0 %v5618
        %v6469 = vpop.f32.mrf.mxu0
        %v6470 = vadd.f32 %v6456, %v6469
        %v6471 = vpop.f32.mrf.mxu0
        %v6472 = vadd.f32 %v6458, %v6471
        %6473 = vdwg.mxu0
        %6474 = vmatpush.bf16.msra.mxu0 %v6135
        %6475 = vmatpush.bf16.msra.mxu0 %v6131
        %6476 = vmatpush.bf16.msra.mxu0 %v6127
        %6477 = vmatpush.bf16.msra.mxu0 %v6123
        %6478 = vmatpush.bf16.msra.mxu0 %v6119
        %6479 = vmatpush.bf16.msra.mxu0 %v6115
        %6480 = vmatpush.bf16.msra.mxu0 %v6111
        %6481 = vmatpush.bf16.msra.mxu0 %v6107
        %6482 = vmatmul.bf16.gmra.mxu0 %v5619
        %v6483 = vpop.f32.mrf.mxu0
        %v6484 = vadd.f32 %v6470, %v6483
        %v6485 = vpop.f32.mrf.mxu0
        %v6486 = vadd.f32 %v6472, %v6485
        %6487 = vdwg.mxu0
        %v6488 = vadd.f32 %v5275, %v6316
        %v6489 = vadd.f32 %v5331, %v6372
        %v6490 = vadd.f32 %v5387, %v6428
        %v6491 = vadd.f32 %v5443, %v6484
        %v6492 = vadd.f32 %v5277, %v6318
        %v6493 = vadd.f32 %v5333, %v6374
        %v6494 = vadd.f32 %v5389, %v6430
        %v6495 = vadd.f32 %v5445, %v6486
        %s6496 = scalar_lea.vmem [#allocation7], 4
        %v6497 = vld [vmem:[%s6496] sm:$0xf]
        %v6499 = vperm.slane %v6497, 0
        %v6500 = vperm.slane %v6497, 1
        %v6501 = vperm.slane %v6497, 2
        %v6502 = vperm.slane %v6497, 3
        %v6507 = vadd.f32 %v6488, %v6499
        %v6508 = vadd.f32 %v6489, %v6500
        %v6509 = vadd.f32 %v6490, %v6501
        %v6510 = vadd.f32 %v6491, %v6502
        %v6511 = vadd.f32 %v6492, %v6499
        %v6512 = vadd.f32 %v6493, %v6500
        %v6513 = vadd.f32 %v6494, %v6501
        %v6514 = vadd.f32 %v6495, %v6502
        %vm6515 = vcmp.gt.f32.partialorder %v6507, 0.0
        %vm6516 = vcmp.gt.f32.partialorder %v6508, 0.0
        %vm6517 = vcmp.gt.f32.partialorder %v6509, 0.0
        %vm6518 = vcmp.gt.f32.partialorder %v6510, 0.0
        %vm6519 = vcmp.gt.f32.partialorder %v6511, 0.0
        %vm6520 = vcmp.gt.f32.partialorder %v6512, 0.0
        %vm6521 = vcmp.gt.f32.partialorder %v6513, 0.0
        %vm6522 = vcmp.gt.f32.partialorder %v6514, 0.0
        %v6523 = vmul.f32 %v6507, 0.1
        %v6524 = vmul.f32 %v6508, 0.1
        %v6525 = vmul.f32 %v6509, 0.1
        %v6526 = vmul.f32 %v6510, 0.1
        %v6527 = vmul.f32 %v6511, 0.1
        %v6528 = vmul.f32 %v6512, 0.1
        %v6529 = vmul.f32 %v6513, 0.1
        %v6530 = vmul.f32 %v6514, 0.1
        %v6531 = vsel %vm6515, %v6507, %v6523
        %v6532 = vsel %vm6516, %v6508, %v6524
        %v6533 = vsel %vm6517, %v6509, %v6525
        %v6534 = vsel %vm6518, %v6510, %v6526
        %v6535 = vsel %vm6519, %v6511, %v6527
        %v6536 = vsel %vm6520, %v6512, %v6528
        %v6537 = vsel %vm6521, %v6513, %v6529
        %v6538 = vsel %vm6522, %v6514, %v6530
        %v6539 = vrot.slane %v6531, 7
        %v6540 = vrot.slane %v6532, 7
        %v6541 = vrot.slane %v6533, 7
        %v6542 = vrot.slane %v6534, 7
        %v6543 = vrot.slane %v6535, 7
        %v6544 = vrot.slane %v6536, 7
        %v6545 = vrot.slane %v6537, 7
        %v6546 = vrot.slane %v6538, 7
        %v6547 = vsel %vm243, %v6539, %v6543
        %v6548 = vsel %vm243, %v6540, %v6544
        %v6549 = vsel %vm243, %v6541, %v6545
        %v6550 = vsel %vm243, %v6542, %v6546
        %v6551 = vsel %vm243, %v6543, %v6539
        %v6552 = vsel %vm243, %v6544, %v6540
        %v6553 = vsel %vm243, %v6545, %v6541
        %v6554 = vsel %vm243, %v6546, %v6542
        %v6555 = vsel %vm252, %v6551, 0.0
        %v6556 = vsel %vm252, %v6552, 0.0
        %v6557 = vsel %vm252, %v6553, 0.0
        %v6558 = vsel %vm252, %v6554, 0.0
        %v6559 = vsel %vm253, %v6547, 0.0
        %v6560 = vsel %vm253, %v6548, 0.0
        %v6561 = vsel %vm253, %v6549, 0.0
        %v6562 = vsel %vm253, %v6550, 0.0
        %v6563 = vpack.c.bf16 %v6556, %v6555
        %v6564 = vpack.c.bf16 %v6558, %v6557
        %v6565 = vpack.c.bf16 %v6560, %v6559
        %v6566 = vpack.c.bf16 %v6562, %v6561
        %s6567 = scalar_lea.vmem [#allocation5], 6144
        %v6568 = vld [vmem:[%s6567] sm:$0xff]
        %v6569 = vld [vmem:[%s6567 + $0x8] sm:$0xff]
        %v6570 = vld [vmem:[%s6567 + $0x10] sm:$0xff]
        %v6571 = vld [vmem:[%s6567 + $0x18] sm:$0xff]
        %v6572 = vld [vmem:[%s6567 + $0x20] sm:$0xff]
        %v6573 = vld [vmem:[%s6567 + $0x28] sm:$0xff]
        %v6574 = vld [vmem:[%s6567 + $0x30] sm:$0xff]
        %v6575 = vld [vmem:[%s6567 + $0x38] sm:$0xff]
        %v6576 = vld [vmem:[%s6567 + $0x40] sm:$0xff]
        %v6577 = vld [vmem:[%s6567 + $0x48] sm:$0xff]
        %v6578 = vld [vmem:[%s6567 + $0x50] sm:$0xff]
        %v6579 = vld [vmem:[%s6567 + $0x58] sm:$0xff]
        %v6580 = vld [vmem:[%s6567 + $0x60] sm:$0xff]
        %v6581 = vld [vmem:[%s6567 + $0x68] sm:$0xff]
        %v6582 = vld [vmem:[%s6567 + $0x70] sm:$0xff]
        %v6583 = vld [vmem:[%s6567 + $0x78] sm:$0xff]
        %v6584 = vld [vmem:[%s6567 + $0x80] sm:$0xff]
        %v6585 = vld [vmem:[%s6567 + $0x88] sm:$0xff]
        %v6586 = vld [vmem:[%s6567 + $0x90] sm:$0xff]
        %v6587 = vld [vmem:[%s6567 + $0x98] sm:$0xff]
        %v6588 = vld [vmem:[%s6567 + $0xa0] sm:$0xff]
        %v6589 = vld [vmem:[%s6567 + $0xa8] sm:$0xff]
        %v6590 = vld [vmem:[%s6567 + $0xb0] sm:$0xff]
        %v6591 = vld [vmem:[%s6567 + $0xb8] sm:$0xff]
        %v6592 = vld [vmem:[%s6567 + $0xc0] sm:$0xff]
        %v6593 = vld [vmem:[%s6567 + $0xc8] sm:$0xff]
        %v6594 = vld [vmem:[%s6567 + $0xd0] sm:$0xff]
        %v6595 = vld [vmem:[%s6567 + $0xd8] sm:$0xff]
        %v6596 = vld [vmem:[%s6567 + $0xe0] sm:$0xff]
        %v6597 = vld [vmem:[%s6567 + $0xe8] sm:$0xff]
        %v6598 = vld [vmem:[%s6567 + $0xf0] sm:$0xff]
        %v6599 = vld [vmem:[%s6567 + $0xf8] sm:$0xff]
        %v6600 = vld [vmem:[%s6567 + $0x100] sm:$0xff]
        %v6601 = vld [vmem:[%s6567 + $0x108] sm:$0xff]
        %v6602 = vld [vmem:[%s6567 + $0x110] sm:$0xff]
        %v6603 = vld [vmem:[%s6567 + $0x118] sm:$0xff]
        %v6604 = vld [vmem:[%s6567 + $0x120] sm:$0xff]
        %v6605 = vld [vmem:[%s6567 + $0x128] sm:$0xff]
        %v6606 = vld [vmem:[%s6567 + $0x130] sm:$0xff]
        %v6607 = vld [vmem:[%s6567 + $0x138] sm:$0xff]
        %v6608 = vld [vmem:[%s6567 + $0x140] sm:$0xff]
        %v6609 = vld [vmem:[%s6567 + $0x148] sm:$0xff]
        %v6610 = vld [vmem:[%s6567 + $0x150] sm:$0xff]
        %v6611 = vld [vmem:[%s6567 + $0x158] sm:$0xff]
        %v6612 = vld [vmem:[%s6567 + $0x160] sm:$0xff]
        %v6613 = vld [vmem:[%s6567 + $0x168] sm:$0xff]
        %v6614 = vld [vmem:[%s6567 + $0x170] sm:$0xff]
        %v6615 = vld [vmem:[%s6567 + $0x178] sm:$0xff]
        %v6616 = vld [vmem:[%s6567 + $0x180] sm:$0xff]
        %v6617 = vld [vmem:[%s6567 + $0x188] sm:$0xff]
        %v6618 = vld [vmem:[%s6567 + $0x190] sm:$0xff]
        %v6619 = vld [vmem:[%s6567 + $0x198] sm:$0xff]
        %v6620 = vld [vmem:[%s6567 + $0x1a0] sm:$0xff]
        %v6621 = vld [vmem:[%s6567 + $0x1a8] sm:$0xff]
        %v6622 = vld [vmem:[%s6567 + $0x1b0] sm:$0xff]
        %v6623 = vld [vmem:[%s6567 + $0x1b8] sm:$0xff]
        %v6624 = vld [vmem:[%s6567 + $0x1c0] sm:$0xff]
        %v6625 = vld [vmem:[%s6567 + $0x1c8] sm:$0xff]
        %v6626 = vld [vmem:[%s6567 + $0x1d0] sm:$0xff]
        %v6627 = vld [vmem:[%s6567 + $0x1d8] sm:$0xff]
        %v6628 = vld [vmem:[%s6567 + $0x1e0] sm:$0xff]
        %v6629 = vld [vmem:[%s6567 + $0x1e8] sm:$0xff]
        %v6630 = vld [vmem:[%s6567 + $0x1f0] sm:$0xff]
        %v6631 = vld [vmem:[%s6567 + $0x1f8] sm:$0xff]
        %v6632 = vld [vmem:[%s6567 + $0x200] sm:$0xff]
        %v6633 = vld [vmem:[%s6567 + $0x208] sm:$0xff]
        %v6634 = vld [vmem:[%s6567 + $0x210] sm:$0xff]
        %v6635 = vld [vmem:[%s6567 + $0x218] sm:$0xff]
        %v6636 = vld [vmem:[%s6567 + $0x220] sm:$0xff]
        %v6637 = vld [vmem:[%s6567 + $0x228] sm:$0xff]
        %v6638 = vld [vmem:[%s6567 + $0x230] sm:$0xff]
        %v6639 = vld [vmem:[%s6567 + $0x238] sm:$0xff]
        %v6640 = vld [vmem:[%s6567 + $0x240] sm:$0xff]
        %v6641 = vld [vmem:[%s6567 + $0x248] sm:$0xff]
        %v6642 = vld [vmem:[%s6567 + $0x250] sm:$0xff]
        %v6643 = vld [vmem:[%s6567 + $0x258] sm:$0xff]
        %v6644 = vld [vmem:[%s6567 + $0x260] sm:$0xff]
        %v6645 = vld [vmem:[%s6567 + $0x268] sm:$0xff]
        %v6646 = vld [vmem:[%s6567 + $0x270] sm:$0xff]
        %v6647 = vld [vmem:[%s6567 + $0x278] sm:$0xff]
        %v6648 = vld [vmem:[%s6567 + $0x280] sm:$0xff]
        %v6649 = vld [vmem:[%s6567 + $0x288] sm:$0xff]
        %v6650 = vld [vmem:[%s6567 + $0x290] sm:$0xff]
        %v6651 = vld [vmem:[%s6567 + $0x298] sm:$0xff]
        %v6652 = vld [vmem:[%s6567 + $0x2a0] sm:$0xff]
        %v6653 = vld [vmem:[%s6567 + $0x2a8] sm:$0xff]
        %v6654 = vld [vmem:[%s6567 + $0x2b0] sm:$0xff]
        %v6655 = vld [vmem:[%s6567 + $0x2b8] sm:$0xff]
        %v6656 = vld [vmem:[%s6567 + $0x2c0] sm:$0xff]
        %v6657 = vld [vmem:[%s6567 + $0x2c8] sm:$0xff]
        %v6658 = vld [vmem:[%s6567 + $0x2d0] sm:$0xff]
        %v6659 = vld [vmem:[%s6567 + $0x2d8] sm:$0xff]
        %v6660 = vld [vmem:[%s6567 + $0x2e0] sm:$0xff]
        %v6661 = vld [vmem:[%s6567 + $0x2e8] sm:$0xff]
        %v6662 = vld [vmem:[%s6567 + $0x2f0] sm:$0xff]
        %v6663 = vld [vmem:[%s6567 + $0x2f8] sm:$0xff]
        %v6664 = vld [vmem:[%s6567 + $0x300] sm:$0xff]
        %v6665 = vld [vmem:[%s6567 + $0x308] sm:$0xff]
        %v6666 = vld [vmem:[%s6567 + $0x310] sm:$0xff]
        %v6667 = vld [vmem:[%s6567 + $0x318] sm:$0xff]
        %v6668 = vld [vmem:[%s6567 + $0x320] sm:$0xff]
        %v6669 = vld [vmem:[%s6567 + $0x328] sm:$0xff]
        %v6670 = vld [vmem:[%s6567 + $0x330] sm:$0xff]
        %v6671 = vld [vmem:[%s6567 + $0x338] sm:$0xff]
        %v6672 = vld [vmem:[%s6567 + $0x340] sm:$0xff]
        %v6673 = vld [vmem:[%s6567 + $0x348] sm:$0xff]
        %v6674 = vld [vmem:[%s6567 + $0x350] sm:$0xff]
        %v6675 = vld [vmem:[%s6567 + $0x358] sm:$0xff]
        %v6676 = vld [vmem:[%s6567 + $0x360] sm:$0xff]
        %v6677 = vld [vmem:[%s6567 + $0x368] sm:$0xff]
        %v6678 = vld [vmem:[%s6567 + $0x370] sm:$0xff]
        %v6679 = vld [vmem:[%s6567 + $0x378] sm:$0xff]
        %v6680 = vld [vmem:[%s6567 + $0x380] sm:$0xff]
        %v6681 = vld [vmem:[%s6567 + $0x388] sm:$0xff]
        %v6682 = vld [vmem:[%s6567 + $0x390] sm:$0xff]
        %v6683 = vld [vmem:[%s6567 + $0x398] sm:$0xff]
        %v6684 = vld [vmem:[%s6567 + $0x3a0] sm:$0xff]
        %v6685 = vld [vmem:[%s6567 + $0x3a8] sm:$0xff]
        %v6686 = vld [vmem:[%s6567 + $0x3b0] sm:$0xff]
        %v6687 = vld [vmem:[%s6567 + $0x3b8] sm:$0xff]
        %v6688 = vld [vmem:[%s6567 + $0x3c0] sm:$0xff]
        %v6689 = vld [vmem:[%s6567 + $0x3c8] sm:$0xff]
        %v6690 = vld [vmem:[%s6567 + $0x3d0] sm:$0xff]
        %v6691 = vld [vmem:[%s6567 + $0x3d8] sm:$0xff]
        %v6692 = vld [vmem:[%s6567 + $0x3e0] sm:$0xff]
        %v6693 = vld [vmem:[%s6567 + $0x3e8] sm:$0xff]
        %v6694 = vld [vmem:[%s6567 + $0x3f0] sm:$0xff]
        %v6695 = vld [vmem:[%s6567 + $0x3f8] sm:$0xff]
        %v6696 = vpack.c.bf16 %v6532, %v6531
        %v6697 = vpack.c.bf16 %v6534, %v6533
        %v6698 = vpack.c.bf16 %v6536, %v6535
        %v6699 = vpack.c.bf16 %v6538, %v6537
        %s6700 = scalar_lea.vmem [#allocation5], 7168
        %v6701 = vld [vmem:[%s6700] sm:$0xff]
        %v6702 = vld [vmem:[%s6700 + $0x8] sm:$0xff]
        %v6703 = vld [vmem:[%s6700 + $0x10] sm:$0xff]
        %v6704 = vld [vmem:[%s6700 + $0x18] sm:$0xff]
        %v6705 = vld [vmem:[%s6700 + $0x20] sm:$0xff]
        %v6706 = vld [vmem:[%s6700 + $0x28] sm:$0xff]
        %v6707 = vld [vmem:[%s6700 + $0x30] sm:$0xff]
        %v6708 = vld [vmem:[%s6700 + $0x38] sm:$0xff]
        %v6709 = vld [vmem:[%s6700 + $0x40] sm:$0xff]
        %v6710 = vld [vmem:[%s6700 + $0x48] sm:$0xff]
        %v6711 = vld [vmem:[%s6700 + $0x50] sm:$0xff]
        %v6712 = vld [vmem:[%s6700 + $0x58] sm:$0xff]
        %v6713 = vld [vmem:[%s6700 + $0x60] sm:$0xff]
        %v6714 = vld [vmem:[%s6700 + $0x68] sm:$0xff]
        %v6715 = vld [vmem:[%s6700 + $0x70] sm:$0xff]
        %v6716 = vld [vmem:[%s6700 + $0x78] sm:$0xff]
        %v6717 = vld [vmem:[%s6700 + $0x80] sm:$0xff]
        %v6718 = vld [vmem:[%s6700 + $0x88] sm:$0xff]
        %v6719 = vld [vmem:[%s6700 + $0x90] sm:$0xff]
        %v6720 = vld [vmem:[%s6700 + $0x98] sm:$0xff]
        %v6721 = vld [vmem:[%s6700 + $0xa0] sm:$0xff]
        %v6722 = vld [vmem:[%s6700 + $0xa8] sm:$0xff]
        %v6723 = vld [vmem:[%s6700 + $0xb0] sm:$0xff]
        %v6724 = vld [vmem:[%s6700 + $0xb8] sm:$0xff]
        %v6725 = vld [vmem:[%s6700 + $0xc0] sm:$0xff]
        %v6726 = vld [vmem:[%s6700 + $0xc8] sm:$0xff]
        %v6727 = vld [vmem:[%s6700 + $0xd0] sm:$0xff]
        %v6728 = vld [vmem:[%s6700 + $0xd8] sm:$0xff]
        %v6729 = vld [vmem:[%s6700 + $0xe0] sm:$0xff]
        %v6730 = vld [vmem:[%s6700 + $0xe8] sm:$0xff]
        %v6731 = vld [vmem:[%s6700 + $0xf0] sm:$0xff]
        %v6732 = vld [vmem:[%s6700 + $0xf8] sm:$0xff]
        %v6733 = vld [vmem:[%s6700 + $0x100] sm:$0xff]
        %v6734 = vld [vmem:[%s6700 + $0x108] sm:$0xff]
        %v6735 = vld [vmem:[%s6700 + $0x110] sm:$0xff]
        %v6736 = vld [vmem:[%s6700 + $0x118] sm:$0xff]
        %v6737 = vld [vmem:[%s6700 + $0x120] sm:$0xff]
        %v6738 = vld [vmem:[%s6700 + $0x128] sm:$0xff]
        %v6739 = vld [vmem:[%s6700 + $0x130] sm:$0xff]
        %v6740 = vld [vmem:[%s6700 + $0x138] sm:$0xff]
        %v6741 = vld [vmem:[%s6700 + $0x140] sm:$0xff]
        %v6742 = vld [vmem:[%s6700 + $0x148] sm:$0xff]
        %v6743 = vld [vmem:[%s6700 + $0x150] sm:$0xff]
        %v6744 = vld [vmem:[%s6700 + $0x158] sm:$0xff]
        %v6745 = vld [vmem:[%s6700 + $0x160] sm:$0xff]
        %v6746 = vld [vmem:[%s6700 + $0x168] sm:$0xff]
        %v6747 = vld [vmem:[%s6700 + $0x170] sm:$0xff]
        %v6748 = vld [vmem:[%s6700 + $0x178] sm:$0xff]
        %v6749 = vld [vmem:[%s6700 + $0x180] sm:$0xff]
        %v6750 = vld [vmem:[%s6700 + $0x188] sm:$0xff]
        %v6751 = vld [vmem:[%s6700 + $0x190] sm:$0xff]
        %v6752 = vld [vmem:[%s6700 + $0x198] sm:$0xff]
        %v6753 = vld [vmem:[%s6700 + $0x1a0] sm:$0xff]
        %v6754 = vld [vmem:[%s6700 + $0x1a8] sm:$0xff]
        %v6755 = vld [vmem:[%s6700 + $0x1b0] sm:$0xff]
        %v6756 = vld [vmem:[%s6700 + $0x1b8] sm:$0xff]
        %v6757 = vld [vmem:[%s6700 + $0x1c0] sm:$0xff]
        %v6758 = vld [vmem:[%s6700 + $0x1c8] sm:$0xff]
        %v6759 = vld [vmem:[%s6700 + $0x1d0] sm:$0xff]
        %v6760 = vld [vmem:[%s6700 + $0x1d8] sm:$0xff]
        %v6761 = vld [vmem:[%s6700 + $0x1e0] sm:$0xff]
        %v6762 = vld [vmem:[%s6700 + $0x1e8] sm:$0xff]
        %v6763 = vld [vmem:[%s6700 + $0x1f0] sm:$0xff]
        %v6764 = vld [vmem:[%s6700 + $0x1f8] sm:$0xff]
        %v6765 = vld [vmem:[%s6700 + $0x200] sm:$0xff]
        %v6766 = vld [vmem:[%s6700 + $0x208] sm:$0xff]
        %v6767 = vld [vmem:[%s6700 + $0x210] sm:$0xff]
        %v6768 = vld [vmem:[%s6700 + $0x218] sm:$0xff]
        %v6769 = vld [vmem:[%s6700 + $0x220] sm:$0xff]
        %v6770 = vld [vmem:[%s6700 + $0x228] sm:$0xff]
        %v6771 = vld [vmem:[%s6700 + $0x230] sm:$0xff]
        %v6772 = vld [vmem:[%s6700 + $0x238] sm:$0xff]
        %v6773 = vld [vmem:[%s6700 + $0x240] sm:$0xff]
        %v6774 = vld [vmem:[%s6700 + $0x248] sm:$0xff]
        %v6775 = vld [vmem:[%s6700 + $0x250] sm:$0xff]
        %v6776 = vld [vmem:[%s6700 + $0x258] sm:$0xff]
        %v6777 = vld [vmem:[%s6700 + $0x260] sm:$0xff]
        %v6778 = vld [vmem:[%s6700 + $0x268] sm:$0xff]
        %v6779 = vld [vmem:[%s6700 + $0x270] sm:$0xff]
        %v6780 = vld [vmem:[%s6700 + $0x278] sm:$0xff]
        %v6781 = vld [vmem:[%s6700 + $0x280] sm:$0xff]
        %v6782 = vld [vmem:[%s6700 + $0x288] sm:$0xff]
        %v6783 = vld [vmem:[%s6700 + $0x290] sm:$0xff]
        %v6784 = vld [vmem:[%s6700 + $0x298] sm:$0xff]
        %v6785 = vld [vmem:[%s6700 + $0x2a0] sm:$0xff]
        %v6786 = vld [vmem:[%s6700 + $0x2a8] sm:$0xff]
        %v6787 = vld [vmem:[%s6700 + $0x2b0] sm:$0xff]
        %v6788 = vld [vmem:[%s6700 + $0x2b8] sm:$0xff]
        %v6789 = vld [vmem:[%s6700 + $0x2c0] sm:$0xff]
        %v6790 = vld [vmem:[%s6700 + $0x2c8] sm:$0xff]
        %v6791 = vld [vmem:[%s6700 + $0x2d0] sm:$0xff]
        %v6792 = vld [vmem:[%s6700 + $0x2d8] sm:$0xff]
        %v6793 = vld [vmem:[%s6700 + $0x2e0] sm:$0xff]
        %v6794 = vld [vmem:[%s6700 + $0x2e8] sm:$0xff]
        %v6795 = vld [vmem:[%s6700 + $0x2f0] sm:$0xff]
        %v6796 = vld [vmem:[%s6700 + $0x2f8] sm:$0xff]
        %v6797 = vld [vmem:[%s6700 + $0x300] sm:$0xff]
        %v6798 = vld [vmem:[%s6700 + $0x308] sm:$0xff]
        %v6799 = vld [vmem:[%s6700 + $0x310] sm:$0xff]
        %v6800 = vld [vmem:[%s6700 + $0x318] sm:$0xff]
        %v6801 = vld [vmem:[%s6700 + $0x320] sm:$0xff]
        %v6802 = vld [vmem:[%s6700 + $0x328] sm:$0xff]
        %v6803 = vld [vmem:[%s6700 + $0x330] sm:$0xff]
        %v6804 = vld [vmem:[%s6700 + $0x338] sm:$0xff]
        %v6805 = vld [vmem:[%s6700 + $0x340] sm:$0xff]
        %v6806 = vld [vmem:[%s6700 + $0x348] sm:$0xff]
        %v6807 = vld [vmem:[%s6700 + $0x350] sm:$0xff]
        %v6808 = vld [vmem:[%s6700 + $0x358] sm:$0xff]
        %v6809 = vld [vmem:[%s6700 + $0x360] sm:$0xff]
        %v6810 = vld [vmem:[%s6700 + $0x368] sm:$0xff]
        %v6811 = vld [vmem:[%s6700 + $0x370] sm:$0xff]
        %v6812 = vld [vmem:[%s6700 + $0x378] sm:$0xff]
        %v6813 = vld [vmem:[%s6700 + $0x380] sm:$0xff]
        %v6814 = vld [vmem:[%s6700 + $0x388] sm:$0xff]
        %v6815 = vld [vmem:[%s6700 + $0x390] sm:$0xff]
        %v6816 = vld [vmem:[%s6700 + $0x398] sm:$0xff]
        %v6817 = vld [vmem:[%s6700 + $0x3a0] sm:$0xff]
        %v6818 = vld [vmem:[%s6700 + $0x3a8] sm:$0xff]
        %v6819 = vld [vmem:[%s6700 + $0x3b0] sm:$0xff]
        %v6820 = vld [vmem:[%s6700 + $0x3b8] sm:$0xff]
        %v6821 = vld [vmem:[%s6700 + $0x3c0] sm:$0xff]
        %v6822 = vld [vmem:[%s6700 + $0x3c8] sm:$0xff]
        %v6823 = vld [vmem:[%s6700 + $0x3d0] sm:$0xff]
        %v6824 = vld [vmem:[%s6700 + $0x3d8] sm:$0xff]
        %v6825 = vld [vmem:[%s6700 + $0x3e0] sm:$0xff]
        %v6826 = vld [vmem:[%s6700 + $0x3e8] sm:$0xff]
        %v6827 = vld [vmem:[%s6700 + $0x3f0] sm:$0xff]
        %v6828 = vld [vmem:[%s6700 + $0x3f8] sm:$0xff]
        %v6833 = vunpack.c.l.b16 %v6696
        %v6834 = vunpack.c.h.b16 %v6696
        %v6835 = vunpack.c.l.b16 %v6697
        %v6836 = vunpack.c.h.b16 %v6697
        %v6837 = vunpack.c.l.b16 %v6698
        %v6838 = vunpack.c.h.b16 %v6698
        %v6839 = vunpack.c.l.b16 %v6699
        %v6840 = vunpack.c.h.b16 %v6699
        %v6841 = vpack.c.b16 %v6837, %v6833
        %v6842 = vpack.c.b16 %v6838, %v6834
        %v6843 = vpack.c.b16 %v6839, %v6835
        %v6844 = vpack.c.b16 %v6840, %v6836
        %v6977 = vunpack.c.l.b16 %v6701
        %v6978 = vunpack.c.h.b16 %v6701
        %v6979 = vunpack.c.l.b16 %v6702
        %v6980 = vunpack.c.h.b16 %v6702
        %v6981 = vunpack.c.l.b16 %v6703
        %v6982 = vunpack.c.h.b16 %v6703
        %v6983 = vunpack.c.l.b16 %v6704
        %v6984 = vunpack.c.h.b16 %v6704
        %v6985 = vunpack.c.l.b16 %v6705
        %v6986 = vunpack.c.h.b16 %v6705
        %v6987 = vunpack.c.l.b16 %v6706
        %v6988 = vunpack.c.h.b16 %v6706
        %v6989 = vunpack.c.l.b16 %v6707
        %v6990 = vunpack.c.h.b16 %v6707
        %v6991 = vunpack.c.l.b16 %v6708
        %v6992 = vunpack.c.h.b16 %v6708
        %v6993 = vunpack.c.l.b16 %v6709
        %v6994 = vunpack.c.h.b16 %v6709
        %v6995 = vunpack.c.l.b16 %v6710
        %v6996 = vunpack.c.h.b16 %v6710
        %v6997 = vunpack.c.l.b16 %v6711
        %v6998 = vunpack.c.h.b16 %v6711
        %v6999 = vunpack.c.l.b16 %v6712
        %v7000 = vunpack.c.h.b16 %v6712
        %v7001 = vunpack.c.l.b16 %v6713
        %v7002 = vunpack.c.h.b16 %v6713
        %v7003 = vunpack.c.l.b16 %v6714
        %v7004 = vunpack.c.h.b16 %v6714
        %v7005 = vunpack.c.l.b16 %v6715
        %v7006 = vunpack.c.h.b16 %v6715
        %v7007 = vunpack.c.l.b16 %v6716
        %v7008 = vunpack.c.h.b16 %v6716
        %v7009 = vunpack.c.l.b16 %v6717
        %v7010 = vunpack.c.h.b16 %v6717
        %v7011 = vunpack.c.l.b16 %v6718
        %v7012 = vunpack.c.h.b16 %v6718
        %v7013 = vunpack.c.l.b16 %v6719
        %v7014 = vunpack.c.h.b16 %v6719
        %v7015 = vunpack.c.l.b16 %v6720
        %v7016 = vunpack.c.h.b16 %v6720
        %v7017 = vunpack.c.l.b16 %v6721
        %v7018 = vunpack.c.h.b16 %v6721
        %v7019 = vunpack.c.l.b16 %v6722
        %v7020 = vunpack.c.h.b16 %v6722
        %v7021 = vunpack.c.l.b16 %v6723
        %v7022 = vunpack.c.h.b16 %v6723
        %v7023 = vunpack.c.l.b16 %v6724
        %v7024 = vunpack.c.h.b16 %v6724
        %v7025 = vunpack.c.l.b16 %v6725
        %v7026 = vunpack.c.h.b16 %v6725
        %v7027 = vunpack.c.l.b16 %v6726
        %v7028 = vunpack.c.h.b16 %v6726
        %v7029 = vunpack.c.l.b16 %v6727
        %v7030 = vunpack.c.h.b16 %v6727
        %v7031 = vunpack.c.l.b16 %v6728
        %v7032 = vunpack.c.h.b16 %v6728
        %v7033 = vunpack.c.l.b16 %v6729
        %v7034 = vunpack.c.h.b16 %v6729
        %v7035 = vunpack.c.l.b16 %v6730
        %v7036 = vunpack.c.h.b16 %v6730
        %v7037 = vunpack.c.l.b16 %v6731
        %v7038 = vunpack.c.h.b16 %v6731
        %v7039 = vunpack.c.l.b16 %v6732
        %v7040 = vunpack.c.h.b16 %v6732
        %v7041 = vunpack.c.l.b16 %v6733
        %v7042 = vunpack.c.h.b16 %v6733
        %v7043 = vunpack.c.l.b16 %v6734
        %v7044 = vunpack.c.h.b16 %v6734
        %v7045 = vunpack.c.l.b16 %v6735
        %v7046 = vunpack.c.h.b16 %v6735
        %v7047 = vunpack.c.l.b16 %v6736
        %v7048 = vunpack.c.h.b16 %v6736
        %v7049 = vunpack.c.l.b16 %v6737
        %v7050 = vunpack.c.h.b16 %v6737
        %v7051 = vunpack.c.l.b16 %v6738
        %v7052 = vunpack.c.h.b16 %v6738
        %v7053 = vunpack.c.l.b16 %v6739
        %v7054 = vunpack.c.h.b16 %v6739
        %v7055 = vunpack.c.l.b16 %v6740
        %v7056 = vunpack.c.h.b16 %v6740
        %v7057 = vunpack.c.l.b16 %v6741
        %v7058 = vunpack.c.h.b16 %v6741
        %v7059 = vunpack.c.l.b16 %v6742
        %v7060 = vunpack.c.h.b16 %v6742
        %v7061 = vunpack.c.l.b16 %v6743
        %v7062 = vunpack.c.h.b16 %v6743
        %v7063 = vunpack.c.l.b16 %v6744
        %v7064 = vunpack.c.h.b16 %v6744
        %v7065 = vunpack.c.l.b16 %v6745
        %v7066 = vunpack.c.h.b16 %v6745
        %v7067 = vunpack.c.l.b16 %v6746
        %v7068 = vunpack.c.h.b16 %v6746
        %v7069 = vunpack.c.l.b16 %v6747
        %v7070 = vunpack.c.h.b16 %v6747
        %v7071 = vunpack.c.l.b16 %v6748
        %v7072 = vunpack.c.h.b16 %v6748
        %v7073 = vunpack.c.l.b16 %v6749
        %v7074 = vunpack.c.h.b16 %v6749
        %v7075 = vunpack.c.l.b16 %v6750
        %v7076 = vunpack.c.h.b16 %v6750
        %v7077 = vunpack.c.l.b16 %v6751
        %v7078 = vunpack.c.h.b16 %v6751
        %v7079 = vunpack.c.l.b16 %v6752
        %v7080 = vunpack.c.h.b16 %v6752
        %v7081 = vunpack.c.l.b16 %v6753
        %v7082 = vunpack.c.h.b16 %v6753
        %v7083 = vunpack.c.l.b16 %v6754
        %v7084 = vunpack.c.h.b16 %v6754
        %v7085 = vunpack.c.l.b16 %v6755
        %v7086 = vunpack.c.h.b16 %v6755
        %v7087 = vunpack.c.l.b16 %v6756
        %v7088 = vunpack.c.h.b16 %v6756
        %v7089 = vunpack.c.l.b16 %v6757
        %v7090 = vunpack.c.h.b16 %v6757
        %v7091 = vunpack.c.l.b16 %v6758
        %v7092 = vunpack.c.h.b16 %v6758
        %v7093 = vunpack.c.l.b16 %v6759
        %v7094 = vunpack.c.h.b16 %v6759
        %v7095 = vunpack.c.l.b16 %v6760
        %v7096 = vunpack.c.h.b16 %v6760
        %v7097 = vunpack.c.l.b16 %v6761
        %v7098 = vunpack.c.h.b16 %v6761
        %v7099 = vunpack.c.l.b16 %v6762
        %v7100 = vunpack.c.h.b16 %v6762
        %v7101 = vunpack.c.l.b16 %v6763
        %v7102 = vunpack.c.h.b16 %v6763
        %v7103 = vunpack.c.l.b16 %v6764
        %v7104 = vunpack.c.h.b16 %v6764
        %v7105 = vunpack.c.l.b16 %v6765
        %v7106 = vunpack.c.h.b16 %v6765
        %v7107 = vunpack.c.l.b16 %v6766
        %v7108 = vunpack.c.h.b16 %v6766
        %v7109 = vunpack.c.l.b16 %v6767
        %v7110 = vunpack.c.h.b16 %v6767
        %v7111 = vunpack.c.l.b16 %v6768
        %v7112 = vunpack.c.h.b16 %v6768
        %v7113 = vunpack.c.l.b16 %v6769
        %v7114 = vunpack.c.h.b16 %v6769
        %v7115 = vunpack.c.l.b16 %v6770
        %v7116 = vunpack.c.h.b16 %v6770
        %v7117 = vunpack.c.l.b16 %v6771
        %v7118 = vunpack.c.h.b16 %v6771
        %v7119 = vunpack.c.l.b16 %v6772
        %v7120 = vunpack.c.h.b16 %v6772
        %v7121 = vunpack.c.l.b16 %v6773
        %v7122 = vunpack.c.h.b16 %v6773
        %v7123 = vunpack.c.l.b16 %v6774
        %v7124 = vunpack.c.h.b16 %v6774
        %v7125 = vunpack.c.l.b16 %v6775
        %v7126 = vunpack.c.h.b16 %v6775
        %v7127 = vunpack.c.l.b16 %v6776
        %v7128 = vunpack.c.h.b16 %v6776
        %v7129 = vunpack.c.l.b16 %v6777
        %v7130 = vunpack.c.h.b16 %v6777
        %v7131 = vunpack.c.l.b16 %v6778
        %v7132 = vunpack.c.h.b16 %v6778
        %v7133 = vunpack.c.l.b16 %v6779
        %v7134 = vunpack.c.h.b16 %v6779
        %v7135 = vunpack.c.l.b16 %v6780
        %v7136 = vunpack.c.h.b16 %v6780
        %v7137 = vunpack.c.l.b16 %v6781
        %v7138 = vunpack.c.h.b16 %v6781
        %v7139 = vunpack.c.l.b16 %v6782
        %v7140 = vunpack.c.h.b16 %v6782
        %v7141 = vunpack.c.l.b16 %v6783
        %v7142 = vunpack.c.h.b16 %v6783
        %v7143 = vunpack.c.l.b16 %v6784
        %v7144 = vunpack.c.h.b16 %v6784
        %v7145 = vunpack.c.l.b16 %v6785
        %v7146 = vunpack.c.h.b16 %v6785
        %v7147 = vunpack.c.l.b16 %v6786
        %v7148 = vunpack.c.h.b16 %v6786
        %v7149 = vunpack.c.l.b16 %v6787
        %v7150 = vunpack.c.h.b16 %v6787
        %v7151 = vunpack.c.l.b16 %v6788
        %v7152 = vunpack.c.h.b16 %v6788
        %v7153 = vunpack.c.l.b16 %v6789
        %v7154 = vunpack.c.h.b16 %v6789
        %v7155 = vunpack.c.l.b16 %v6790
        %v7156 = vunpack.c.h.b16 %v6790
        %v7157 = vunpack.c.l.b16 %v6791
        %v7158 = vunpack.c.h.b16 %v6791
        %v7159 = vunpack.c.l.b16 %v6792
        %v7160 = vunpack.c.h.b16 %v6792
        %v7161 = vunpack.c.l.b16 %v6793
        %v7162 = vunpack.c.h.b16 %v6793
        %v7163 = vunpack.c.l.b16 %v6794
        %v7164 = vunpack.c.h.b16 %v6794
        %v7165 = vunpack.c.l.b16 %v6795
        %v7166 = vunpack.c.h.b16 %v6795
        %v7167 = vunpack.c.l.b16 %v6796
        %v7168 = vunpack.c.h.b16 %v6796
        %v7169 = vunpack.c.l.b16 %v6797
        %v7170 = vunpack.c.h.b16 %v6797
        %v7171 = vunpack.c.l.b16 %v6798
        %v7172 = vunpack.c.h.b16 %v6798
        %v7173 = vunpack.c.l.b16 %v6799
        %v7174 = vunpack.c.h.b16 %v6799
        %v7175 = vunpack.c.l.b16 %v6800
        %v7176 = vunpack.c.h.b16 %v6800
        %v7177 = vunpack.c.l.b16 %v6801
        %v7178 = vunpack.c.h.b16 %v6801
        %v7179 = vunpack.c.l.b16 %v6802
        %v7180 = vunpack.c.h.b16 %v6802
        %v7181 = vunpack.c.l.b16 %v6803
        %v7182 = vunpack.c.h.b16 %v6803
        %v7183 = vunpack.c.l.b16 %v6804
        %v7184 = vunpack.c.h.b16 %v6804
        %v7185 = vunpack.c.l.b16 %v6805
        %v7186 = vunpack.c.h.b16 %v6805
        %v7187 = vunpack.c.l.b16 %v6806
        %v7188 = vunpack.c.h.b16 %v6806
        %v7189 = vunpack.c.l.b16 %v6807
        %v7190 = vunpack.c.h.b16 %v6807
        %v7191 = vunpack.c.l.b16 %v6808
        %v7192 = vunpack.c.h.b16 %v6808
        %v7193 = vunpack.c.l.b16 %v6809
        %v7194 = vunpack.c.h.b16 %v6809
        %v7195 = vunpack.c.l.b16 %v6810
        %v7196 = vunpack.c.h.b16 %v6810
        %v7197 = vunpack.c.l.b16 %v6811
        %v7198 = vunpack.c.h.b16 %v6811
        %v7199 = vunpack.c.l.b16 %v6812
        %v7200 = vunpack.c.h.b16 %v6812
        %v7201 = vunpack.c.l.b16 %v6813
        %v7202 = vunpack.c.h.b16 %v6813
        %v7203 = vunpack.c.l.b16 %v6814
        %v7204 = vunpack.c.h.b16 %v6814
        %v7205 = vunpack.c.l.b16 %v6815
        %v7206 = vunpack.c.h.b16 %v6815
        %v7207 = vunpack.c.l.b16 %v6816
        %v7208 = vunpack.c.h.b16 %v6816
        %v7209 = vunpack.c.l.b16 %v6817
        %v7210 = vunpack.c.h.b16 %v6817
        %v7211 = vunpack.c.l.b16 %v6818
        %v7212 = vunpack.c.h.b16 %v6818
        %v7213 = vunpack.c.l.b16 %v6819
        %v7214 = vunpack.c.h.b16 %v6819
        %v7215 = vunpack.c.l.b16 %v6820
        %v7216 = vunpack.c.h.b16 %v6820
        %v7217 = vunpack.c.l.b16 %v6821
        %v7218 = vunpack.c.h.b16 %v6821
        %v7219 = vunpack.c.l.b16 %v6822
        %v7220 = vunpack.c.h.b16 %v6822
        %v7221 = vunpack.c.l.b16 %v6823
        %v7222 = vunpack.c.h.b16 %v6823
        %v7223 = vunpack.c.l.b16 %v6824
        %v7224 = vunpack.c.h.b16 %v6824
        %v7225 = vunpack.c.l.b16 %v6825
        %v7226 = vunpack.c.h.b16 %v6825
        %v7227 = vunpack.c.l.b16 %v6826
        %v7228 = vunpack.c.h.b16 %v6826
        %v7229 = vunpack.c.l.b16 %v6827
        %v7230 = vunpack.c.h.b16 %v6827
        %v7231 = vunpack.c.l.b16 %v6828
        %v7232 = vunpack.c.h.b16 %v6828
        %v7233 = vpack.c.b16 %v6981, %v6977
        %v7234 = vpack.c.b16 %v6982, %v6978
        %v7235 = vpack.c.b16 %v6983, %v6979
        %v7236 = vpack.c.b16 %v6984, %v6980
        %v7237 = vpack.c.b16 %v6989, %v6985
        %v7238 = vpack.c.b16 %v6990, %v6986
        %v7239 = vpack.c.b16 %v6991, %v6987
        %v7240 = vpack.c.b16 %v6992, %v6988
        %v7241 = vpack.c.b16 %v6997, %v6993
        %v7242 = vpack.c.b16 %v6998, %v6994
        %v7243 = vpack.c.b16 %v6999, %v6995
        %v7244 = vpack.c.b16 %v7000, %v6996
        %v7245 = vpack.c.b16 %v7005, %v7001
        %v7246 = vpack.c.b16 %v7006, %v7002
        %v7247 = vpack.c.b16 %v7007, %v7003
        %v7248 = vpack.c.b16 %v7008, %v7004
        %v7249 = vpack.c.b16 %v7013, %v7009
        %v7250 = vpack.c.b16 %v7014, %v7010
        %v7251 = vpack.c.b16 %v7015, %v7011
        %v7252 = vpack.c.b16 %v7016, %v7012
        %v7253 = vpack.c.b16 %v7021, %v7017
        %v7254 = vpack.c.b16 %v7022, %v7018
        %v7255 = vpack.c.b16 %v7023, %v7019
        %v7256 = vpack.c.b16 %v7024, %v7020
        %v7257 = vpack.c.b16 %v7029, %v7025
        %v7258 = vpack.c.b16 %v7030, %v7026
        %v7259 = vpack.c.b16 %v7031, %v7027
        %v7260 = vpack.c.b16 %v7032, %v7028
        %v7261 = vpack.c.b16 %v7037, %v7033
        %v7262 = vpack.c.b16 %v7038, %v7034
        %v7263 = vpack.c.b16 %v7039, %v7035
        %v7264 = vpack.c.b16 %v7040, %v7036
        %v7265 = vpack.c.b16 %v7045, %v7041
        %v7266 = vpack.c.b16 %v7046, %v7042
        %v7267 = vpack.c.b16 %v7047, %v7043
        %v7268 = vpack.c.b16 %v7048, %v7044
        %v7269 = vpack.c.b16 %v7053, %v7049
        %v7270 = vpack.c.b16 %v7054, %v7050
        %v7271 = vpack.c.b16 %v7055, %v7051
        %v7272 = vpack.c.b16 %v7056, %v7052
        %v7273 = vpack.c.b16 %v7061, %v7057
        %v7274 = vpack.c.b16 %v7062, %v7058
        %v7275 = vpack.c.b16 %v7063, %v7059
        %v7276 = vpack.c.b16 %v7064, %v7060
        %v7277 = vpack.c.b16 %v7069, %v7065
        %v7278 = vpack.c.b16 %v7070, %v7066
        %v7279 = vpack.c.b16 %v7071, %v7067
        %v7280 = vpack.c.b16 %v7072, %v7068
        %v7281 = vpack.c.b16 %v7077, %v7073
        %v7282 = vpack.c.b16 %v7078, %v7074
        %v7283 = vpack.c.b16 %v7079, %v7075
        %v7284 = vpack.c.b16 %v7080, %v7076
        %v7285 = vpack.c.b16 %v7085, %v7081
        %v7286 = vpack.c.b16 %v7086, %v7082
        %v7287 = vpack.c.b16 %v7087, %v7083
        %v7288 = vpack.c.b16 %v7088, %v7084
        %v7289 = vpack.c.b16 %v7093, %v7089
        %v7290 = vpack.c.b16 %v7094, %v7090
        %v7291 = vpack.c.b16 %v7095, %v7091
        %v7292 = vpack.c.b16 %v7096, %v7092
        %v7293 = vpack.c.b16 %v7101, %v7097
        %v7294 = vpack.c.b16 %v7102, %v7098
        %v7295 = vpack.c.b16 %v7103, %v7099
        %v7296 = vpack.c.b16 %v7104, %v7100
        %v7297 = vpack.c.b16 %v7109, %v7105
        %v7298 = vpack.c.b16 %v7110, %v7106
        %v7299 = vpack.c.b16 %v7111, %v7107
        %v7300 = vpack.c.b16 %v7112, %v7108
        %v7301 = vpack.c.b16 %v7117, %v7113
        %v7302 = vpack.c.b16 %v7118, %v7114
        %v7303 = vpack.c.b16 %v7119, %v7115
        %v7304 = vpack.c.b16 %v7120, %v7116
        %v7305 = vpack.c.b16 %v7125, %v7121
        %v7306 = vpack.c.b16 %v7126, %v7122
        %v7307 = vpack.c.b16 %v7127, %v7123
        %v7308 = vpack.c.b16 %v7128, %v7124
        %v7309 = vpack.c.b16 %v7133, %v7129
        %v7310 = vpack.c.b16 %v7134, %v7130
        %v7311 = vpack.c.b16 %v7135, %v7131
        %v7312 = vpack.c.b16 %v7136, %v7132
        %v7313 = vpack.c.b16 %v7141, %v7137
        %v7314 = vpack.c.b16 %v7142, %v7138
        %v7315 = vpack.c.b16 %v7143, %v7139
        %v7316 = vpack.c.b16 %v7144, %v7140
        %v7317 = vpack.c.b16 %v7149, %v7145
        %v7318 = vpack.c.b16 %v7150, %v7146
        %v7319 = vpack.c.b16 %v7151, %v7147
        %v7320 = vpack.c.b16 %v7152, %v7148
        %v7321 = vpack.c.b16 %v7157, %v7153
        %v7322 = vpack.c.b16 %v7158, %v7154
        %v7323 = vpack.c.b16 %v7159, %v7155
        %v7324 = vpack.c.b16 %v7160, %v7156
        %v7325 = vpack.c.b16 %v7165, %v7161
        %v7326 = vpack.c.b16 %v7166, %v7162
        %v7327 = vpack.c.b16 %v7167, %v7163
        %v7328 = vpack.c.b16 %v7168, %v7164
        %v7329 = vpack.c.b16 %v7173, %v7169
        %v7330 = vpack.c.b16 %v7174, %v7170
        %v7331 = vpack.c.b16 %v7175, %v7171
        %v7332 = vpack.c.b16 %v7176, %v7172
        %v7333 = vpack.c.b16 %v7181, %v7177
        %v7334 = vpack.c.b16 %v7182, %v7178
        %v7335 = vpack.c.b16 %v7183, %v7179
        %v7336 = vpack.c.b16 %v7184, %v7180
        %v7337 = vpack.c.b16 %v7189, %v7185
        %v7338 = vpack.c.b16 %v7190, %v7186
        %v7339 = vpack.c.b16 %v7191, %v7187
        %v7340 = vpack.c.b16 %v7192, %v7188
        %v7341 = vpack.c.b16 %v7197, %v7193
        %v7342 = vpack.c.b16 %v7198, %v7194
        %v7343 = vpack.c.b16 %v7199, %v7195
        %v7344 = vpack.c.b16 %v7200, %v7196
        %v7345 = vpack.c.b16 %v7205, %v7201
        %v7346 = vpack.c.b16 %v7206, %v7202
        %v7347 = vpack.c.b16 %v7207, %v7203
        %v7348 = vpack.c.b16 %v7208, %v7204
        %v7349 = vpack.c.b16 %v7213, %v7209
        %v7350 = vpack.c.b16 %v7214, %v7210
        %v7351 = vpack.c.b16 %v7215, %v7211
        %v7352 = vpack.c.b16 %v7216, %v7212
        %v7353 = vpack.c.b16 %v7221, %v7217
        %v7354 = vpack.c.b16 %v7222, %v7218
        %v7355 = vpack.c.b16 %v7223, %v7219
        %v7356 = vpack.c.b16 %v7224, %v7220
        %v7357 = vpack.c.b16 %v7229, %v7225
        %v7358 = vpack.c.b16 %v7230, %v7226
        %v7359 = vpack.c.b16 %v7231, %v7227
        %v7360 = vpack.c.b16 %v7232, %v7228
        %7489 = vmatpush.bf16.msra.mxu0 %v7261
        %7490 = vmatpush.bf16.msra.mxu0 %v7257
        %7491 = vmatpush.bf16.msra.mxu0 %v7253
        %7492 = vmatpush.bf16.msra.mxu0 %v7249
        %7493 = vmatpush.bf16.msra.mxu0 %v7245
        %7494 = vmatpush.bf16.msra.mxu0 %v7241
        %7495 = vmatpush.bf16.msra.mxu0 %v7237
        %7496 = vmatpush.bf16.msra.mxu0 %v7233
        %7497 = vmatmul.bf16.gmra.mxu0 %v6841
        %v7498 = vpop.f32.mrf.mxu0
        %v7499 = vadd.f32 0.0, %v7498
        %v7500 = vpop.f32.mrf.mxu0
        %v7501 = vadd.f32 0.0, %v7500
        %7502 = vdwg.mxu0
        %7503 = vmatpush.bf16.msra.mxu0 %v7293
        %7504 = vmatpush.bf16.msra.mxu0 %v7289
        %7505 = vmatpush.bf16.msra.mxu0 %v7285
        %7506 = vmatpush.bf16.msra.mxu0 %v7281
        %7507 = vmatpush.bf16.msra.mxu0 %v7277
        %7508 = vmatpush.bf16.msra.mxu0 %v7273
        %7509 = vmatpush.bf16.msra.mxu0 %v7269
        %7510 = vmatpush.bf16.msra.mxu0 %v7265
        %7511 = vmatmul.bf16.gmra.mxu0 %v6842
        %v7512 = vpop.f32.mrf.mxu0
        %v7513 = vadd.f32 %v7499, %v7512
        %v7514 = vpop.f32.mrf.mxu0
        %v7515 = vadd.f32 %v7501, %v7514
        %7516 = vdwg.mxu0
        %7517 = vmatpush.bf16.msra.mxu0 %v7325
        %7518 = vmatpush.bf16.msra.mxu0 %v7321
        %7519 = vmatpush.bf16.msra.mxu0 %v7317
        %7520 = vmatpush.bf16.msra.mxu0 %v7313
        %7521 = vmatpush.bf16.msra.mxu0 %v7309
        %7522 = vmatpush.bf16.msra.mxu0 %v7305
        %7523 = vmatpush.bf16.msra.mxu0 %v7301
        %7524 = vmatpush.bf16.msra.mxu0 %v7297
        %7525 = vmatmul.bf16.gmra.mxu0 %v6843
        %v7526 = vpop.f32.mrf.mxu0
        %v7527 = vadd.f32 %v7513, %v7526
        %v7528 = vpop.f32.mrf.mxu0
        %v7529 = vadd.f32 %v7515, %v7528
        %7530 = vdwg.mxu0
        %7531 = vmatpush.bf16.msra.mxu0 %v7357
        %7532 = vmatpush.bf16.msra.mxu0 %v7353
        %7533 = vmatpush.bf16.msra.mxu0 %v7349
        %7534 = vmatpush.bf16.msra.mxu0 %v7345
        %7535 = vmatpush.bf16.msra.mxu0 %v7341
        %7536 = vmatpush.bf16.msra.mxu0 %v7337
        %7537 = vmatpush.bf16.msra.mxu0 %v7333
        %7538 = vmatpush.bf16.msra.mxu0 %v7329
        %7539 = vmatmul.bf16.gmra.mxu0 %v6844
        %v7540 = vpop.f32.mrf.mxu0
        %v7541 = vadd.f32 %v7527, %v7540
        %v7542 = vpop.f32.mrf.mxu0
        %v7543 = vadd.f32 %v7529, %v7542
        %7544 = vdwg.mxu0
        %7545 = vmatpush.bf16.msra.mxu0 %v7262
        %7546 = vmatpush.bf16.msra.mxu0 %v7258
        %7547 = vmatpush.bf16.msra.mxu0 %v7254
        %7548 = vmatpush.bf16.msra.mxu0 %v7250
        %7549 = vmatpush.bf16.msra.mxu0 %v7246
        %7550 = vmatpush.bf16.msra.mxu0 %v7242
        %7551 = vmatpush.bf16.msra.mxu0 %v7238
        %7552 = vmatpush.bf16.msra.mxu0 %v7234
        %7553 = vmatmul.bf16.gmra.mxu0 %v6841
        %v7554 = vpop.f32.mrf.mxu0
        %v7555 = vadd.f32 0.0, %v7554
        %v7556 = vpop.f32.mrf.mxu0
        %v7557 = vadd.f32 0.0, %v7556
        %7558 = vdwg.mxu0
        %7559 = vmatpush.bf16.msra.mxu0 %v7294
        %7560 = vmatpush.bf16.msra.mxu0 %v7290
        %7561 = vmatpush.bf16.msra.mxu0 %v7286
        %7562 = vmatpush.bf16.msra.mxu0 %v7282
        %7563 = vmatpush.bf16.msra.mxu0 %v7278
        %7564 = vmatpush.bf16.msra.mxu0 %v7274
        %7565 = vmatpush.bf16.msra.mxu0 %v7270
        %7566 = vmatpush.bf16.msra.mxu0 %v7266
        %7567 = vmatmul.bf16.gmra.mxu0 %v6842
        %v7568 = vpop.f32.mrf.mxu0
        %v7569 = vadd.f32 %v7555, %v7568
        %v7570 = vpop.f32.mrf.mxu0
        %v7571 = vadd.f32 %v7557, %v7570
        %7572 = vdwg.mxu0
        %7573 = vmatpush.bf16.msra.mxu0 %v7326
        %7574 = vmatpush.bf16.msra.mxu0 %v7322
        %7575 = vmatpush.bf16.msra.mxu0 %v7318
        %7576 = vmatpush.bf16.msra.mxu0 %v7314
        %7577 = vmatpush.bf16.msra.mxu0 %v7310
        %7578 = vmatpush.bf16.msra.mxu0 %v7306
        %7579 = vmatpush.bf16.msra.mxu0 %v7302
        %7580 = vmatpush.bf16.msra.mxu0 %v7298
        %7581 = vmatmul.bf16.gmra.mxu0 %v6843
        %v7582 = vpop.f32.mrf.mxu0
        %v7583 = vadd.f32 %v7569, %v7582
        %v7584 = vpop.f32.mrf.mxu0
        %v7585 = vadd.f32 %v7571, %v7584
        %7586 = vdwg.mxu0
        %7587 = vmatpush.bf16.msra.mxu0 %v7358
        %7588 = vmatpush.bf16.msra.mxu0 %v7354
        %7589 = vmatpush.bf16.msra.mxu0 %v7350
        %7590 = vmatpush.bf16.msra.mxu0 %v7346
        %7591 = vmatpush.bf16.msra.mxu0 %v7342
        %7592 = vmatpush.bf16.msra.mxu0 %v7338
        %7593 = vmatpush.bf16.msra.mxu0 %v7334
        %7594 = vmatpush.bf16.msra.mxu0 %v7330
        %7595 = vmatmul.bf16.gmra.mxu0 %v6844
        %v7596 = vpop.f32.mrf.mxu0
        %v7597 = vadd.f32 %v7583, %v7596
        %v7598 = vpop.f32.mrf.mxu0
        %v7599 = vadd.f32 %v7585, %v7598
        %7600 = vdwg.mxu0
        %7601 = vmatpush.bf16.msra.mxu0 %v7263
        %7602 = vmatpush.bf16.msra.mxu0 %v7259
        %7603 = vmatpush.bf16.msra.mxu0 %v7255
        %7604 = vmatpush.bf16.msra.mxu0 %v7251
        %7605 = vmatpush.bf16.msra.mxu0 %v7247
        %7606 = vmatpush.bf16.msra.mxu0 %v7243
        %7607 = vmatpush.bf16.msra.mxu0 %v7239
        %7608 = vmatpush.bf16.msra.mxu0 %v7235
        %7609 = vmatmul.bf16.gmra.mxu0 %v6841
        %v7610 = vpop.f32.mrf.mxu0
        %v7611 = vadd.f32 0.0, %v7610
        %v7612 = vpop.f32.mrf.mxu0
        %v7613 = vadd.f32 0.0, %v7612
        %7614 = vdwg.mxu0
        %7615 = vmatpush.bf16.msra.mxu0 %v7295
        %7616 = vmatpush.bf16.msra.mxu0 %v7291
        %7617 = vmatpush.bf16.msra.mxu0 %v7287
        %7618 = vmatpush.bf16.msra.mxu0 %v7283
        %7619 = vmatpush.bf16.msra.mxu0 %v7279
        %7620 = vmatpush.bf16.msra.mxu0 %v7275
        %7621 = vmatpush.bf16.msra.mxu0 %v7271
        %7622 = vmatpush.bf16.msra.mxu0 %v7267
        %7623 = vmatmul.bf16.gmra.mxu0 %v6842
        %v7624 = vpop.f32.mrf.mxu0
        %v7625 = vadd.f32 %v7611, %v7624
        %v7626 = vpop.f32.mrf.mxu0
        %v7627 = vadd.f32 %v7613, %v7626
        %7628 = vdwg.mxu0
        %7629 = vmatpush.bf16.msra.mxu0 %v7327
        %7630 = vmatpush.bf16.msra.mxu0 %v7323
        %7631 = vmatpush.bf16.msra.mxu0 %v7319
        %7632 = vmatpush.bf16.msra.mxu0 %v7315
        %7633 = vmatpush.bf16.msra.mxu0 %v7311
        %7634 = vmatpush.bf16.msra.mxu0 %v7307
        %7635 = vmatpush.bf16.msra.mxu0 %v7303
        %7636 = vmatpush.bf16.msra.mxu0 %v7299
        %7637 = vmatmul.bf16.gmra.mxu0 %v6843
        %v7638 = vpop.f32.mrf.mxu0
        %v7639 = vadd.f32 %v7625, %v7638
        %v7640 = vpop.f32.mrf.mxu0
        %v7641 = vadd.f32 %v7627, %v7640
        %7642 = vdwg.mxu0
        %7643 = vmatpush.bf16.msra.mxu0 %v7359
        %7644 = vmatpush.bf16.msra.mxu0 %v7355
        %7645 = vmatpush.bf16.msra.mxu0 %v7351
        %7646 = vmatpush.bf16.msra.mxu0 %v7347
        %7647 = vmatpush.bf16.msra.mxu0 %v7343
        %7648 = vmatpush.bf16.msra.mxu0 %v7339
        %7649 = vmatpush.bf16.msra.mxu0 %v7335
        %7650 = vmatpush.bf16.msra.mxu0 %v7331
        %7651 = vmatmul.bf16.gmra.mxu0 %v6844
        %v7652 = vpop.f32.mrf.mxu0
        %v7653 = vadd.f32 %v7639, %v7652
        %v7654 = vpop.f32.mrf.mxu0
        %v7655 = vadd.f32 %v7641, %v7654
        %7656 = vdwg.mxu0
        %7657 = vmatpush.bf16.msra.mxu0 %v7264
        %7658 = vmatpush.bf16.msra.mxu0 %v7260
        %7659 = vmatpush.bf16.msra.mxu0 %v7256
        %7660 = vmatpush.bf16.msra.mxu0 %v7252
        %7661 = vmatpush.bf16.msra.mxu0 %v7248
        %7662 = vmatpush.bf16.msra.mxu0 %v7244
        %7663 = vmatpush.bf16.msra.mxu0 %v7240
        %7664 = vmatpush.bf16.msra.mxu0 %v7236
        %7665 = vmatmul.bf16.gmra.mxu0 %v6841
        %v7666 = vpop.f32.mrf.mxu0
        %v7667 = vadd.f32 0.0, %v7666
        %v7668 = vpop.f32.mrf.mxu0
        %v7669 = vadd.f32 0.0, %v7668
        %7670 = vdwg.mxu0
        %7671 = vmatpush.bf16.msra.mxu0 %v7296
        %7672 = vmatpush.bf16.msra.mxu0 %v7292
        %7673 = vmatpush.bf16.msra.mxu0 %v7288
        %7674 = vmatpush.bf16.msra.mxu0 %v7284
        %7675 = vmatpush.bf16.msra.mxu0 %v7280
        %7676 = vmatpush.bf16.msra.mxu0 %v7276
        %7677 = vmatpush.bf16.msra.mxu0 %v7272
        %7678 = vmatpush.bf16.msra.mxu0 %v7268
        %7679 = vmatmul.bf16.gmra.mxu0 %v6842
        %v7680 = vpop.f32.mrf.mxu0
        %v7681 = vadd.f32 %v7667, %v7680
        %v7682 = vpop.f32.mrf.mxu0
        %v7683 = vadd.f32 %v7669, %v7682
        %7684 = vdwg.mxu0
        %7685 = vmatpush.bf16.msra.mxu0 %v7328
        %7686 = vmatpush.bf16.msra.mxu0 %v7324
        %7687 = vmatpush.bf16.msra.mxu0 %v7320
        %7688 = vmatpush.bf16.msra.mxu0 %v7316
        %7689 = vmatpush.bf16.msra.mxu0 %v7312
        %7690 = vmatpush.bf16.msra.mxu0 %v7308
        %7691 = vmatpush.bf16.msra.mxu0 %v7304
        %7692 = vmatpush.bf16.msra.mxu0 %v7300
        %7693 = vmatmul.bf16.gmra.mxu0 %v6843
        %v7694 = vpop.f32.mrf.mxu0
        %v7695 = vadd.f32 %v7681, %v7694
        %v7696 = vpop.f32.mrf.mxu0
        %v7697 = vadd.f32 %v7683, %v7696
        %7698 = vdwg.mxu0
        %7699 = vmatpush.bf16.msra.mxu0 %v7360
        %7700 = vmatpush.bf16.msra.mxu0 %v7356
        %7701 = vmatpush.bf16.msra.mxu0 %v7352
        %7702 = vmatpush.bf16.msra.mxu0 %v7348
        %7703 = vmatpush.bf16.msra.mxu0 %v7344
        %7704 = vmatpush.bf16.msra.mxu0 %v7340
        %7705 = vmatpush.bf16.msra.mxu0 %v7336
        %7706 = vmatpush.bf16.msra.mxu0 %v7332
        %7707 = vmatmul.bf16.gmra.mxu0 %v6844
        %v7708 = vpop.f32.mrf.mxu0
        %v7709 = vadd.f32 %v7695, %v7708
        %v7710 = vpop.f32.mrf.mxu0
        %v7711 = vadd.f32 %v7697, %v7710
        %7712 = vdwg.mxu0
        %v7717 = vunpack.c.l.b16 %v6563
        %v7718 = vunpack.c.h.b16 %v6563
        %v7719 = vunpack.c.l.b16 %v6564
        %v7720 = vunpack.c.h.b16 %v6564
        %v7721 = vunpack.c.l.b16 %v6565
        %v7722 = vunpack.c.h.b16 %v6565
        %v7723 = vunpack.c.l.b16 %v6566
        %v7724 = vunpack.c.h.b16 %v6566
        %v7725 = vpack.c.b16 %v7721, %v7717
        %v7726 = vpack.c.b16 %v7722, %v7718
        %v7727 = vpack.c.b16 %v7723, %v7719
        %v7728 = vpack.c.b16 %v7724, %v7720
        %v7861 = vunpack.c.l.b16 %v6568
        %v7862 = vunpack.c.h.b16 %v6568
        %v7863 = vunpack.c.l.b16 %v6569
        %v7864 = vunpack.c.h.b16 %v6569
        %v7865 = vunpack.c.l.b16 %v6570
        %v7866 = vunpack.c.h.b16 %v6570
        %v7867 = vunpack.c.l.b16 %v6571
        %v7868 = vunpack.c.h.b16 %v6571
        %v7869 = vunpack.c.l.b16 %v6572
        %v7870 = vunpack.c.h.b16 %v6572
        %v7871 = vunpack.c.l.b16 %v6573
        %v7872 = vunpack.c.h.b16 %v6573
        %v7873 = vunpack.c.l.b16 %v6574
        %v7874 = vunpack.c.h.b16 %v6574
        %v7875 = vunpack.c.l.b16 %v6575
        %v7876 = vunpack.c.h.b16 %v6575
        %v7877 = vunpack.c.l.b16 %v6576
        %v7878 = vunpack.c.h.b16 %v6576
        %v7879 = vunpack.c.l.b16 %v6577
        %v7880 = vunpack.c.h.b16 %v6577
        %v7881 = vunpack.c.l.b16 %v6578
        %v7882 = vunpack.c.h.b16 %v6578
        %v7883 = vunpack.c.l.b16 %v6579
        %v7884 = vunpack.c.h.b16 %v6579
        %v7885 = vunpack.c.l.b16 %v6580
        %v7886 = vunpack.c.h.b16 %v6580
        %v7887 = vunpack.c.l.b16 %v6581
        %v7888 = vunpack.c.h.b16 %v6581
        %v7889 = vunpack.c.l.b16 %v6582
        %v7890 = vunpack.c.h.b16 %v6582
        %v7891 = vunpack.c.l.b16 %v6583
        %v7892 = vunpack.c.h.b16 %v6583
        %v7893 = vunpack.c.l.b16 %v6584
        %v7894 = vunpack.c.h.b16 %v6584
        %v7895 = vunpack.c.l.b16 %v6585
        %v7896 = vunpack.c.h.b16 %v6585
        %v7897 = vunpack.c.l.b16 %v6586
        %v7898 = vunpack.c.h.b16 %v6586
        %v7899 = vunpack.c.l.b16 %v6587
        %v7900 = vunpack.c.h.b16 %v6587
        %v7901 = vunpack.c.l.b16 %v6588
        %v7902 = vunpack.c.h.b16 %v6588
        %v7903 = vunpack.c.l.b16 %v6589
        %v7904 = vunpack.c.h.b16 %v6589
        %v7905 = vunpack.c.l.b16 %v6590
        %v7906 = vunpack.c.h.b16 %v6590
        %v7907 = vunpack.c.l.b16 %v6591
        %v7908 = vunpack.c.h.b16 %v6591
        %v7909 = vunpack.c.l.b16 %v6592
        %v7910 = vunpack.c.h.b16 %v6592
        %v7911 = vunpack.c.l.b16 %v6593
        %v7912 = vunpack.c.h.b16 %v6593
        %v7913 = vunpack.c.l.b16 %v6594
        %v7914 = vunpack.c.h.b16 %v6594
        %v7915 = vunpack.c.l.b16 %v6595
        %v7916 = vunpack.c.h.b16 %v6595
        %v7917 = vunpack.c.l.b16 %v6596
        %v7918 = vunpack.c.h.b16 %v6596
        %v7919 = vunpack.c.l.b16 %v6597
        %v7920 = vunpack.c.h.b16 %v6597
        %v7921 = vunpack.c.l.b16 %v6598
        %v7922 = vunpack.c.h.b16 %v6598
        %v7923 = vunpack.c.l.b16 %v6599
        %v7924 = vunpack.c.h.b16 %v6599
        %v7925 = vunpack.c.l.b16 %v6600
        %v7926 = vunpack.c.h.b16 %v6600
        %v7927 = vunpack.c.l.b16 %v6601
        %v7928 = vunpack.c.h.b16 %v6601
        %v7929 = vunpack.c.l.b16 %v6602
        %v7930 = vunpack.c.h.b16 %v6602
        %v7931 = vunpack.c.l.b16 %v6603
        %v7932 = vunpack.c.h.b16 %v6603
        %v7933 = vunpack.c.l.b16 %v6604
        %v7934 = vunpack.c.h.b16 %v6604
        %v7935 = vunpack.c.l.b16 %v6605
        %v7936 = vunpack.c.h.b16 %v6605
        %v7937 = vunpack.c.l.b16 %v6606
        %v7938 = vunpack.c.h.b16 %v6606
        %v7939 = vunpack.c.l.b16 %v6607
        %v7940 = vunpack.c.h.b16 %v6607
        %v7941 = vunpack.c.l.b16 %v6608
        %v7942 = vunpack.c.h.b16 %v6608
        %v7943 = vunpack.c.l.b16 %v6609
        %v7944 = vunpack.c.h.b16 %v6609
        %v7945 = vunpack.c.l.b16 %v6610
        %v7946 = vunpack.c.h.b16 %v6610
        %v7947 = vunpack.c.l.b16 %v6611
        %v7948 = vunpack.c.h.b16 %v6611
        %v7949 = vunpack.c.l.b16 %v6612
        %v7950 = vunpack.c.h.b16 %v6612
        %v7951 = vunpack.c.l.b16 %v6613
        %v7952 = vunpack.c.h.b16 %v6613
        %v7953 = vunpack.c.l.b16 %v6614
        %v7954 = vunpack.c.h.b16 %v6614
        %v7955 = vunpack.c.l.b16 %v6615
        %v7956 = vunpack.c.h.b16 %v6615
        %v7957 = vunpack.c.l.b16 %v6616
        %v7958 = vunpack.c.h.b16 %v6616
        %v7959 = vunpack.c.l.b16 %v6617
        %v7960 = vunpack.c.h.b16 %v6617
        %v7961 = vunpack.c.l.b16 %v6618
        %v7962 = vunpack.c.h.b16 %v6618
        %v7963 = vunpack.c.l.b16 %v6619
        %v7964 = vunpack.c.h.b16 %v6619
        %v7965 = vunpack.c.l.b16 %v6620
        %v7966 = vunpack.c.h.b16 %v6620
        %v7967 = vunpack.c.l.b16 %v6621
        %v7968 = vunpack.c.h.b16 %v6621
        %v7969 = vunpack.c.l.b16 %v6622
        %v7970 = vunpack.c.h.b16 %v6622
        %v7971 = vunpack.c.l.b16 %v6623
        %v7972 = vunpack.c.h.b16 %v6623
        %v7973 = vunpack.c.l.b16 %v6624
        %v7974 = vunpack.c.h.b16 %v6624
        %v7975 = vunpack.c.l.b16 %v6625
        %v7976 = vunpack.c.h.b16 %v6625
        %v7977 = vunpack.c.l.b16 %v6626
        %v7978 = vunpack.c.h.b16 %v6626
        %v7979 = vunpack.c.l.b16 %v6627
        %v7980 = vunpack.c.h.b16 %v6627
        %v7981 = vunpack.c.l.b16 %v6628
        %v7982 = vunpack.c.h.b16 %v6628
        %v7983 = vunpack.c.l.b16 %v6629
        %v7984 = vunpack.c.h.b16 %v6629
        %v7985 = vunpack.c.l.b16 %v6630
        %v7986 = vunpack.c.h.b16 %v6630
        %v7987 = vunpack.c.l.b16 %v6631
        %v7988 = vunpack.c.h.b16 %v6631
        %v7989 = vunpack.c.l.b16 %v6632
        %v7990 = vunpack.c.h.b16 %v6632
        %v7991 = vunpack.c.l.b16 %v6633
        %v7992 = vunpack.c.h.b16 %v6633
        %v7993 = vunpack.c.l.b16 %v6634
        %v7994 = vunpack.c.h.b16 %v6634
        %v7995 = vunpack.c.l.b16 %v6635
        %v7996 = vunpack.c.h.b16 %v6635
        %v7997 = vunpack.c.l.b16 %v6636
        %v7998 = vunpack.c.h.b16 %v6636
        %v7999 = vunpack.c.l.b16 %v6637
        %v8000 = vunpack.c.h.b16 %v6637
        %v8001 = vunpack.c.l.b16 %v6638
        %v8002 = vunpack.c.h.b16 %v6638
        %v8003 = vunpack.c.l.b16 %v6639
        %v8004 = vunpack.c.h.b16 %v6639
        %v8005 = vunpack.c.l.b16 %v6640
        %v8006 = vunpack.c.h.b16 %v6640
        %v8007 = vunpack.c.l.b16 %v6641
        %v8008 = vunpack.c.h.b16 %v6641
        %v8009 = vunpack.c.l.b16 %v6642
        %v8010 = vunpack.c.h.b16 %v6642
        %v8011 = vunpack.c.l.b16 %v6643
        %v8012 = vunpack.c.h.b16 %v6643
        %v8013 = vunpack.c.l.b16 %v6644
        %v8014 = vunpack.c.h.b16 %v6644
        %v8015 = vunpack.c.l.b16 %v6645
        %v8016 = vunpack.c.h.b16 %v6645
        %v8017 = vunpack.c.l.b16 %v6646
        %v8018 = vunpack.c.h.b16 %v6646
        %v8019 = vunpack.c.l.b16 %v6647
        %v8020 = vunpack.c.h.b16 %v6647
        %v8021 = vunpack.c.l.b16 %v6648
        %v8022 = vunpack.c.h.b16 %v6648
        %v8023 = vunpack.c.l.b16 %v6649
        %v8024 = vunpack.c.h.b16 %v6649
        %v8025 = vunpack.c.l.b16 %v6650
        %v8026 = vunpack.c.h.b16 %v6650
        %v8027 = vunpack.c.l.b16 %v6651
        %v8028 = vunpack.c.h.b16 %v6651
        %v8029 = vunpack.c.l.b16 %v6652
        %v8030 = vunpack.c.h.b16 %v6652
        %v8031 = vunpack.c.l.b16 %v6653
        %v8032 = vunpack.c.h.b16 %v6653
        %v8033 = vunpack.c.l.b16 %v6654
        %v8034 = vunpack.c.h.b16 %v6654
        %v8035 = vunpack.c.l.b16 %v6655
        %v8036 = vunpack.c.h.b16 %v6655
        %v8037 = vunpack.c.l.b16 %v6656
        %v8038 = vunpack.c.h.b16 %v6656
        %v8039 = vunpack.c.l.b16 %v6657
        %v8040 = vunpack.c.h.b16 %v6657
        %v8041 = vunpack.c.l.b16 %v6658
        %v8042 = vunpack.c.h.b16 %v6658
        %v8043 = vunpack.c.l.b16 %v6659
        %v8044 = vunpack.c.h.b16 %v6659
        %v8045 = vunpack.c.l.b16 %v6660
        %v8046 = vunpack.c.h.b16 %v6660
        %v8047 = vunpack.c.l.b16 %v6661
        %v8048 = vunpack.c.h.b16 %v6661
        %v8049 = vunpack.c.l.b16 %v6662
        %v8050 = vunpack.c.h.b16 %v6662
        %v8051 = vunpack.c.l.b16 %v6663
        %v8052 = vunpack.c.h.b16 %v6663
        %v8053 = vunpack.c.l.b16 %v6664
        %v8054 = vunpack.c.h.b16 %v6664
        %v8055 = vunpack.c.l.b16 %v6665
        %v8056 = vunpack.c.h.b16 %v6665
        %v8057 = vunpack.c.l.b16 %v6666
        %v8058 = vunpack.c.h.b16 %v6666
        %v8059 = vunpack.c.l.b16 %v6667
        %v8060 = vunpack.c.h.b16 %v6667
        %v8061 = vunpack.c.l.b16 %v6668
        %v8062 = vunpack.c.h.b16 %v6668
        %v8063 = vunpack.c.l.b16 %v6669
        %v8064 = vunpack.c.h.b16 %v6669
        %v8065 = vunpack.c.l.b16 %v6670
        %v8066 = vunpack.c.h.b16 %v6670
        %v8067 = vunpack.c.l.b16 %v6671
        %v8068 = vunpack.c.h.b16 %v6671
        %v8069 = vunpack.c.l.b16 %v6672
        %v8070 = vunpack.c.h.b16 %v6672
        %v8071 = vunpack.c.l.b16 %v6673
        %v8072 = vunpack.c.h.b16 %v6673
        %v8073 = vunpack.c.l.b16 %v6674
        %v8074 = vunpack.c.h.b16 %v6674
        %v8075 = vunpack.c.l.b16 %v6675
        %v8076 = vunpack.c.h.b16 %v6675
        %v8077 = vunpack.c.l.b16 %v6676
        %v8078 = vunpack.c.h.b16 %v6676
        %v8079 = vunpack.c.l.b16 %v6677
        %v8080 = vunpack.c.h.b16 %v6677
        %v8081 = vunpack.c.l.b16 %v6678
        %v8082 = vunpack.c.h.b16 %v6678
        %v8083 = vunpack.c.l.b16 %v6679
        %v8084 = vunpack.c.h.b16 %v6679
        %v8085 = vunpack.c.l.b16 %v6680
        %v8086 = vunpack.c.h.b16 %v6680
        %v8087 = vunpack.c.l.b16 %v6681
        %v8088 = vunpack.c.h.b16 %v6681
        %v8089 = vunpack.c.l.b16 %v6682
        %v8090 = vunpack.c.h.b16 %v6682
        %v8091 = vunpack.c.l.b16 %v6683
        %v8092 = vunpack.c.h.b16 %v6683
        %v8093 = vunpack.c.l.b16 %v6684
        %v8094 = vunpack.c.h.b16 %v6684
        %v8095 = vunpack.c.l.b16 %v6685
        %v8096 = vunpack.c.h.b16 %v6685
        %v8097 = vunpack.c.l.b16 %v6686
        %v8098 = vunpack.c.h.b16 %v6686
        %v8099 = vunpack.c.l.b16 %v6687
        %v8100 = vunpack.c.h.b16 %v6687
        %v8101 = vunpack.c.l.b16 %v6688
        %v8102 = vunpack.c.h.b16 %v6688
        %v8103 = vunpack.c.l.b16 %v6689
        %v8104 = vunpack.c.h.b16 %v6689
        %v8105 = vunpack.c.l.b16 %v6690
        %v8106 = vunpack.c.h.b16 %v6690
        %v8107 = vunpack.c.l.b16 %v6691
        %v8108 = vunpack.c.h.b16 %v6691
        %v8109 = vunpack.c.l.b16 %v6692
        %v8110 = vunpack.c.h.b16 %v6692
        %v8111 = vunpack.c.l.b16 %v6693
        %v8112 = vunpack.c.h.b16 %v6693
        %v8113 = vunpack.c.l.b16 %v6694
        %v8114 = vunpack.c.h.b16 %v6694
        %v8115 = vunpack.c.l.b16 %v6695
        %v8116 = vunpack.c.h.b16 %v6695
        %v8117 = vpack.c.b16 %v7865, %v7861
        %v8118 = vpack.c.b16 %v7866, %v7862
        %v8119 = vpack.c.b16 %v7867, %v7863
        %v8120 = vpack.c.b16 %v7868, %v7864
        %v8121 = vpack.c.b16 %v7873, %v7869
        %v8122 = vpack.c.b16 %v7874, %v7870
        %v8123 = vpack.c.b16 %v7875, %v7871
        %v8124 = vpack.c.b16 %v7876, %v7872
        %v8125 = vpack.c.b16 %v7881, %v7877
        %v8126 = vpack.c.b16 %v7882, %v7878
        %v8127 = vpack.c.b16 %v7883, %v7879
        %v8128 = vpack.c.b16 %v7884, %v7880
        %v8129 = vpack.c.b16 %v7889, %v7885
        %v8130 = vpack.c.b16 %v7890, %v7886
        %v8131 = vpack.c.b16 %v7891, %v7887
        %v8132 = vpack.c.b16 %v7892, %v7888
        %v8133 = vpack.c.b16 %v7897, %v7893
        %v8134 = vpack.c.b16 %v7898, %v7894
        %v8135 = vpack.c.b16 %v7899, %v7895
        %v8136 = vpack.c.b16 %v7900, %v7896
        %v8137 = vpack.c.b16 %v7905, %v7901
        %v8138 = vpack.c.b16 %v7906, %v7902
        %v8139 = vpack.c.b16 %v7907, %v7903
        %v8140 = vpack.c.b16 %v7908, %v7904
        %v8141 = vpack.c.b16 %v7913, %v7909
        %v8142 = vpack.c.b16 %v7914, %v7910
        %v8143 = vpack.c.b16 %v7915, %v7911
        %v8144 = vpack.c.b16 %v7916, %v7912
        %v8145 = vpack.c.b16 %v7921, %v7917
        %v8146 = vpack.c.b16 %v7922, %v7918
        %v8147 = vpack.c.b16 %v7923, %v7919
        %v8148 = vpack.c.b16 %v7924, %v7920
        %v8149 = vpack.c.b16 %v7929, %v7925
        %v8150 = vpack.c.b16 %v7930, %v7926
        %v8151 = vpack.c.b16 %v7931, %v7927
        %v8152 = vpack.c.b16 %v7932, %v7928
        %v8153 = vpack.c.b16 %v7937, %v7933
        %v8154 = vpack.c.b16 %v7938, %v7934
        %v8155 = vpack.c.b16 %v7939, %v7935
        %v8156 = vpack.c.b16 %v7940, %v7936
        %v8157 = vpack.c.b16 %v7945, %v7941
        %v8158 = vpack.c.b16 %v7946, %v7942
        %v8159 = vpack.c.b16 %v7947, %v7943
        %v8160 = vpack.c.b16 %v7948, %v7944
        %v8161 = vpack.c.b16 %v7953, %v7949
        %v8162 = vpack.c.b16 %v7954, %v7950
        %v8163 = vpack.c.b16 %v7955, %v7951
        %v8164 = vpack.c.b16 %v7956, %v7952
        %v8165 = vpack.c.b16 %v7961, %v7957
        %v8166 = vpack.c.b16 %v7962, %v7958
        %v8167 = vpack.c.b16 %v7963, %v7959
        %v8168 = vpack.c.b16 %v7964, %v7960
        %v8169 = vpack.c.b16 %v7969, %v7965
        %v8170 = vpack.c.b16 %v7970, %v7966
        %v8171 = vpack.c.b16 %v7971, %v7967
        %v8172 = vpack.c.b16 %v7972, %v7968
        %v8173 = vpack.c.b16 %v7977, %v7973
        %v8174 = vpack.c.b16 %v7978, %v7974
        %v8175 = vpack.c.b16 %v7979, %v7975
        %v8176 = vpack.c.b16 %v7980, %v7976
        %v8177 = vpack.c.b16 %v7985, %v7981
        %v8178 = vpack.c.b16 %v7986, %v7982
        %v8179 = vpack.c.b16 %v7987, %v7983
        %v8180 = vpack.c.b16 %v7988, %v7984
        %v8181 = vpack.c.b16 %v7993, %v7989
        %v8182 = vpack.c.b16 %v7994, %v7990
        %v8183 = vpack.c.b16 %v7995, %v7991
        %v8184 = vpack.c.b16 %v7996, %v7992
        %v8185 = vpack.c.b16 %v8001, %v7997
        %v8186 = vpack.c.b16 %v8002, %v7998
        %v8187 = vpack.c.b16 %v8003, %v7999
        %v8188 = vpack.c.b16 %v8004, %v8000
        %v8189 = vpack.c.b16 %v8009, %v8005
        %v8190 = vpack.c.b16 %v8010, %v8006
        %v8191 = vpack.c.b16 %v8011, %v8007
        %v8192 = vpack.c.b16 %v8012, %v8008
        %v8193 = vpack.c.b16 %v8017, %v8013
        %v8194 = vpack.c.b16 %v8018, %v8014
        %v8195 = vpack.c.b16 %v8019, %v8015
        %v8196 = vpack.c.b16 %v8020, %v8016
        %v8197 = vpack.c.b16 %v8025, %v8021
        %v8198 = vpack.c.b16 %v8026, %v8022
        %v8199 = vpack.c.b16 %v8027, %v8023
        %v8200 = vpack.c.b16 %v8028, %v8024
        %v8201 = vpack.c.b16 %v8033, %v8029
        %v8202 = vpack.c.b16 %v8034, %v8030
        %v8203 = vpack.c.b16 %v8035, %v8031
        %v8204 = vpack.c.b16 %v8036, %v8032
        %v8205 = vpack.c.b16 %v8041, %v8037
        %v8206 = vpack.c.b16 %v8042, %v8038
        %v8207 = vpack.c.b16 %v8043, %v8039
        %v8208 = vpack.c.b16 %v8044, %v8040
        %v8209 = vpack.c.b16 %v8049, %v8045
        %v8210 = vpack.c.b16 %v8050, %v8046
        %v8211 = vpack.c.b16 %v8051, %v8047
        %v8212 = vpack.c.b16 %v8052, %v8048
        %v8213 = vpack.c.b16 %v8057, %v8053
        %v8214 = vpack.c.b16 %v8058, %v8054
        %v8215 = vpack.c.b16 %v8059, %v8055
        %v8216 = vpack.c.b16 %v8060, %v8056
        %v8217 = vpack.c.b16 %v8065, %v8061
        %v8218 = vpack.c.b16 %v8066, %v8062
        %v8219 = vpack.c.b16 %v8067, %v8063
        %v8220 = vpack.c.b16 %v8068, %v8064
        %v8221 = vpack.c.b16 %v8073, %v8069
        %v8222 = vpack.c.b16 %v8074, %v8070
        %v8223 = vpack.c.b16 %v8075, %v8071
        %v8224 = vpack.c.b16 %v8076, %v8072
        %v8225 = vpack.c.b16 %v8081, %v8077
        %v8226 = vpack.c.b16 %v8082, %v8078
        %v8227 = vpack.c.b16 %v8083, %v8079
        %v8228 = vpack.c.b16 %v8084, %v8080
        %v8229 = vpack.c.b16 %v8089, %v8085
        %v8230 = vpack.c.b16 %v8090, %v8086
        %v8231 = vpack.c.b16 %v8091, %v8087
        %v8232 = vpack.c.b16 %v8092, %v8088
        %v8233 = vpack.c.b16 %v8097, %v8093
        %v8234 = vpack.c.b16 %v8098, %v8094
        %v8235 = vpack.c.b16 %v8099, %v8095
        %v8236 = vpack.c.b16 %v8100, %v8096
        %v8237 = vpack.c.b16 %v8105, %v8101
        %v8238 = vpack.c.b16 %v8106, %v8102
        %v8239 = vpack.c.b16 %v8107, %v8103
        %v8240 = vpack.c.b16 %v8108, %v8104
        %v8241 = vpack.c.b16 %v8113, %v8109
        %v8242 = vpack.c.b16 %v8114, %v8110
        %v8243 = vpack.c.b16 %v8115, %v8111
        %v8244 = vpack.c.b16 %v8116, %v8112
        %8373 = vmatpush.bf16.msra.mxu0 %v8145
        %8374 = vmatpush.bf16.msra.mxu0 %v8141
        %8375 = vmatpush.bf16.msra.mxu0 %v8137
        %8376 = vmatpush.bf16.msra.mxu0 %v8133
        %8377 = vmatpush.bf16.msra.mxu0 %v8129
        %8378 = vmatpush.bf16.msra.mxu0 %v8125
        %8379 = vmatpush.bf16.msra.mxu0 %v8121
        %8380 = vmatpush.bf16.msra.mxu0 %v8117
        %8381 = vmatmul.bf16.gmra.mxu0 %v7725
        %v8382 = vpop.f32.mrf.mxu0
        %v8383 = vadd.f32 %v7541, %v8382
        %v8384 = vpop.f32.mrf.mxu0
        %v8385 = vadd.f32 %v7543, %v8384
        %8386 = vdwg.mxu0
        %8387 = vmatpush.bf16.msra.mxu0 %v8177
        %8388 = vmatpush.bf16.msra.mxu0 %v8173
        %8389 = vmatpush.bf16.msra.mxu0 %v8169
        %8390 = vmatpush.bf16.msra.mxu0 %v8165
        %8391 = vmatpush.bf16.msra.mxu0 %v8161
        %8392 = vmatpush.bf16.msra.mxu0 %v8157
        %8393 = vmatpush.bf16.msra.mxu0 %v8153
        %8394 = vmatpush.bf16.msra.mxu0 %v8149
        %8395 = vmatmul.bf16.gmra.mxu0 %v7726
        %v8396 = vpop.f32.mrf.mxu0
        %v8397 = vadd.f32 %v8383, %v8396
        %v8398 = vpop.f32.mrf.mxu0
        %v8399 = vadd.f32 %v8385, %v8398
        %8400 = vdwg.mxu0
        %8401 = vmatpush.bf16.msra.mxu0 %v8209
        %8402 = vmatpush.bf16.msra.mxu0 %v8205
        %8403 = vmatpush.bf16.msra.mxu0 %v8201
        %8404 = vmatpush.bf16.msra.mxu0 %v8197
        %8405 = vmatpush.bf16.msra.mxu0 %v8193
        %8406 = vmatpush.bf16.msra.mxu0 %v8189
        %8407 = vmatpush.bf16.msra.mxu0 %v8185
        %8408 = vmatpush.bf16.msra.mxu0 %v8181
        %8409 = vmatmul.bf16.gmra.mxu0 %v7727
        %v8410 = vpop.f32.mrf.mxu0
        %v8411 = vadd.f32 %v8397, %v8410
        %v8412 = vpop.f32.mrf.mxu0
        %v8413 = vadd.f32 %v8399, %v8412
        %8414 = vdwg.mxu0
        %8415 = vmatpush.bf16.msra.mxu0 %v8241
        %8416 = vmatpush.bf16.msra.mxu0 %v8237
        %8417 = vmatpush.bf16.msra.mxu0 %v8233
        %8418 = vmatpush.bf16.msra.mxu0 %v8229
        %8419 = vmatpush.bf16.msra.mxu0 %v8225
        %8420 = vmatpush.bf16.msra.mxu0 %v8221
        %8421 = vmatpush.bf16.msra.mxu0 %v8217
        %8422 = vmatpush.bf16.msra.mxu0 %v8213
        %8423 = vmatmul.bf16.gmra.mxu0 %v7728
        %v8424 = vpop.f32.mrf.mxu0
        %v8425 = vadd.f32 %v8411, %v8424
        %v8426 = vpop.f32.mrf.mxu0
        %v8427 = vadd.f32 %v8413, %v8426
        %8428 = vdwg.mxu0
        %8429 = vmatpush.bf16.msra.mxu0 %v8146
        %8430 = vmatpush.bf16.msra.mxu0 %v8142
        %8431 = vmatpush.bf16.msra.mxu0 %v8138
        %8432 = vmatpush.bf16.msra.mxu0 %v8134
        %8433 = vmatpush.bf16.msra.mxu0 %v8130
        %8434 = vmatpush.bf16.msra.mxu0 %v8126
        %8435 = vmatpush.bf16.msra.mxu0 %v8122
        %8436 = vmatpush.bf16.msra.mxu0 %v8118
        %8437 = vmatmul.bf16.gmra.mxu0 %v7725
        %v8438 = vpop.f32.mrf.mxu0
        %v8439 = vadd.f32 %v7597, %v8438
        %v8440 = vpop.f32.mrf.mxu0
        %v8441 = vadd.f32 %v7599, %v8440
        %8442 = vdwg.mxu0
        %8443 = vmatpush.bf16.msra.mxu0 %v8178
        %8444 = vmatpush.bf16.msra.mxu0 %v8174
        %8445 = vmatpush.bf16.msra.mxu0 %v8170
        %8446 = vmatpush.bf16.msra.mxu0 %v8166
        %8447 = vmatpush.bf16.msra.mxu0 %v8162
        %8448 = vmatpush.bf16.msra.mxu0 %v8158
        %8449 = vmatpush.bf16.msra.mxu0 %v8154
        %8450 = vmatpush.bf16.msra.mxu0 %v8150
        %8451 = vmatmul.bf16.gmra.mxu0 %v7726
        %v8452 = vpop.f32.mrf.mxu0
        %v8453 = vadd.f32 %v8439, %v8452
        %v8454 = vpop.f32.mrf.mxu0
        %v8455 = vadd.f32 %v8441, %v8454
        %8456 = vdwg.mxu0
        %8457 = vmatpush.bf16.msra.mxu0 %v8210
        %8458 = vmatpush.bf16.msra.mxu0 %v8206
        %8459 = vmatpush.bf16.msra.mxu0 %v8202
        %8460 = vmatpush.bf16.msra.mxu0 %v8198
        %8461 = vmatpush.bf16.msra.mxu0 %v8194
        %8462 = vmatpush.bf16.msra.mxu0 %v8190
        %8463 = vmatpush.bf16.msra.mxu0 %v8186
        %8464 = vmatpush.bf16.msra.mxu0 %v8182
        %8465 = vmatmul.bf16.gmra.mxu0 %v7727
        %v8466 = vpop.f32.mrf.mxu0
        %v8467 = vadd.f32 %v8453, %v8466
        %v8468 = vpop.f32.mrf.mxu0
        %v8469 = vadd.f32 %v8455, %v8468
        %8470 = vdwg.mxu0
        %8471 = vmatpush.bf16.msra.mxu0 %v8242
        %8472 = vmatpush.bf16.msra.mxu0 %v8238
        %8473 = vmatpush.bf16.msra.mxu0 %v8234
        %8474 = vmatpush.bf16.msra.mxu0 %v8230
        %8475 = vmatpush.bf16.msra.mxu0 %v8226
        %8476 = vmatpush.bf16.msra.mxu0 %v8222
        %8477 = vmatpush.bf16.msra.mxu0 %v8218
        %8478 = vmatpush.bf16.msra.mxu0 %v8214
        %8479 = vmatmul.bf16.gmra.mxu0 %v7728
        %v8480 = vpop.f32.mrf.mxu0
        %v8481 = vadd.f32 %v8467, %v8480
        %v8482 = vpop.f32.mrf.mxu0
        %v8483 = vadd.f32 %v8469, %v8482
        %8484 = vdwg.mxu0
        %8485 = vmatpush.bf16.msra.mxu0 %v8147
        %8486 = vmatpush.bf16.msra.mxu0 %v8143
        %8487 = vmatpush.bf16.msra.mxu0 %v8139
        %8488 = vmatpush.bf16.msra.mxu0 %v8135
        %8489 = vmatpush.bf16.msra.mxu0 %v8131
        %8490 = vmatpush.bf16.msra.mxu0 %v8127
        %8491 = vmatpush.bf16.msra.mxu0 %v8123
        %8492 = vmatpush.bf16.msra.mxu0 %v8119
        %8493 = vmatmul.bf16.gmra.mxu0 %v7725
        %v8494 = vpop.f32.mrf.mxu0
        %v8495 = vadd.f32 %v7653, %v8494
        %v8496 = vpop.f32.mrf.mxu0
        %v8497 = vadd.f32 %v7655, %v8496
        %8498 = vdwg.mxu0
        %8499 = vmatpush.bf16.msra.mxu0 %v8179
        %8500 = vmatpush.bf16.msra.mxu0 %v8175
        %8501 = vmatpush.bf16.msra.mxu0 %v8171
        %8502 = vmatpush.bf16.msra.mxu0 %v8167
        %8503 = vmatpush.bf16.msra.mxu0 %v8163
        %8504 = vmatpush.bf16.msra.mxu0 %v8159
        %8505 = vmatpush.bf16.msra.mxu0 %v8155
        %8506 = vmatpush.bf16.msra.mxu0 %v8151
        %8507 = vmatmul.bf16.gmra.mxu0 %v7726
        %v8508 = vpop.f32.mrf.mxu0
        %v8509 = vadd.f32 %v8495, %v8508
        %v8510 = vpop.f32.mrf.mxu0
        %v8511 = vadd.f32 %v8497, %v8510
        %8512 = vdwg.mxu0
        %8513 = vmatpush.bf16.msra.mxu0 %v8211
        %8514 = vmatpush.bf16.msra.mxu0 %v8207
        %8515 = vmatpush.bf16.msra.mxu0 %v8203
        %8516 = vmatpush.bf16.msra.mxu0 %v8199
        %8517 = vmatpush.bf16.msra.mxu0 %v8195
        %8518 = vmatpush.bf16.msra.mxu0 %v8191
        %8519 = vmatpush.bf16.msra.mxu0 %v8187
        %8520 = vmatpush.bf16.msra.mxu0 %v8183
        %8521 = vmatmul.bf16.gmra.mxu0 %v7727
        %v8522 = vpop.f32.mrf.mxu0
        %v8523 = vadd.f32 %v8509, %v8522
        %v8524 = vpop.f32.mrf.mxu0
        %v8525 = vadd.f32 %v8511, %v8524
        %8526 = vdwg.mxu0
        %8527 = vmatpush.bf16.msra.mxu0 %v8243
        %8528 = vmatpush.bf16.msra.mxu0 %v8239
        %8529 = vmatpush.bf16.msra.mxu0 %v8235
        %8530 = vmatpush.bf16.msra.mxu0 %v8231
        %8531 = vmatpush.bf16.msra.mxu0 %v8227
        %8532 = vmatpush.bf16.msra.mxu0 %v8223
        %8533 = vmatpush.bf16.msra.mxu0 %v8219
        %8534 = vmatpush.bf16.msra.mxu0 %v8215
        %8535 = vmatmul.bf16.gmra.mxu0 %v7728
        %v8536 = vpop.f32.mrf.mxu0
        %v8537 = vadd.f32 %v8523, %v8536
        %v8538 = vpop.f32.mrf.mxu0
        %v8539 = vadd.f32 %v8525, %v8538
        %8540 = vdwg.mxu0
        %8541 = vmatpush.bf16.msra.mxu0 %v8148
        %8542 = vmatpush.bf16.msra.mxu0 %v8144
        %8543 = vmatpush.bf16.msra.mxu0 %v8140
        %8544 = vmatpush.bf16.msra.mxu0 %v8136
        %8545 = vmatpush.bf16.msra.mxu0 %v8132
        %8546 = vmatpush.bf16.msra.mxu0 %v8128
        %8547 = vmatpush.bf16.msra.mxu0 %v8124
        %8548 = vmatpush.bf16.msra.mxu0 %v8120
        %8549 = vmatmul.bf16.gmra.mxu0 %v7725
        %v8550 = vpop.f32.mrf.mxu0
        %v8551 = vadd.f32 %v7709, %v8550
        %v8552 = vpop.f32.mrf.mxu0
        %v8553 = vadd.f32 %v7711, %v8552
        %8554 = vdwg.mxu0
        %8555 = vmatpush.bf16.msra.mxu0 %v8180
        %8556 = vmatpush.bf16.msra.mxu0 %v8176
        %8557 = vmatpush.bf16.msra.mxu0 %v8172
        %8558 = vmatpush.bf16.msra.mxu0 %v8168
        %8559 = vmatpush.bf16.msra.mxu0 %v8164
        %8560 = vmatpush.bf16.msra.mxu0 %v8160
        %8561 = vmatpush.bf16.msra.mxu0 %v8156
        %8562 = vmatpush.bf16.msra.mxu0 %v8152
        %8563 = vmatmul.bf16.gmra.mxu0 %v7726
        %v8564 = vpop.f32.mrf.mxu0
        %v8565 = vadd.f32 %v8551, %v8564
        %v8566 = vpop.f32.mrf.mxu0
        %v8567 = vadd.f32 %v8553, %v8566
        %8568 = vdwg.mxu0
        %8569 = vmatpush.bf16.msra.mxu0 %v8212
        %8570 = vmatpush.bf16.msra.mxu0 %v8208
        %8571 = vmatpush.bf16.msra.mxu0 %v8204
        %8572 = vmatpush.bf16.msra.mxu0 %v8200
        %8573 = vmatpush.bf16.msra.mxu0 %v8196
        %8574 = vmatpush.bf16.msra.mxu0 %v8192
        %8575 = vmatpush.bf16.msra.mxu0 %v8188
        %8576 = vmatpush.bf16.msra.mxu0 %v8184
        %8577 = vmatmul.bf16.gmra.mxu0 %v7727
        %v8578 = vpop.f32.mrf.mxu0
        %v8579 = vadd.f32 %v8565, %v8578
        %v8580 = vpop.f32.mrf.mxu0
        %v8581 = vadd.f32 %v8567, %v8580
        %8582 = vdwg.mxu0
        %8583 = vmatpush.bf16.msra.mxu0 %v8244
        %8584 = vmatpush.bf16.msra.mxu0 %v8240
        %8585 = vmatpush.bf16.msra.mxu0 %v8236
        %8586 = vmatpush.bf16.msra.mxu0 %v8232
        %8587 = vmatpush.bf16.msra.mxu0 %v8228
        %8588 = vmatpush.bf16.msra.mxu0 %v8224
        %8589 = vmatpush.bf16.msra.mxu0 %v8220
        %8590 = vmatpush.bf16.msra.mxu0 %v8216
        %8591 = vmatmul.bf16.gmra.mxu0 %v7728
        %v8592 = vpop.f32.mrf.mxu0
        %v8593 = vadd.f32 %v8579, %v8592
        %v8594 = vpop.f32.mrf.mxu0
        %v8595 = vadd.f32 %v8581, %v8594
        %8596 = vdwg.mxu0
        %v8597 = vrot.slane %v6531, 1
        %v8598 = vrot.slane %v6532, 1
        %v8599 = vrot.slane %v6533, 1
        %v8600 = vrot.slane %v6534, 1
        %v8601 = vrot.slane %v6535, 1
        %v8602 = vrot.slane %v6536, 1
        %v8603 = vrot.slane %v6537, 1
        %v8604 = vrot.slane %v6538, 1
        %v8605 = vsel %vm2303, %v8597, %v8601
        %v8606 = vsel %vm2303, %v8598, %v8602
        %v8607 = vsel %vm2303, %v8599, %v8603
        %v8608 = vsel %vm2303, %v8600, %v8604
        %v8609 = vsel %vm2303, %v8601, %v8597
        %v8610 = vsel %vm2303, %v8602, %v8598
        %v8611 = vsel %vm2303, %v8603, %v8599
        %v8612 = vsel %vm2303, %v8604, %v8600
        %v8613 = vsel %vm2312, %v8605, 0.0
        %v8614 = vsel %vm2312, %v8606, 0.0
        %v8615 = vsel %vm2312, %v8607, 0.0
        %v8616 = vsel %vm2312, %v8608, 0.0
        %v8617 = vsel %vm2313, %v8609, 0.0
        %v8618 = vsel %vm2313, %v8610, 0.0
        %v8619 = vsel %vm2313, %v8611, 0.0
        %v8620 = vsel %vm2313, %v8612, 0.0
        %v8621 = vpack.c.bf16 %v8614, %v8613
        %v8622 = vpack.c.bf16 %v8616, %v8615
        %v8623 = vpack.c.bf16 %v8618, %v8617
        %v8624 = vpack.c.bf16 %v8620, %v8619
        %s8625 = scalar_lea.vmem [#allocation5], 8192
        %v8626 = vld [vmem:[%s8625] sm:$0xff]
        %v8627 = vld [vmem:[%s8625 + $0x8] sm:$0xff]
        %v8628 = vld [vmem:[%s8625 + $0x10] sm:$0xff]
        %v8629 = vld [vmem:[%s8625 + $0x18] sm:$0xff]
        %v8630 = vld [vmem:[%s8625 + $0x20] sm:$0xff]
        %v8631 = vld [vmem:[%s8625 + $0x28] sm:$0xff]
        %v8632 = vld [vmem:[%s8625 + $0x30] sm:$0xff]
        %v8633 = vld [vmem:[%s8625 + $0x38] sm:$0xff]
        %v8634 = vld [vmem:[%s8625 + $0x40] sm:$0xff]
        %v8635 = vld [vmem:[%s8625 + $0x48] sm:$0xff]
        %v8636 = vld [vmem:[%s8625 + $0x50] sm:$0xff]
        %v8637 = vld [vmem:[%s8625 + $0x58] sm:$0xff]
        %v8638 = vld [vmem:[%s8625 + $0x60] sm:$0xff]
        %v8639 = vld [vmem:[%s8625 + $0x68] sm:$0xff]
        %v8640 = vld [vmem:[%s8625 + $0x70] sm:$0xff]
        %v8641 = vld [vmem:[%s8625 + $0x78] sm:$0xff]
        %v8642 = vld [vmem:[%s8625 + $0x80] sm:$0xff]
        %v8643 = vld [vmem:[%s8625 + $0x88] sm:$0xff]
        %v8644 = vld [vmem:[%s8625 + $0x90] sm:$0xff]
        %v8645 = vld [vmem:[%s8625 + $0x98] sm:$0xff]
        %v8646 = vld [vmem:[%s8625 + $0xa0] sm:$0xff]
        %v8647 = vld [vmem:[%s8625 + $0xa8] sm:$0xff]
        %v8648 = vld [vmem:[%s8625 + $0xb0] sm:$0xff]
        %v8649 = vld [vmem:[%s8625 + $0xb8] sm:$0xff]
        %v8650 = vld [vmem:[%s8625 + $0xc0] sm:$0xff]
        %v8651 = vld [vmem:[%s8625 + $0xc8] sm:$0xff]
        %v8652 = vld [vmem:[%s8625 + $0xd0] sm:$0xff]
        %v8653 = vld [vmem:[%s8625 + $0xd8] sm:$0xff]
        %v8654 = vld [vmem:[%s8625 + $0xe0] sm:$0xff]
        %v8655 = vld [vmem:[%s8625 + $0xe8] sm:$0xff]
        %v8656 = vld [vmem:[%s8625 + $0xf0] sm:$0xff]
        %v8657 = vld [vmem:[%s8625 + $0xf8] sm:$0xff]
        %v8658 = vld [vmem:[%s8625 + $0x100] sm:$0xff]
        %v8659 = vld [vmem:[%s8625 + $0x108] sm:$0xff]
        %v8660 = vld [vmem:[%s8625 + $0x110] sm:$0xff]
        %v8661 = vld [vmem:[%s8625 + $0x118] sm:$0xff]
        %v8662 = vld [vmem:[%s8625 + $0x120] sm:$0xff]
        %v8663 = vld [vmem:[%s8625 + $0x128] sm:$0xff]
        %v8664 = vld [vmem:[%s8625 + $0x130] sm:$0xff]
        %v8665 = vld [vmem:[%s8625 + $0x138] sm:$0xff]
        %v8666 = vld [vmem:[%s8625 + $0x140] sm:$0xff]
        %v8667 = vld [vmem:[%s8625 + $0x148] sm:$0xff]
        %v8668 = vld [vmem:[%s8625 + $0x150] sm:$0xff]
        %v8669 = vld [vmem:[%s8625 + $0x158] sm:$0xff]
        %v8670 = vld [vmem:[%s8625 + $0x160] sm:$0xff]
        %v8671 = vld [vmem:[%s8625 + $0x168] sm:$0xff]
        %v8672 = vld [vmem:[%s8625 + $0x170] sm:$0xff]
        %v8673 = vld [vmem:[%s8625 + $0x178] sm:$0xff]
        %v8674 = vld [vmem:[%s8625 + $0x180] sm:$0xff]
        %v8675 = vld [vmem:[%s8625 + $0x188] sm:$0xff]
        %v8676 = vld [vmem:[%s8625 + $0x190] sm:$0xff]
        %v8677 = vld [vmem:[%s8625 + $0x198] sm:$0xff]
        %v8678 = vld [vmem:[%s8625 + $0x1a0] sm:$0xff]
        %v8679 = vld [vmem:[%s8625 + $0x1a8] sm:$0xff]
        %v8680 = vld [vmem:[%s8625 + $0x1b0] sm:$0xff]
        %v8681 = vld [vmem:[%s8625 + $0x1b8] sm:$0xff]
        %v8682 = vld [vmem:[%s8625 + $0x1c0] sm:$0xff]
        %v8683 = vld [vmem:[%s8625 + $0x1c8] sm:$0xff]
        %v8684 = vld [vmem:[%s8625 + $0x1d0] sm:$0xff]
        %v8685 = vld [vmem:[%s8625 + $0x1d8] sm:$0xff]
        %v8686 = vld [vmem:[%s8625 + $0x1e0] sm:$0xff]
        %v8687 = vld [vmem:[%s8625 + $0x1e8] sm:$0xff]
        %v8688 = vld [vmem:[%s8625 + $0x1f0] sm:$0xff]
        %v8689 = vld [vmem:[%s8625 + $0x1f8] sm:$0xff]
        %v8690 = vld [vmem:[%s8625 + $0x200] sm:$0xff]
        %v8691 = vld [vmem:[%s8625 + $0x208] sm:$0xff]
        %v8692 = vld [vmem:[%s8625 + $0x210] sm:$0xff]
        %v8693 = vld [vmem:[%s8625 + $0x218] sm:$0xff]
        %v8694 = vld [vmem:[%s8625 + $0x220] sm:$0xff]
        %v8695 = vld [vmem:[%s8625 + $0x228] sm:$0xff]
        %v8696 = vld [vmem:[%s8625 + $0x230] sm:$0xff]
        %v8697 = vld [vmem:[%s8625 + $0x238] sm:$0xff]
        %v8698 = vld [vmem:[%s8625 + $0x240] sm:$0xff]
        %v8699 = vld [vmem:[%s8625 + $0x248] sm:$0xff]
        %v8700 = vld [vmem:[%s8625 + $0x250] sm:$0xff]
        %v8701 = vld [vmem:[%s8625 + $0x258] sm:$0xff]
        %v8702 = vld [vmem:[%s8625 + $0x260] sm:$0xff]
        %v8703 = vld [vmem:[%s8625 + $0x268] sm:$0xff]
        %v8704 = vld [vmem:[%s8625 + $0x270] sm:$0xff]
        %v8705 = vld [vmem:[%s8625 + $0x278] sm:$0xff]
        %v8706 = vld [vmem:[%s8625 + $0x280] sm:$0xff]
        %v8707 = vld [vmem:[%s8625 + $0x288] sm:$0xff]
        %v8708 = vld [vmem:[%s8625 + $0x290] sm:$0xff]
        %v8709 = vld [vmem:[%s8625 + $0x298] sm:$0xff]
        %v8710 = vld [vmem:[%s8625 + $0x2a0] sm:$0xff]
        %v8711 = vld [vmem:[%s8625 + $0x2a8] sm:$0xff]
        %v8712 = vld [vmem:[%s8625 + $0x2b0] sm:$0xff]
        %v8713 = vld [vmem:[%s8625 + $0x2b8] sm:$0xff]
        %v8714 = vld [vmem:[%s8625 + $0x2c0] sm:$0xff]
        %v8715 = vld [vmem:[%s8625 + $0x2c8] sm:$0xff]
        %v8716 = vld [vmem:[%s8625 + $0x2d0] sm:$0xff]
        %v8717 = vld [vmem:[%s8625 + $0x2d8] sm:$0xff]
        %v8718 = vld [vmem:[%s8625 + $0x2e0] sm:$0xff]
        %v8719 = vld [vmem:[%s8625 + $0x2e8] sm:$0xff]
        %v8720 = vld [vmem:[%s8625 + $0x2f0] sm:$0xff]
        %v8721 = vld [vmem:[%s8625 + $0x2f8] sm:$0xff]
        %v8722 = vld [vmem:[%s8625 + $0x300] sm:$0xff]
        %v8723 = vld [vmem:[%s8625 + $0x308] sm:$0xff]
        %v8724 = vld [vmem:[%s8625 + $0x310] sm:$0xff]
        %v8725 = vld [vmem:[%s8625 + $0x318] sm:$0xff]
        %v8726 = vld [vmem:[%s8625 + $0x320] sm:$0xff]
        %v8727 = vld [vmem:[%s8625 + $0x328] sm:$0xff]
        %v8728 = vld [vmem:[%s8625 + $0x330] sm:$0xff]
        %v8729 = vld [vmem:[%s8625 + $0x338] sm:$0xff]
        %v8730 = vld [vmem:[%s8625 + $0x340] sm:$0xff]
        %v8731 = vld [vmem:[%s8625 + $0x348] sm:$0xff]
        %v8732 = vld [vmem:[%s8625 + $0x350] sm:$0xff]
        %v8733 = vld [vmem:[%s8625 + $0x358] sm:$0xff]
        %v8734 = vld [vmem:[%s8625 + $0x360] sm:$0xff]
        %v8735 = vld [vmem:[%s8625 + $0x368] sm:$0xff]
        %v8736 = vld [vmem:[%s8625 + $0x370] sm:$0xff]
        %v8737 = vld [vmem:[%s8625 + $0x378] sm:$0xff]
        %v8738 = vld [vmem:[%s8625 + $0x380] sm:$0xff]
        %v8739 = vld [vmem:[%s8625 + $0x388] sm:$0xff]
        %v8740 = vld [vmem:[%s8625 + $0x390] sm:$0xff]
        %v8741 = vld [vmem:[%s8625 + $0x398] sm:$0xff]
        %v8742 = vld [vmem:[%s8625 + $0x3a0] sm:$0xff]
        %v8743 = vld [vmem:[%s8625 + $0x3a8] sm:$0xff]
        %v8744 = vld [vmem:[%s8625 + $0x3b0] sm:$0xff]
        %v8745 = vld [vmem:[%s8625 + $0x3b8] sm:$0xff]
        %v8746 = vld [vmem:[%s8625 + $0x3c0] sm:$0xff]
        %v8747 = vld [vmem:[%s8625 + $0x3c8] sm:$0xff]
        %v8748 = vld [vmem:[%s8625 + $0x3d0] sm:$0xff]
        %v8749 = vld [vmem:[%s8625 + $0x3d8] sm:$0xff]
        %v8750 = vld [vmem:[%s8625 + $0x3e0] sm:$0xff]
        %v8751 = vld [vmem:[%s8625 + $0x3e8] sm:$0xff]
        %v8752 = vld [vmem:[%s8625 + $0x3f0] sm:$0xff]
        %v8753 = vld [vmem:[%s8625 + $0x3f8] sm:$0xff]
        %v8758 = vunpack.c.l.b16 %v8621
        %v8759 = vunpack.c.h.b16 %v8621
        %v8760 = vunpack.c.l.b16 %v8622
        %v8761 = vunpack.c.h.b16 %v8622
        %v8762 = vunpack.c.l.b16 %v8623
        %v8763 = vunpack.c.h.b16 %v8623
        %v8764 = vunpack.c.l.b16 %v8624
        %v8765 = vunpack.c.h.b16 %v8624
        %v8766 = vpack.c.b16 %v8762, %v8758
        %v8767 = vpack.c.b16 %v8763, %v8759
        %v8768 = vpack.c.b16 %v8764, %v8760
        %v8769 = vpack.c.b16 %v8765, %v8761
        %v8902 = vunpack.c.l.b16 %v8626
        %v8903 = vunpack.c.h.b16 %v8626
        %v8904 = vunpack.c.l.b16 %v8627
        %v8905 = vunpack.c.h.b16 %v8627
        %v8906 = vunpack.c.l.b16 %v8628
        %v8907 = vunpack.c.h.b16 %v8628
        %v8908 = vunpack.c.l.b16 %v8629
        %v8909 = vunpack.c.h.b16 %v8629
        %v8910 = vunpack.c.l.b16 %v8630
        %v8911 = vunpack.c.h.b16 %v8630
        %v8912 = vunpack.c.l.b16 %v8631
        %v8913 = vunpack.c.h.b16 %v8631
        %v8914 = vunpack.c.l.b16 %v8632
        %v8915 = vunpack.c.h.b16 %v8632
        %v8916 = vunpack.c.l.b16 %v8633
        %v8917 = vunpack.c.h.b16 %v8633
        %v8918 = vunpack.c.l.b16 %v8634
        %v8919 = vunpack.c.h.b16 %v8634
        %v8920 = vunpack.c.l.b16 %v8635
        %v8921 = vunpack.c.h.b16 %v8635
        %v8922 = vunpack.c.l.b16 %v8636
        %v8923 = vunpack.c.h.b16 %v8636
        %v8924 = vunpack.c.l.b16 %v8637
        %v8925 = vunpack.c.h.b16 %v8637
        %v8926 = vunpack.c.l.b16 %v8638
        %v8927 = vunpack.c.h.b16 %v8638
        %v8928 = vunpack.c.l.b16 %v8639
        %v8929 = vunpack.c.h.b16 %v8639
        %v8930 = vunpack.c.l.b16 %v8640
        %v8931 = vunpack.c.h.b16 %v8640
        %v8932 = vunpack.c.l.b16 %v8641
        %v8933 = vunpack.c.h.b16 %v8641
        %v8934 = vunpack.c.l.b16 %v8642
        %v8935 = vunpack.c.h.b16 %v8642
        %v8936 = vunpack.c.l.b16 %v8643
        %v8937 = vunpack.c.h.b16 %v8643
        %v8938 = vunpack.c.l.b16 %v8644
        %v8939 = vunpack.c.h.b16 %v8644
        %v8940 = vunpack.c.l.b16 %v8645
        %v8941 = vunpack.c.h.b16 %v8645
        %v8942 = vunpack.c.l.b16 %v8646
        %v8943 = vunpack.c.h.b16 %v8646
        %v8944 = vunpack.c.l.b16 %v8647
        %v8945 = vunpack.c.h.b16 %v8647
        %v8946 = vunpack.c.l.b16 %v8648
        %v8947 = vunpack.c.h.b16 %v8648
        %v8948 = vunpack.c.l.b16 %v8649
        %v8949 = vunpack.c.h.b16 %v8649
        %v8950 = vunpack.c.l.b16 %v8650
        %v8951 = vunpack.c.h.b16 %v8650
        %v8952 = vunpack.c.l.b16 %v8651
        %v8953 = vunpack.c.h.b16 %v8651
        %v8954 = vunpack.c.l.b16 %v8652
        %v8955 = vunpack.c.h.b16 %v8652
        %v8956 = vunpack.c.l.b16 %v8653
        %v8957 = vunpack.c.h.b16 %v8653
        %v8958 = vunpack.c.l.b16 %v8654
        %v8959 = vunpack.c.h.b16 %v8654
        %v8960 = vunpack.c.l.b16 %v8655
        %v8961 = vunpack.c.h.b16 %v8655
        %v8962 = vunpack.c.l.b16 %v8656
        %v8963 = vunpack.c.h.b16 %v8656
        %v8964 = vunpack.c.l.b16 %v8657
        %v8965 = vunpack.c.h.b16 %v8657
        %v8966 = vunpack.c.l.b16 %v8658
        %v8967 = vunpack.c.h.b16 %v8658
        %v8968 = vunpack.c.l.b16 %v8659
        %v8969 = vunpack.c.h.b16 %v8659
        %v8970 = vunpack.c.l.b16 %v8660
        %v8971 = vunpack.c.h.b16 %v8660
        %v8972 = vunpack.c.l.b16 %v8661
        %v8973 = vunpack.c.h.b16 %v8661
        %v8974 = vunpack.c.l.b16 %v8662
        %v8975 = vunpack.c.h.b16 %v8662
        %v8976 = vunpack.c.l.b16 %v8663
        %v8977 = vunpack.c.h.b16 %v8663
        %v8978 = vunpack.c.l.b16 %v8664
        %v8979 = vunpack.c.h.b16 %v8664
        %v8980 = vunpack.c.l.b16 %v8665
        %v8981 = vunpack.c.h.b16 %v8665
        %v8982 = vunpack.c.l.b16 %v8666
        %v8983 = vunpack.c.h.b16 %v8666
        %v8984 = vunpack.c.l.b16 %v8667
        %v8985 = vunpack.c.h.b16 %v8667
        %v8986 = vunpack.c.l.b16 %v8668
        %v8987 = vunpack.c.h.b16 %v8668
        %v8988 = vunpack.c.l.b16 %v8669
        %v8989 = vunpack.c.h.b16 %v8669
        %v8990 = vunpack.c.l.b16 %v8670
        %v8991 = vunpack.c.h.b16 %v8670
        %v8992 = vunpack.c.l.b16 %v8671
        %v8993 = vunpack.c.h.b16 %v8671
        %v8994 = vunpack.c.l.b16 %v8672
        %v8995 = vunpack.c.h.b16 %v8672
        %v8996 = vunpack.c.l.b16 %v8673
        %v8997 = vunpack.c.h.b16 %v8673
        %v8998 = vunpack.c.l.b16 %v8674
        %v8999 = vunpack.c.h.b16 %v8674
        %v9000 = vunpack.c.l.b16 %v8675
        %v9001 = vunpack.c.h.b16 %v8675
        %v9002 = vunpack.c.l.b16 %v8676
        %v9003 = vunpack.c.h.b16 %v8676
        %v9004 = vunpack.c.l.b16 %v8677
        %v9005 = vunpack.c.h.b16 %v8677
        %v9006 = vunpack.c.l.b16 %v8678
        %v9007 = vunpack.c.h.b16 %v8678
        %v9008 = vunpack.c.l.b16 %v8679
        %v9009 = vunpack.c.h.b16 %v8679
        %v9010 = vunpack.c.l.b16 %v8680
        %v9011 = vunpack.c.h.b16 %v8680
        %v9012 = vunpack.c.l.b16 %v8681
        %v9013 = vunpack.c.h.b16 %v8681
        %v9014 = vunpack.c.l.b16 %v8682
        %v9015 = vunpack.c.h.b16 %v8682
        %v9016 = vunpack.c.l.b16 %v8683
        %v9017 = vunpack.c.h.b16 %v8683
        %v9018 = vunpack.c.l.b16 %v8684
        %v9019 = vunpack.c.h.b16 %v8684
        %v9020 = vunpack.c.l.b16 %v8685
        %v9021 = vunpack.c.h.b16 %v8685
        %v9022 = vunpack.c.l.b16 %v8686
        %v9023 = vunpack.c.h.b16 %v8686
        %v9024 = vunpack.c.l.b16 %v8687
        %v9025 = vunpack.c.h.b16 %v8687
        %v9026 = vunpack.c.l.b16 %v8688
        %v9027 = vunpack.c.h.b16 %v8688
        %v9028 = vunpack.c.l.b16 %v8689
        %v9029 = vunpack.c.h.b16 %v8689
        %v9030 = vunpack.c.l.b16 %v8690
        %v9031 = vunpack.c.h.b16 %v8690
        %v9032 = vunpack.c.l.b16 %v8691
        %v9033 = vunpack.c.h.b16 %v8691
        %v9034 = vunpack.c.l.b16 %v8692
        %v9035 = vunpack.c.h.b16 %v8692
        %v9036 = vunpack.c.l.b16 %v8693
        %v9037 = vunpack.c.h.b16 %v8693
        %v9038 = vunpack.c.l.b16 %v8694
        %v9039 = vunpack.c.h.b16 %v8694
        %v9040 = vunpack.c.l.b16 %v8695
        %v9041 = vunpack.c.h.b16 %v8695
        %v9042 = vunpack.c.l.b16 %v8696
        %v9043 = vunpack.c.h.b16 %v8696
        %v9044 = vunpack.c.l.b16 %v8697
        %v9045 = vunpack.c.h.b16 %v8697
        %v9046 = vunpack.c.l.b16 %v8698
        %v9047 = vunpack.c.h.b16 %v8698
        %v9048 = vunpack.c.l.b16 %v8699
        %v9049 = vunpack.c.h.b16 %v8699
        %v9050 = vunpack.c.l.b16 %v8700
        %v9051 = vunpack.c.h.b16 %v8700
        %v9052 = vunpack.c.l.b16 %v8701
        %v9053 = vunpack.c.h.b16 %v8701
        %v9054 = vunpack.c.l.b16 %v8702
        %v9055 = vunpack.c.h.b16 %v8702
        %v9056 = vunpack.c.l.b16 %v8703
        %v9057 = vunpack.c.h.b16 %v8703
        %v9058 = vunpack.c.l.b16 %v8704
        %v9059 = vunpack.c.h.b16 %v8704
        %v9060 = vunpack.c.l.b16 %v8705
        %v9061 = vunpack.c.h.b16 %v8705
        %v9062 = vunpack.c.l.b16 %v8706
        %v9063 = vunpack.c.h.b16 %v8706
        %v9064 = vunpack.c.l.b16 %v8707
        %v9065 = vunpack.c.h.b16 %v8707
        %v9066 = vunpack.c.l.b16 %v8708
        %v9067 = vunpack.c.h.b16 %v8708
        %v9068 = vunpack.c.l.b16 %v8709
        %v9069 = vunpack.c.h.b16 %v8709
        %v9070 = vunpack.c.l.b16 %v8710
        %v9071 = vunpack.c.h.b16 %v8710
        %v9072 = vunpack.c.l.b16 %v8711
        %v9073 = vunpack.c.h.b16 %v8711
        %v9074 = vunpack.c.l.b16 %v8712
        %v9075 = vunpack.c.h.b16 %v8712
        %v9076 = vunpack.c.l.b16 %v8713
        %v9077 = vunpack.c.h.b16 %v8713
        %v9078 = vunpack.c.l.b16 %v8714
        %v9079 = vunpack.c.h.b16 %v8714
        %v9080 = vunpack.c.l.b16 %v8715
        %v9081 = vunpack.c.h.b16 %v8715
        %v9082 = vunpack.c.l.b16 %v8716
        %v9083 = vunpack.c.h.b16 %v8716
        %v9084 = vunpack.c.l.b16 %v8717
        %v9085 = vunpack.c.h.b16 %v8717
        %v9086 = vunpack.c.l.b16 %v8718
        %v9087 = vunpack.c.h.b16 %v8718
        %v9088 = vunpack.c.l.b16 %v8719
        %v9089 = vunpack.c.h.b16 %v8719
        %v9090 = vunpack.c.l.b16 %v8720
        %v9091 = vunpack.c.h.b16 %v8720
        %v9092 = vunpack.c.l.b16 %v8721
        %v9093 = vunpack.c.h.b16 %v8721
        %v9094 = vunpack.c.l.b16 %v8722
        %v9095 = vunpack.c.h.b16 %v8722
        %v9096 = vunpack.c.l.b16 %v8723
        %v9097 = vunpack.c.h.b16 %v8723
        %v9098 = vunpack.c.l.b16 %v8724
        %v9099 = vunpack.c.h.b16 %v8724
        %v9100 = vunpack.c.l.b16 %v8725
        %v9101 = vunpack.c.h.b16 %v8725
        %v9102 = vunpack.c.l.b16 %v8726
        %v9103 = vunpack.c.h.b16 %v8726
        %v9104 = vunpack.c.l.b16 %v8727
        %v9105 = vunpack.c.h.b16 %v8727
        %v9106 = vunpack.c.l.b16 %v8728
        %v9107 = vunpack.c.h.b16 %v8728
        %v9108 = vunpack.c.l.b16 %v8729
        %v9109 = vunpack.c.h.b16 %v8729
        %v9110 = vunpack.c.l.b16 %v8730
        %v9111 = vunpack.c.h.b16 %v8730
        %v9112 = vunpack.c.l.b16 %v8731
        %v9113 = vunpack.c.h.b16 %v8731
        %v9114 = vunpack.c.l.b16 %v8732
        %v9115 = vunpack.c.h.b16 %v8732
        %v9116 = vunpack.c.l.b16 %v8733
        %v9117 = vunpack.c.h.b16 %v8733
        %v9118 = vunpack.c.l.b16 %v8734
        %v9119 = vunpack.c.h.b16 %v8734
        %v9120 = vunpack.c.l.b16 %v8735
        %v9121 = vunpack.c.h.b16 %v8735
        %v9122 = vunpack.c.l.b16 %v8736
        %v9123 = vunpack.c.h.b16 %v8736
        %v9124 = vunpack.c.l.b16 %v8737
        %v9125 = vunpack.c.h.b16 %v8737
        %v9126 = vunpack.c.l.b16 %v8738
        %v9127 = vunpack.c.h.b16 %v8738
        %v9128 = vunpack.c.l.b16 %v8739
        %v9129 = vunpack.c.h.b16 %v8739
        %v9130 = vunpack.c.l.b16 %v8740
        %v9131 = vunpack.c.h.b16 %v8740
        %v9132 = vunpack.c.l.b16 %v8741
        %v9133 = vunpack.c.h.b16 %v8741
        %v9134 = vunpack.c.l.b16 %v8742
        %v9135 = vunpack.c.h.b16 %v8742
        %v9136 = vunpack.c.l.b16 %v8743
        %v9137 = vunpack.c.h.b16 %v8743
        %v9138 = vunpack.c.l.b16 %v8744
        %v9139 = vunpack.c.h.b16 %v8744
        %v9140 = vunpack.c.l.b16 %v8745
        %v9141 = vunpack.c.h.b16 %v8745
        %v9142 = vunpack.c.l.b16 %v8746
        %v9143 = vunpack.c.h.b16 %v8746
        %v9144 = vunpack.c.l.b16 %v8747
        %v9145 = vunpack.c.h.b16 %v8747
        %v9146 = vunpack.c.l.b16 %v8748
        %v9147 = vunpack.c.h.b16 %v8748
        %v9148 = vunpack.c.l.b16 %v8749
        %v9149 = vunpack.c.h.b16 %v8749
        %v9150 = vunpack.c.l.b16 %v8750
        %v9151 = vunpack.c.h.b16 %v8750
        %v9152 = vunpack.c.l.b16 %v8751
        %v9153 = vunpack.c.h.b16 %v8751
        %v9154 = vunpack.c.l.b16 %v8752
        %v9155 = vunpack.c.h.b16 %v8752
        %v9156 = vunpack.c.l.b16 %v8753
        %v9157 = vunpack.c.h.b16 %v8753
        %v9158 = vpack.c.b16 %v8906, %v8902
        %v9159 = vpack.c.b16 %v8907, %v8903
        %v9160 = vpack.c.b16 %v8908, %v8904
        %v9161 = vpack.c.b16 %v8909, %v8905
        %v9162 = vpack.c.b16 %v8914, %v8910
        %v9163 = vpack.c.b16 %v8915, %v8911
        %v9164 = vpack.c.b16 %v8916, %v8912
        %v9165 = vpack.c.b16 %v8917, %v8913
        %v9166 = vpack.c.b16 %v8922, %v8918
        %v9167 = vpack.c.b16 %v8923, %v8919
        %v9168 = vpack.c.b16 %v8924, %v8920
        %v9169 = vpack.c.b16 %v8925, %v8921
        %v9170 = vpack.c.b16 %v8930, %v8926
        %v9171 = vpack.c.b16 %v8931, %v8927
        %v9172 = vpack.c.b16 %v8932, %v8928
        %v9173 = vpack.c.b16 %v8933, %v8929
        %v9174 = vpack.c.b16 %v8938, %v8934
        %v9175 = vpack.c.b16 %v8939, %v8935
        %v9176 = vpack.c.b16 %v8940, %v8936
        %v9177 = vpack.c.b16 %v8941, %v8937
        %v9178 = vpack.c.b16 %v8946, %v8942
        %v9179 = vpack.c.b16 %v8947, %v8943
        %v9180 = vpack.c.b16 %v8948, %v8944
        %v9181 = vpack.c.b16 %v8949, %v8945
        %v9182 = vpack.c.b16 %v8954, %v8950
        %v9183 = vpack.c.b16 %v8955, %v8951
        %v9184 = vpack.c.b16 %v8956, %v8952
        %v9185 = vpack.c.b16 %v8957, %v8953
        %v9186 = vpack.c.b16 %v8962, %v8958
        %v9187 = vpack.c.b16 %v8963, %v8959
        %v9188 = vpack.c.b16 %v8964, %v8960
        %v9189 = vpack.c.b16 %v8965, %v8961
        %v9190 = vpack.c.b16 %v8970, %v8966
        %v9191 = vpack.c.b16 %v8971, %v8967
        %v9192 = vpack.c.b16 %v8972, %v8968
        %v9193 = vpack.c.b16 %v8973, %v8969
        %v9194 = vpack.c.b16 %v8978, %v8974
        %v9195 = vpack.c.b16 %v8979, %v8975
        %v9196 = vpack.c.b16 %v8980, %v8976
        %v9197 = vpack.c.b16 %v8981, %v8977
        %v9198 = vpack.c.b16 %v8986, %v8982
        %v9199 = vpack.c.b16 %v8987, %v8983
        %v9200 = vpack.c.b16 %v8988, %v8984
        %v9201 = vpack.c.b16 %v8989, %v8985
        %v9202 = vpack.c.b16 %v8994, %v8990
        %v9203 = vpack.c.b16 %v8995, %v8991
        %v9204 = vpack.c.b16 %v8996, %v8992
        %v9205 = vpack.c.b16 %v8997, %v8993
        %v9206 = vpack.c.b16 %v9002, %v8998
        %v9207 = vpack.c.b16 %v9003, %v8999
        %v9208 = vpack.c.b16 %v9004, %v9000
        %v9209 = vpack.c.b16 %v9005, %v9001
        %v9210 = vpack.c.b16 %v9010, %v9006
        %v9211 = vpack.c.b16 %v9011, %v9007
        %v9212 = vpack.c.b16 %v9012, %v9008
        %v9213 = vpack.c.b16 %v9013, %v9009
        %v9214 = vpack.c.b16 %v9018, %v9014
        %v9215 = vpack.c.b16 %v9019, %v9015
        %v9216 = vpack.c.b16 %v9020, %v9016
        %v9217 = vpack.c.b16 %v9021, %v9017
        %v9218 = vpack.c.b16 %v9026, %v9022
        %v9219 = vpack.c.b16 %v9027, %v9023
        %v9220 = vpack.c.b16 %v9028, %v9024
        %v9221 = vpack.c.b16 %v9029, %v9025
        %v9222 = vpack.c.b16 %v9034, %v9030
        %v9223 = vpack.c.b16 %v9035, %v9031
        %v9224 = vpack.c.b16 %v9036, %v9032
        %v9225 = vpack.c.b16 %v9037, %v9033
        %v9226 = vpack.c.b16 %v9042, %v9038
        %v9227 = vpack.c.b16 %v9043, %v9039
        %v9228 = vpack.c.b16 %v9044, %v9040
        %v9229 = vpack.c.b16 %v9045, %v9041
        %v9230 = vpack.c.b16 %v9050, %v9046
        %v9231 = vpack.c.b16 %v9051, %v9047
        %v9232 = vpack.c.b16 %v9052, %v9048
        %v9233 = vpack.c.b16 %v9053, %v9049
        %v9234 = vpack.c.b16 %v9058, %v9054
        %v9235 = vpack.c.b16 %v9059, %v9055
        %v9236 = vpack.c.b16 %v9060, %v9056
        %v9237 = vpack.c.b16 %v9061, %v9057
        %v9238 = vpack.c.b16 %v9066, %v9062
        %v9239 = vpack.c.b16 %v9067, %v9063
        %v9240 = vpack.c.b16 %v9068, %v9064
        %v9241 = vpack.c.b16 %v9069, %v9065
        %v9242 = vpack.c.b16 %v9074, %v9070
        %v9243 = vpack.c.b16 %v9075, %v9071
        %v9244 = vpack.c.b16 %v9076, %v9072
        %v9245 = vpack.c.b16 %v9077, %v9073
        %v9246 = vpack.c.b16 %v9082, %v9078
        %v9247 = vpack.c.b16 %v9083, %v9079
        %v9248 = vpack.c.b16 %v9084, %v9080
        %v9249 = vpack.c.b16 %v9085, %v9081
        %v9250 = vpack.c.b16 %v9090, %v9086
        %v9251 = vpack.c.b16 %v9091, %v9087
        %v9252 = vpack.c.b16 %v9092, %v9088
        %v9253 = vpack.c.b16 %v9093, %v9089
        %v9254 = vpack.c.b16 %v9098, %v9094
        %v9255 = vpack.c.b16 %v9099, %v9095
        %v9256 = vpack.c.b16 %v9100, %v9096
        %v9257 = vpack.c.b16 %v9101, %v9097
        %v9258 = vpack.c.b16 %v9106, %v9102
        %v9259 = vpack.c.b16 %v9107, %v9103
        %v9260 = vpack.c.b16 %v9108, %v9104
        %v9261 = vpack.c.b16 %v9109, %v9105
        %v9262 = vpack.c.b16 %v9114, %v9110
        %v9263 = vpack.c.b16 %v9115, %v9111
        %v9264 = vpack.c.b16 %v9116, %v9112
        %v9265 = vpack.c.b16 %v9117, %v9113
        %v9266 = vpack.c.b16 %v9122, %v9118
        %v9267 = vpack.c.b16 %v9123, %v9119
        %v9268 = vpack.c.b16 %v9124, %v9120
        %v9269 = vpack.c.b16 %v9125, %v9121
        %v9270 = vpack.c.b16 %v9130, %v9126
        %v9271 = vpack.c.b16 %v9131, %v9127
        %v9272 = vpack.c.b16 %v9132, %v9128
        %v9273 = vpack.c.b16 %v9133, %v9129
        %v9274 = vpack.c.b16 %v9138, %v9134
        %v9275 = vpack.c.b16 %v9139, %v9135
        %v9276 = vpack.c.b16 %v9140, %v9136
        %v9277 = vpack.c.b16 %v9141, %v9137
        %v9278 = vpack.c.b16 %v9146, %v9142
        %v9279 = vpack.c.b16 %v9147, %v9143
        %v9280 = vpack.c.b16 %v9148, %v9144
        %v9281 = vpack.c.b16 %v9149, %v9145
        %v9282 = vpack.c.b16 %v9154, %v9150
        %v9283 = vpack.c.b16 %v9155, %v9151
        %v9284 = vpack.c.b16 %v9156, %v9152
        %v9285 = vpack.c.b16 %v9157, %v9153
        %9414 = vmatpush.bf16.msra.mxu0 %v9186
        %9415 = vmatpush.bf16.msra.mxu0 %v9182
        %9416 = vmatpush.bf16.msra.mxu0 %v9178
        %9417 = vmatpush.bf16.msra.mxu0 %v9174
        %9418 = vmatpush.bf16.msra.mxu0 %v9170
        %9419 = vmatpush.bf16.msra.mxu0 %v9166
        %9420 = vmatpush.bf16.msra.mxu0 %v9162
        %9421 = vmatpush.bf16.msra.mxu0 %v9158
        %9422 = vmatmul.bf16.gmra.mxu0 %v8766
        %v9423 = vpop.f32.mrf.mxu0
        %v9424 = vadd.f32 0.0, %v9423
        %v9425 = vpop.f32.mrf.mxu0
        %v9426 = vadd.f32 0.0, %v9425
        %9427 = vdwg.mxu0
        %9428 = vmatpush.bf16.msra.mxu0 %v9218
        %9429 = vmatpush.bf16.msra.mxu0 %v9214
        %9430 = vmatpush.bf16.msra.mxu0 %v9210
        %9431 = vmatpush.bf16.msra.mxu0 %v9206
        %9432 = vmatpush.bf16.msra.mxu0 %v9202
        %9433 = vmatpush.bf16.msra.mxu0 %v9198
        %9434 = vmatpush.bf16.msra.mxu0 %v9194
        %9435 = vmatpush.bf16.msra.mxu0 %v9190
        %9436 = vmatmul.bf16.gmra.mxu0 %v8767
        %v9437 = vpop.f32.mrf.mxu0
        %v9438 = vadd.f32 %v9424, %v9437
        %v9439 = vpop.f32.mrf.mxu0
        %v9440 = vadd.f32 %v9426, %v9439
        %9441 = vdwg.mxu0
        %9442 = vmatpush.bf16.msra.mxu0 %v9250
        %9443 = vmatpush.bf16.msra.mxu0 %v9246
        %9444 = vmatpush.bf16.msra.mxu0 %v9242
        %9445 = vmatpush.bf16.msra.mxu0 %v9238
        %9446 = vmatpush.bf16.msra.mxu0 %v9234
        %9447 = vmatpush.bf16.msra.mxu0 %v9230
        %9448 = vmatpush.bf16.msra.mxu0 %v9226
        %9449 = vmatpush.bf16.msra.mxu0 %v9222
        %9450 = vmatmul.bf16.gmra.mxu0 %v8768
        %v9451 = vpop.f32.mrf.mxu0
        %v9452 = vadd.f32 %v9438, %v9451
        %v9453 = vpop.f32.mrf.mxu0
        %v9454 = vadd.f32 %v9440, %v9453
        %9455 = vdwg.mxu0
        %9456 = vmatpush.bf16.msra.mxu0 %v9282
        %9457 = vmatpush.bf16.msra.mxu0 %v9278
        %9458 = vmatpush.bf16.msra.mxu0 %v9274
        %9459 = vmatpush.bf16.msra.mxu0 %v9270
        %9460 = vmatpush.bf16.msra.mxu0 %v9266
        %9461 = vmatpush.bf16.msra.mxu0 %v9262
        %9462 = vmatpush.bf16.msra.mxu0 %v9258
        %9463 = vmatpush.bf16.msra.mxu0 %v9254
        %9464 = vmatmul.bf16.gmra.mxu0 %v8769
        %v9465 = vpop.f32.mrf.mxu0
        %v9466 = vadd.f32 %v9452, %v9465
        %v9467 = vpop.f32.mrf.mxu0
        %v9468 = vadd.f32 %v9454, %v9467
        %9469 = vdwg.mxu0
        %9470 = vmatpush.bf16.msra.mxu0 %v9187
        %9471 = vmatpush.bf16.msra.mxu0 %v9183
        %9472 = vmatpush.bf16.msra.mxu0 %v9179
        %9473 = vmatpush.bf16.msra.mxu0 %v9175
        %9474 = vmatpush.bf16.msra.mxu0 %v9171
        %9475 = vmatpush.bf16.msra.mxu0 %v9167
        %9476 = vmatpush.bf16.msra.mxu0 %v9163
        %9477 = vmatpush.bf16.msra.mxu0 %v9159
        %9478 = vmatmul.bf16.gmra.mxu0 %v8766
        %v9479 = vpop.f32.mrf.mxu0
        %v9480 = vadd.f32 0.0, %v9479
        %v9481 = vpop.f32.mrf.mxu0
        %v9482 = vadd.f32 0.0, %v9481
        %9483 = vdwg.mxu0
        %9484 = vmatpush.bf16.msra.mxu0 %v9219
        %9485 = vmatpush.bf16.msra.mxu0 %v9215
        %9486 = vmatpush.bf16.msra.mxu0 %v9211
        %9487 = vmatpush.bf16.msra.mxu0 %v9207
        %9488 = vmatpush.bf16.msra.mxu0 %v9203
        %9489 = vmatpush.bf16.msra.mxu0 %v9199
        %9490 = vmatpush.bf16.msra.mxu0 %v9195
        %9491 = vmatpush.bf16.msra.mxu0 %v9191
        %9492 = vmatmul.bf16.gmra.mxu0 %v8767
        %v9493 = vpop.f32.mrf.mxu0
        %v9494 = vadd.f32 %v9480, %v9493
        %v9495 = vpop.f32.mrf.mxu0
        %v9496 = vadd.f32 %v9482, %v9495
        %9497 = vdwg.mxu0
        %9498 = vmatpush.bf16.msra.mxu0 %v9251
        %9499 = vmatpush.bf16.msra.mxu0 %v9247
        %9500 = vmatpush.bf16.msra.mxu0 %v9243
        %9501 = vmatpush.bf16.msra.mxu0 %v9239
        %9502 = vmatpush.bf16.msra.mxu0 %v9235
        %9503 = vmatpush.bf16.msra.mxu0 %v9231
        %9504 = vmatpush.bf16.msra.mxu0 %v9227
        %9505 = vmatpush.bf16.msra.mxu0 %v9223
        %9506 = vmatmul.bf16.gmra.mxu0 %v8768
        %v9507 = vpop.f32.mrf.mxu0
        %v9508 = vadd.f32 %v9494, %v9507
        %v9509 = vpop.f32.mrf.mxu0
        %v9510 = vadd.f32 %v9496, %v9509
        %9511 = vdwg.mxu0
        %9512 = vmatpush.bf16.msra.mxu0 %v9283
        %9513 = vmatpush.bf16.msra.mxu0 %v9279
        %9514 = vmatpush.bf16.msra.mxu0 %v9275
        %9515 = vmatpush.bf16.msra.mxu0 %v9271
        %9516 = vmatpush.bf16.msra.mxu0 %v9267
        %9517 = vmatpush.bf16.msra.mxu0 %v9263
        %9518 = vmatpush.bf16.msra.mxu0 %v9259
        %9519 = vmatpush.bf16.msra.mxu0 %v9255
        %9520 = vmatmul.bf16.gmra.mxu0 %v8769
        %v9521 = vpop.f32.mrf.mxu0
        %v9522 = vadd.f32 %v9508, %v9521
        %v9523 = vpop.f32.mrf.mxu0
        %v9524 = vadd.f32 %v9510, %v9523
        %9525 = vdwg.mxu0
        %9526 = vmatpush.bf16.msra.mxu0 %v9188
        %9527 = vmatpush.bf16.msra.mxu0 %v9184
        %9528 = vmatpush.bf16.msra.mxu0 %v9180
        %9529 = vmatpush.bf16.msra.mxu0 %v9176
        %9530 = vmatpush.bf16.msra.mxu0 %v9172
        %9531 = vmatpush.bf16.msra.mxu0 %v9168
        %9532 = vmatpush.bf16.msra.mxu0 %v9164
        %9533 = vmatpush.bf16.msra.mxu0 %v9160
        %9534 = vmatmul.bf16.gmra.mxu0 %v8766
        %v9535 = vpop.f32.mrf.mxu0
        %v9536 = vadd.f32 0.0, %v9535
        %v9537 = vpop.f32.mrf.mxu0
        %v9538 = vadd.f32 0.0, %v9537
        %9539 = vdwg.mxu0
        %9540 = vmatpush.bf16.msra.mxu0 %v9220
        %9541 = vmatpush.bf16.msra.mxu0 %v9216
        %9542 = vmatpush.bf16.msra.mxu0 %v9212
        %9543 = vmatpush.bf16.msra.mxu0 %v9208
        %9544 = vmatpush.bf16.msra.mxu0 %v9204
        %9545 = vmatpush.bf16.msra.mxu0 %v9200
        %9546 = vmatpush.bf16.msra.mxu0 %v9196
        %9547 = vmatpush.bf16.msra.mxu0 %v9192
        %9548 = vmatmul.bf16.gmra.mxu0 %v8767
        %v9549 = vpop.f32.mrf.mxu0
        %v9550 = vadd.f32 %v9536, %v9549
        %v9551 = vpop.f32.mrf.mxu0
        %v9552 = vadd.f32 %v9538, %v9551
        %9553 = vdwg.mxu0
        %9554 = vmatpush.bf16.msra.mxu0 %v9252
        %9555 = vmatpush.bf16.msra.mxu0 %v9248
        %9556 = vmatpush.bf16.msra.mxu0 %v9244
        %9557 = vmatpush.bf16.msra.mxu0 %v9240
        %9558 = vmatpush.bf16.msra.mxu0 %v9236
        %9559 = vmatpush.bf16.msra.mxu0 %v9232
        %9560 = vmatpush.bf16.msra.mxu0 %v9228
        %9561 = vmatpush.bf16.msra.mxu0 %v9224
        %9562 = vmatmul.bf16.gmra.mxu0 %v8768
        %v9563 = vpop.f32.mrf.mxu0
        %v9564 = vadd.f32 %v9550, %v9563
        %v9565 = vpop.f32.mrf.mxu0
        %v9566 = vadd.f32 %v9552, %v9565
        %9567 = vdwg.mxu0
        %9568 = vmatpush.bf16.msra.mxu0 %v9284
        %9569 = vmatpush.bf16.msra.mxu0 %v9280
        %9570 = vmatpush.bf16.msra.mxu0 %v9276
        %9571 = vmatpush.bf16.msra.mxu0 %v9272
        %9572 = vmatpush.bf16.msra.mxu0 %v9268
        %9573 = vmatpush.bf16.msra.mxu0 %v9264
        %9574 = vmatpush.bf16.msra.mxu0 %v9260
        %9575 = vmatpush.bf16.msra.mxu0 %v9256
        %9576 = vmatmul.bf16.gmra.mxu0 %v8769
        %v9577 = vpop.f32.mrf.mxu0
        %v9578 = vadd.f32 %v9564, %v9577
        %v9579 = vpop.f32.mrf.mxu0
        %v9580 = vadd.f32 %v9566, %v9579
        %9581 = vdwg.mxu0
        %9582 = vmatpush.bf16.msra.mxu0 %v9189
        %9583 = vmatpush.bf16.msra.mxu0 %v9185
        %9584 = vmatpush.bf16.msra.mxu0 %v9181
        %9585 = vmatpush.bf16.msra.mxu0 %v9177
        %9586 = vmatpush.bf16.msra.mxu0 %v9173
        %9587 = vmatpush.bf16.msra.mxu0 %v9169
        %9588 = vmatpush.bf16.msra.mxu0 %v9165
        %9589 = vmatpush.bf16.msra.mxu0 %v9161
        %9590 = vmatmul.bf16.gmra.mxu0 %v8766
        %v9591 = vpop.f32.mrf.mxu0
        %v9592 = vadd.f32 0.0, %v9591
        %v9593 = vpop.f32.mrf.mxu0
        %v9594 = vadd.f32 0.0, %v9593
        %9595 = vdwg.mxu0
        %9596 = vmatpush.bf16.msra.mxu0 %v9221
        %9597 = vmatpush.bf16.msra.mxu0 %v9217
        %9598 = vmatpush.bf16.msra.mxu0 %v9213
        %9599 = vmatpush.bf16.msra.mxu0 %v9209
        %9600 = vmatpush.bf16.msra.mxu0 %v9205
        %9601 = vmatpush.bf16.msra.mxu0 %v9201
        %9602 = vmatpush.bf16.msra.mxu0 %v9197
        %9603 = vmatpush.bf16.msra.mxu0 %v9193
        %9604 = vmatmul.bf16.gmra.mxu0 %v8767
        %v9605 = vpop.f32.mrf.mxu0
        %v9606 = vadd.f32 %v9592, %v9605
        %v9607 = vpop.f32.mrf.mxu0
        %v9608 = vadd.f32 %v9594, %v9607
        %9609 = vdwg.mxu0
        %9610 = vmatpush.bf16.msra.mxu0 %v9253
        %9611 = vmatpush.bf16.msra.mxu0 %v9249
        %9612 = vmatpush.bf16.msra.mxu0 %v9245
        %9613 = vmatpush.bf16.msra.mxu0 %v9241
        %9614 = vmatpush.bf16.msra.mxu0 %v9237
        %9615 = vmatpush.bf16.msra.mxu0 %v9233
        %9616 = vmatpush.bf16.msra.mxu0 %v9229
        %9617 = vmatpush.bf16.msra.mxu0 %v9225
        %9618 = vmatmul.bf16.gmra.mxu0 %v8768
        %v9619 = vpop.f32.mrf.mxu0
        %v9620 = vadd.f32 %v9606, %v9619
        %v9621 = vpop.f32.mrf.mxu0
        %v9622 = vadd.f32 %v9608, %v9621
        %9623 = vdwg.mxu0
        %9624 = vmatpush.bf16.msra.mxu0 %v9285
        %9625 = vmatpush.bf16.msra.mxu0 %v9281
        %9626 = vmatpush.bf16.msra.mxu0 %v9277
        %9627 = vmatpush.bf16.msra.mxu0 %v9273
        %9628 = vmatpush.bf16.msra.mxu0 %v9269
        %9629 = vmatpush.bf16.msra.mxu0 %v9265
        %9630 = vmatpush.bf16.msra.mxu0 %v9261
        %9631 = vmatpush.bf16.msra.mxu0 %v9257
        %9632 = vmatmul.bf16.gmra.mxu0 %v8769
        %v9633 = vpop.f32.mrf.mxu0
        %v9634 = vadd.f32 %v9620, %v9633
        %v9635 = vpop.f32.mrf.mxu0
        %v9636 = vadd.f32 %v9622, %v9635
        %9637 = vdwg.mxu0
        %v9638 = vadd.f32 %v8425, %v9466
        %v9639 = vadd.f32 %v8481, %v9522
        %v9640 = vadd.f32 %v8537, %v9578
        %v9641 = vadd.f32 %v8593, %v9634
        %v9642 = vadd.f32 %v8427, %v9468
        %v9643 = vadd.f32 %v8483, %v9524
        %v9644 = vadd.f32 %v8539, %v9580
        %v9645 = vadd.f32 %v8595, %v9636
        %s9646 = scalar_lea.vmem [#allocation7], 8
        %v9647 = vld [vmem:[%s9646] sm:$0xf]
        %v9649 = vperm.slane %v9647, 0
        %v9650 = vperm.slane %v9647, 1
        %v9651 = vperm.slane %v9647, 2
        %v9652 = vperm.slane %v9647, 3
        %v9657 = vadd.f32 %v9638, %v9649
        %v9658 = vadd.f32 %v9639, %v9650
        %v9659 = vadd.f32 %v9640, %v9651
        %v9660 = vadd.f32 %v9641, %v9652
        %v9661 = vadd.f32 %v9642, %v9649
        %v9662 = vadd.f32 %v9643, %v9650
        %v9663 = vadd.f32 %v9644, %v9651
        %v9664 = vadd.f32 %v9645, %v9652
        %vm9665 = vcmp.gt.f32.partialorder %v9657, 0.0
        %vm9666 = vcmp.gt.f32.partialorder %v9658, 0.0
        %vm9667 = vcmp.gt.f32.partialorder %v9659, 0.0
        %vm9668 = vcmp.gt.f32.partialorder %v9660, 0.0
        %vm9669 = vcmp.gt.f32.partialorder %v9661, 0.0
        %vm9670 = vcmp.gt.f32.partialorder %v9662, 0.0
        %vm9671 = vcmp.gt.f32.partialorder %v9663, 0.0
        %vm9672 = vcmp.gt.f32.partialorder %v9664, 0.0
        %v9673 = vmul.f32 %v9657, 0.1
        %v9674 = vmul.f32 %v9658, 0.1
        %v9675 = vmul.f32 %v9659, 0.1
        %v9676 = vmul.f32 %v9660, 0.1
        %v9677 = vmul.f32 %v9661, 0.1
        %v9678 = vmul.f32 %v9662, 0.1
        %v9679 = vmul.f32 %v9663, 0.1
        %v9680 = vmul.f32 %v9664, 0.1
        %v9681 = vsel %vm9665, %v9657, %v9673
        %v9682 = vsel %vm9666, %v9658, %v9674
        %v9683 = vsel %vm9667, %v9659, %v9675
        %v9684 = vsel %vm9668, %v9660, %v9676
        %v9685 = vsel %vm9669, %v9661, %v9677
        %v9686 = vsel %vm9670, %v9662, %v9678
        %v9687 = vsel %vm9671, %v9663, %v9679
        %v9688 = vsel %vm9672, %v9664, %v9680
        %v9689 = vrot.slane %v9681, 7
        %v9690 = vrot.slane %v9682, 7
        %v9691 = vrot.slane %v9683, 7
        %v9692 = vrot.slane %v9684, 7
        %v9693 = vrot.slane %v9685, 7
        %v9694 = vrot.slane %v9686, 7
        %v9695 = vrot.slane %v9687, 7
        %v9696 = vrot.slane %v9688, 7
        %v9697 = vsel %vm243, %v9689, %v9693
        %v9698 = vsel %vm243, %v9690, %v9694
        %v9699 = vsel %vm243, %v9691, %v9695
        %v9700 = vsel %vm243, %v9692, %v9696
        %v9701 = vsel %vm243, %v9693, %v9689
        %v9702 = vsel %vm243, %v9694, %v9690
        %v9703 = vsel %vm243, %v9695, %v9691
        %v9704 = vsel %vm243, %v9696, %v9692
        %v9705 = vsel %vm252, %v9701, 0.0
        %v9706 = vsel %vm252, %v9702, 0.0
        %v9707 = vsel %vm252, %v9703, 0.0
        %v9708 = vsel %vm252, %v9704, 0.0
        %v9709 = vsel %vm253, %v9697, 0.0
        %v9710 = vsel %vm253, %v9698, 0.0
        %v9711 = vsel %vm253, %v9699, 0.0
        %v9712 = vsel %vm253, %v9700, 0.0
        %v9713 = vpack.c.bf16 %v9706, %v9705
        %v9714 = vpack.c.bf16 %v9708, %v9707
        %v9715 = vpack.c.bf16 %v9710, %v9709
        %v9716 = vpack.c.bf16 %v9712, %v9711
        %s9717 = scalar_lea.vmem [#allocation5], 9216
        %v9718 = vld [vmem:[%s9717] sm:$0xff]
        %v9719 = vld [vmem:[%s9717 + $0x8] sm:$0xff]
        %v9720 = vld [vmem:[%s9717 + $0x10] sm:$0xff]
        %v9721 = vld [vmem:[%s9717 + $0x18] sm:$0xff]
        %v9722 = vld [vmem:[%s9717 + $0x20] sm:$0xff]
        %v9723 = vld [vmem:[%s9717 + $0x28] sm:$0xff]
        %v9724 = vld [vmem:[%s9717 + $0x30] sm:$0xff]
        %v9725 = vld [vmem:[%s9717 + $0x38] sm:$0xff]
        %v9726 = vld [vmem:[%s9717 + $0x40] sm:$0xff]
        %v9727 = vld [vmem:[%s9717 + $0x48] sm:$0xff]
        %v9728 = vld [vmem:[%s9717 + $0x50] sm:$0xff]
        %v9729 = vld [vmem:[%s9717 + $0x58] sm:$0xff]
        %v9730 = vld [vmem:[%s9717 + $0x60] sm:$0xff]
        %v9731 = vld [vmem:[%s9717 + $0x68] sm:$0xff]
        %v9732 = vld [vmem:[%s9717 + $0x70] sm:$0xff]
        %v9733 = vld [vmem:[%s9717 + $0x78] sm:$0xff]
        %v9734 = vld [vmem:[%s9717 + $0x80] sm:$0xff]
        %v9735 = vld [vmem:[%s9717 + $0x88] sm:$0xff]
        %v9736 = vld [vmem:[%s9717 + $0x90] sm:$0xff]
        %v9737 = vld [vmem:[%s9717 + $0x98] sm:$0xff]
        %v9738 = vld [vmem:[%s9717 + $0xa0] sm:$0xff]
        %v9739 = vld [vmem:[%s9717 + $0xa8] sm:$0xff]
        %v9740 = vld [vmem:[%s9717 + $0xb0] sm:$0xff]
        %v9741 = vld [vmem:[%s9717 + $0xb8] sm:$0xff]
        %v9742 = vld [vmem:[%s9717 + $0xc0] sm:$0xff]
        %v9743 = vld [vmem:[%s9717 + $0xc8] sm:$0xff]
        %v9744 = vld [vmem:[%s9717 + $0xd0] sm:$0xff]
        %v9745 = vld [vmem:[%s9717 + $0xd8] sm:$0xff]
        %v9746 = vld [vmem:[%s9717 + $0xe0] sm:$0xff]
        %v9747 = vld [vmem:[%s9717 + $0xe8] sm:$0xff]
        %v9748 = vld [vmem:[%s9717 + $0xf0] sm:$0xff]
        %v9749 = vld [vmem:[%s9717 + $0xf8] sm:$0xff]
        %v9750 = vld [vmem:[%s9717 + $0x100] sm:$0xff]
        %v9751 = vld [vmem:[%s9717 + $0x108] sm:$0xff]
        %v9752 = vld [vmem:[%s9717 + $0x110] sm:$0xff]
        %v9753 = vld [vmem:[%s9717 + $0x118] sm:$0xff]
        %v9754 = vld [vmem:[%s9717 + $0x120] sm:$0xff]
        %v9755 = vld [vmem:[%s9717 + $0x128] sm:$0xff]
        %v9756 = vld [vmem:[%s9717 + $0x130] sm:$0xff]
        %v9757 = vld [vmem:[%s9717 + $0x138] sm:$0xff]
        %v9758 = vld [vmem:[%s9717 + $0x140] sm:$0xff]
        %v9759 = vld [vmem:[%s9717 + $0x148] sm:$0xff]
        %v9760 = vld [vmem:[%s9717 + $0x150] sm:$0xff]
        %v9761 = vld [vmem:[%s9717 + $0x158] sm:$0xff]
        %v9762 = vld [vmem:[%s9717 + $0x160] sm:$0xff]
        %v9763 = vld [vmem:[%s9717 + $0x168] sm:$0xff]
        %v9764 = vld [vmem:[%s9717 + $0x170] sm:$0xff]
        %v9765 = vld [vmem:[%s9717 + $0x178] sm:$0xff]
        %v9766 = vld [vmem:[%s9717 + $0x180] sm:$0xff]
        %v9767 = vld [vmem:[%s9717 + $0x188] sm:$0xff]
        %v9768 = vld [vmem:[%s9717 + $0x190] sm:$0xff]
        %v9769 = vld [vmem:[%s9717 + $0x198] sm:$0xff]
        %v9770 = vld [vmem:[%s9717 + $0x1a0] sm:$0xff]
        %v9771 = vld [vmem:[%s9717 + $0x1a8] sm:$0xff]
        %v9772 = vld [vmem:[%s9717 + $0x1b0] sm:$0xff]
        %v9773 = vld [vmem:[%s9717 + $0x1b8] sm:$0xff]
        %v9774 = vld [vmem:[%s9717 + $0x1c0] sm:$0xff]
        %v9775 = vld [vmem:[%s9717 + $0x1c8] sm:$0xff]
        %v9776 = vld [vmem:[%s9717 + $0x1d0] sm:$0xff]
        %v9777 = vld [vmem:[%s9717 + $0x1d8] sm:$0xff]
        %v9778 = vld [vmem:[%s9717 + $0x1e0] sm:$0xff]
        %v9779 = vld [vmem:[%s9717 + $0x1e8] sm:$0xff]
        %v9780 = vld [vmem:[%s9717 + $0x1f0] sm:$0xff]
        %v9781 = vld [vmem:[%s9717 + $0x1f8] sm:$0xff]
        %v9782 = vld [vmem:[%s9717 + $0x200] sm:$0xff]
        %v9783 = vld [vmem:[%s9717 + $0x208] sm:$0xff]
        %v9784 = vld [vmem:[%s9717 + $0x210] sm:$0xff]
        %v9785 = vld [vmem:[%s9717 + $0x218] sm:$0xff]
        %v9786 = vld [vmem:[%s9717 + $0x220] sm:$0xff]
        %v9787 = vld [vmem:[%s9717 + $0x228] sm:$0xff]
        %v9788 = vld [vmem:[%s9717 + $0x230] sm:$0xff]
        %v9789 = vld [vmem:[%s9717 + $0x238] sm:$0xff]
        %v9790 = vld [vmem:[%s9717 + $0x240] sm:$0xff]
        %v9791 = vld [vmem:[%s9717 + $0x248] sm:$0xff]
        %v9792 = vld [vmem:[%s9717 + $0x250] sm:$0xff]
        %v9793 = vld [vmem:[%s9717 + $0x258] sm:$0xff]
        %v9794 = vld [vmem:[%s9717 + $0x260] sm:$0xff]
        %v9795 = vld [vmem:[%s9717 + $0x268] sm:$0xff]
        %v9796 = vld [vmem:[%s9717 + $0x270] sm:$0xff]
        %v9797 = vld [vmem:[%s9717 + $0x278] sm:$0xff]
        %v9798 = vld [vmem:[%s9717 + $0x280] sm:$0xff]
        %v9799 = vld [vmem:[%s9717 + $0x288] sm:$0xff]
        %v9800 = vld [vmem:[%s9717 + $0x290] sm:$0xff]
        %v9801 = vld [vmem:[%s9717 + $0x298] sm:$0xff]
        %v9802 = vld [vmem:[%s9717 + $0x2a0] sm:$0xff]
        %v9803 = vld [vmem:[%s9717 + $0x2a8] sm:$0xff]
        %v9804 = vld [vmem:[%s9717 + $0x2b0] sm:$0xff]
        %v9805 = vld [vmem:[%s9717 + $0x2b8] sm:$0xff]
        %v9806 = vld [vmem:[%s9717 + $0x2c0] sm:$0xff]
        %v9807 = vld [vmem:[%s9717 + $0x2c8] sm:$0xff]
        %v9808 = vld [vmem:[%s9717 + $0x2d0] sm:$0xff]
        %v9809 = vld [vmem:[%s9717 + $0x2d8] sm:$0xff]
        %v9810 = vld [vmem:[%s9717 + $0x2e0] sm:$0xff]
        %v9811 = vld [vmem:[%s9717 + $0x2e8] sm:$0xff]
        %v9812 = vld [vmem:[%s9717 + $0x2f0] sm:$0xff]
        %v9813 = vld [vmem:[%s9717 + $0x2f8] sm:$0xff]
        %v9814 = vld [vmem:[%s9717 + $0x300] sm:$0xff]
        %v9815 = vld [vmem:[%s9717 + $0x308] sm:$0xff]
        %v9816 = vld [vmem:[%s9717 + $0x310] sm:$0xff]
        %v9817 = vld [vmem:[%s9717 + $0x318] sm:$0xff]
        %v9818 = vld [vmem:[%s9717 + $0x320] sm:$0xff]
        %v9819 = vld [vmem:[%s9717 + $0x328] sm:$0xff]
        %v9820 = vld [vmem:[%s9717 + $0x330] sm:$0xff]
        %v9821 = vld [vmem:[%s9717 + $0x338] sm:$0xff]
        %v9822 = vld [vmem:[%s9717 + $0x340] sm:$0xff]
        %v9823 = vld [vmem:[%s9717 + $0x348] sm:$0xff]
        %v9824 = vld [vmem:[%s9717 + $0x350] sm:$0xff]
        %v9825 = vld [vmem:[%s9717 + $0x358] sm:$0xff]
        %v9826 = vld [vmem:[%s9717 + $0x360] sm:$0xff]
        %v9827 = vld [vmem:[%s9717 + $0x368] sm:$0xff]
        %v9828 = vld [vmem:[%s9717 + $0x370] sm:$0xff]
        %v9829 = vld [vmem:[%s9717 + $0x378] sm:$0xff]
        %v9830 = vld [vmem:[%s9717 + $0x380] sm:$0xff]
        %v9831 = vld [vmem:[%s9717 + $0x388] sm:$0xff]
        %v9832 = vld [vmem:[%s9717 + $0x390] sm:$0xff]
        %v9833 = vld [vmem:[%s9717 + $0x398] sm:$0xff]
        %v9834 = vld [vmem:[%s9717 + $0x3a0] sm:$0xff]
        %v9835 = vld [vmem:[%s9717 + $0x3a8] sm:$0xff]
        %v9836 = vld [vmem:[%s9717 + $0x3b0] sm:$0xff]
        %v9837 = vld [vmem:[%s9717 + $0x3b8] sm:$0xff]
        %v9838 = vld [vmem:[%s9717 + $0x3c0] sm:$0xff]
        %v9839 = vld [vmem:[%s9717 + $0x3c8] sm:$0xff]
        %v9840 = vld [vmem:[%s9717 + $0x3d0] sm:$0xff]
        %v9841 = vld [vmem:[%s9717 + $0x3d8] sm:$0xff]
        %v9842 = vld [vmem:[%s9717 + $0x3e0] sm:$0xff]
        %v9843 = vld [vmem:[%s9717 + $0x3e8] sm:$0xff]
        %v9844 = vld [vmem:[%s9717 + $0x3f0] sm:$0xff]
        %v9845 = vld [vmem:[%s9717 + $0x3f8] sm:$0xff]
        %v9846 = vpack.c.bf16 %v9682, %v9681
        %v9847 = vpack.c.bf16 %v9684, %v9683
        %v9848 = vpack.c.bf16 %v9686, %v9685
        %v9849 = vpack.c.bf16 %v9688, %v9687
        %s9850 = scalar_lea.vmem [#allocation5], 10240
        %v9851 = vld [vmem:[%s9850] sm:$0xff]
        %v9852 = vld [vmem:[%s9850 + $0x8] sm:$0xff]
        %v9853 = vld [vmem:[%s9850 + $0x10] sm:$0xff]
        %v9854 = vld [vmem:[%s9850 + $0x18] sm:$0xff]
        %v9855 = vld [vmem:[%s9850 + $0x20] sm:$0xff]
        %v9856 = vld [vmem:[%s9850 + $0x28] sm:$0xff]
        %v9857 = vld [vmem:[%s9850 + $0x30] sm:$0xff]
        %v9858 = vld [vmem:[%s9850 + $0x38] sm:$0xff]
        %v9859 = vld [vmem:[%s9850 + $0x40] sm:$0xff]
        %v9860 = vld [vmem:[%s9850 + $0x48] sm:$0xff]
        %v9861 = vld [vmem:[%s9850 + $0x50] sm:$0xff]
        %v9862 = vld [vmem:[%s9850 + $0x58] sm:$0xff]
        %v9863 = vld [vmem:[%s9850 + $0x60] sm:$0xff]
        %v9864 = vld [vmem:[%s9850 + $0x68] sm:$0xff]
        %v9865 = vld [vmem:[%s9850 + $0x70] sm:$0xff]
        %v9866 = vld [vmem:[%s9850 + $0x78] sm:$0xff]
        %v9867 = vld [vmem:[%s9850 + $0x80] sm:$0xff]
        %v9868 = vld [vmem:[%s9850 + $0x88] sm:$0xff]
        %v9869 = vld [vmem:[%s9850 + $0x90] sm:$0xff]
        %v9870 = vld [vmem:[%s9850 + $0x98] sm:$0xff]
        %v9871 = vld [vmem:[%s9850 + $0xa0] sm:$0xff]
        %v9872 = vld [vmem:[%s9850 + $0xa8] sm:$0xff]
        %v9873 = vld [vmem:[%s9850 + $0xb0] sm:$0xff]
        %v9874 = vld [vmem:[%s9850 + $0xb8] sm:$0xff]
        %v9875 = vld [vmem:[%s9850 + $0xc0] sm:$0xff]
        %v9876 = vld [vmem:[%s9850 + $0xc8] sm:$0xff]
        %v9877 = vld [vmem:[%s9850 + $0xd0] sm:$0xff]
        %v9878 = vld [vmem:[%s9850 + $0xd8] sm:$0xff]
        %v9879 = vld [vmem:[%s9850 + $0xe0] sm:$0xff]
        %v9880 = vld [vmem:[%s9850 + $0xe8] sm:$0xff]
        %v9881 = vld [vmem:[%s9850 + $0xf0] sm:$0xff]
        %v9882 = vld [vmem:[%s9850 + $0xf8] sm:$0xff]
        %v9883 = vld [vmem:[%s9850 + $0x100] sm:$0xff]
        %v9884 = vld [vmem:[%s9850 + $0x108] sm:$0xff]
        %v9885 = vld [vmem:[%s9850 + $0x110] sm:$0xff]
        %v9886 = vld [vmem:[%s9850 + $0x118] sm:$0xff]
        %v9887 = vld [vmem:[%s9850 + $0x120] sm:$0xff]
        %v9888 = vld [vmem:[%s9850 + $0x128] sm:$0xff]
        %v9889 = vld [vmem:[%s9850 + $0x130] sm:$0xff]
        %v9890 = vld [vmem:[%s9850 + $0x138] sm:$0xff]
        %v9891 = vld [vmem:[%s9850 + $0x140] sm:$0xff]
        %v9892 = vld [vmem:[%s9850 + $0x148] sm:$0xff]
        %v9893 = vld [vmem:[%s9850 + $0x150] sm:$0xff]
        %v9894 = vld [vmem:[%s9850 + $0x158] sm:$0xff]
        %v9895 = vld [vmem:[%s9850 + $0x160] sm:$0xff]
        %v9896 = vld [vmem:[%s9850 + $0x168] sm:$0xff]
        %v9897 = vld [vmem:[%s9850 + $0x170] sm:$0xff]
        %v9898 = vld [vmem:[%s9850 + $0x178] sm:$0xff]
        %v9899 = vld [vmem:[%s9850 + $0x180] sm:$0xff]
        %v9900 = vld [vmem:[%s9850 + $0x188] sm:$0xff]
        %v9901 = vld [vmem:[%s9850 + $0x190] sm:$0xff]
        %v9902 = vld [vmem:[%s9850 + $0x198] sm:$0xff]
        %v9903 = vld [vmem:[%s9850 + $0x1a0] sm:$0xff]
        %v9904 = vld [vmem:[%s9850 + $0x1a8] sm:$0xff]
        %v9905 = vld [vmem:[%s9850 + $0x1b0] sm:$0xff]
        %v9906 = vld [vmem:[%s9850 + $0x1b8] sm:$0xff]
        %v9907 = vld [vmem:[%s9850 + $0x1c0] sm:$0xff]
        %v9908 = vld [vmem:[%s9850 + $0x1c8] sm:$0xff]
        %v9909 = vld [vmem:[%s9850 + $0x1d0] sm:$0xff]
        %v9910 = vld [vmem:[%s9850 + $0x1d8] sm:$0xff]
        %v9911 = vld [vmem:[%s9850 + $0x1e0] sm:$0xff]
        %v9912 = vld [vmem:[%s9850 + $0x1e8] sm:$0xff]
        %v9913 = vld [vmem:[%s9850 + $0x1f0] sm:$0xff]
        %v9914 = vld [vmem:[%s9850 + $0x1f8] sm:$0xff]
        %v9915 = vld [vmem:[%s9850 + $0x200] sm:$0xff]
        %v9916 = vld [vmem:[%s9850 + $0x208] sm:$0xff]
        %v9917 = vld [vmem:[%s9850 + $0x210] sm:$0xff]
        %v9918 = vld [vmem:[%s9850 + $0x218] sm:$0xff]
        %v9919 = vld [vmem:[%s9850 + $0x220] sm:$0xff]
        %v9920 = vld [vmem:[%s9850 + $0x228] sm:$0xff]
        %v9921 = vld [vmem:[%s9850 + $0x230] sm:$0xff]
        %v9922 = vld [vmem:[%s9850 + $0x238] sm:$0xff]
        %v9923 = vld [vmem:[%s9850 + $0x240] sm:$0xff]
        %v9924 = vld [vmem:[%s9850 + $0x248] sm:$0xff]
        %v9925 = vld [vmem:[%s9850 + $0x250] sm:$0xff]
        %v9926 = vld [vmem:[%s9850 + $0x258] sm:$0xff]
        %v9927 = vld [vmem:[%s9850 + $0x260] sm:$0xff]
        %v9928 = vld [vmem:[%s9850 + $0x268] sm:$0xff]
        %v9929 = vld [vmem:[%s9850 + $0x270] sm:$0xff]
        %v9930 = vld [vmem:[%s9850 + $0x278] sm:$0xff]
        %v9931 = vld [vmem:[%s9850 + $0x280] sm:$0xff]
        %v9932 = vld [vmem:[%s9850 + $0x288] sm:$0xff]
        %v9933 = vld [vmem:[%s9850 + $0x290] sm:$0xff]
        %v9934 = vld [vmem:[%s9850 + $0x298] sm:$0xff]
        %v9935 = vld [vmem:[%s9850 + $0x2a0] sm:$0xff]
        %v9936 = vld [vmem:[%s9850 + $0x2a8] sm:$0xff]
        %v9937 = vld [vmem:[%s9850 + $0x2b0] sm:$0xff]
        %v9938 = vld [vmem:[%s9850 + $0x2b8] sm:$0xff]
        %v9939 = vld [vmem:[%s9850 + $0x2c0] sm:$0xff]
        %v9940 = vld [vmem:[%s9850 + $0x2c8] sm:$0xff]
        %v9941 = vld [vmem:[%s9850 + $0x2d0] sm:$0xff]
        %v9942 = vld [vmem:[%s9850 + $0x2d8] sm:$0xff]
        %v9943 = vld [vmem:[%s9850 + $0x2e0] sm:$0xff]
        %v9944 = vld [vmem:[%s9850 + $0x2e8] sm:$0xff]
        %v9945 = vld [vmem:[%s9850 + $0x2f0] sm:$0xff]
        %v9946 = vld [vmem:[%s9850 + $0x2f8] sm:$0xff]
        %v9947 = vld [vmem:[%s9850 + $0x300] sm:$0xff]
        %v9948 = vld [vmem:[%s9850 + $0x308] sm:$0xff]
        %v9949 = vld [vmem:[%s9850 + $0x310] sm:$0xff]
        %v9950 = vld [vmem:[%s9850 + $0x318] sm:$0xff]
        %v9951 = vld [vmem:[%s9850 + $0x320] sm:$0xff]
        %v9952 = vld [vmem:[%s9850 + $0x328] sm:$0xff]
        %v9953 = vld [vmem:[%s9850 + $0x330] sm:$0xff]
        %v9954 = vld [vmem:[%s9850 + $0x338] sm:$0xff]
        %v9955 = vld [vmem:[%s9850 + $0x340] sm:$0xff]
        %v9956 = vld [vmem:[%s9850 + $0x348] sm:$0xff]
        %v9957 = vld [vmem:[%s9850 + $0x350] sm:$0xff]
        %v9958 = vld [vmem:[%s9850 + $0x358] sm:$0xff]
        %v9959 = vld [vmem:[%s9850 + $0x360] sm:$0xff]
        %v9960 = vld [vmem:[%s9850 + $0x368] sm:$0xff]
        %v9961 = vld [vmem:[%s9850 + $0x370] sm:$0xff]
        %v9962 = vld [vmem:[%s9850 + $0x378] sm:$0xff]
        %v9963 = vld [vmem:[%s9850 + $0x380] sm:$0xff]
        %v9964 = vld [vmem:[%s9850 + $0x388] sm:$0xff]
        %v9965 = vld [vmem:[%s9850 + $0x390] sm:$0xff]
        %v9966 = vld [vmem:[%s9850 + $0x398] sm:$0xff]
        %v9967 = vld [vmem:[%s9850 + $0x3a0] sm:$0xff]
        %v9968 = vld [vmem:[%s9850 + $0x3a8] sm:$0xff]
        %v9969 = vld [vmem:[%s9850 + $0x3b0] sm:$0xff]
        %v9970 = vld [vmem:[%s9850 + $0x3b8] sm:$0xff]
        %v9971 = vld [vmem:[%s9850 + $0x3c0] sm:$0xff]
        %v9972 = vld [vmem:[%s9850 + $0x3c8] sm:$0xff]
        %v9973 = vld [vmem:[%s9850 + $0x3d0] sm:$0xff]
        %v9974 = vld [vmem:[%s9850 + $0x3d8] sm:$0xff]
        %v9975 = vld [vmem:[%s9850 + $0x3e0] sm:$0xff]
        %v9976 = vld [vmem:[%s9850 + $0x3e8] sm:$0xff]
        %v9977 = vld [vmem:[%s9850 + $0x3f0] sm:$0xff]
        %v9978 = vld [vmem:[%s9850 + $0x3f8] sm:$0xff]
        %v9983 = vunpack.c.l.b16 %v9846
        %v9984 = vunpack.c.h.b16 %v9846
        %v9985 = vunpack.c.l.b16 %v9847
        %v9986 = vunpack.c.h.b16 %v9847
        %v9987 = vunpack.c.l.b16 %v9848
        %v9988 = vunpack.c.h.b16 %v9848
        %v9989 = vunpack.c.l.b16 %v9849
        %v9990 = vunpack.c.h.b16 %v9849
        %v9991 = vpack.c.b16 %v9987, %v9983
        %v9992 = vpack.c.b16 %v9988, %v9984
        %v9993 = vpack.c.b16 %v9989, %v9985
        %v9994 = vpack.c.b16 %v9990, %v9986
        %v10127 = vunpack.c.l.b16 %v9851
        %v10128 = vunpack.c.h.b16 %v9851
        %v10129 = vunpack.c.l.b16 %v9852
        %v10130 = vunpack.c.h.b16 %v9852
        %v10131 = vunpack.c.l.b16 %v9853
        %v10132 = vunpack.c.h.b16 %v9853
        %v10133 = vunpack.c.l.b16 %v9854
        %v10134 = vunpack.c.h.b16 %v9854
        %v10135 = vunpack.c.l.b16 %v9855
        %v10136 = vunpack.c.h.b16 %v9855
        %v10137 = vunpack.c.l.b16 %v9856
        %v10138 = vunpack.c.h.b16 %v9856
        %v10139 = vunpack.c.l.b16 %v9857
        %v10140 = vunpack.c.h.b16 %v9857
        %v10141 = vunpack.c.l.b16 %v9858
        %v10142 = vunpack.c.h.b16 %v9858
        %v10143 = vunpack.c.l.b16 %v9859
        %v10144 = vunpack.c.h.b16 %v9859
        %v10145 = vunpack.c.l.b16 %v9860
        %v10146 = vunpack.c.h.b16 %v9860
        %v10147 = vunpack.c.l.b16 %v9861
        %v10148 = vunpack.c.h.b16 %v9861
        %v10149 = vunpack.c.l.b16 %v9862
        %v10150 = vunpack.c.h.b16 %v9862
        %v10151 = vunpack.c.l.b16 %v9863
        %v10152 = vunpack.c.h.b16 %v9863
        %v10153 = vunpack.c.l.b16 %v9864
        %v10154 = vunpack.c.h.b16 %v9864
        %v10155 = vunpack.c.l.b16 %v9865
        %v10156 = vunpack.c.h.b16 %v9865
        %v10157 = vunpack.c.l.b16 %v9866
        %v10158 = vunpack.c.h.b16 %v9866
        %v10159 = vunpack.c.l.b16 %v9867
        %v10160 = vunpack.c.h.b16 %v9867
        %v10161 = vunpack.c.l.b16 %v9868
        %v10162 = vunpack.c.h.b16 %v9868
        %v10163 = vunpack.c.l.b16 %v9869
        %v10164 = vunpack.c.h.b16 %v9869
        %v10165 = vunpack.c.l.b16 %v9870
        %v10166 = vunpack.c.h.b16 %v9870
        %v10167 = vunpack.c.l.b16 %v9871
        %v10168 = vunpack.c.h.b16 %v9871
        %v10169 = vunpack.c.l.b16 %v9872
        %v10170 = vunpack.c.h.b16 %v9872
        %v10171 = vunpack.c.l.b16 %v9873
        %v10172 = vunpack.c.h.b16 %v9873
        %v10173 = vunpack.c.l.b16 %v9874
        %v10174 = vunpack.c.h.b16 %v9874
        %v10175 = vunpack.c.l.b16 %v9875
        %v10176 = vunpack.c.h.b16 %v9875
        %v10177 = vunpack.c.l.b16 %v9876
        %v10178 = vunpack.c.h.b16 %v9876
        %v10179 = vunpack.c.l.b16 %v9877
        %v10180 = vunpack.c.h.b16 %v9877
        %v10181 = vunpack.c.l.b16 %v9878
        %v10182 = vunpack.c.h.b16 %v9878
        %v10183 = vunpack.c.l.b16 %v9879
        %v10184 = vunpack.c.h.b16 %v9879
        %v10185 = vunpack.c.l.b16 %v9880
        %v10186 = vunpack.c.h.b16 %v9880
        %v10187 = vunpack.c.l.b16 %v9881
        %v10188 = vunpack.c.h.b16 %v9881
        %v10189 = vunpack.c.l.b16 %v9882
        %v10190 = vunpack.c.h.b16 %v9882
        %v10191 = vunpack.c.l.b16 %v9883
        %v10192 = vunpack.c.h.b16 %v9883
        %v10193 = vunpack.c.l.b16 %v9884
        %v10194 = vunpack.c.h.b16 %v9884
        %v10195 = vunpack.c.l.b16 %v9885
        %v10196 = vunpack.c.h.b16 %v9885
        %v10197 = vunpack.c.l.b16 %v9886
        %v10198 = vunpack.c.h.b16 %v9886
        %v10199 = vunpack.c.l.b16 %v9887
        %v10200 = vunpack.c.h.b16 %v9887
        %v10201 = vunpack.c.l.b16 %v9888
        %v10202 = vunpack.c.h.b16 %v9888
        %v10203 = vunpack.c.l.b16 %v9889
        %v10204 = vunpack.c.h.b16 %v9889
        %v10205 = vunpack.c.l.b16 %v9890
        %v10206 = vunpack.c.h.b16 %v9890
        %v10207 = vunpack.c.l.b16 %v9891
        %v10208 = vunpack.c.h.b16 %v9891
        %v10209 = vunpack.c.l.b16 %v9892
        %v10210 = vunpack.c.h.b16 %v9892
        %v10211 = vunpack.c.l.b16 %v9893
        %v10212 = vunpack.c.h.b16 %v9893
        %v10213 = vunpack.c.l.b16 %v9894
        %v10214 = vunpack.c.h.b16 %v9894
        %v10215 = vunpack.c.l.b16 %v9895
        %v10216 = vunpack.c.h.b16 %v9895
        %v10217 = vunpack.c.l.b16 %v9896
        %v10218 = vunpack.c.h.b16 %v9896
        %v10219 = vunpack.c.l.b16 %v9897
        %v10220 = vunpack.c.h.b16 %v9897
        %v10221 = vunpack.c.l.b16 %v9898
        %v10222 = vunpack.c.h.b16 %v9898
        %v10223 = vunpack.c.l.b16 %v9899
        %v10224 = vunpack.c.h.b16 %v9899
        %v10225 = vunpack.c.l.b16 %v9900
        %v10226 = vunpack.c.h.b16 %v9900
        %v10227 = vunpack.c.l.b16 %v9901
        %v10228 = vunpack.c.h.b16 %v9901
        %v10229 = vunpack.c.l.b16 %v9902
        %v10230 = vunpack.c.h.b16 %v9902
        %v10231 = vunpack.c.l.b16 %v9903
        %v10232 = vunpack.c.h.b16 %v9903
        %v10233 = vunpack.c.l.b16 %v9904
        %v10234 = vunpack.c.h.b16 %v9904
        %v10235 = vunpack.c.l.b16 %v9905
        %v10236 = vunpack.c.h.b16 %v9905
        %v10237 = vunpack.c.l.b16 %v9906
        %v10238 = vunpack.c.h.b16 %v9906
        %v10239 = vunpack.c.l.b16 %v9907
        %v10240 = vunpack.c.h.b16 %v9907
        %v10241 = vunpack.c.l.b16 %v9908
        %v10242 = vunpack.c.h.b16 %v9908
        %v10243 = vunpack.c.l.b16 %v9909
        %v10244 = vunpack.c.h.b16 %v9909
        %v10245 = vunpack.c.l.b16 %v9910
        %v10246 = vunpack.c.h.b16 %v9910
        %v10247 = vunpack.c.l.b16 %v9911
        %v10248 = vunpack.c.h.b16 %v9911
        %v10249 = vunpack.c.l.b16 %v9912
        %v10250 = vunpack.c.h.b16 %v9912
        %v10251 = vunpack.c.l.b16 %v9913
        %v10252 = vunpack.c.h.b16 %v9913
        %v10253 = vunpack.c.l.b16 %v9914
        %v10254 = vunpack.c.h.b16 %v9914
        %v10255 = vunpack.c.l.b16 %v9915
        %v10256 = vunpack.c.h.b16 %v9915
        %v10257 = vunpack.c.l.b16 %v9916
        %v10258 = vunpack.c.h.b16 %v9916
        %v10259 = vunpack.c.l.b16 %v9917
        %v10260 = vunpack.c.h.b16 %v9917
        %v10261 = vunpack.c.l.b16 %v9918
        %v10262 = vunpack.c.h.b16 %v9918
        %v10263 = vunpack.c.l.b16 %v9919
        %v10264 = vunpack.c.h.b16 %v9919
        %v10265 = vunpack.c.l.b16 %v9920
        %v10266 = vunpack.c.h.b16 %v9920
        %v10267 = vunpack.c.l.b16 %v9921
        %v10268 = vunpack.c.h.b16 %v9921
        %v10269 = vunpack.c.l.b16 %v9922
        %v10270 = vunpack.c.h.b16 %v9922
        %v10271 = vunpack.c.l.b16 %v9923
        %v10272 = vunpack.c.h.b16 %v9923
        %v10273 = vunpack.c.l.b16 %v9924
        %v10274 = vunpack.c.h.b16 %v9924
        %v10275 = vunpack.c.l.b16 %v9925
        %v10276 = vunpack.c.h.b16 %v9925
        %v10277 = vunpack.c.l.b16 %v9926
        %v10278 = vunpack.c.h.b16 %v9926
        %v10279 = vunpack.c.l.b16 %v9927
        %v10280 = vunpack.c.h.b16 %v9927
        %v10281 = vunpack.c.l.b16 %v9928
        %v10282 = vunpack.c.h.b16 %v9928
        %v10283 = vunpack.c.l.b16 %v9929
        %v10284 = vunpack.c.h.b16 %v9929
        %v10285 = vunpack.c.l.b16 %v9930
        %v10286 = vunpack.c.h.b16 %v9930
        %v10287 = vunpack.c.l.b16 %v9931
        %v10288 = vunpack.c.h.b16 %v9931
        %v10289 = vunpack.c.l.b16 %v9932
        %v10290 = vunpack.c.h.b16 %v9932
        %v10291 = vunpack.c.l.b16 %v9933
        %v10292 = vunpack.c.h.b16 %v9933
        %v10293 = vunpack.c.l.b16 %v9934
        %v10294 = vunpack.c.h.b16 %v9934
        %v10295 = vunpack.c.l.b16 %v9935
        %v10296 = vunpack.c.h.b16 %v9935
        %v10297 = vunpack.c.l.b16 %v9936
        %v10298 = vunpack.c.h.b16 %v9936
        %v10299 = vunpack.c.l.b16 %v9937
        %v10300 = vunpack.c.h.b16 %v9937
        %v10301 = vunpack.c.l.b16 %v9938
        %v10302 = vunpack.c.h.b16 %v9938
        %v10303 = vunpack.c.l.b16 %v9939
        %v10304 = vunpack.c.h.b16 %v9939
        %v10305 = vunpack.c.l.b16 %v9940
        %v10306 = vunpack.c.h.b16 %v9940
        %v10307 = vunpack.c.l.b16 %v9941
        %v10308 = vunpack.c.h.b16 %v9941
        %v10309 = vunpack.c.l.b16 %v9942
        %v10310 = vunpack.c.h.b16 %v9942
        %v10311 = vunpack.c.l.b16 %v9943
        %v10312 = vunpack.c.h.b16 %v9943
        %v10313 = vunpack.c.l.b16 %v9944
        %v10314 = vunpack.c.h.b16 %v9944
        %v10315 = vunpack.c.l.b16 %v9945
        %v10316 = vunpack.c.h.b16 %v9945
        %v10317 = vunpack.c.l.b16 %v9946
        %v10318 = vunpack.c.h.b16 %v9946
        %v10319 = vunpack.c.l.b16 %v9947
        %v10320 = vunpack.c.h.b16 %v9947
        %v10321 = vunpack.c.l.b16 %v9948
        %v10322 = vunpack.c.h.b16 %v9948
        %v10323 = vunpack.c.l.b16 %v9949
        %v10324 = vunpack.c.h.b16 %v9949
        %v10325 = vunpack.c.l.b16 %v9950
        %v10326 = vunpack.c.h.b16 %v9950
        %v10327 = vunpack.c.l.b16 %v9951
        %v10328 = vunpack.c.h.b16 %v9951
        %v10329 = vunpack.c.l.b16 %v9952
        %v10330 = vunpack.c.h.b16 %v9952
        %v10331 = vunpack.c.l.b16 %v9953
        %v10332 = vunpack.c.h.b16 %v9953
        %v10333 = vunpack.c.l.b16 %v9954
        %v10334 = vunpack.c.h.b16 %v9954
        %v10335 = vunpack.c.l.b16 %v9955
        %v10336 = vunpack.c.h.b16 %v9955
        %v10337 = vunpack.c.l.b16 %v9956
        %v10338 = vunpack.c.h.b16 %v9956
        %v10339 = vunpack.c.l.b16 %v9957
        %v10340 = vunpack.c.h.b16 %v9957
        %v10341 = vunpack.c.l.b16 %v9958
        %v10342 = vunpack.c.h.b16 %v9958
        %v10343 = vunpack.c.l.b16 %v9959
        %v10344 = vunpack.c.h.b16 %v9959
        %v10345 = vunpack.c.l.b16 %v9960
        %v10346 = vunpack.c.h.b16 %v9960
        %v10347 = vunpack.c.l.b16 %v9961
        %v10348 = vunpack.c.h.b16 %v9961
        %v10349 = vunpack.c.l.b16 %v9962
        %v10350 = vunpack.c.h.b16 %v9962
        %v10351 = vunpack.c.l.b16 %v9963
        %v10352 = vunpack.c.h.b16 %v9963
        %v10353 = vunpack.c.l.b16 %v9964
        %v10354 = vunpack.c.h.b16 %v9964
        %v10355 = vunpack.c.l.b16 %v9965
        %v10356 = vunpack.c.h.b16 %v9965
        %v10357 = vunpack.c.l.b16 %v9966
        %v10358 = vunpack.c.h.b16 %v9966
        %v10359 = vunpack.c.l.b16 %v9967
        %v10360 = vunpack.c.h.b16 %v9967
        %v10361 = vunpack.c.l.b16 %v9968
        %v10362 = vunpack.c.h.b16 %v9968
        %v10363 = vunpack.c.l.b16 %v9969
        %v10364 = vunpack.c.h.b16 %v9969
        %v10365 = vunpack.c.l.b16 %v9970
        %v10366 = vunpack.c.h.b16 %v9970
        %v10367 = vunpack.c.l.b16 %v9971
        %v10368 = vunpack.c.h.b16 %v9971
        %v10369 = vunpack.c.l.b16 %v9972
        %v10370 = vunpack.c.h.b16 %v9972
        %v10371 = vunpack.c.l.b16 %v9973
        %v10372 = vunpack.c.h.b16 %v9973
        %v10373 = vunpack.c.l.b16 %v9974
        %v10374 = vunpack.c.h.b16 %v9974
        %v10375 = vunpack.c.l.b16 %v9975
        %v10376 = vunpack.c.h.b16 %v9975
        %v10377 = vunpack.c.l.b16 %v9976
        %v10378 = vunpack.c.h.b16 %v9976
        %v10379 = vunpack.c.l.b16 %v9977
        %v10380 = vunpack.c.h.b16 %v9977
        %v10381 = vunpack.c.l.b16 %v9978
        %v10382 = vunpack.c.h.b16 %v9978
        %v10383 = vpack.c.b16 %v10131, %v10127
        %v10384 = vpack.c.b16 %v10132, %v10128
        %v10385 = vpack.c.b16 %v10133, %v10129
        %v10386 = vpack.c.b16 %v10134, %v10130
        %v10387 = vpack.c.b16 %v10139, %v10135
        %v10388 = vpack.c.b16 %v10140, %v10136
        %v10389 = vpack.c.b16 %v10141, %v10137
        %v10390 = vpack.c.b16 %v10142, %v10138
        %v10391 = vpack.c.b16 %v10147, %v10143
        %v10392 = vpack.c.b16 %v10148, %v10144
        %v10393 = vpack.c.b16 %v10149, %v10145
        %v10394 = vpack.c.b16 %v10150, %v10146
        %v10395 = vpack.c.b16 %v10155, %v10151
        %v10396 = vpack.c.b16 %v10156, %v10152
        %v10397 = vpack.c.b16 %v10157, %v10153
        %v10398 = vpack.c.b16 %v10158, %v10154
        %v10399 = vpack.c.b16 %v10163, %v10159
        %v10400 = vpack.c.b16 %v10164, %v10160
        %v10401 = vpack.c.b16 %v10165, %v10161
        %v10402 = vpack.c.b16 %v10166, %v10162
        %v10403 = vpack.c.b16 %v10171, %v10167
        %v10404 = vpack.c.b16 %v10172, %v10168
        %v10405 = vpack.c.b16 %v10173, %v10169
        %v10406 = vpack.c.b16 %v10174, %v10170
        %v10407 = vpack.c.b16 %v10179, %v10175
        %v10408 = vpack.c.b16 %v10180, %v10176
        %v10409 = vpack.c.b16 %v10181, %v10177
        %v10410 = vpack.c.b16 %v10182, %v10178
        %v10411 = vpack.c.b16 %v10187, %v10183
        %v10412 = vpack.c.b16 %v10188, %v10184
        %v10413 = vpack.c.b16 %v10189, %v10185
        %v10414 = vpack.c.b16 %v10190, %v10186
        %v10415 = vpack.c.b16 %v10195, %v10191
        %v10416 = vpack.c.b16 %v10196, %v10192
        %v10417 = vpack.c.b16 %v10197, %v10193
        %v10418 = vpack.c.b16 %v10198, %v10194
        %v10419 = vpack.c.b16 %v10203, %v10199
        %v10420 = vpack.c.b16 %v10204, %v10200
        %v10421 = vpack.c.b16 %v10205, %v10201
        %v10422 = vpack.c.b16 %v10206, %v10202
        %v10423 = vpack.c.b16 %v10211, %v10207
        %v10424 = vpack.c.b16 %v10212, %v10208
        %v10425 = vpack.c.b16 %v10213, %v10209
        %v10426 = vpack.c.b16 %v10214, %v10210
        %v10427 = vpack.c.b16 %v10219, %v10215
        %v10428 = vpack.c.b16 %v10220, %v10216
        %v10429 = vpack.c.b16 %v10221, %v10217
        %v10430 = vpack.c.b16 %v10222, %v10218
        %v10431 = vpack.c.b16 %v10227, %v10223
        %v10432 = vpack.c.b16 %v10228, %v10224
        %v10433 = vpack.c.b16 %v10229, %v10225
        %v10434 = vpack.c.b16 %v10230, %v10226
        %v10435 = vpack.c.b16 %v10235, %v10231
        %v10436 = vpack.c.b16 %v10236, %v10232
        %v10437 = vpack.c.b16 %v10237, %v10233
        %v10438 = vpack.c.b16 %v10238, %v10234
        %v10439 = vpack.c.b16 %v10243, %v10239
        %v10440 = vpack.c.b16 %v10244, %v10240
        %v10441 = vpack.c.b16 %v10245, %v10241
        %v10442 = vpack.c.b16 %v10246, %v10242
        %v10443 = vpack.c.b16 %v10251, %v10247
        %v10444 = vpack.c.b16 %v10252, %v10248
        %v10445 = vpack.c.b16 %v10253, %v10249
        %v10446 = vpack.c.b16 %v10254, %v10250
        %v10447 = vpack.c.b16 %v10259, %v10255
        %v10448 = vpack.c.b16 %v10260, %v10256
        %v10449 = vpack.c.b16 %v10261, %v10257
        %v10450 = vpack.c.b16 %v10262, %v10258
        %v10451 = vpack.c.b16 %v10267, %v10263
        %v10452 = vpack.c.b16 %v10268, %v10264
        %v10453 = vpack.c.b16 %v10269, %v10265
        %v10454 = vpack.c.b16 %v10270, %v10266
        %v10455 = vpack.c.b16 %v10275, %v10271
        %v10456 = vpack.c.b16 %v10276, %v10272
        %v10457 = vpack.c.b16 %v10277, %v10273
        %v10458 = vpack.c.b16 %v10278, %v10274
        %v10459 = vpack.c.b16 %v10283, %v10279
        %v10460 = vpack.c.b16 %v10284, %v10280
        %v10461 = vpack.c.b16 %v10285, %v10281
        %v10462 = vpack.c.b16 %v10286, %v10282
        %v10463 = vpack.c.b16 %v10291, %v10287
        %v10464 = vpack.c.b16 %v10292, %v10288
        %v10465 = vpack.c.b16 %v10293, %v10289
        %v10466 = vpack.c.b16 %v10294, %v10290
        %v10467 = vpack.c.b16 %v10299, %v10295
        %v10468 = vpack.c.b16 %v10300, %v10296
        %v10469 = vpack.c.b16 %v10301, %v10297
        %v10470 = vpack.c.b16 %v10302, %v10298
        %v10471 = vpack.c.b16 %v10307, %v10303
        %v10472 = vpack.c.b16 %v10308, %v10304
        %v10473 = vpack.c.b16 %v10309, %v10305
        %v10474 = vpack.c.b16 %v10310, %v10306
        %v10475 = vpack.c.b16 %v10315, %v10311
        %v10476 = vpack.c.b16 %v10316, %v10312
        %v10477 = vpack.c.b16 %v10317, %v10313
        %v10478 = vpack.c.b16 %v10318, %v10314
        %v10479 = vpack.c.b16 %v10323, %v10319
        %v10480 = vpack.c.b16 %v10324, %v10320
        %v10481 = vpack.c.b16 %v10325, %v10321
        %v10482 = vpack.c.b16 %v10326, %v10322
        %v10483 = vpack.c.b16 %v10331, %v10327
        %v10484 = vpack.c.b16 %v10332, %v10328
        %v10485 = vpack.c.b16 %v10333, %v10329
        %v10486 = vpack.c.b16 %v10334, %v10330
        %v10487 = vpack.c.b16 %v10339, %v10335
        %v10488 = vpack.c.b16 %v10340, %v10336
        %v10489 = vpack.c.b16 %v10341, %v10337
        %v10490 = vpack.c.b16 %v10342, %v10338
        %v10491 = vpack.c.b16 %v10347, %v10343
        %v10492 = vpack.c.b16 %v10348, %v10344
        %v10493 = vpack.c.b16 %v10349, %v10345
        %v10494 = vpack.c.b16 %v10350, %v10346
        %v10495 = vpack.c.b16 %v10355, %v10351
        %v10496 = vpack.c.b16 %v10356, %v10352
        %v10497 = vpack.c.b16 %v10357, %v10353
        %v10498 = vpack.c.b16 %v10358, %v10354
        %v10499 = vpack.c.b16 %v10363, %v10359
        %v10500 = vpack.c.b16 %v10364, %v10360
        %v10501 = vpack.c.b16 %v10365, %v10361
        %v10502 = vpack.c.b16 %v10366, %v10362
        %v10503 = vpack.c.b16 %v10371, %v10367
        %v10504 = vpack.c.b16 %v10372, %v10368
        %v10505 = vpack.c.b16 %v10373, %v10369
        %v10506 = vpack.c.b16 %v10374, %v10370
        %v10507 = vpack.c.b16 %v10379, %v10375
        %v10508 = vpack.c.b16 %v10380, %v10376
        %v10509 = vpack.c.b16 %v10381, %v10377
        %v10510 = vpack.c.b16 %v10382, %v10378
        %10639 = vmatpush.bf16.msra.mxu0 %v10411
        %10640 = vmatpush.bf16.msra.mxu0 %v10407
        %10641 = vmatpush.bf16.msra.mxu0 %v10403
        %10642 = vmatpush.bf16.msra.mxu0 %v10399
        %10643 = vmatpush.bf16.msra.mxu0 %v10395
        %10644 = vmatpush.bf16.msra.mxu0 %v10391
        %10645 = vmatpush.bf16.msra.mxu0 %v10387
        %10646 = vmatpush.bf16.msra.mxu0 %v10383
        %10647 = vmatmul.bf16.gmra.mxu0 %v9991
        %v10648 = vpop.f32.mrf.mxu0
        %v10649 = vadd.f32 0.0, %v10648
        %v10650 = vpop.f32.mrf.mxu0
        %v10651 = vadd.f32 0.0, %v10650
        %10652 = vdwg.mxu0
        %10653 = vmatpush.bf16.msra.mxu0 %v10443
        %10654 = vmatpush.bf16.msra.mxu0 %v10439
        %10655 = vmatpush.bf16.msra.mxu0 %v10435
        %10656 = vmatpush.bf16.msra.mxu0 %v10431
        %10657 = vmatpush.bf16.msra.mxu0 %v10427
        %10658 = vmatpush.bf16.msra.mxu0 %v10423
        %10659 = vmatpush.bf16.msra.mxu0 %v10419
        %10660 = vmatpush.bf16.msra.mxu0 %v10415
        %10661 = vmatmul.bf16.gmra.mxu0 %v9992
        %v10662 = vpop.f32.mrf.mxu0
        %v10663 = vadd.f32 %v10649, %v10662
        %v10664 = vpop.f32.mrf.mxu0
        %v10665 = vadd.f32 %v10651, %v10664
        %10666 = vdwg.mxu0
        %10667 = vmatpush.bf16.msra.mxu0 %v10475
        %10668 = vmatpush.bf16.msra.mxu0 %v10471
        %10669 = vmatpush.bf16.msra.mxu0 %v10467
        %10670 = vmatpush.bf16.msra.mxu0 %v10463
        %10671 = vmatpush.bf16.msra.mxu0 %v10459
        %10672 = vmatpush.bf16.msra.mxu0 %v10455
        %10673 = vmatpush.bf16.msra.mxu0 %v10451
        %10674 = vmatpush.bf16.msra.mxu0 %v10447
        %10675 = vmatmul.bf16.gmra.mxu0 %v9993
        %v10676 = vpop.f32.mrf.mxu0
        %v10677 = vadd.f32 %v10663, %v10676
        %v10678 = vpop.f32.mrf.mxu0
        %v10679 = vadd.f32 %v10665, %v10678
        %10680 = vdwg.mxu0
        %10681 = vmatpush.bf16.msra.mxu0 %v10507
        %10682 = vmatpush.bf16.msra.mxu0 %v10503
        %10683 = vmatpush.bf16.msra.mxu0 %v10499
        %10684 = vmatpush.bf16.msra.mxu0 %v10495
        %10685 = vmatpush.bf16.msra.mxu0 %v10491
        %10686 = vmatpush.bf16.msra.mxu0 %v10487
        %10687 = vmatpush.bf16.msra.mxu0 %v10483
        %10688 = vmatpush.bf16.msra.mxu0 %v10479
        %10689 = vmatmul.bf16.gmra.mxu0 %v9994
        %v10690 = vpop.f32.mrf.mxu0
        %v10691 = vadd.f32 %v10677, %v10690
        %v10692 = vpop.f32.mrf.mxu0
        %v10693 = vadd.f32 %v10679, %v10692
        %10694 = vdwg.mxu0
        %10695 = vmatpush.bf16.msra.mxu0 %v10412
        %10696 = vmatpush.bf16.msra.mxu0 %v10408
        %10697 = vmatpush.bf16.msra.mxu0 %v10404
        %10698 = vmatpush.bf16.msra.mxu0 %v10400
        %10699 = vmatpush.bf16.msra.mxu0 %v10396
        %10700 = vmatpush.bf16.msra.mxu0 %v10392
        %10701 = vmatpush.bf16.msra.mxu0 %v10388
        %10702 = vmatpush.bf16.msra.mxu0 %v10384
        %10703 = vmatmul.bf16.gmra.mxu0 %v9991
        %v10704 = vpop.f32.mrf.mxu0
        %v10705 = vadd.f32 0.0, %v10704
        %v10706 = vpop.f32.mrf.mxu0
        %v10707 = vadd.f32 0.0, %v10706
        %10708 = vdwg.mxu0
        %10709 = vmatpush.bf16.msra.mxu0 %v10444
        %10710 = vmatpush.bf16.msra.mxu0 %v10440
        %10711 = vmatpush.bf16.msra.mxu0 %v10436
        %10712 = vmatpush.bf16.msra.mxu0 %v10432
        %10713 = vmatpush.bf16.msra.mxu0 %v10428
        %10714 = vmatpush.bf16.msra.mxu0 %v10424
        %10715 = vmatpush.bf16.msra.mxu0 %v10420
        %10716 = vmatpush.bf16.msra.mxu0 %v10416
        %10717 = vmatmul.bf16.gmra.mxu0 %v9992
        %v10718 = vpop.f32.mrf.mxu0
        %v10719 = vadd.f32 %v10705, %v10718
        %v10720 = vpop.f32.mrf.mxu0
        %v10721 = vadd.f32 %v10707, %v10720
        %10722 = vdwg.mxu0
        %10723 = vmatpush.bf16.msra.mxu0 %v10476
        %10724 = vmatpush.bf16.msra.mxu0 %v10472
        %10725 = vmatpush.bf16.msra.mxu0 %v10468
        %10726 = vmatpush.bf16.msra.mxu0 %v10464
        %10727 = vmatpush.bf16.msra.mxu0 %v10460
        %10728 = vmatpush.bf16.msra.mxu0 %v10456
        %10729 = vmatpush.bf16.msra.mxu0 %v10452
        %10730 = vmatpush.bf16.msra.mxu0 %v10448
        %10731 = vmatmul.bf16.gmra.mxu0 %v9993
        %v10732 = vpop.f32.mrf.mxu0
        %v10733 = vadd.f32 %v10719, %v10732
        %v10734 = vpop.f32.mrf.mxu0
        %v10735 = vadd.f32 %v10721, %v10734
        %10736 = vdwg.mxu0
        %10737 = vmatpush.bf16.msra.mxu0 %v10508
        %10738 = vmatpush.bf16.msra.mxu0 %v10504
        %10739 = vmatpush.bf16.msra.mxu0 %v10500
        %10740 = vmatpush.bf16.msra.mxu0 %v10496
        %10741 = vmatpush.bf16.msra.mxu0 %v10492
        %10742 = vmatpush.bf16.msra.mxu0 %v10488
        %10743 = vmatpush.bf16.msra.mxu0 %v10484
        %10744 = vmatpush.bf16.msra.mxu0 %v10480
        %10745 = vmatmul.bf16.gmra.mxu0 %v9994
        %v10746 = vpop.f32.mrf.mxu0
        %v10747 = vadd.f32 %v10733, %v10746
        %v10748 = vpop.f32.mrf.mxu0
        %v10749 = vadd.f32 %v10735, %v10748
        %10750 = vdwg.mxu0
        %10751 = vmatpush.bf16.msra.mxu0 %v10413
        %10752 = vmatpush.bf16.msra.mxu0 %v10409
        %10753 = vmatpush.bf16.msra.mxu0 %v10405
        %10754 = vmatpush.bf16.msra.mxu0 %v10401
        %10755 = vmatpush.bf16.msra.mxu0 %v10397
        %10756 = vmatpush.bf16.msra.mxu0 %v10393
        %10757 = vmatpush.bf16.msra.mxu0 %v10389
        %10758 = vmatpush.bf16.msra.mxu0 %v10385
        %10759 = vmatmul.bf16.gmra.mxu0 %v9991
        %v10760 = vpop.f32.mrf.mxu0
        %v10761 = vadd.f32 0.0, %v10760
        %v10762 = vpop.f32.mrf.mxu0
        %v10763 = vadd.f32 0.0, %v10762
        %10764 = vdwg.mxu0
        %10765 = vmatpush.bf16.msra.mxu0 %v10445
        %10766 = vmatpush.bf16.msra.mxu0 %v10441
        %10767 = vmatpush.bf16.msra.mxu0 %v10437
        %10768 = vmatpush.bf16.msra.mxu0 %v10433
        %10769 = vmatpush.bf16.msra.mxu0 %v10429
        %10770 = vmatpush.bf16.msra.mxu0 %v10425
        %10771 = vmatpush.bf16.msra.mxu0 %v10421
        %10772 = vmatpush.bf16.msra.mxu0 %v10417
        %10773 = vmatmul.bf16.gmra.mxu0 %v9992
        %v10774 = vpop.f32.mrf.mxu0
        %v10775 = vadd.f32 %v10761, %v10774
        %v10776 = vpop.f32.mrf.mxu0
        %v10777 = vadd.f32 %v10763, %v10776
        %10778 = vdwg.mxu0
        %10779 = vmatpush.bf16.msra.mxu0 %v10477
        %10780 = vmatpush.bf16.msra.mxu0 %v10473
        %10781 = vmatpush.bf16.msra.mxu0 %v10469
        %10782 = vmatpush.bf16.msra.mxu0 %v10465
        %10783 = vmatpush.bf16.msra.mxu0 %v10461
        %10784 = vmatpush.bf16.msra.mxu0 %v10457
        %10785 = vmatpush.bf16.msra.mxu0 %v10453
        %10786 = vmatpush.bf16.msra.mxu0 %v10449
        %10787 = vmatmul.bf16.gmra.mxu0 %v9993
        %v10788 = vpop.f32.mrf.mxu0
        %v10789 = vadd.f32 %v10775, %v10788
        %v10790 = vpop.f32.mrf.mxu0
        %v10791 = vadd.f32 %v10777, %v10790
        %10792 = vdwg.mxu0
        %10793 = vmatpush.bf16.msra.mxu0 %v10509
        %10794 = vmatpush.bf16.msra.mxu0 %v10505
        %10795 = vmatpush.bf16.msra.mxu0 %v10501
        %10796 = vmatpush.bf16.msra.mxu0 %v10497
        %10797 = vmatpush.bf16.msra.mxu0 %v10493
        %10798 = vmatpush.bf16.msra.mxu0 %v10489
        %10799 = vmatpush.bf16.msra.mxu0 %v10485
        %10800 = vmatpush.bf16.msra.mxu0 %v10481
        %10801 = vmatmul.bf16.gmra.mxu0 %v9994
        %v10802 = vpop.f32.mrf.mxu0
        %v10803 = vadd.f32 %v10789, %v10802
        %v10804 = vpop.f32.mrf.mxu0
        %v10805 = vadd.f32 %v10791, %v10804
        %10806 = vdwg.mxu0
        %10807 = vmatpush.bf16.msra.mxu0 %v10414
        %10808 = vmatpush.bf16.msra.mxu0 %v10410
        %10809 = vmatpush.bf16.msra.mxu0 %v10406
        %10810 = vmatpush.bf16.msra.mxu0 %v10402
        %10811 = vmatpush.bf16.msra.mxu0 %v10398
        %10812 = vmatpush.bf16.msra.mxu0 %v10394
        %10813 = vmatpush.bf16.msra.mxu0 %v10390
        %10814 = vmatpush.bf16.msra.mxu0 %v10386
        %10815 = vmatmul.bf16.gmra.mxu0 %v9991
        %v10816 = vpop.f32.mrf.mxu0
        %v10817 = vadd.f32 0.0, %v10816
        %v10818 = vpop.f32.mrf.mxu0
        %v10819 = vadd.f32 0.0, %v10818
        %10820 = vdwg.mxu0
        %10821 = vmatpush.bf16.msra.mxu0 %v10446
        %10822 = vmatpush.bf16.msra.mxu0 %v10442
        %10823 = vmatpush.bf16.msra.mxu0 %v10438
        %10824 = vmatpush.bf16.msra.mxu0 %v10434
        %10825 = vmatpush.bf16.msra.mxu0 %v10430
        %10826 = vmatpush.bf16.msra.mxu0 %v10426
        %10827 = vmatpush.bf16.msra.mxu0 %v10422
        %10828 = vmatpush.bf16.msra.mxu0 %v10418
        %10829 = vmatmul.bf16.gmra.mxu0 %v9992
        %v10830 = vpop.f32.mrf.mxu0
        %v10831 = vadd.f32 %v10817, %v10830
        %v10832 = vpop.f32.mrf.mxu0
        %v10833 = vadd.f32 %v10819, %v10832
        %10834 = vdwg.mxu0
        %10835 = vmatpush.bf16.msra.mxu0 %v10478
        %10836 = vmatpush.bf16.msra.mxu0 %v10474
        %10837 = vmatpush.bf16.msra.mxu0 %v10470
        %10838 = vmatpush.bf16.msra.mxu0 %v10466
        %10839 = vmatpush.bf16.msra.mxu0 %v10462
        %10840 = vmatpush.bf16.msra.mxu0 %v10458
        %10841 = vmatpush.bf16.msra.mxu0 %v10454
        %10842 = vmatpush.bf16.msra.mxu0 %v10450
        %10843 = vmatmul.bf16.gmra.mxu0 %v9993
        %v10844 = vpop.f32.mrf.mxu0
        %v10845 = vadd.f32 %v10831, %v10844
        %v10846 = vpop.f32.mrf.mxu0
        %v10847 = vadd.f32 %v10833, %v10846
        %10848 = vdwg.mxu0
        %10849 = vmatpush.bf16.msra.mxu0 %v10510
        %10850 = vmatpush.bf16.msra.mxu0 %v10506
        %10851 = vmatpush.bf16.msra.mxu0 %v10502
        %10852 = vmatpush.bf16.msra.mxu0 %v10498
        %10853 = vmatpush.bf16.msra.mxu0 %v10494
        %10854 = vmatpush.bf16.msra.mxu0 %v10490
        %10855 = vmatpush.bf16.msra.mxu0 %v10486
        %10856 = vmatpush.bf16.msra.mxu0 %v10482
        %10857 = vmatmul.bf16.gmra.mxu0 %v9994
        %v10858 = vpop.f32.mrf.mxu0
        %v10859 = vadd.f32 %v10845, %v10858
        %v10860 = vpop.f32.mrf.mxu0
        %v10861 = vadd.f32 %v10847, %v10860
        %10862 = vdwg.mxu0
        %v10867 = vunpack.c.l.b16 %v9713
        %v10868 = vunpack.c.h.b16 %v9713
        %v10869 = vunpack.c.l.b16 %v9714
        %v10870 = vunpack.c.h.b16 %v9714
        %v10871 = vunpack.c.l.b16 %v9715
        %v10872 = vunpack.c.h.b16 %v9715
        %v10873 = vunpack.c.l.b16 %v9716
        %v10874 = vunpack.c.h.b16 %v9716
        %v10875 = vpack.c.b16 %v10871, %v10867
        %v10876 = vpack.c.b16 %v10872, %v10868
        %v10877 = vpack.c.b16 %v10873, %v10869
        %v10878 = vpack.c.b16 %v10874, %v10870
        %v11011 = vunpack.c.l.b16 %v9718
        %v11012 = vunpack.c.h.b16 %v9718
        %v11013 = vunpack.c.l.b16 %v9719
        %v11014 = vunpack.c.h.b16 %v9719
        %v11015 = vunpack.c.l.b16 %v9720
        %v11016 = vunpack.c.h.b16 %v9720
        %v11017 = vunpack.c.l.b16 %v9721
        %v11018 = vunpack.c.h.b16 %v9721
        %v11019 = vunpack.c.l.b16 %v9722
        %v11020 = vunpack.c.h.b16 %v9722
        %v11021 = vunpack.c.l.b16 %v9723
        %v11022 = vunpack.c.h.b16 %v9723
        %v11023 = vunpack.c.l.b16 %v9724
        %v11024 = vunpack.c.h.b16 %v9724
        %v11025 = vunpack.c.l.b16 %v9725
        %v11026 = vunpack.c.h.b16 %v9725
        %v11027 = vunpack.c.l.b16 %v9726
        %v11028 = vunpack.c.h.b16 %v9726
        %v11029 = vunpack.c.l.b16 %v9727
        %v11030 = vunpack.c.h.b16 %v9727
        %v11031 = vunpack.c.l.b16 %v9728
        %v11032 = vunpack.c.h.b16 %v9728
        %v11033 = vunpack.c.l.b16 %v9729
        %v11034 = vunpack.c.h.b16 %v9729
        %v11035 = vunpack.c.l.b16 %v9730
        %v11036 = vunpack.c.h.b16 %v9730
        %v11037 = vunpack.c.l.b16 %v9731
        %v11038 = vunpack.c.h.b16 %v9731
        %v11039 = vunpack.c.l.b16 %v9732
        %v11040 = vunpack.c.h.b16 %v9732
        %v11041 = vunpack.c.l.b16 %v9733
        %v11042 = vunpack.c.h.b16 %v9733
        %v11043 = vunpack.c.l.b16 %v9734
        %v11044 = vunpack.c.h.b16 %v9734
        %v11045 = vunpack.c.l.b16 %v9735
        %v11046 = vunpack.c.h.b16 %v9735
        %v11047 = vunpack.c.l.b16 %v9736
        %v11048 = vunpack.c.h.b16 %v9736
        %v11049 = vunpack.c.l.b16 %v9737
        %v11050 = vunpack.c.h.b16 %v9737
        %v11051 = vunpack.c.l.b16 %v9738
        %v11052 = vunpack.c.h.b16 %v9738
        %v11053 = vunpack.c.l.b16 %v9739
        %v11054 = vunpack.c.h.b16 %v9739
        %v11055 = vunpack.c.l.b16 %v9740
        %v11056 = vunpack.c.h.b16 %v9740
        %v11057 = vunpack.c.l.b16 %v9741
        %v11058 = vunpack.c.h.b16 %v9741
        %v11059 = vunpack.c.l.b16 %v9742
        %v11060 = vunpack.c.h.b16 %v9742
        %v11061 = vunpack.c.l.b16 %v9743
        %v11062 = vunpack.c.h.b16 %v9743
        %v11063 = vunpack.c.l.b16 %v9744
        %v11064 = vunpack.c.h.b16 %v9744
        %v11065 = vunpack.c.l.b16 %v9745
        %v11066 = vunpack.c.h.b16 %v9745
        %v11067 = vunpack.c.l.b16 %v9746
        %v11068 = vunpack.c.h.b16 %v9746
        %v11069 = vunpack.c.l.b16 %v9747
        %v11070 = vunpack.c.h.b16 %v9747
        %v11071 = vunpack.c.l.b16 %v9748
        %v11072 = vunpack.c.h.b16 %v9748
        %v11073 = vunpack.c.l.b16 %v9749
        %v11074 = vunpack.c.h.b16 %v9749
        %v11075 = vunpack.c.l.b16 %v9750
        %v11076 = vunpack.c.h.b16 %v9750
        %v11077 = vunpack.c.l.b16 %v9751
        %v11078 = vunpack.c.h.b16 %v9751
        %v11079 = vunpack.c.l.b16 %v9752
        %v11080 = vunpack.c.h.b16 %v9752
        %v11081 = vunpack.c.l.b16 %v9753
        %v11082 = vunpack.c.h.b16 %v9753
        %v11083 = vunpack.c.l.b16 %v9754
        %v11084 = vunpack.c.h.b16 %v9754
        %v11085 = vunpack.c.l.b16 %v9755
        %v11086 = vunpack.c.h.b16 %v9755
        %v11087 = vunpack.c.l.b16 %v9756
        %v11088 = vunpack.c.h.b16 %v9756
        %v11089 = vunpack.c.l.b16 %v9757
        %v11090 = vunpack.c.h.b16 %v9757
        %v11091 = vunpack.c.l.b16 %v9758
        %v11092 = vunpack.c.h.b16 %v9758
        %v11093 = vunpack.c.l.b16 %v9759
        %v11094 = vunpack.c.h.b16 %v9759
        %v11095 = vunpack.c.l.b16 %v9760
        %v11096 = vunpack.c.h.b16 %v9760
        %v11097 = vunpack.c.l.b16 %v9761
        %v11098 = vunpack.c.h.b16 %v9761
        %v11099 = vunpack.c.l.b16 %v9762
        %v11100 = vunpack.c.h.b16 %v9762
        %v11101 = vunpack.c.l.b16 %v9763
        %v11102 = vunpack.c.h.b16 %v9763
        %v11103 = vunpack.c.l.b16 %v9764
        %v11104 = vunpack.c.h.b16 %v9764
        %v11105 = vunpack.c.l.b16 %v9765
        %v11106 = vunpack.c.h.b16 %v9765
        %v11107 = vunpack.c.l.b16 %v9766
        %v11108 = vunpack.c.h.b16 %v9766
        %v11109 = vunpack.c.l.b16 %v9767
        %v11110 = vunpack.c.h.b16 %v9767
        %v11111 = vunpack.c.l.b16 %v9768
        %v11112 = vunpack.c.h.b16 %v9768
        %v11113 = vunpack.c.l.b16 %v9769
        %v11114 = vunpack.c.h.b16 %v9769
        %v11115 = vunpack.c.l.b16 %v9770
        %v11116 = vunpack.c.h.b16 %v9770
        %v11117 = vunpack.c.l.b16 %v9771
        %v11118 = vunpack.c.h.b16 %v9771
        %v11119 = vunpack.c.l.b16 %v9772
        %v11120 = vunpack.c.h.b16 %v9772
        %v11121 = vunpack.c.l.b16 %v9773
        %v11122 = vunpack.c.h.b16 %v9773
        %v11123 = vunpack.c.l.b16 %v9774
        %v11124 = vunpack.c.h.b16 %v9774
        %v11125 = vunpack.c.l.b16 %v9775
        %v11126 = vunpack.c.h.b16 %v9775
        %v11127 = vunpack.c.l.b16 %v9776
        %v11128 = vunpack.c.h.b16 %v9776
        %v11129 = vunpack.c.l.b16 %v9777
        %v11130 = vunpack.c.h.b16 %v9777
        %v11131 = vunpack.c.l.b16 %v9778
        %v11132 = vunpack.c.h.b16 %v9778
        %v11133 = vunpack.c.l.b16 %v9779
        %v11134 = vunpack.c.h.b16 %v9779
        %v11135 = vunpack.c.l.b16 %v9780
        %v11136 = vunpack.c.h.b16 %v9780
        %v11137 = vunpack.c.l.b16 %v9781
        %v11138 = vunpack.c.h.b16 %v9781
        %v11139 = vunpack.c.l.b16 %v9782
        %v11140 = vunpack.c.h.b16 %v9782
        %v11141 = vunpack.c.l.b16 %v9783
        %v11142 = vunpack.c.h.b16 %v9783
        %v11143 = vunpack.c.l.b16 %v9784
        %v11144 = vunpack.c.h.b16 %v9784
        %v11145 = vunpack.c.l.b16 %v9785
        %v11146 = vunpack.c.h.b16 %v9785
        %v11147 = vunpack.c.l.b16 %v9786
        %v11148 = vunpack.c.h.b16 %v9786
        %v11149 = vunpack.c.l.b16 %v9787
        %v11150 = vunpack.c.h.b16 %v9787
        %v11151 = vunpack.c.l.b16 %v9788
        %v11152 = vunpack.c.h.b16 %v9788
        %v11153 = vunpack.c.l.b16 %v9789
        %v11154 = vunpack.c.h.b16 %v9789
        %v11155 = vunpack.c.l.b16 %v9790
        %v11156 = vunpack.c.h.b16 %v9790
        %v11157 = vunpack.c.l.b16 %v9791
        %v11158 = vunpack.c.h.b16 %v9791
        %v11159 = vunpack.c.l.b16 %v9792
        %v11160 = vunpack.c.h.b16 %v9792
        %v11161 = vunpack.c.l.b16 %v9793
        %v11162 = vunpack.c.h.b16 %v9793
        %v11163 = vunpack.c.l.b16 %v9794
        %v11164 = vunpack.c.h.b16 %v9794
        %v11165 = vunpack.c.l.b16 %v9795
        %v11166 = vunpack.c.h.b16 %v9795
        %v11167 = vunpack.c.l.b16 %v9796
        %v11168 = vunpack.c.h.b16 %v9796
        %v11169 = vunpack.c.l.b16 %v9797
        %v11170 = vunpack.c.h.b16 %v9797
        %v11171 = vunpack.c.l.b16 %v9798
        %v11172 = vunpack.c.h.b16 %v9798
        %v11173 = vunpack.c.l.b16 %v9799
        %v11174 = vunpack.c.h.b16 %v9799
        %v11175 = vunpack.c.l.b16 %v9800
        %v11176 = vunpack.c.h.b16 %v9800
        %v11177 = vunpack.c.l.b16 %v9801
        %v11178 = vunpack.c.h.b16 %v9801
        %v11179 = vunpack.c.l.b16 %v9802
        %v11180 = vunpack.c.h.b16 %v9802
        %v11181 = vunpack.c.l.b16 %v9803
        %v11182 = vunpack.c.h.b16 %v9803
        %v11183 = vunpack.c.l.b16 %v9804
        %v11184 = vunpack.c.h.b16 %v9804
        %v11185 = vunpack.c.l.b16 %v9805
        %v11186 = vunpack.c.h.b16 %v9805
        %v11187 = vunpack.c.l.b16 %v9806
        %v11188 = vunpack.c.h.b16 %v9806
        %v11189 = vunpack.c.l.b16 %v9807
        %v11190 = vunpack.c.h.b16 %v9807
        %v11191 = vunpack.c.l.b16 %v9808
        %v11192 = vunpack.c.h.b16 %v9808
        %v11193 = vunpack.c.l.b16 %v9809
        %v11194 = vunpack.c.h.b16 %v9809
        %v11195 = vunpack.c.l.b16 %v9810
        %v11196 = vunpack.c.h.b16 %v9810
        %v11197 = vunpack.c.l.b16 %v9811
        %v11198 = vunpack.c.h.b16 %v9811
        %v11199 = vunpack.c.l.b16 %v9812
        %v11200 = vunpack.c.h.b16 %v9812
        %v11201 = vunpack.c.l.b16 %v9813
        %v11202 = vunpack.c.h.b16 %v9813
        %v11203 = vunpack.c.l.b16 %v9814
        %v11204 = vunpack.c.h.b16 %v9814
        %v11205 = vunpack.c.l.b16 %v9815
        %v11206 = vunpack.c.h.b16 %v9815
        %v11207 = vunpack.c.l.b16 %v9816
        %v11208 = vunpack.c.h.b16 %v9816
        %v11209 = vunpack.c.l.b16 %v9817
        %v11210 = vunpack.c.h.b16 %v9817
        %v11211 = vunpack.c.l.b16 %v9818
        %v11212 = vunpack.c.h.b16 %v9818
        %v11213 = vunpack.c.l.b16 %v9819
        %v11214 = vunpack.c.h.b16 %v9819
        %v11215 = vunpack.c.l.b16 %v9820
        %v11216 = vunpack.c.h.b16 %v9820
        %v11217 = vunpack.c.l.b16 %v9821
        %v11218 = vunpack.c.h.b16 %v9821
        %v11219 = vunpack.c.l.b16 %v9822
        %v11220 = vunpack.c.h.b16 %v9822
        %v11221 = vunpack.c.l.b16 %v9823
        %v11222 = vunpack.c.h.b16 %v9823
        %v11223 = vunpack.c.l.b16 %v9824
        %v11224 = vunpack.c.h.b16 %v9824
        %v11225 = vunpack.c.l.b16 %v9825
        %v11226 = vunpack.c.h.b16 %v9825
        %v11227 = vunpack.c.l.b16 %v9826
        %v11228 = vunpack.c.h.b16 %v9826
        %v11229 = vunpack.c.l.b16 %v9827
        %v11230 = vunpack.c.h.b16 %v9827
        %v11231 = vunpack.c.l.b16 %v9828
        %v11232 = vunpack.c.h.b16 %v9828
        %v11233 = vunpack.c.l.b16 %v9829
        %v11234 = vunpack.c.h.b16 %v9829
        %v11235 = vunpack.c.l.b16 %v9830
        %v11236 = vunpack.c.h.b16 %v9830
        %v11237 = vunpack.c.l.b16 %v9831
        %v11238 = vunpack.c.h.b16 %v9831
        %v11239 = vunpack.c.l.b16 %v9832
        %v11240 = vunpack.c.h.b16 %v9832
        %v11241 = vunpack.c.l.b16 %v9833
        %v11242 = vunpack.c.h.b16 %v9833
        %v11243 = vunpack.c.l.b16 %v9834
        %v11244 = vunpack.c.h.b16 %v9834
        %v11245 = vunpack.c.l.b16 %v9835
        %v11246 = vunpack.c.h.b16 %v9835
        %v11247 = vunpack.c.l.b16 %v9836
        %v11248 = vunpack.c.h.b16 %v9836
        %v11249 = vunpack.c.l.b16 %v9837
        %v11250 = vunpack.c.h.b16 %v9837
        %v11251 = vunpack.c.l.b16 %v9838
        %v11252 = vunpack.c.h.b16 %v9838
        %v11253 = vunpack.c.l.b16 %v9839
        %v11254 = vunpack.c.h.b16 %v9839
        %v11255 = vunpack.c.l.b16 %v9840
        %v11256 = vunpack.c.h.b16 %v9840
        %v11257 = vunpack.c.l.b16 %v9841
        %v11258 = vunpack.c.h.b16 %v9841
        %v11259 = vunpack.c.l.b16 %v9842
        %v11260 = vunpack.c.h.b16 %v9842
        %v11261 = vunpack.c.l.b16 %v9843
        %v11262 = vunpack.c.h.b16 %v9843
        %v11263 = vunpack.c.l.b16 %v9844
        %v11264 = vunpack.c.h.b16 %v9844
        %v11265 = vunpack.c.l.b16 %v9845
        %v11266 = vunpack.c.h.b16 %v9845
        %v11267 = vpack.c.b16 %v11015, %v11011
        %v11268 = vpack.c.b16 %v11016, %v11012
        %v11269 = vpack.c.b16 %v11017, %v11013
        %v11270 = vpack.c.b16 %v11018, %v11014
        %v11271 = vpack.c.b16 %v11023, %v11019
        %v11272 = vpack.c.b16 %v11024, %v11020
        %v11273 = vpack.c.b16 %v11025, %v11021
        %v11274 = vpack.c.b16 %v11026, %v11022
        %v11275 = vpack.c.b16 %v11031, %v11027
        %v11276 = vpack.c.b16 %v11032, %v11028
        %v11277 = vpack.c.b16 %v11033, %v11029
        %v11278 = vpack.c.b16 %v11034, %v11030
        %v11279 = vpack.c.b16 %v11039, %v11035
        %v11280 = vpack.c.b16 %v11040, %v11036
        %v11281 = vpack.c.b16 %v11041, %v11037
        %v11282 = vpack.c.b16 %v11042, %v11038
        %v11283 = vpack.c.b16 %v11047, %v11043
        %v11284 = vpack.c.b16 %v11048, %v11044
        %v11285 = vpack.c.b16 %v11049, %v11045
        %v11286 = vpack.c.b16 %v11050, %v11046
        %v11287 = vpack.c.b16 %v11055, %v11051
        %v11288 = vpack.c.b16 %v11056, %v11052
        %v11289 = vpack.c.b16 %v11057, %v11053
        %v11290 = vpack.c.b16 %v11058, %v11054
        %v11291 = vpack.c.b16 %v11063, %v11059
        %v11292 = vpack.c.b16 %v11064, %v11060
        %v11293 = vpack.c.b16 %v11065, %v11061
        %v11294 = vpack.c.b16 %v11066, %v11062
        %v11295 = vpack.c.b16 %v11071, %v11067
        %v11296 = vpack.c.b16 %v11072, %v11068
        %v11297 = vpack.c.b16 %v11073, %v11069
        %v11298 = vpack.c.b16 %v11074, %v11070
        %v11299 = vpack.c.b16 %v11079, %v11075
        %v11300 = vpack.c.b16 %v11080, %v11076
        %v11301 = vpack.c.b16 %v11081, %v11077
        %v11302 = vpack.c.b16 %v11082, %v11078
        %v11303 = vpack.c.b16 %v11087, %v11083
        %v11304 = vpack.c.b16 %v11088, %v11084
        %v11305 = vpack.c.b16 %v11089, %v11085
        %v11306 = vpack.c.b16 %v11090, %v11086
        %v11307 = vpack.c.b16 %v11095, %v11091
        %v11308 = vpack.c.b16 %v11096, %v11092
        %v11309 = vpack.c.b16 %v11097, %v11093
        %v11310 = vpack.c.b16 %v11098, %v11094
        %v11311 = vpack.c.b16 %v11103, %v11099
        %v11312 = vpack.c.b16 %v11104, %v11100
        %v11313 = vpack.c.b16 %v11105, %v11101
        %v11314 = vpack.c.b16 %v11106, %v11102
        %v11315 = vpack.c.b16 %v11111, %v11107
        %v11316 = vpack.c.b16 %v11112, %v11108
        %v11317 = vpack.c.b16 %v11113, %v11109
        %v11318 = vpack.c.b16 %v11114, %v11110
        %v11319 = vpack.c.b16 %v11119, %v11115
        %v11320 = vpack.c.b16 %v11120, %v11116
        %v11321 = vpack.c.b16 %v11121, %v11117
        %v11322 = vpack.c.b16 %v11122, %v11118
        %v11323 = vpack.c.b16 %v11127, %v11123
        %v11324 = vpack.c.b16 %v11128, %v11124
        %v11325 = vpack.c.b16 %v11129, %v11125
        %v11326 = vpack.c.b16 %v11130, %v11126
        %v11327 = vpack.c.b16 %v11135, %v11131
        %v11328 = vpack.c.b16 %v11136, %v11132
        %v11329 = vpack.c.b16 %v11137, %v11133
        %v11330 = vpack.c.b16 %v11138, %v11134
        %v11331 = vpack.c.b16 %v11143, %v11139
        %v11332 = vpack.c.b16 %v11144, %v11140
        %v11333 = vpack.c.b16 %v11145, %v11141
        %v11334 = vpack.c.b16 %v11146, %v11142
        %v11335 = vpack.c.b16 %v11151, %v11147
        %v11336 = vpack.c.b16 %v11152, %v11148
        %v11337 = vpack.c.b16 %v11153, %v11149
        %v11338 = vpack.c.b16 %v11154, %v11150
        %v11339 = vpack.c.b16 %v11159, %v11155
        %v11340 = vpack.c.b16 %v11160, %v11156
        %v11341 = vpack.c.b16 %v11161, %v11157
        %v11342 = vpack.c.b16 %v11162, %v11158
        %v11343 = vpack.c.b16 %v11167, %v11163
        %v11344 = vpack.c.b16 %v11168, %v11164
        %v11345 = vpack.c.b16 %v11169, %v11165
        %v11346 = vpack.c.b16 %v11170, %v11166
        %v11347 = vpack.c.b16 %v11175, %v11171
        %v11348 = vpack.c.b16 %v11176, %v11172
        %v11349 = vpack.c.b16 %v11177, %v11173
        %v11350 = vpack.c.b16 %v11178, %v11174
        %v11351 = vpack.c.b16 %v11183, %v11179
        %v11352 = vpack.c.b16 %v11184, %v11180
        %v11353 = vpack.c.b16 %v11185, %v11181
        %v11354 = vpack.c.b16 %v11186, %v11182
        %v11355 = vpack.c.b16 %v11191, %v11187
        %v11356 = vpack.c.b16 %v11192, %v11188
        %v11357 = vpack.c.b16 %v11193, %v11189
        %v11358 = vpack.c.b16 %v11194, %v11190
        %v11359 = vpack.c.b16 %v11199, %v11195
        %v11360 = vpack.c.b16 %v11200, %v11196
        %v11361 = vpack.c.b16 %v11201, %v11197
        %v11362 = vpack.c.b16 %v11202, %v11198
        %v11363 = vpack.c.b16 %v11207, %v11203
        %v11364 = vpack.c.b16 %v11208, %v11204
        %v11365 = vpack.c.b16 %v11209, %v11205
        %v11366 = vpack.c.b16 %v11210, %v11206
        %v11367 = vpack.c.b16 %v11215, %v11211
        %v11368 = vpack.c.b16 %v11216, %v11212
        %v11369 = vpack.c.b16 %v11217, %v11213
        %v11370 = vpack.c.b16 %v11218, %v11214
        %v11371 = vpack.c.b16 %v11223, %v11219
        %v11372 = vpack.c.b16 %v11224, %v11220
        %v11373 = vpack.c.b16 %v11225, %v11221
        %v11374 = vpack.c.b16 %v11226, %v11222
        %v11375 = vpack.c.b16 %v11231, %v11227
        %v11376 = vpack.c.b16 %v11232, %v11228
        %v11377 = vpack.c.b16 %v11233, %v11229
        %v11378 = vpack.c.b16 %v11234, %v11230
        %v11379 = vpack.c.b16 %v11239, %v11235
        %v11380 = vpack.c.b16 %v11240, %v11236
        %v11381 = vpack.c.b16 %v11241, %v11237
        %v11382 = vpack.c.b16 %v11242, %v11238
        %v11383 = vpack.c.b16 %v11247, %v11243
        %v11384 = vpack.c.b16 %v11248, %v11244
        %v11385 = vpack.c.b16 %v11249, %v11245
        %v11386 = vpack.c.b16 %v11250, %v11246
        %v11387 = vpack.c.b16 %v11255, %v11251
        %v11388 = vpack.c.b16 %v11256, %v11252
        %v11389 = vpack.c.b16 %v11257, %v11253
        %v11390 = vpack.c.b16 %v11258, %v11254
        %v11391 = vpack.c.b16 %v11263, %v11259
        %v11392 = vpack.c.b16 %v11264, %v11260
        %v11393 = vpack.c.b16 %v11265, %v11261
        %v11394 = vpack.c.b16 %v11266, %v11262
        %11523 = vmatpush.bf16.msra.mxu0 %v11295
        %11524 = vmatpush.bf16.msra.mxu0 %v11291
        %11525 = vmatpush.bf16.msra.mxu0 %v11287
        %11526 = vmatpush.bf16.msra.mxu0 %v11283
        %11527 = vmatpush.bf16.msra.mxu0 %v11279
        %11528 = vmatpush.bf16.msra.mxu0 %v11275
        %11529 = vmatpush.bf16.msra.mxu0 %v11271
        %11530 = vmatpush.bf16.msra.mxu0 %v11267
        %11531 = vmatmul.bf16.gmra.mxu0 %v10875
        %v11532 = vpop.f32.mrf.mxu0
        %v11533 = vadd.f32 %v10691, %v11532
        %v11534 = vpop.f32.mrf.mxu0
        %v11535 = vadd.f32 %v10693, %v11534
        %11536 = vdwg.mxu0
        %11537 = vmatpush.bf16.msra.mxu0 %v11327
        %11538 = vmatpush.bf16.msra.mxu0 %v11323
        %11539 = vmatpush.bf16.msra.mxu0 %v11319
        %11540 = vmatpush.bf16.msra.mxu0 %v11315
        %11541 = vmatpush.bf16.msra.mxu0 %v11311
        %11542 = vmatpush.bf16.msra.mxu0 %v11307
        %11543 = vmatpush.bf16.msra.mxu0 %v11303
        %11544 = vmatpush.bf16.msra.mxu0 %v11299
        %11545 = vmatmul.bf16.gmra.mxu0 %v10876
        %v11546 = vpop.f32.mrf.mxu0
        %v11547 = vadd.f32 %v11533, %v11546
        %v11548 = vpop.f32.mrf.mxu0
        %v11549 = vadd.f32 %v11535, %v11548
        %11550 = vdwg.mxu0
        %11551 = vmatpush.bf16.msra.mxu0 %v11359
        %11552 = vmatpush.bf16.msra.mxu0 %v11355
        %11553 = vmatpush.bf16.msra.mxu0 %v11351
        %11554 = vmatpush.bf16.msra.mxu0 %v11347
        %11555 = vmatpush.bf16.msra.mxu0 %v11343
        %11556 = vmatpush.bf16.msra.mxu0 %v11339
        %11557 = vmatpush.bf16.msra.mxu0 %v11335
        %11558 = vmatpush.bf16.msra.mxu0 %v11331
        %11559 = vmatmul.bf16.gmra.mxu0 %v10877
        %v11560 = vpop.f32.mrf.mxu0
        %v11561 = vadd.f32 %v11547, %v11560
        %v11562 = vpop.f32.mrf.mxu0
        %v11563 = vadd.f32 %v11549, %v11562
        %11564 = vdwg.mxu0
        %11565 = vmatpush.bf16.msra.mxu0 %v11391
        %11566 = vmatpush.bf16.msra.mxu0 %v11387
        %11567 = vmatpush.bf16.msra.mxu0 %v11383
        %11568 = vmatpush.bf16.msra.mxu0 %v11379
        %11569 = vmatpush.bf16.msra.mxu0 %v11375
        %11570 = vmatpush.bf16.msra.mxu0 %v11371
        %11571 = vmatpush.bf16.msra.mxu0 %v11367
        %11572 = vmatpush.bf16.msra.mxu0 %v11363
        %11573 = vmatmul.bf16.gmra.mxu0 %v10878
        %v11574 = vpop.f32.mrf.mxu0
        %v11575 = vadd.f32 %v11561, %v11574
        %v11576 = vpop.f32.mrf.mxu0
        %v11577 = vadd.f32 %v11563, %v11576
        %11578 = vdwg.mxu0
        %11579 = vmatpush.bf16.msra.mxu0 %v11296
        %11580 = vmatpush.bf16.msra.mxu0 %v11292
        %11581 = vmatpush.bf16.msra.mxu0 %v11288
        %11582 = vmatpush.bf16.msra.mxu0 %v11284
        %11583 = vmatpush.bf16.msra.mxu0 %v11280
        %11584 = vmatpush.bf16.msra.mxu0 %v11276
        %11585 = vmatpush.bf16.msra.mxu0 %v11272
        %11586 = vmatpush.bf16.msra.mxu0 %v11268
        %11587 = vmatmul.bf16.gmra.mxu0 %v10875
        %v11588 = vpop.f32.mrf.mxu0
        %v11589 = vadd.f32 %v10747, %v11588
        %v11590 = vpop.f32.mrf.mxu0
        %v11591 = vadd.f32 %v10749, %v11590
        %11592 = vdwg.mxu0
        %11593 = vmatpush.bf16.msra.mxu0 %v11328
        %11594 = vmatpush.bf16.msra.mxu0 %v11324
        %11595 = vmatpush.bf16.msra.mxu0 %v11320
        %11596 = vmatpush.bf16.msra.mxu0 %v11316
        %11597 = vmatpush.bf16.msra.mxu0 %v11312
        %11598 = vmatpush.bf16.msra.mxu0 %v11308
        %11599 = vmatpush.bf16.msra.mxu0 %v11304
        %11600 = vmatpush.bf16.msra.mxu0 %v11300
        %11601 = vmatmul.bf16.gmra.mxu0 %v10876
        %v11602 = vpop.f32.mrf.mxu0
        %v11603 = vadd.f32 %v11589, %v11602
        %v11604 = vpop.f32.mrf.mxu0
        %v11605 = vadd.f32 %v11591, %v11604
        %11606 = vdwg.mxu0
        %11607 = vmatpush.bf16.msra.mxu0 %v11360
        %11608 = vmatpush.bf16.msra.mxu0 %v11356
        %11609 = vmatpush.bf16.msra.mxu0 %v11352
        %11610 = vmatpush.bf16.msra.mxu0 %v11348
        %11611 = vmatpush.bf16.msra.mxu0 %v11344
        %11612 = vmatpush.bf16.msra.mxu0 %v11340
        %11613 = vmatpush.bf16.msra.mxu0 %v11336
        %11614 = vmatpush.bf16.msra.mxu0 %v11332
        %11615 = vmatmul.bf16.gmra.mxu0 %v10877
        %v11616 = vpop.f32.mrf.mxu0
        %v11617 = vadd.f32 %v11603, %v11616
        %v11618 = vpop.f32.mrf.mxu0
        %v11619 = vadd.f32 %v11605, %v11618
        %11620 = vdwg.mxu0
        %11621 = vmatpush.bf16.msra.mxu0 %v11392
        %11622 = vmatpush.bf16.msra.mxu0 %v11388
        %11623 = vmatpush.bf16.msra.mxu0 %v11384
        %11624 = vmatpush.bf16.msra.mxu0 %v11380
        %11625 = vmatpush.bf16.msra.mxu0 %v11376
        %11626 = vmatpush.bf16.msra.mxu0 %v11372
        %11627 = vmatpush.bf16.msra.mxu0 %v11368
        %11628 = vmatpush.bf16.msra.mxu0 %v11364
        %11629 = vmatmul.bf16.gmra.mxu0 %v10878
        %v11630 = vpop.f32.mrf.mxu0
        %v11631 = vadd.f32 %v11617, %v11630
        %v11632 = vpop.f32.mrf.mxu0
        %v11633 = vadd.f32 %v11619, %v11632
        %11634 = vdwg.mxu0
        %11635 = vmatpush.bf16.msra.mxu0 %v11297
        %11636 = vmatpush.bf16.msra.mxu0 %v11293
        %11637 = vmatpush.bf16.msra.mxu0 %v11289
        %11638 = vmatpush.bf16.msra.mxu0 %v11285
        %11639 = vmatpush.bf16.msra.mxu0 %v11281
        %11640 = vmatpush.bf16.msra.mxu0 %v11277
        %11641 = vmatpush.bf16.msra.mxu0 %v11273
        %11642 = vmatpush.bf16.msra.mxu0 %v11269
        %11643 = vmatmul.bf16.gmra.mxu0 %v10875
        %v11644 = vpop.f32.mrf.mxu0
        %v11645 = vadd.f32 %v10803, %v11644
        %v11646 = vpop.f32.mrf.mxu0
        %v11647 = vadd.f32 %v10805, %v11646
        %11648 = vdwg.mxu0
        %11649 = vmatpush.bf16.msra.mxu0 %v11329
        %11650 = vmatpush.bf16.msra.mxu0 %v11325
        %11651 = vmatpush.bf16.msra.mxu0 %v11321
        %11652 = vmatpush.bf16.msra.mxu0 %v11317
        %11653 = vmatpush.bf16.msra.mxu0 %v11313
        %11654 = vmatpush.bf16.msra.mxu0 %v11309
        %11655 = vmatpush.bf16.msra.mxu0 %v11305
        %11656 = vmatpush.bf16.msra.mxu0 %v11301
        %11657 = vmatmul.bf16.gmra.mxu0 %v10876
        %v11658 = vpop.f32.mrf.mxu0
        %v11659 = vadd.f32 %v11645, %v11658
        %v11660 = vpop.f32.mrf.mxu0
        %v11661 = vadd.f32 %v11647, %v11660
        %11662 = vdwg.mxu0
        %11663 = vmatpush.bf16.msra.mxu0 %v11361
        %11664 = vmatpush.bf16.msra.mxu0 %v11357
        %11665 = vmatpush.bf16.msra.mxu0 %v11353
        %11666 = vmatpush.bf16.msra.mxu0 %v11349
        %11667 = vmatpush.bf16.msra.mxu0 %v11345
        %11668 = vmatpush.bf16.msra.mxu0 %v11341
        %11669 = vmatpush.bf16.msra.mxu0 %v11337
        %11670 = vmatpush.bf16.msra.mxu0 %v11333
        %11671 = vmatmul.bf16.gmra.mxu0 %v10877
        %v11672 = vpop.f32.mrf.mxu0
        %v11673 = vadd.f32 %v11659, %v11672
        %v11674 = vpop.f32.mrf.mxu0
        %v11675 = vadd.f32 %v11661, %v11674
        %11676 = vdwg.mxu0
        %11677 = vmatpush.bf16.msra.mxu0 %v11393
        %11678 = vmatpush.bf16.msra.mxu0 %v11389
        %11679 = vmatpush.bf16.msra.mxu0 %v11385
        %11680 = vmatpush.bf16.msra.mxu0 %v11381
        %11681 = vmatpush.bf16.msra.mxu0 %v11377
        %11682 = vmatpush.bf16.msra.mxu0 %v11373
        %11683 = vmatpush.bf16.msra.mxu0 %v11369
        %11684 = vmatpush.bf16.msra.mxu0 %v11365
        %11685 = vmatmul.bf16.gmra.mxu0 %v10878
        %v11686 = vpop.f32.mrf.mxu0
        %v11687 = vadd.f32 %v11673, %v11686
        %v11688 = vpop.f32.mrf.mxu0
        %v11689 = vadd.f32 %v11675, %v11688
        %11690 = vdwg.mxu0
        %11691 = vmatpush.bf16.msra.mxu0 %v11298
        %11692 = vmatpush.bf16.msra.mxu0 %v11294
        %11693 = vmatpush.bf16.msra.mxu0 %v11290
        %11694 = vmatpush.bf16.msra.mxu0 %v11286
        %11695 = vmatpush.bf16.msra.mxu0 %v11282
        %11696 = vmatpush.bf16.msra.mxu0 %v11278
        %11697 = vmatpush.bf16.msra.mxu0 %v11274
        %11698 = vmatpush.bf16.msra.mxu0 %v11270
        %11699 = vmatmul.bf16.gmra.mxu0 %v10875
        %v11700 = vpop.f32.mrf.mxu0
        %v11701 = vadd.f32 %v10859, %v11700
        %v11702 = vpop.f32.mrf.mxu0
        %v11703 = vadd.f32 %v10861, %v11702
        %11704 = vdwg.mxu0
        %11705 = vmatpush.bf16.msra.mxu0 %v11330
        %11706 = vmatpush.bf16.msra.mxu0 %v11326
        %11707 = vmatpush.bf16.msra.mxu0 %v11322
        %11708 = vmatpush.bf16.msra.mxu0 %v11318
        %11709 = vmatpush.bf16.msra.mxu0 %v11314
        %11710 = vmatpush.bf16.msra.mxu0 %v11310
        %11711 = vmatpush.bf16.msra.mxu0 %v11306
        %11712 = vmatpush.bf16.msra.mxu0 %v11302
        %11713 = vmatmul.bf16.gmra.mxu0 %v10876
        %v11714 = vpop.f32.mrf.mxu0
        %v11715 = vadd.f32 %v11701, %v11714
        %v11716 = vpop.f32.mrf.mxu0
        %v11717 = vadd.f32 %v11703, %v11716
        %11718 = vdwg.mxu0
        %11719 = vmatpush.bf16.msra.mxu0 %v11362
        %11720 = vmatpush.bf16.msra.mxu0 %v11358
        %11721 = vmatpush.bf16.msra.mxu0 %v11354
        %11722 = vmatpush.bf16.msra.mxu0 %v11350
        %11723 = vmatpush.bf16.msra.mxu0 %v11346
        %11724 = vmatpush.bf16.msra.mxu0 %v11342
        %11725 = vmatpush.bf16.msra.mxu0 %v11338
        %11726 = vmatpush.bf16.msra.mxu0 %v11334
        %11727 = vmatmul.bf16.gmra.mxu0 %v10877
        %v11728 = vpop.f32.mrf.mxu0
        %v11729 = vadd.f32 %v11715, %v11728
        %v11730 = vpop.f32.mrf.mxu0
        %v11731 = vadd.f32 %v11717, %v11730
        %11732 = vdwg.mxu0
        %11733 = vmatpush.bf16.msra.mxu0 %v11394
        %11734 = vmatpush.bf16.msra.mxu0 %v11390
        %11735 = vmatpush.bf16.msra.mxu0 %v11386
        %11736 = vmatpush.bf16.msra.mxu0 %v11382
        %11737 = vmatpush.bf16.msra.mxu0 %v11378
        %11738 = vmatpush.bf16.msra.mxu0 %v11374
        %11739 = vmatpush.bf16.msra.mxu0 %v11370
        %11740 = vmatpush.bf16.msra.mxu0 %v11366
        %11741 = vmatmul.bf16.gmra.mxu0 %v10878
        %v11742 = vpop.f32.mrf.mxu0
        %v11743 = vadd.f32 %v11729, %v11742
        %v11744 = vpop.f32.mrf.mxu0
        %v11745 = vadd.f32 %v11731, %v11744
        %11746 = vdwg.mxu0
        %v11747 = vrot.slane %v9681, 1
        %v11748 = vrot.slane %v9682, 1
        %v11749 = vrot.slane %v9683, 1
        %v11750 = vrot.slane %v9684, 1
        %v11751 = vrot.slane %v9685, 1
        %v11752 = vrot.slane %v9686, 1
        %v11753 = vrot.slane %v9687, 1
        %v11754 = vrot.slane %v9688, 1
        %v11755 = vsel %vm2303, %v11747, %v11751
        %v11756 = vsel %vm2303, %v11748, %v11752
        %v11757 = vsel %vm2303, %v11749, %v11753
        %v11758 = vsel %vm2303, %v11750, %v11754
        %v11759 = vsel %vm2303, %v11751, %v11747
        %v11760 = vsel %vm2303, %v11752, %v11748
        %v11761 = vsel %vm2303, %v11753, %v11749
        %v11762 = vsel %vm2303, %v11754, %v11750
        %v11763 = vsel %vm2312, %v11755, 0.0
        %v11764 = vsel %vm2312, %v11756, 0.0
        %v11765 = vsel %vm2312, %v11757, 0.0
        %v11766 = vsel %vm2312, %v11758, 0.0
        %v11767 = vsel %vm2313, %v11759, 0.0
        %v11768 = vsel %vm2313, %v11760, 0.0
        %v11769 = vsel %vm2313, %v11761, 0.0
        %v11770 = vsel %vm2313, %v11762, 0.0
        %v11771 = vpack.c.bf16 %v11764, %v11763
        %v11772 = vpack.c.bf16 %v11766, %v11765
        %v11773 = vpack.c.bf16 %v11768, %v11767
        %v11774 = vpack.c.bf16 %v11770, %v11769
        %s11775 = scalar_lea.vmem [#allocation5], 11264
        %v11776 = vld [vmem:[%s11775] sm:$0xff]
        %v11777 = vld [vmem:[%s11775 + $0x8] sm:$0xff]
        %v11778 = vld [vmem:[%s11775 + $0x10] sm:$0xff]
        %v11779 = vld [vmem:[%s11775 + $0x18] sm:$0xff]
        %v11780 = vld [vmem:[%s11775 + $0x20] sm:$0xff]
        %v11781 = vld [vmem:[%s11775 + $0x28] sm:$0xff]
        %v11782 = vld [vmem:[%s11775 + $0x30] sm:$0xff]
        %v11783 = vld [vmem:[%s11775 + $0x38] sm:$0xff]
        %v11784 = vld [vmem:[%s11775 + $0x40] sm:$0xff]
        %v11785 = vld [vmem:[%s11775 + $0x48] sm:$0xff]
        %v11786 = vld [vmem:[%s11775 + $0x50] sm:$0xff]
        %v11787 = vld [vmem:[%s11775 + $0x58] sm:$0xff]
        %v11788 = vld [vmem:[%s11775 + $0x60] sm:$0xff]
        %v11789 = vld [vmem:[%s11775 + $0x68] sm:$0xff]
        %v11790 = vld [vmem:[%s11775 + $0x70] sm:$0xff]
        %v11791 = vld [vmem:[%s11775 + $0x78] sm:$0xff]
        %v11792 = vld [vmem:[%s11775 + $0x80] sm:$0xff]
        %v11793 = vld [vmem:[%s11775 + $0x88] sm:$0xff]
        %v11794 = vld [vmem:[%s11775 + $0x90] sm:$0xff]
        %v11795 = vld [vmem:[%s11775 + $0x98] sm:$0xff]
        %v11796 = vld [vmem:[%s11775 + $0xa0] sm:$0xff]
        %v11797 = vld [vmem:[%s11775 + $0xa8] sm:$0xff]
        %v11798 = vld [vmem:[%s11775 + $0xb0] sm:$0xff]
        %v11799 = vld [vmem:[%s11775 + $0xb8] sm:$0xff]
        %v11800 = vld [vmem:[%s11775 + $0xc0] sm:$0xff]
        %v11801 = vld [vmem:[%s11775 + $0xc8] sm:$0xff]
        %v11802 = vld [vmem:[%s11775 + $0xd0] sm:$0xff]
        %v11803 = vld [vmem:[%s11775 + $0xd8] sm:$0xff]
        %v11804 = vld [vmem:[%s11775 + $0xe0] sm:$0xff]
        %v11805 = vld [vmem:[%s11775 + $0xe8] sm:$0xff]
        %v11806 = vld [vmem:[%s11775 + $0xf0] sm:$0xff]
        %v11807 = vld [vmem:[%s11775 + $0xf8] sm:$0xff]
        %v11808 = vld [vmem:[%s11775 + $0x100] sm:$0xff]
        %v11809 = vld [vmem:[%s11775 + $0x108] sm:$0xff]
        %v11810 = vld [vmem:[%s11775 + $0x110] sm:$0xff]
        %v11811 = vld [vmem:[%s11775 + $0x118] sm:$0xff]
        %v11812 = vld [vmem:[%s11775 + $0x120] sm:$0xff]
        %v11813 = vld [vmem:[%s11775 + $0x128] sm:$0xff]
        %v11814 = vld [vmem:[%s11775 + $0x130] sm:$0xff]
        %v11815 = vld [vmem:[%s11775 + $0x138] sm:$0xff]
        %v11816 = vld [vmem:[%s11775 + $0x140] sm:$0xff]
        %v11817 = vld [vmem:[%s11775 + $0x148] sm:$0xff]
        %v11818 = vld [vmem:[%s11775 + $0x150] sm:$0xff]
        %v11819 = vld [vmem:[%s11775 + $0x158] sm:$0xff]
        %v11820 = vld [vmem:[%s11775 + $0x160] sm:$0xff]
        %v11821 = vld [vmem:[%s11775 + $0x168] sm:$0xff]
        %v11822 = vld [vmem:[%s11775 + $0x170] sm:$0xff]
        %v11823 = vld [vmem:[%s11775 + $0x178] sm:$0xff]
        %v11824 = vld [vmem:[%s11775 + $0x180] sm:$0xff]
        %v11825 = vld [vmem:[%s11775 + $0x188] sm:$0xff]
        %v11826 = vld [vmem:[%s11775 + $0x190] sm:$0xff]
        %v11827 = vld [vmem:[%s11775 + $0x198] sm:$0xff]
        %v11828 = vld [vmem:[%s11775 + $0x1a0] sm:$0xff]
        %v11829 = vld [vmem:[%s11775 + $0x1a8] sm:$0xff]
        %v11830 = vld [vmem:[%s11775 + $0x1b0] sm:$0xff]
        %v11831 = vld [vmem:[%s11775 + $0x1b8] sm:$0xff]
        %v11832 = vld [vmem:[%s11775 + $0x1c0] sm:$0xff]
        %v11833 = vld [vmem:[%s11775 + $0x1c8] sm:$0xff]
        %v11834 = vld [vmem:[%s11775 + $0x1d0] sm:$0xff]
        %v11835 = vld [vmem:[%s11775 + $0x1d8] sm:$0xff]
        %v11836 = vld [vmem:[%s11775 + $0x1e0] sm:$0xff]
        %v11837 = vld [vmem:[%s11775 + $0x1e8] sm:$0xff]
        %v11838 = vld [vmem:[%s11775 + $0x1f0] sm:$0xff]
        %v11839 = vld [vmem:[%s11775 + $0x1f8] sm:$0xff]
        %v11840 = vld [vmem:[%s11775 + $0x200] sm:$0xff]
        %v11841 = vld [vmem:[%s11775 + $0x208] sm:$0xff]
        %v11842 = vld [vmem:[%s11775 + $0x210] sm:$0xff]
        %v11843 = vld [vmem:[%s11775 + $0x218] sm:$0xff]
        %v11844 = vld [vmem:[%s11775 + $0x220] sm:$0xff]
        %v11845 = vld [vmem:[%s11775 + $0x228] sm:$0xff]
        %v11846 = vld [vmem:[%s11775 + $0x230] sm:$0xff]
        %v11847 = vld [vmem:[%s11775 + $0x238] sm:$0xff]
        %v11848 = vld [vmem:[%s11775 + $0x240] sm:$0xff]
        %v11849 = vld [vmem:[%s11775 + $0x248] sm:$0xff]
        %v11850 = vld [vmem:[%s11775 + $0x250] sm:$0xff]
        %v11851 = vld [vmem:[%s11775 + $0x258] sm:$0xff]
        %v11852 = vld [vmem:[%s11775 + $0x260] sm:$0xff]
        %v11853 = vld [vmem:[%s11775 + $0x268] sm:$0xff]
        %v11854 = vld [vmem:[%s11775 + $0x270] sm:$0xff]
        %v11855 = vld [vmem:[%s11775 + $0x278] sm:$0xff]
        %v11856 = vld [vmem:[%s11775 + $0x280] sm:$0xff]
        %v11857 = vld [vmem:[%s11775 + $0x288] sm:$0xff]
        %v11858 = vld [vmem:[%s11775 + $0x290] sm:$0xff]
        %v11859 = vld [vmem:[%s11775 + $0x298] sm:$0xff]
        %v11860 = vld [vmem:[%s11775 + $0x2a0] sm:$0xff]
        %v11861 = vld [vmem:[%s11775 + $0x2a8] sm:$0xff]
        %v11862 = vld [vmem:[%s11775 + $0x2b0] sm:$0xff]
        %v11863 = vld [vmem:[%s11775 + $0x2b8] sm:$0xff]
        %v11864 = vld [vmem:[%s11775 + $0x2c0] sm:$0xff]
        %v11865 = vld [vmem:[%s11775 + $0x2c8] sm:$0xff]
        %v11866 = vld [vmem:[%s11775 + $0x2d0] sm:$0xff]
        %v11867 = vld [vmem:[%s11775 + $0x2d8] sm:$0xff]
        %v11868 = vld [vmem:[%s11775 + $0x2e0] sm:$0xff]
        %v11869 = vld [vmem:[%s11775 + $0x2e8] sm:$0xff]
        %v11870 = vld [vmem:[%s11775 + $0x2f0] sm:$0xff]
        %v11871 = vld [vmem:[%s11775 + $0x2f8] sm:$0xff]
        %v11872 = vld [vmem:[%s11775 + $0x300] sm:$0xff]
        %v11873 = vld [vmem:[%s11775 + $0x308] sm:$0xff]
        %v11874 = vld [vmem:[%s11775 + $0x310] sm:$0xff]
        %v11875 = vld [vmem:[%s11775 + $0x318] sm:$0xff]
        %v11876 = vld [vmem:[%s11775 + $0x320] sm:$0xff]
        %v11877 = vld [vmem:[%s11775 + $0x328] sm:$0xff]
        %v11878 = vld [vmem:[%s11775 + $0x330] sm:$0xff]
        %v11879 = vld [vmem:[%s11775 + $0x338] sm:$0xff]
        %v11880 = vld [vmem:[%s11775 + $0x340] sm:$0xff]
        %v11881 = vld [vmem:[%s11775 + $0x348] sm:$0xff]
        %v11882 = vld [vmem:[%s11775 + $0x350] sm:$0xff]
        %v11883 = vld [vmem:[%s11775 + $0x358] sm:$0xff]
        %v11884 = vld [vmem:[%s11775 + $0x360] sm:$0xff]
        %v11885 = vld [vmem:[%s11775 + $0x368] sm:$0xff]
        %v11886 = vld [vmem:[%s11775 + $0x370] sm:$0xff]
        %v11887 = vld [vmem:[%s11775 + $0x378] sm:$0xff]
        %v11888 = vld [vmem:[%s11775 + $0x380] sm:$0xff]
        %v11889 = vld [vmem:[%s11775 + $0x388] sm:$0xff]
        %v11890 = vld [vmem:[%s11775 + $0x390] sm:$0xff]
        %v11891 = vld [vmem:[%s11775 + $0x398] sm:$0xff]
        %v11892 = vld [vmem:[%s11775 + $0x3a0] sm:$0xff]
        %v11893 = vld [vmem:[%s11775 + $0x3a8] sm:$0xff]
        %v11894 = vld [vmem:[%s11775 + $0x3b0] sm:$0xff]
        %v11895 = vld [vmem:[%s11775 + $0x3b8] sm:$0xff]
        %v11896 = vld [vmem:[%s11775 + $0x3c0] sm:$0xff]
        %v11897 = vld [vmem:[%s11775 + $0x3c8] sm:$0xff]
        %v11898 = vld [vmem:[%s11775 + $0x3d0] sm:$0xff]
        %v11899 = vld [vmem:[%s11775 + $0x3d8] sm:$0xff]
        %v11900 = vld [vmem:[%s11775 + $0x3e0] sm:$0xff]
        %v11901 = vld [vmem:[%s11775 + $0x3e8] sm:$0xff]
        %v11902 = vld [vmem:[%s11775 + $0x3f0] sm:$0xff]
        %v11903 = vld [vmem:[%s11775 + $0x3f8] sm:$0xff]
        %v11908 = vunpack.c.l.b16 %v11771
        %v11909 = vunpack.c.h.b16 %v11771
        %v11910 = vunpack.c.l.b16 %v11772
        %v11911 = vunpack.c.h.b16 %v11772
        %v11912 = vunpack.c.l.b16 %v11773
        %v11913 = vunpack.c.h.b16 %v11773
        %v11914 = vunpack.c.l.b16 %v11774
        %v11915 = vunpack.c.h.b16 %v11774
        %v11916 = vpack.c.b16 %v11912, %v11908
        %v11917 = vpack.c.b16 %v11913, %v11909
        %v11918 = vpack.c.b16 %v11914, %v11910
        %v11919 = vpack.c.b16 %v11915, %v11911
        %v12052 = vunpack.c.l.b16 %v11776
        %v12053 = vunpack.c.h.b16 %v11776
        %v12054 = vunpack.c.l.b16 %v11777
        %v12055 = vunpack.c.h.b16 %v11777
        %v12056 = vunpack.c.l.b16 %v11778
        %v12057 = vunpack.c.h.b16 %v11778
        %v12058 = vunpack.c.l.b16 %v11779
        %v12059 = vunpack.c.h.b16 %v11779
        %v12060 = vunpack.c.l.b16 %v11780
        %v12061 = vunpack.c.h.b16 %v11780
        %v12062 = vunpack.c.l.b16 %v11781
        %v12063 = vunpack.c.h.b16 %v11781
        %v12064 = vunpack.c.l.b16 %v11782
        %v12065 = vunpack.c.h.b16 %v11782
        %v12066 = vunpack.c.l.b16 %v11783
        %v12067 = vunpack.c.h.b16 %v11783
        %v12068 = vunpack.c.l.b16 %v11784
        %v12069 = vunpack.c.h.b16 %v11784
        %v12070 = vunpack.c.l.b16 %v11785
        %v12071 = vunpack.c.h.b16 %v11785
        %v12072 = vunpack.c.l.b16 %v11786
        %v12073 = vunpack.c.h.b16 %v11786
        %v12074 = vunpack.c.l.b16 %v11787
        %v12075 = vunpack.c.h.b16 %v11787
        %v12076 = vunpack.c.l.b16 %v11788
        %v12077 = vunpack.c.h.b16 %v11788
        %v12078 = vunpack.c.l.b16 %v11789
        %v12079 = vunpack.c.h.b16 %v11789
        %v12080 = vunpack.c.l.b16 %v11790
        %v12081 = vunpack.c.h.b16 %v11790
        %v12082 = vunpack.c.l.b16 %v11791
        %v12083 = vunpack.c.h.b16 %v11791
        %v12084 = vunpack.c.l.b16 %v11792
        %v12085 = vunpack.c.h.b16 %v11792
        %v12086 = vunpack.c.l.b16 %v11793
        %v12087 = vunpack.c.h.b16 %v11793
        %v12088 = vunpack.c.l.b16 %v11794
        %v12089 = vunpack.c.h.b16 %v11794
        %v12090 = vunpack.c.l.b16 %v11795
        %v12091 = vunpack.c.h.b16 %v11795
        %v12092 = vunpack.c.l.b16 %v11796
        %v12093 = vunpack.c.h.b16 %v11796
        %v12094 = vunpack.c.l.b16 %v11797
        %v12095 = vunpack.c.h.b16 %v11797
        %v12096 = vunpack.c.l.b16 %v11798
        %v12097 = vunpack.c.h.b16 %v11798
        %v12098 = vunpack.c.l.b16 %v11799
        %v12099 = vunpack.c.h.b16 %v11799
        %v12100 = vunpack.c.l.b16 %v11800
        %v12101 = vunpack.c.h.b16 %v11800
        %v12102 = vunpack.c.l.b16 %v11801
        %v12103 = vunpack.c.h.b16 %v11801
        %v12104 = vunpack.c.l.b16 %v11802
        %v12105 = vunpack.c.h.b16 %v11802
        %v12106 = vunpack.c.l.b16 %v11803
        %v12107 = vunpack.c.h.b16 %v11803
        %v12108 = vunpack.c.l.b16 %v11804
        %v12109 = vunpack.c.h.b16 %v11804
        %v12110 = vunpack.c.l.b16 %v11805
        %v12111 = vunpack.c.h.b16 %v11805
        %v12112 = vunpack.c.l.b16 %v11806
        %v12113 = vunpack.c.h.b16 %v11806
        %v12114 = vunpack.c.l.b16 %v11807
        %v12115 = vunpack.c.h.b16 %v11807
        %v12116 = vunpack.c.l.b16 %v11808
        %v12117 = vunpack.c.h.b16 %v11808
        %v12118 = vunpack.c.l.b16 %v11809
        %v12119 = vunpack.c.h.b16 %v11809
        %v12120 = vunpack.c.l.b16 %v11810
        %v12121 = vunpack.c.h.b16 %v11810
        %v12122 = vunpack.c.l.b16 %v11811
        %v12123 = vunpack.c.h.b16 %v11811
        %v12124 = vunpack.c.l.b16 %v11812
        %v12125 = vunpack.c.h.b16 %v11812
        %v12126 = vunpack.c.l.b16 %v11813
        %v12127 = vunpack.c.h.b16 %v11813
        %v12128 = vunpack.c.l.b16 %v11814
        %v12129 = vunpack.c.h.b16 %v11814
        %v12130 = vunpack.c.l.b16 %v11815
        %v12131 = vunpack.c.h.b16 %v11815
        %v12132 = vunpack.c.l.b16 %v11816
        %v12133 = vunpack.c.h.b16 %v11816
        %v12134 = vunpack.c.l.b16 %v11817
        %v12135 = vunpack.c.h.b16 %v11817
        %v12136 = vunpack.c.l.b16 %v11818
        %v12137 = vunpack.c.h.b16 %v11818
        %v12138 = vunpack.c.l.b16 %v11819
        %v12139 = vunpack.c.h.b16 %v11819
        %v12140 = vunpack.c.l.b16 %v11820
        %v12141 = vunpack.c.h.b16 %v11820
        %v12142 = vunpack.c.l.b16 %v11821
        %v12143 = vunpack.c.h.b16 %v11821
        %v12144 = vunpack.c.l.b16 %v11822
        %v12145 = vunpack.c.h.b16 %v11822
        %v12146 = vunpack.c.l.b16 %v11823
        %v12147 = vunpack.c.h.b16 %v11823
        %v12148 = vunpack.c.l.b16 %v11824
        %v12149 = vunpack.c.h.b16 %v11824
        %v12150 = vunpack.c.l.b16 %v11825
        %v12151 = vunpack.c.h.b16 %v11825
        %v12152 = vunpack.c.l.b16 %v11826
        %v12153 = vunpack.c.h.b16 %v11826
        %v12154 = vunpack.c.l.b16 %v11827
        %v12155 = vunpack.c.h.b16 %v11827
        %v12156 = vunpack.c.l.b16 %v11828
        %v12157 = vunpack.c.h.b16 %v11828
        %v12158 = vunpack.c.l.b16 %v11829
        %v12159 = vunpack.c.h.b16 %v11829
        %v12160 = vunpack.c.l.b16 %v11830
        %v12161 = vunpack.c.h.b16 %v11830
        %v12162 = vunpack.c.l.b16 %v11831
        %v12163 = vunpack.c.h.b16 %v11831
        %v12164 = vunpack.c.l.b16 %v11832
        %v12165 = vunpack.c.h.b16 %v11832
        %v12166 = vunpack.c.l.b16 %v11833
        %v12167 = vunpack.c.h.b16 %v11833
        %v12168 = vunpack.c.l.b16 %v11834
        %v12169 = vunpack.c.h.b16 %v11834
        %v12170 = vunpack.c.l.b16 %v11835
        %v12171 = vunpack.c.h.b16 %v11835
        %v12172 = vunpack.c.l.b16 %v11836
        %v12173 = vunpack.c.h.b16 %v11836
        %v12174 = vunpack.c.l.b16 %v11837
        %v12175 = vunpack.c.h.b16 %v11837
        %v12176 = vunpack.c.l.b16 %v11838
        %v12177 = vunpack.c.h.b16 %v11838
        %v12178 = vunpack.c.l.b16 %v11839
        %v12179 = vunpack.c.h.b16 %v11839
        %v12180 = vunpack.c.l.b16 %v11840
        %v12181 = vunpack.c.h.b16 %v11840
        %v12182 = vunpack.c.l.b16 %v11841
        %v12183 = vunpack.c.h.b16 %v11841
        %v12184 = vunpack.c.l.b16 %v11842
        %v12185 = vunpack.c.h.b16 %v11842
        %v12186 = vunpack.c.l.b16 %v11843
        %v12187 = vunpack.c.h.b16 %v11843
        %v12188 = vunpack.c.l.b16 %v11844
        %v12189 = vunpack.c.h.b16 %v11844
        %v12190 = vunpack.c.l.b16 %v11845
        %v12191 = vunpack.c.h.b16 %v11845
        %v12192 = vunpack.c.l.b16 %v11846
        %v12193 = vunpack.c.h.b16 %v11846
        %v12194 = vunpack.c.l.b16 %v11847
        %v12195 = vunpack.c.h.b16 %v11847
        %v12196 = vunpack.c.l.b16 %v11848
        %v12197 = vunpack.c.h.b16 %v11848
        %v12198 = vunpack.c.l.b16 %v11849
        %v12199 = vunpack.c.h.b16 %v11849
        %v12200 = vunpack.c.l.b16 %v11850
        %v12201 = vunpack.c.h.b16 %v11850
        %v12202 = vunpack.c.l.b16 %v11851
        %v12203 = vunpack.c.h.b16 %v11851
        %v12204 = vunpack.c.l.b16 %v11852
        %v12205 = vunpack.c.h.b16 %v11852
        %v12206 = vunpack.c.l.b16 %v11853
        %v12207 = vunpack.c.h.b16 %v11853
        %v12208 = vunpack.c.l.b16 %v11854
        %v12209 = vunpack.c.h.b16 %v11854
        %v12210 = vunpack.c.l.b16 %v11855
        %v12211 = vunpack.c.h.b16 %v11855
        %v12212 = vunpack.c.l.b16 %v11856
        %v12213 = vunpack.c.h.b16 %v11856
        %v12214 = vunpack.c.l.b16 %v11857
        %v12215 = vunpack.c.h.b16 %v11857
        %v12216 = vunpack.c.l.b16 %v11858
        %v12217 = vunpack.c.h.b16 %v11858
        %v12218 = vunpack.c.l.b16 %v11859
        %v12219 = vunpack.c.h.b16 %v11859
        %v12220 = vunpack.c.l.b16 %v11860
        %v12221 = vunpack.c.h.b16 %v11860
        %v12222 = vunpack.c.l.b16 %v11861
        %v12223 = vunpack.c.h.b16 %v11861
        %v12224 = vunpack.c.l.b16 %v11862
        %v12225 = vunpack.c.h.b16 %v11862
        %v12226 = vunpack.c.l.b16 %v11863
        %v12227 = vunpack.c.h.b16 %v11863
        %v12228 = vunpack.c.l.b16 %v11864
        %v12229 = vunpack.c.h.b16 %v11864
        %v12230 = vunpack.c.l.b16 %v11865
        %v12231 = vunpack.c.h.b16 %v11865
        %v12232 = vunpack.c.l.b16 %v11866
        %v12233 = vunpack.c.h.b16 %v11866
        %v12234 = vunpack.c.l.b16 %v11867
        %v12235 = vunpack.c.h.b16 %v11867
        %v12236 = vunpack.c.l.b16 %v11868
        %v12237 = vunpack.c.h.b16 %v11868
        %v12238 = vunpack.c.l.b16 %v11869
        %v12239 = vunpack.c.h.b16 %v11869
        %v12240 = vunpack.c.l.b16 %v11870
        %v12241 = vunpack.c.h.b16 %v11870
        %v12242 = vunpack.c.l.b16 %v11871
        %v12243 = vunpack.c.h.b16 %v11871
        %v12244 = vunpack.c.l.b16 %v11872
        %v12245 = vunpack.c.h.b16 %v11872
        %v12246 = vunpack.c.l.b16 %v11873
        %v12247 = vunpack.c.h.b16 %v11873
        %v12248 = vunpack.c.l.b16 %v11874
        %v12249 = vunpack.c.h.b16 %v11874
        %v12250 = vunpack.c.l.b16 %v11875
        %v12251 = vunpack.c.h.b16 %v11875
        %v12252 = vunpack.c.l.b16 %v11876
        %v12253 = vunpack.c.h.b16 %v11876
        %v12254 = vunpack.c.l.b16 %v11877
        %v12255 = vunpack.c.h.b16 %v11877
        %v12256 = vunpack.c.l.b16 %v11878
        %v12257 = vunpack.c.h.b16 %v11878
        %v12258 = vunpack.c.l.b16 %v11879
        %v12259 = vunpack.c.h.b16 %v11879
        %v12260 = vunpack.c.l.b16 %v11880
        %v12261 = vunpack.c.h.b16 %v11880
        %v12262 = vunpack.c.l.b16 %v11881
        %v12263 = vunpack.c.h.b16 %v11881
        %v12264 = vunpack.c.l.b16 %v11882
        %v12265 = vunpack.c.h.b16 %v11882
        %v12266 = vunpack.c.l.b16 %v11883
        %v12267 = vunpack.c.h.b16 %v11883
        %v12268 = vunpack.c.l.b16 %v11884
        %v12269 = vunpack.c.h.b16 %v11884
        %v12270 = vunpack.c.l.b16 %v11885
        %v12271 = vunpack.c.h.b16 %v11885
        %v12272 = vunpack.c.l.b16 %v11886
        %v12273 = vunpack.c.h.b16 %v11886
        %v12274 = vunpack.c.l.b16 %v11887
        %v12275 = vunpack.c.h.b16 %v11887
        %v12276 = vunpack.c.l.b16 %v11888
        %v12277 = vunpack.c.h.b16 %v11888
        %v12278 = vunpack.c.l.b16 %v11889
        %v12279 = vunpack.c.h.b16 %v11889
        %v12280 = vunpack.c.l.b16 %v11890
        %v12281 = vunpack.c.h.b16 %v11890
        %v12282 = vunpack.c.l.b16 %v11891
        %v12283 = vunpack.c.h.b16 %v11891
        %v12284 = vunpack.c.l.b16 %v11892
        %v12285 = vunpack.c.h.b16 %v11892
        %v12286 = vunpack.c.l.b16 %v11893
        %v12287 = vunpack.c.h.b16 %v11893
        %v12288 = vunpack.c.l.b16 %v11894
        %v12289 = vunpack.c.h.b16 %v11894
        %v12290 = vunpack.c.l.b16 %v11895
        %v12291 = vunpack.c.h.b16 %v11895
        %v12292 = vunpack.c.l.b16 %v11896
        %v12293 = vunpack.c.h.b16 %v11896
        %v12294 = vunpack.c.l.b16 %v11897
        %v12295 = vunpack.c.h.b16 %v11897
        %v12296 = vunpack.c.l.b16 %v11898
        %v12297 = vunpack.c.h.b16 %v11898
        %v12298 = vunpack.c.l.b16 %v11899
        %v12299 = vunpack.c.h.b16 %v11899
        %v12300 = vunpack.c.l.b16 %v11900
        %v12301 = vunpack.c.h.b16 %v11900
        %v12302 = vunpack.c.l.b16 %v11901
        %v12303 = vunpack.c.h.b16 %v11901
        %v12304 = vunpack.c.l.b16 %v11902
        %v12305 = vunpack.c.h.b16 %v11902
        %v12306 = vunpack.c.l.b16 %v11903
        %v12307 = vunpack.c.h.b16 %v11903
        %v12308 = vpack.c.b16 %v12056, %v12052
        %v12309 = vpack.c.b16 %v12057, %v12053
        %v12310 = vpack.c.b16 %v12058, %v12054
        %v12311 = vpack.c.b16 %v12059, %v12055
        %v12312 = vpack.c.b16 %v12064, %v12060
        %v12313 = vpack.c.b16 %v12065, %v12061
        %v12314 = vpack.c.b16 %v12066, %v12062
        %v12315 = vpack.c.b16 %v12067, %v12063
        %v12316 = vpack.c.b16 %v12072, %v12068
        %v12317 = vpack.c.b16 %v12073, %v12069
        %v12318 = vpack.c.b16 %v12074, %v12070
        %v12319 = vpack.c.b16 %v12075, %v12071
        %v12320 = vpack.c.b16 %v12080, %v12076
        %v12321 = vpack.c.b16 %v12081, %v12077
        %v12322 = vpack.c.b16 %v12082, %v12078
        %v12323 = vpack.c.b16 %v12083, %v12079
        %v12324 = vpack.c.b16 %v12088, %v12084
        %v12325 = vpack.c.b16 %v12089, %v12085
        %v12326 = vpack.c.b16 %v12090, %v12086
        %v12327 = vpack.c.b16 %v12091, %v12087
        %v12328 = vpack.c.b16 %v12096, %v12092
        %v12329 = vpack.c.b16 %v12097, %v12093
        %v12330 = vpack.c.b16 %v12098, %v12094
        %v12331 = vpack.c.b16 %v12099, %v12095
        %v12332 = vpack.c.b16 %v12104, %v12100
        %v12333 = vpack.c.b16 %v12105, %v12101
        %v12334 = vpack.c.b16 %v12106, %v12102
        %v12335 = vpack.c.b16 %v12107, %v12103
        %v12336 = vpack.c.b16 %v12112, %v12108
        %v12337 = vpack.c.b16 %v12113, %v12109
        %v12338 = vpack.c.b16 %v12114, %v12110
        %v12339 = vpack.c.b16 %v12115, %v12111
        %v12340 = vpack.c.b16 %v12120, %v12116
        %v12341 = vpack.c.b16 %v12121, %v12117
        %v12342 = vpack.c.b16 %v12122, %v12118
        %v12343 = vpack.c.b16 %v12123, %v12119
        %v12344 = vpack.c.b16 %v12128, %v12124
        %v12345 = vpack.c.b16 %v12129, %v12125
        %v12346 = vpack.c.b16 %v12130, %v12126
        %v12347 = vpack.c.b16 %v12131, %v12127
        %v12348 = vpack.c.b16 %v12136, %v12132
        %v12349 = vpack.c.b16 %v12137, %v12133
        %v12350 = vpack.c.b16 %v12138, %v12134
        %v12351 = vpack.c.b16 %v12139, %v12135
        %v12352 = vpack.c.b16 %v12144, %v12140
        %v12353 = vpack.c.b16 %v12145, %v12141
        %v12354 = vpack.c.b16 %v12146, %v12142
        %v12355 = vpack.c.b16 %v12147, %v12143
        %v12356 = vpack.c.b16 %v12152, %v12148
        %v12357 = vpack.c.b16 %v12153, %v12149
        %v12358 = vpack.c.b16 %v12154, %v12150
        %v12359 = vpack.c.b16 %v12155, %v12151
        %v12360 = vpack.c.b16 %v12160, %v12156
        %v12361 = vpack.c.b16 %v12161, %v12157
        %v12362 = vpack.c.b16 %v12162, %v12158
        %v12363 = vpack.c.b16 %v12163, %v12159
        %v12364 = vpack.c.b16 %v12168, %v12164
        %v12365 = vpack.c.b16 %v12169, %v12165
        %v12366 = vpack.c.b16 %v12170, %v12166
        %v12367 = vpack.c.b16 %v12171, %v12167
        %v12368 = vpack.c.b16 %v12176, %v12172
        %v12369 = vpack.c.b16 %v12177, %v12173
        %v12370 = vpack.c.b16 %v12178, %v12174
        %v12371 = vpack.c.b16 %v12179, %v12175
        %v12372 = vpack.c.b16 %v12184, %v12180
        %v12373 = vpack.c.b16 %v12185, %v12181
        %v12374 = vpack.c.b16 %v12186, %v12182
        %v12375 = vpack.c.b16 %v12187, %v12183
        %v12376 = vpack.c.b16 %v12192, %v12188
        %v12377 = vpack.c.b16 %v12193, %v12189
        %v12378 = vpack.c.b16 %v12194, %v12190
        %v12379 = vpack.c.b16 %v12195, %v12191
        %v12380 = vpack.c.b16 %v12200, %v12196
        %v12381 = vpack.c.b16 %v12201, %v12197
        %v12382 = vpack.c.b16 %v12202, %v12198
        %v12383 = vpack.c.b16 %v12203, %v12199
        %v12384 = vpack.c.b16 %v12208, %v12204
        %v12385 = vpack.c.b16 %v12209, %v12205
        %v12386 = vpack.c.b16 %v12210, %v12206
        %v12387 = vpack.c.b16 %v12211, %v12207
        %v12388 = vpack.c.b16 %v12216, %v12212
        %v12389 = vpack.c.b16 %v12217, %v12213
        %v12390 = vpack.c.b16 %v12218, %v12214
        %v12391 = vpack.c.b16 %v12219, %v12215
        %v12392 = vpack.c.b16 %v12224, %v12220
        %v12393 = vpack.c.b16 %v12225, %v12221
        %v12394 = vpack.c.b16 %v12226, %v12222
        %v12395 = vpack.c.b16 %v12227, %v12223
        %v12396 = vpack.c.b16 %v12232, %v12228
        %v12397 = vpack.c.b16 %v12233, %v12229
        %v12398 = vpack.c.b16 %v12234, %v12230
        %v12399 = vpack.c.b16 %v12235, %v12231
        %v12400 = vpack.c.b16 %v12240, %v12236
        %v12401 = vpack.c.b16 %v12241, %v12237
        %v12402 = vpack.c.b16 %v12242, %v12238
        %v12403 = vpack.c.b16 %v12243, %v12239
        %v12404 = vpack.c.b16 %v12248, %v12244
        %v12405 = vpack.c.b16 %v12249, %v12245
        %v12406 = vpack.c.b16 %v12250, %v12246
        %v12407 = vpack.c.b16 %v12251, %v12247
        %v12408 = vpack.c.b16 %v12256, %v12252
        %v12409 = vpack.c.b16 %v12257, %v12253
        %v12410 = vpack.c.b16 %v12258, %v12254
        %v12411 = vpack.c.b16 %v12259, %v12255
        %v12412 = vpack.c.b16 %v12264, %v12260
        %v12413 = vpack.c.b16 %v12265, %v12261
        %v12414 = vpack.c.b16 %v12266, %v12262
        %v12415 = vpack.c.b16 %v12267, %v12263
        %v12416 = vpack.c.b16 %v12272, %v12268
        %v12417 = vpack.c.b16 %v12273, %v12269
        %v12418 = vpack.c.b16 %v12274, %v12270
        %v12419 = vpack.c.b16 %v12275, %v12271
        %v12420 = vpack.c.b16 %v12280, %v12276
        %v12421 = vpack.c.b16 %v12281, %v12277
        %v12422 = vpack.c.b16 %v12282, %v12278
        %v12423 = vpack.c.b16 %v12283, %v12279
        %v12424 = vpack.c.b16 %v12288, %v12284
        %v12425 = vpack.c.b16 %v12289, %v12285
        %v12426 = vpack.c.b16 %v12290, %v12286
        %v12427 = vpack.c.b16 %v12291, %v12287
        %v12428 = vpack.c.b16 %v12296, %v12292
        %v12429 = vpack.c.b16 %v12297, %v12293
        %v12430 = vpack.c.b16 %v12298, %v12294
        %v12431 = vpack.c.b16 %v12299, %v12295
        %v12432 = vpack.c.b16 %v12304, %v12300
        %v12433 = vpack.c.b16 %v12305, %v12301
        %v12434 = vpack.c.b16 %v12306, %v12302
        %v12435 = vpack.c.b16 %v12307, %v12303
        %12564 = vmatpush.bf16.msra.mxu0 %v12336
        %12565 = vmatpush.bf16.msra.mxu0 %v12332
        %12566 = vmatpush.bf16.msra.mxu0 %v12328
        %12567 = vmatpush.bf16.msra.mxu0 %v12324
        %12568 = vmatpush.bf16.msra.mxu0 %v12320
        %12569 = vmatpush.bf16.msra.mxu0 %v12316
        %12570 = vmatpush.bf16.msra.mxu0 %v12312
        %12571 = vmatpush.bf16.msra.mxu0 %v12308
        %12572 = vmatmul.bf16.gmra.mxu0 %v11916
        %v12573 = vpop.f32.mrf.mxu0
        %v12574 = vadd.f32 0.0, %v12573
        %v12575 = vpop.f32.mrf.mxu0
        %v12576 = vadd.f32 0.0, %v12575
        %12577 = vdwg.mxu0
        %12578 = vmatpush.bf16.msra.mxu0 %v12368
        %12579 = vmatpush.bf16.msra.mxu0 %v12364
        %12580 = vmatpush.bf16.msra.mxu0 %v12360
        %12581 = vmatpush.bf16.msra.mxu0 %v12356
        %12582 = vmatpush.bf16.msra.mxu0 %v12352
        %12583 = vmatpush.bf16.msra.mxu0 %v12348
        %12584 = vmatpush.bf16.msra.mxu0 %v12344
        %12585 = vmatpush.bf16.msra.mxu0 %v12340
        %12586 = vmatmul.bf16.gmra.mxu0 %v11917
        %v12587 = vpop.f32.mrf.mxu0
        %v12588 = vadd.f32 %v12574, %v12587
        %v12589 = vpop.f32.mrf.mxu0
        %v12590 = vadd.f32 %v12576, %v12589
        %12591 = vdwg.mxu0
        %12592 = vmatpush.bf16.msra.mxu0 %v12400
        %12593 = vmatpush.bf16.msra.mxu0 %v12396
        %12594 = vmatpush.bf16.msra.mxu0 %v12392
        %12595 = vmatpush.bf16.msra.mxu0 %v12388
        %12596 = vmatpush.bf16.msra.mxu0 %v12384
        %12597 = vmatpush.bf16.msra.mxu0 %v12380
        %12598 = vmatpush.bf16.msra.mxu0 %v12376
        %12599 = vmatpush.bf16.msra.mxu0 %v12372
        %12600 = vmatmul.bf16.gmra.mxu0 %v11918
        %v12601 = vpop.f32.mrf.mxu0
        %v12602 = vadd.f32 %v12588, %v12601
        %v12603 = vpop.f32.mrf.mxu0
        %v12604 = vadd.f32 %v12590, %v12603
        %12605 = vdwg.mxu0
        %12606 = vmatpush.bf16.msra.mxu0 %v12432
        %12607 = vmatpush.bf16.msra.mxu0 %v12428
        %12608 = vmatpush.bf16.msra.mxu0 %v12424
        %12609 = vmatpush.bf16.msra.mxu0 %v12420
        %12610 = vmatpush.bf16.msra.mxu0 %v12416
        %12611 = vmatpush.bf16.msra.mxu0 %v12412
        %12612 = vmatpush.bf16.msra.mxu0 %v12408
        %12613 = vmatpush.bf16.msra.mxu0 %v12404
        %12614 = vmatmul.bf16.gmra.mxu0 %v11919
        %v12615 = vpop.f32.mrf.mxu0
        %v12616 = vadd.f32 %v12602, %v12615
        %v12617 = vpop.f32.mrf.mxu0
        %v12618 = vadd.f32 %v12604, %v12617
        %12619 = vdwg.mxu0
        %12620 = vmatpush.bf16.msra.mxu0 %v12337
        %12621 = vmatpush.bf16.msra.mxu0 %v12333
        %12622 = vmatpush.bf16.msra.mxu0 %v12329
        %12623 = vmatpush.bf16.msra.mxu0 %v12325
        %12624 = vmatpush.bf16.msra.mxu0 %v12321
        %12625 = vmatpush.bf16.msra.mxu0 %v12317
        %12626 = vmatpush.bf16.msra.mxu0 %v12313
        %12627 = vmatpush.bf16.msra.mxu0 %v12309
        %12628 = vmatmul.bf16.gmra.mxu0 %v11916
        %v12629 = vpop.f32.mrf.mxu0
        %v12630 = vadd.f32 0.0, %v12629
        %v12631 = vpop.f32.mrf.mxu0
        %v12632 = vadd.f32 0.0, %v12631
        %12633 = vdwg.mxu0
        %12634 = vmatpush.bf16.msra.mxu0 %v12369
        %12635 = vmatpush.bf16.msra.mxu0 %v12365
        %12636 = vmatpush.bf16.msra.mxu0 %v12361
        %12637 = vmatpush.bf16.msra.mxu0 %v12357
        %12638 = vmatpush.bf16.msra.mxu0 %v12353
        %12639 = vmatpush.bf16.msra.mxu0 %v12349
        %12640 = vmatpush.bf16.msra.mxu0 %v12345
        %12641 = vmatpush.bf16.msra.mxu0 %v12341
        %12642 = vmatmul.bf16.gmra.mxu0 %v11917
        %v12643 = vpop.f32.mrf.mxu0
        %v12644 = vadd.f32 %v12630, %v12643
        %v12645 = vpop.f32.mrf.mxu0
        %v12646 = vadd.f32 %v12632, %v12645
        %12647 = vdwg.mxu0
        %12648 = vmatpush.bf16.msra.mxu0 %v12401
        %12649 = vmatpush.bf16.msra.mxu0 %v12397
        %12650 = vmatpush.bf16.msra.mxu0 %v12393
        %12651 = vmatpush.bf16.msra.mxu0 %v12389
        %12652 = vmatpush.bf16.msra.mxu0 %v12385
        %12653 = vmatpush.bf16.msra.mxu0 %v12381
        %12654 = vmatpush.bf16.msra.mxu0 %v12377
        %12655 = vmatpush.bf16.msra.mxu0 %v12373
        %12656 = vmatmul.bf16.gmra.mxu0 %v11918
        %v12657 = vpop.f32.mrf.mxu0
        %v12658 = vadd.f32 %v12644, %v12657
        %v12659 = vpop.f32.mrf.mxu0
        %v12660 = vadd.f32 %v12646, %v12659
        %12661 = vdwg.mxu0
        %12662 = vmatpush.bf16.msra.mxu0 %v12433
        %12663 = vmatpush.bf16.msra.mxu0 %v12429
        %12664 = vmatpush.bf16.msra.mxu0 %v12425
        %12665 = vmatpush.bf16.msra.mxu0 %v12421
        %12666 = vmatpush.bf16.msra.mxu0 %v12417
        %12667 = vmatpush.bf16.msra.mxu0 %v12413
        %12668 = vmatpush.bf16.msra.mxu0 %v12409
        %12669 = vmatpush.bf16.msra.mxu0 %v12405
        %12670 = vmatmul.bf16.gmra.mxu0 %v11919
        %v12671 = vpop.f32.mrf.mxu0
        %v12672 = vadd.f32 %v12658, %v12671
        %v12673 = vpop.f32.mrf.mxu0
        %v12674 = vadd.f32 %v12660, %v12673
        %12675 = vdwg.mxu0
        %12676 = vmatpush.bf16.msra.mxu0 %v12338
        %12677 = vmatpush.bf16.msra.mxu0 %v12334
        %12678 = vmatpush.bf16.msra.mxu0 %v12330
        %12679 = vmatpush.bf16.msra.mxu0 %v12326
        %12680 = vmatpush.bf16.msra.mxu0 %v12322
        %12681 = vmatpush.bf16.msra.mxu0 %v12318
        %12682 = vmatpush.bf16.msra.mxu0 %v12314
        %12683 = vmatpush.bf16.msra.mxu0 %v12310
        %12684 = vmatmul.bf16.gmra.mxu0 %v11916
        %v12685 = vpop.f32.mrf.mxu0
        %v12686 = vadd.f32 0.0, %v12685
        %v12687 = vpop.f32.mrf.mxu0
        %v12688 = vadd.f32 0.0, %v12687
        %12689 = vdwg.mxu0
        %12690 = vmatpush.bf16.msra.mxu0 %v12370
        %12691 = vmatpush.bf16.msra.mxu0 %v12366
        %12692 = vmatpush.bf16.msra.mxu0 %v12362
        %12693 = vmatpush.bf16.msra.mxu0 %v12358
        %12694 = vmatpush.bf16.msra.mxu0 %v12354
        %12695 = vmatpush.bf16.msra.mxu0 %v12350
        %12696 = vmatpush.bf16.msra.mxu0 %v12346
        %12697 = vmatpush.bf16.msra.mxu0 %v12342
        %12698 = vmatmul.bf16.gmra.mxu0 %v11917
        %v12699 = vpop.f32.mrf.mxu0
        %v12700 = vadd.f32 %v12686, %v12699
        %v12701 = vpop.f32.mrf.mxu0
        %v12702 = vadd.f32 %v12688, %v12701
        %12703 = vdwg.mxu0
        %12704 = vmatpush.bf16.msra.mxu0 %v12402
        %12705 = vmatpush.bf16.msra.mxu0 %v12398
        %12706 = vmatpush.bf16.msra.mxu0 %v12394
        %12707 = vmatpush.bf16.msra.mxu0 %v12390
        %12708 = vmatpush.bf16.msra.mxu0 %v12386
        %12709 = vmatpush.bf16.msra.mxu0 %v12382
        %12710 = vmatpush.bf16.msra.mxu0 %v12378
        %12711 = vmatpush.bf16.msra.mxu0 %v12374
        %12712 = vmatmul.bf16.gmra.mxu0 %v11918
        %v12713 = vpop.f32.mrf.mxu0
        %v12714 = vadd.f32 %v12700, %v12713
        %v12715 = vpop.f32.mrf.mxu0
        %v12716 = vadd.f32 %v12702, %v12715
        %12717 = vdwg.mxu0
        %12718 = vmatpush.bf16.msra.mxu0 %v12434
        %12719 = vmatpush.bf16.msra.mxu0 %v12430
        %12720 = vmatpush.bf16.msra.mxu0 %v12426
        %12721 = vmatpush.bf16.msra.mxu0 %v12422
        %12722 = vmatpush.bf16.msra.mxu0 %v12418
        %12723 = vmatpush.bf16.msra.mxu0 %v12414
        %12724 = vmatpush.bf16.msra.mxu0 %v12410
        %12725 = vmatpush.bf16.msra.mxu0 %v12406
        %12726 = vmatmul.bf16.gmra.mxu0 %v11919
        %v12727 = vpop.f32.mrf.mxu0
        %v12728 = vadd.f32 %v12714, %v12727
        %v12729 = vpop.f32.mrf.mxu0
        %v12730 = vadd.f32 %v12716, %v12729
        %12731 = vdwg.mxu0
        %12732 = vmatpush.bf16.msra.mxu0 %v12339
        %12733 = vmatpush.bf16.msra.mxu0 %v12335
        %12734 = vmatpush.bf16.msra.mxu0 %v12331
        %12735 = vmatpush.bf16.msra.mxu0 %v12327
        %12736 = vmatpush.bf16.msra.mxu0 %v12323
        %12737 = vmatpush.bf16.msra.mxu0 %v12319
        %12738 = vmatpush.bf16.msra.mxu0 %v12315
        %12739 = vmatpush.bf16.msra.mxu0 %v12311
        %12740 = vmatmul.bf16.gmra.mxu0 %v11916
        %v12741 = vpop.f32.mrf.mxu0
        %v12742 = vadd.f32 0.0, %v12741
        %v12743 = vpop.f32.mrf.mxu0
        %v12744 = vadd.f32 0.0, %v12743
        %12745 = vdwg.mxu0
        %12746 = vmatpush.bf16.msra.mxu0 %v12371
        %12747 = vmatpush.bf16.msra.mxu0 %v12367
        %12748 = vmatpush.bf16.msra.mxu0 %v12363
        %12749 = vmatpush.bf16.msra.mxu0 %v12359
        %12750 = vmatpush.bf16.msra.mxu0 %v12355
        %12751 = vmatpush.bf16.msra.mxu0 %v12351
        %12752 = vmatpush.bf16.msra.mxu0 %v12347
        %12753 = vmatpush.bf16.msra.mxu0 %v12343
        %12754 = vmatmul.bf16.gmra.mxu0 %v11917
        %v12755 = vpop.f32.mrf.mxu0
        %v12756 = vadd.f32 %v12742, %v12755
        %v12757 = vpop.f32.mrf.mxu0
        %v12758 = vadd.f32 %v12744, %v12757
        %12759 = vdwg.mxu0
        %12760 = vmatpush.bf16.msra.mxu0 %v12403
        %12761 = vmatpush.bf16.msra.mxu0 %v12399
        %12762 = vmatpush.bf16.msra.mxu0 %v12395
        %12763 = vmatpush.bf16.msra.mxu0 %v12391
        %12764 = vmatpush.bf16.msra.mxu0 %v12387
        %12765 = vmatpush.bf16.msra.mxu0 %v12383
        %12766 = vmatpush.bf16.msra.mxu0 %v12379
        %12767 = vmatpush.bf16.msra.mxu0 %v12375
        %12768 = vmatmul.bf16.gmra.mxu0 %v11918
        %v12769 = vpop.f32.mrf.mxu0
        %v12770 = vadd.f32 %v12756, %v12769
        %v12771 = vpop.f32.mrf.mxu0
        %v12772 = vadd.f32 %v12758, %v12771
        %12773 = vdwg.mxu0
        %12774 = vmatpush.bf16.msra.mxu0 %v12435
        %12775 = vmatpush.bf16.msra.mxu0 %v12431
        %12776 = vmatpush.bf16.msra.mxu0 %v12427
        %12777 = vmatpush.bf16.msra.mxu0 %v12423
        %12778 = vmatpush.bf16.msra.mxu0 %v12419
        %12779 = vmatpush.bf16.msra.mxu0 %v12415
        %12780 = vmatpush.bf16.msra.mxu0 %v12411
        %12781 = vmatpush.bf16.msra.mxu0 %v12407
        %12782 = vmatmul.bf16.gmra.mxu0 %v11919
        %v12783 = vpop.f32.mrf.mxu0
        %v12784 = vadd.f32 %v12770, %v12783
        %v12785 = vpop.f32.mrf.mxu0
        %v12786 = vadd.f32 %v12772, %v12785
        %12787 = vdwg.mxu0
        %v12788 = vadd.f32 %v11575, %v12616
        %v12789 = vadd.f32 %v11631, %v12672
        %v12790 = vadd.f32 %v11687, %v12728
        %v12791 = vadd.f32 %v11743, %v12784
        %v12792 = vadd.f32 %v11577, %v12618
        %v12793 = vadd.f32 %v11633, %v12674
        %v12794 = vadd.f32 %v11689, %v12730
        %v12795 = vadd.f32 %v11745, %v12786
        %s12796 = scalar_lea.vmem [#allocation7], 12
        %v12797 = vld [vmem:[%s12796] sm:$0xf]
        %v12799 = vperm.slane %v12797, 0
        %v12800 = vperm.slane %v12797, 1
        %v12801 = vperm.slane %v12797, 2
        %v12802 = vperm.slane %v12797, 3
        %v12807 = vadd.f32 %v12788, %v12799
        %v12808 = vadd.f32 %v12789, %v12800
        %v12809 = vadd.f32 %v12790, %v12801
        %v12810 = vadd.f32 %v12791, %v12802
        %v12811 = vadd.f32 %v12792, %v12799
        %v12812 = vadd.f32 %v12793, %v12800
        %v12813 = vadd.f32 %v12794, %v12801
        %v12814 = vadd.f32 %v12795, %v12802
        %v12815 = vadd.f32 %v12807, %v224
        %v12816 = vadd.f32 %v12808, %v225
        %v12817 = vadd.f32 %v12809, %v226
        %v12818 = vadd.f32 %v12810, %v227
        %v12819 = vadd.f32 %v12811, %v228
        %v12820 = vadd.f32 %v12812, %v229
        %v12821 = vadd.f32 %v12813, %v230
        %v12822 = vadd.f32 %v12814, %v231
        %12823 = vst [vmem:[%s223] sm:$0xff] %v12815
        %12824 = vst [vmem:[%s223 + $0x8] sm:$0xff] %v12816
        %12825 = vst [vmem:[%s223 + $0x10] sm:$0xff] %v12817
        %12826 = vst [vmem:[%s223 + $0x18] sm:$0xff] %v12818
        %12827 = vst [vmem:[%s223 + $0x20] sm:$0xff] %v12819
        %12828 = vst [vmem:[%s223 + $0x28] sm:$0xff] %v12820
        %12829 = vst [vmem:[%s223 + $0x30] sm:$0xff] %v12821
        %12830 = vst [vmem:[%s223 + $0x38] sm:$0xff] %v12822
        %s12831 = sand.u32 %s97, 1
        %s12832 = scalar_lea.sflag [#allocation4], %s12831
        %s12833 = sand.u32 %s97, 1
        %s12834 = smul.addr %s12833, 64
        %s12835 = scalar_lea.vmem [#allocation8], %s12834
        // Predicated region
        $region45: #{tpu_custom_call.1} parent=31 // pred_check
          %p12836 = pneg %p107
        $region46: #{tpu_custom_call.1} parent=31 // pred_check_branch
          %12838 = sbr.rel (%p12836) target = $region48
        $region47: #{tpu_custom_call.1} parent=31 // pred_region
          %12840 = vsyncadd %s12832, 0
          %s12841 = smul.addr %s21, 8
          %s12842 = smul.addr %s12841, 8
          %s12843 = scalar_lea.hbm %s3, %s12842
          %s12844 = sshll.u32 %s12835, 4
          %s12845 = int_to_ptr.vmem [resolvable:$true] %s12844
          %s12846 = sshll.u32 %s12843, 4
          %s12847 = int_to_ptr.hbm [resolvable:$true] %s12846
          %12852 = dma.vmem_to_hbm [thread:$0]  %s12845, 1024, %s12847, %s12832, 512, 512, 32
        $region48: #{tpu_custom_call.1} parent=31 // pred_fallthru
          _
      $region32: #{tpu_custom_call.1} parent=5 // pred_fallthru
        _
      %p12853 = scmp.le.s32.totalorder 2, %s16
      // Predicated region
      $region49: #{tpu_custom_call.1} parent=5 // pred_check
        %p12854 = pneg %p12853
      $region50: #{tpu_custom_call.1} parent=5 // pred_check_branch
        %12856 = sbr.rel (%p12854) target = $region52
      $region51: #{tpu_custom_call.1} parent=5 // pred_region
        %s12857 = ssub.s32 %s16, 2
        // Predicated region
        $region53: #{tpu_custom_call.1} parent=51 // pred_check
          %p12858 = pneg %p113
        $region54: #{tpu_custom_call.1} parent=51 // pred_check_branch
          %12860 = sbr.rel (%p12858) target = $region56
        $region55: #{tpu_custom_call.1} parent=51 // pred_region
          %s12861 = sand.u32 %s98, 1
          %s12862 = scalar_lea.sflag [#allocation4], %s12861
          %s12863 = sand.u32 %s98, 1
          %s12864 = smul.addr %s12863, 64
          %s12865 = scalar_lea.vmem [#allocation8], %s12864
          %12867 = dma.done %s12862, 1024
        $region56: #{tpu_custom_call.1} parent=51 // pred_fallthru
          _
      $region52: #{tpu_custom_call.1} parent=5 // pred_fallthru
        _
    $region6: #{tpu_custom_call.1} parent=1 // loop_footer
      %s20 = sadd.s32 1, %s16
    $region7: #{tpu_custom_call.1} parent=1 // loop_footer_branch
      %15 = sbr.rel target = $region3
    $region8: #{tpu_custom_call.1} parent=1 // loop_exit
      _
    %12868 = vsyncpa [#allocation3], 1
    %s12869 = scalar_lea.sflag [#allocation3], 1
    %12870 = vsyncpa %s12869, 1
    %12871 = vsyncpa [#allocation6], 1
    %12872 = vsyncpa [#allocation4], 1
    %s12873 = scalar_lea.sflag [#allocation4], 1
    %12874 = vsyncpa %s12873, 1

</llo_original>
